<compile_context>
chip_gen: v7x
topology: tpu7x:2x2x1
jax: 0.10.0
libtpu: 0.0.40
codegen_flags: <defaults>
</compile_context>

<pallas_src>
import jax
import jax.numpy as jnp
from jax.experimental import pallas as pl
from jax.experimental.pallas import tpu as pltpu

IN_DIM = 2048
HID_DIM = 1024
OUT_DIM = 2
OUT_PAD = 128            # lane-dense padded fc3 width
BN_EPS = 1e-5
TILE_B_MAX = 512         # rows per grid step for large batches
SINGLE_TILE_MAX = 256    # up to this many rows: one tile (weights DMA'd once)
MIN_TILE = 16            # bf16 sublane packing requirement
NEG_BIG = -1e30          # padded-logit bias (exp() underflows to 0)


def _mlp_kernel(x_ref, w1_ref, s1_ref, t1_ref, w2_ref, s2_ref, t2_ref,
                w3_ref, b3_ref, out_ref):
    """Fused 3-layer MLP (+BN scale/shift, ReLU) + log_softmax, one batch tile.

    x is already bf16; weights are bf16 and grid-invariant (resident in VMEM
    across the batch grid); dots accumulate in f32 on the MXU.
    """
    x = x_ref[...]

    # fc1 + bn1 (as activation scale/shift) + relu
    h1 = jnp.dot(x, w1_ref[...], preferred_element_type=jnp.float32)
    h1 = jnp.maximum(h1 * s1_ref[...] + t1_ref[...], 0.0)

    # fc2 + bn2 + relu
    h2 = jnp.dot(h1.astype(jnp.bfloat16), w2_ref[...],
                 preferred_element_type=jnp.float32)
    h2 = jnp.maximum(h2 * s2_ref[...] + t2_ref[...], 0.0)

    # fc3 (padded to 128 lanes; padded bias is -1e30 so those columns vanish
    # from the softmax normalizer)
    logits = jnp.dot(h2.astype(jnp.bfloat16), w3_ref[...],
                     preferred_element_type=jnp.float32) + b3_ref[...]

    # log_softmax along feature axis (numerically stable)
    m = jnp.max(logits, axis=-1, keepdims=True)
    shifted = logits - m
    lse = jnp.log(jnp.sum(jnp.exp(shifted), axis=-1, keepdims=True))
    out_ref[...] = shifted - lse


def prepare_params(params):
    """One-time parameter preparation (outside the per-call forward):
    - BN(eval) -> per-channel scale/shift vectors (linear bias folded in),
    - weights cast to bf16,
    - fc3 padded to 128 output lanes for a lane-dense output store."""
    (w1, b1, g1, be1, m1, v1,
     w2, b2, g2, be2, m2, v2,
     w3, b3) = params

    s1 = g1 / jnp.sqrt(v1 + BN_EPS)
    t1 = (b1 - m1) * s1 + be1
    s2 = g2 / jnp.sqrt(v2 + BN_EPS)
    t2 = (b2 - m2) * s2 + be2

    w3_pad = jnp.zeros((HID_DIM, OUT_PAD), jnp.float32).at[:, :OUT_DIM].set(w3)
    b3_pad = jnp.full((OUT_PAD,), NEG_BIG, jnp.float32).at[:OUT_DIM].set(b3)

    return (
        w1.astype(jnp.bfloat16), s1.reshape(1, HID_DIM), t1.reshape(1, HID_DIM),
        w2.astype(jnp.bfloat16), s2.reshape(1, HID_DIM), t2.reshape(1, HID_DIM),
        w3_pad.astype(jnp.bfloat16), b3_pad.reshape(1, OUT_PAD),
    )


def _round_up(n, m):
    return ((n + m - 1) // m) * m


def _choose_tile_b(batch):
    """Pick the batch tile (static, from x.shape)."""
    b16 = _round_up(batch, MIN_TILE)
    if b16 <= SINGLE_TILE_MAX:
        # Small batch: a single tile so the ~6.3 MiB of resident weights is
        # DMA'd exactly once (splitting across v7x's two cores would double
        # weight HBM traffic for no compute win).
        return b16
    # Large batch: cap the tile but keep the grid length >= 2 so the
    # "parallel" batch axis can actually be sharded across v7x's two cores.
    return min(TILE_B_MAX, _round_up(pl.cdiv(b16, 2), MIN_TILE))


@jax.jit
def svhn_domain_classifier_forward(x, constant, prepared):
    """Forward pass. `constant` only affects the backward of grad-reverse,
    so it is unused here (grad-reverse is identity in the forward pass)."""
    del constant
    (w1, s1, t1, w2, s2, t2, w3, b3) = prepared

    B = x.shape[0]
    tile_b = _choose_tile_b(B)
    b_pad = _round_up(B, tile_b)
    grid_b = b_pad // tile_b

    # Quantize activations to bf16 in the wrapper (halves the x-tile DMA per
    # grid step). The row pad is applied to the bf16 result so cast + pad is
    # a single rewrite of x (no extra HBM round trip).
    x = x.astype(jnp.bfloat16)
    if b_pad != B:
        x = jnp.pad(x, ((0, b_pad - B), (0, 0)))

    def resident(shape):
        # Grid-invariant operand: same block every grid step -> stays in VMEM.
        # Single-buffered: its block index never changes, double-buffering
        # would only burn VMEM.
        return pl.BlockSpec(shape, lambda i: tuple(0 for _ in shape),
                            pipeline_mode=pl.Buffered(1))

    out_full = pl.pallas_call(
        _mlp_kernel,
        out_shape=jax.ShapeDtypeStruct((b_pad, OUT_PAD), jnp.float32),
        grid_spec=pl.GridSpec(
            grid=(grid_b,),
            in_specs=[
                pl.BlockSpec((tile_b, IN_DIM), lambda i: (i, 0)),   # x tile
                resident(w1.shape), resident(s1.shape), resident(t1.shape),
                resident(w2.shape), resident(s2.shape), resident(t2.shape),
                resident(w3.shape), resident(b3.shape),
            ],
            out_specs=pl.BlockSpec((tile_b, OUT_PAD), lambda i: (i, 0)),
        ),
        compiler_params=pltpu.CompilerParams(
            # With a single grid step, "parallel" would only make v7x's second
            # TensorCore re-load the resident weights for nothing.
            dimension_semantics=("parallel",) if grid_b > 1 else ("arbitrary",),
            vmem_limit_bytes=48 * 1024 * 1024,
        ),
    )(x, w1, s1, t1, w2, s2, t2, w3, b3)

    return out_full[:B, :OUT_DIM]


def init_params(key):
    """Deterministic synthetic parameters, mimicking nn.Linear/BatchNorm1d shapes."""
    ks = jax.random.split(key, 8)

    def linear(kw, kb, fan_in, fan_out):
        bound = 1.0 / jnp.sqrt(fan_in)
        w = jax.random.uniform(kw, (fan_in, fan_out), jnp.float32, -bound, bound)
        b = jax.random.uniform(kb, (fan_out,), jnp.float32, -bound, bound)
        return w, b

    w1, b1 = linear(ks[0], ks[1], IN_DIM, HID_DIM)
    w2, b2 = linear(ks[2], ks[3], HID_DIM, HID_DIM)
    w3, b3 = linear(ks[4], ks[5], HID_DIM, OUT_DIM)

    # BatchNorm1d parameters / running stats (nonzero so folding is exercised)
    g1 = 1.0 + 0.1 * jax.random.normal(ks[6], (HID_DIM,), jnp.float32)
    be1 = 0.1 * jax.random.normal(ks[7], (HID_DIM,), jnp.float32)
    m1 = 0.05 * jnp.sin(jnp.arange(HID_DIM, dtype=jnp.float32))
    v1 = 1.0 + 0.1 * jnp.cos(jnp.arange(HID_DIM, dtype=jnp.float32)) ** 2

    g2 = jnp.ones((HID_DIM,), jnp.float32) * 0.9
    be2 = jnp.full((HID_DIM,), 0.02, jnp.float32)
    m2 = -0.03 * jnp.ones((HID_DIM,), jnp.float32)
    v2 = jnp.full((HID_DIM,), 1.3, jnp.float32)

    return (w1, b1, g1, be1, m1, v1,
            w2, b2, g2, be2, m2, v2,
            w3, b3)


def _reference_f32(x, params):
    """Pure-JAX f32 reference implementing the PyTorch module (eval mode)."""
    (w1, b1, g1, be1, m1, v1,
     w2, b2, g2, be2, m2, v2,
     w3, b3) = params
    h = x @ w1 + b1
    h = (h - m1) / jnp.sqrt(v1 + BN_EPS) * g1 + be1
    h = jnp.maximum(h, 0.0)
    h = h @ w2 + b2
    h = (h - m2) / jnp.sqrt(v2 + BN_EPS) * g2 + be2
    h = jnp.maximum(h, 0.0)
    logits = h @ w3 + b3
    return jax.nn.log_softmax(logits, axis=-1)


def _reference_bf16(x, params):
    """Reference that mimics the kernel's bf16 weight/activation quantization."""
    (w1, b1, g1, be1, m1, v1,
     w2, b2, g2, be2, m2, v2,
     w3, b3) = params

    def q(a):
        return a.astype(jnp.bfloat16).astype(jnp.float32)

    s1 = g1 / jnp.sqrt(v1 + BN_EPS)
    t1 = (b1 - m1) * s1 + be1
    s2 = g2 / jnp.sqrt(v2 + BN_EPS)
    t2 = (b2 - m2) * s2 + be2

    h = q(x) @ q(w1)
    h = jnp.maximum(h * s1 + t1, 0.0)
    h = q(h) @ q(w2)
    h = jnp.maximum(h * s2 + t2, 0.0)
    logits = q(h) @ q(w3) + b3
    return jax.nn.log_softmax(logits, axis=-1)


if __name__ == "__main__":
    key = jax.random.PRNGKey(0)
    k_x, k_x2, k_p = jax.random.split(key, 3)

    params = init_params(k_p)
    prepared = prepare_params(params)          # one-time: bf16 cast + BN -> scale/shift
    constant = jnp.float32(1.0)                # grad-reverse lambda (forward: unused)

    # Tiny batch: single grid step, "arbitrary" semantics path.
    B = 2
    x = jax.random.normal(k_x, (B, IN_DIM), jnp.float32)
    out = jax.block_until_ready(svhn_domain_classifier_forward(x, constant, prepared))
    assert out.shape == (B, OUT_DIM)
    assert jnp.all(jnp.isfinite(out))
    ref_q = _reference_bf16(x, params)
    ref_f = _reference_f32(x, params)
    assert jnp.allclose(out, ref_q, atol=2e-3, rtol=1e-3), "mismatch vs bf16 reference"
    assert jnp.allclose(out, ref_f, atol=5e-2, rtol=5e-2), "mismatch vs f32 reference"

    # Larger, non-multiple-of-tile batch: exercises batch tiling (grid >= 2,
    # "parallel" semantics) + bf16 row padding.
    B2 = 300
    x2 = jax.random.normal(k_x2, (B2, IN_DIM), jnp.float32)
    out2 = jax.block_until_ready(svhn_domain_classifier_forward(x2, constant, prepared))
    assert out2.shape == (B2, OUT_DIM)
    assert jnp.all(jnp.isfinite(out2))
    ref2 = _reference_bf16(x2, params)
    assert jnp.allclose(out2, ref2, atol=2e-3, rtol=1e-3), "mismatch vs reference (tiled batch)"

    print("KERNEL_OK")
</pallas_src>

<mosaic_0001>
module attributes {stable_mosaic.version = 11 : i64} {
  func.func @_mlp_kernel(%arg0: i32, %arg1: memref<16x2048xbf16, #tpu.memory_space<vmem>>, %arg2: memref<2048x1024xbf16, #tpu.memory_space<vmem>>, %arg3: memref<1x1024xf32, #tpu.memory_space<vmem>>, %arg4: memref<1x1024xf32, #tpu.memory_space<vmem>>, %arg5: memref<1024x1024xbf16, #tpu.memory_space<vmem>>, %arg6: memref<1x1024xf32, #tpu.memory_space<vmem>>, %arg7: memref<1x1024xf32, #tpu.memory_space<vmem>>, %arg8: memref<1024x128xbf16, #tpu.memory_space<vmem>>, %arg9: memref<1x128xf32, #tpu.memory_space<vmem>>, %arg10: memref<16x128xf32, #tpu.memory_space<vmem>>) attributes {dimension_semantics = [#tpu.dimension_semantics<arbitrary>], iteration_bounds = array<i64: 1>, scalar_prefetch = 0 : i64, scratch_operands = 0 : i64, tpu.core_type = #tpu.core_type<tc>, window_params = [{transform_indices = @transform_0, window_bounds = array<i64: 16, 2048>}, {pipeline_mode = #tpu.pipeline_mode<synchronous>, transform_indices = @transform_1, window_bounds = array<i64: 2048, 1024>}, {pipeline_mode = #tpu.pipeline_mode<synchronous>, transform_indices = @transform_2, window_bounds = array<i64: 1, 1024>}, {pipeline_mode = #tpu.pipeline_mode<synchronous>, transform_indices = @transform_3, window_bounds = array<i64: 1, 1024>}, {pipeline_mode = #tpu.pipeline_mode<synchronous>, transform_indices = @transform_4, window_bounds = array<i64: 1024, 1024>}, {pipeline_mode = #tpu.pipeline_mode<synchronous>, transform_indices = @transform_5, window_bounds = array<i64: 1, 1024>}, {pipeline_mode = #tpu.pipeline_mode<synchronous>, transform_indices = @transform_6, window_bounds = array<i64: 1, 1024>}, {pipeline_mode = #tpu.pipeline_mode<synchronous>, transform_indices = @transform_7, window_bounds = array<i64: 1024, 128>}, {pipeline_mode = #tpu.pipeline_mode<synchronous>, transform_indices = @transform_8, window_bounds = array<i64: 1, 128>}, {transform_indices = @transform_9, window_bounds = array<i64: 16, 128>}]} {
    %c0 = arith.constant 0 : index
    %c0_0 = arith.constant 0 : index
    %0 = vector.load %arg1[%c0, %c0_0] : memref<16x2048xbf16, #tpu.memory_space<vmem>>, vector<16x2048xbf16>
    %c0_1 = arith.constant 0 : index
    %c0_2 = arith.constant 0 : index
    %1 = vector.load %arg2[%c0_1, %c0_2] : memref<2048x1024xbf16, #tpu.memory_space<vmem>>, vector<2048x1024xbf16>
    %cst = arith.constant dense<0.000000e+00> : vector<16x1024xf32>
    %2 = tpu.matmul %0, %1, %cst {dimension_numbers = #tpu.dot_dimension_numbers<[1], [0], [0], [1], [0, 0, 1, 1], [], []>} : vector<16x2048xbf16>, vector<2048x1024xbf16>, vector<16x1024xf32> -> vector<16x1024xf32>
    %c0_3 = arith.constant 0 : index
    %c0_4 = arith.constant 0 : index
    %3 = vector.load %arg3[%c0_3, %c0_4] : memref<1x1024xf32, #tpu.memory_space<vmem>>, vector<1x1024xf32>
    %4 = vector.broadcast %3 : vector<1x1024xf32> to vector<16x1024xf32>
    %5 = arith.mulf %2, %4 : vector<16x1024xf32>
    %c0_5 = arith.constant 0 : index
    %c0_6 = arith.constant 0 : index
    %6 = vector.load %arg4[%c0_5, %c0_6] : memref<1x1024xf32, #tpu.memory_space<vmem>>, vector<1x1024xf32>
    %7 = vector.broadcast %6 : vector<1x1024xf32> to vector<16x1024xf32>
    %8 = arith.addf %5, %7 : vector<16x1024xf32>
    %cst_7 = arith.constant 0.000000e+00 : f32
    %9 = vector.broadcast %cst_7 : f32 to vector<16x1024xf32>
    %10 = arith.maximumf %8, %9 : vector<16x1024xf32>
    %11 = arith.truncf %10 : vector<16x1024xf32> to vector<16x1024xbf16>
    %c0_8 = arith.constant 0 : index
    %c0_9 = arith.constant 0 : index
    %12 = vector.load %arg5[%c0_8, %c0_9] : memref<1024x1024xbf16, #tpu.memory_space<vmem>>, vector<1024x1024xbf16>
    %cst_10 = arith.constant dense<0.000000e+00> : vector<16x1024xf32>
    %13 = tpu.matmul %11, %12, %cst_10 {dimension_numbers = #tpu.dot_dimension_numbers<[1], [0], [0], [1], [0, 0, 1, 1], [], []>} : vector<16x1024xbf16>, vector<1024x1024xbf16>, vector<16x1024xf32> -> vector<16x1024xf32>
    %c0_11 = arith.constant 0 : index
    %c0_12 = arith.constant 0 : index
    %14 = vector.load %arg6[%c0_11, %c0_12] : memref<1x1024xf32, #tpu.memory_space<vmem>>, vector<1x1024xf32>
    %15 = vector.broadcast %14 : vector<1x1024xf32> to vector<16x1024xf32>
    %16 = arith.mulf %13, %15 : vector<16x1024xf32>
    %c0_13 = arith.constant 0 : index
    %c0_14 = arith.constant 0 : index
    %17 = vector.load %arg7[%c0_13, %c0_14] : memref<1x1024xf32, #tpu.memory_space<vmem>>, vector<1x1024xf32>
    %18 = vector.broadcast %17 : vector<1x1024xf32> to vector<16x1024xf32>
    %19 = arith.addf %16, %18 : vector<16x1024xf32>
    %cst_15 = arith.constant 0.000000e+00 : f32
    %20 = vector.broadcast %cst_15 : f32 to vector<16x1024xf32>
    %21 = arith.maximumf %19, %20 : vector<16x1024xf32>
    %22 = arith.truncf %21 : vector<16x1024xf32> to vector<16x1024xbf16>
    %c0_16 = arith.constant 0 : index
    %c0_17 = arith.constant 0 : index
    %23 = vector.load %arg8[%c0_16, %c0_17] : memref<1024x128xbf16, #tpu.memory_space<vmem>>, vector<1024x128xbf16>
    %cst_18 = arith.constant dense<0.000000e+00> : vector<16x128xf32>
    %24 = tpu.matmul %22, %23, %cst_18 {dimension_numbers = #tpu.dot_dimension_numbers<[1], [0], [0], [1], [0, 0, 1, 1], [], []>} : vector<16x1024xbf16>, vector<1024x128xbf16>, vector<16x128xf32> -> vector<16x128xf32>
    %c0_19 = arith.constant 0 : index
    %c0_20 = arith.constant 0 : index
    %25 = vector.load %arg9[%c0_19, %c0_20] : memref<1x128xf32, #tpu.memory_space<vmem>>, vector<1x128xf32>
    %26 = vector.broadcast %25 : vector<1x128xf32> to vector<16x128xf32>
    %27 = arith.addf %24, %26 : vector<16x128xf32>
    %cst_21 = arith.constant dense<0xFF800000> : vector<16xf32>
    %28 = vector.multi_reduction <maximumf>, %27, %cst_21 [1] : vector<16x128xf32> to vector<16xf32>
    %29 = vector.shape_cast %28 : vector<16xf32> to vector<16x1xf32>
    %30 = vector.broadcast %29 : vector<16x1xf32> to vector<16x128xf32>
    %31 = arith.subf %27, %30 : vector<16x128xf32>
    %32 = math.exp %31 : vector<16x128xf32>
    %cst_22 = arith.constant dense<0.000000e+00> : vector<16xf32>
    %33 = vector.multi_reduction <add>, %32, %cst_22 [1] : vector<16x128xf32> to vector<16xf32>
    %34 = vector.shape_cast %33 : vector<16xf32> to vector<16x1xf32>
    %35 = math.log %34 : vector<16x1xf32>
    %36 = vector.broadcast %35 : vector<16x1xf32> to vector<16x128xf32>
    %37 = arith.subf %31, %36 : vector<16x128xf32>
    %c0_23 = arith.constant 0 : index
    %c0_24 = arith.constant 0 : index
    %38 = vector.load %arg10[%c0_23, %c0_24] : memref<16x128xf32, #tpu.memory_space<vmem>>, vector<16x128xf32>
    tpu.vector_store %arg10[%c0_23, %c0_24], %37 {strides = array<i32>} : memref<16x128xf32, #tpu.memory_space<vmem>>, vector<16x128xf32>,
    return
  }
  func.func @transform_0(%arg0: i32) -> (i32, i32) {
    %c0_i32 = arith.constant 0 : i32
    %c0_i32_0 = arith.constant 0 : i32
    return %arg0, %c0_i32 : i32, i32
  }
  func.func @transform_1(%arg0: i32) -> (i32, i32) {
    %c0_i32 = arith.constant 0 : i32
    %c0_i32_0 = arith.constant 0 : i32
    %c0_i32_1 = arith.constant 0 : i32
    return %c0_i32, %c0_i32_0 : i32, i32
  }
  func.func @transform_2(%arg0: i32) -> (i32, i32) {
    %c0_i32 = arith.constant 0 : i32
    %c0_i32_0 = arith.constant 0 : i32
    %c0_i32_1 = arith.constant 0 : i32
    return %c0_i32, %c0_i32_0 : i32, i32
  }
  func.func @transform_3(%arg0: i32) -> (i32, i32) {
    %c0_i32 = arith.constant 0 : i32
    %c0_i32_0 = arith.constant 0 : i32
    %c0_i32_1 = arith.constant 0 : i32
    return %c0_i32, %c0_i32_0 : i32, i32
  }
  func.func @transform_4(%arg0: i32) -> (i32, i32) {
    %c0_i32 = arith.constant 0 : i32
    %c0_i32_0 = arith.constant 0 : i32
    %c0_i32_1 = arith.constant 0 : i32
    return %c0_i32, %c0_i32_0 : i32, i32
  }
  func.func @transform_5(%arg0: i32) -> (i32, i32) {
    %c0_i32 = arith.constant 0 : i32
    %c0_i32_0 = arith.constant 0 : i32
    %c0_i32_1 = arith.constant 0 : i32
    return %c0_i32, %c0_i32_0 : i32, i32
  }
  func.func @transform_6(%arg0: i32) -> (i32, i32) {
    %c0_i32 = arith.constant 0 : i32
    %c0_i32_0 = arith.constant 0 : i32
    %c0_i32_1 = arith.constant 0 : i32
    return %c0_i32, %c0_i32_0 : i32, i32
  }
  func.func @transform_7(%arg0: i32) -> (i32, i32) {
    %c0_i32 = arith.constant 0 : i32
    %c0_i32_0 = arith.constant 0 : i32
    %c0_i32_1 = arith.constant 0 : i32
    return %c0_i32, %c0_i32_0 : i32, i32
  }
  func.func @transform_8(%arg0: i32) -> (i32, i32) {
    %c0_i32 = arith.constant 0 : i32
    %c0_i32_0 = arith.constant 0 : i32
    %c0_i32_1 = arith.constant 0 : i32
    return %c0_i32, %c0_i32_0 : i32, i32
  }
  func.func @transform_9(%arg0: i32) -> (i32, i32) {
    %c0_i32 = arith.constant 0 : i32
    %c0_i32_0 = arith.constant 0 : i32
    return %arg0, %c0_i32 : i32, i32
  }
}

</mosaic_0001>

<llo_original>
// kernel: svhn_domain_classifier_forward.1
$region0: #{svhn_domain_classifier_forward.1}
  #allocation0 [shape = 'u32[]', space=smem, size = 0x4, offset = 0x4, fixed_abs, tag = 'smem constant byte address 0x4 - core index']
  #allocation1 [shape = 'u32[144,128]{1,0:T(1,128)}', space=vmem, size = 0x12000, scoped, tag = 'internal scratch']
  %s0 = inlined_call_operand.vmem [shape: bf16[16,2048], index: 0, kind: input, shape index: {}]
  %s1 = inlined_call_operand.hbm [shape: bf16[2048,1024], index: 1, kind: input, shape index: {}]
  %s2 = inlined_call_operand.hbm [shape: f32[1,1024], index: 2, kind: input, shape index: {}]
  %s3 = inlined_call_operand.hbm [shape: f32[1,1024], index: 3, kind: input, shape index: {}]
  %s4 = inlined_call_operand.hbm [shape: bf16[1024,1024], index: 4, kind: input, shape index: {}]
  %s5 = inlined_call_operand.hbm [shape: f32[1,1024], index: 5, kind: input, shape index: {}]
  %s6 = inlined_call_operand.hbm [shape: f32[1,1024], index: 6, kind: input, shape index: {}]
  %s7 = inlined_call_operand.hbm [shape: bf16[1024,128], index: 7, kind: input, shape index: {}]
  %s8 = inlined_call_operand.hbm [shape: f32[1,128], index: 8, kind: input, shape index: {}]
  %s9 = inlined_call_operand.vmem [shape: f32[16,128], index: 9, kind: output, shape index: {}]
  %s10 = sld [smem:[#allocation0]]
  $region78: #{svhn_domain_classifier_forward.1} parent=0
    _
  %s12 = ssub.s32 1, %s10
  %s13 = scalar_select 0, %s12, %s10
  $region1: #{svhn_domain_classifier_forward.1} parent=0
    #allocation2 [shape = 'u8[4194304]{0}', space=vmem, size = 0x400000, scoped, tag = 'input window, operand 1, single buffered']
    #allocation3 [shape = 's32[1]{0}', space=sflag, size = 0x4, scoped, tag = 'scoped memory for svhn_domain_classifier_forward.1']
    #allocation4 [shape = 'u8[4096]{0}', space=vmem, size = 0x1000, scoped, tag = 'input window, operand 2, single buffered']
    #allocation5 [shape = 's32[1]{0}', space=sflag, size = 0x4, scoped, tag = 'scoped memory for svhn_domain_classifier_forward.1']
    #allocation6 [shape = 'u8[4096]{0}', space=vmem, size = 0x1000, scoped, tag = 'input window, operand 3, single buffered']
    #allocation7 [shape = 'u8[2097152]{0}', space=vmem, size = 0x200000, scoped, tag = 'input window, operand 4, single buffered']
    #allocation8 [shape = 's32[1]{0}', space=sflag, size = 0x4, scoped, tag = 'scoped memory for svhn_domain_classifier_forward.1']
    #allocation9 [shape = 'u8[4096]{0}', space=vmem, size = 0x1000, scoped, tag = 'input window, operand 5, single buffered']
    #allocation10 [shape = 'u8[4096]{0}', space=vmem, size = 0x1000, scoped, tag = 'input window, operand 6, single buffered']
    #allocation11 [shape = 's32[1]{0}', space=sflag, size = 0x4, scoped, tag = 'scoped memory for svhn_domain_classifier_forward.1']
    #allocation12 [shape = 'u8[262144]{0}', space=vmem, size = 0x40000, scoped, tag = 'input window, operand 7, single buffered']
    #allocation13 [shape = 'u8[512]{0}', space=vmem, size = 0x400, scoped, tag = 'input window, operand 8, single buffered']
    #allocation14 [shape = 's32[1]{0}', space=sflag, size = 0x4, scoped, tag = 'scoped memory for svhn_domain_classifier_forward.1']
    %14 = vsyncpa [#allocation3], 0
    %15 = vsyncpa [#allocation5], 0
    %16 = vsyncpa [#allocation8], 0
    %17 = vsyncpa [#allocation11], 0
    %18 = vsyncpa [#allocation14], 0
    // Predicated region
    $region2: #{svhn_domain_classifier_forward.1} parent=1 // pred_check
      _
    $region3: #{svhn_domain_classifier_forward.1} parent=1 // pred_check_branch
      %20 = sbr.rel (0) target = $region5
    $region4: #{svhn_domain_classifier_forward.1} parent=1 // pred_region
      _
    $region5: #{svhn_domain_classifier_forward.1} parent=1 // pred_fallthru
      _
    // Predicated region
    $region6: #{svhn_domain_classifier_forward.1} parent=1 // pred_check
      _
    $region7: #{svhn_domain_classifier_forward.1} parent=1 // pred_check_branch
      %22 = sbr.rel (0) target = $region9
    $region8: #{svhn_domain_classifier_forward.1} parent=1 // pred_region
      %s24 = ssub.s32 131072, 131072
      %25 = vsyncadd [#allocation3], %s24
      %s26 = sshll.u32 [#allocation2], 4
      %s27 = int_to_ptr.vmem [resolvable:$true] %s26
      %32 = dma.hbm_to_vmem [thread:$0]  %s1, 131072, %s27, [#allocation3], 512, 512, 32
    $region9: #{svhn_domain_classifier_forward.1} parent=1 // pred_fallthru
      _
    // Predicated region
    $region10: #{svhn_domain_classifier_forward.1} parent=1 // pred_check
      _
    $region11: #{svhn_domain_classifier_forward.1} parent=1 // pred_check_branch
      %34 = sbr.rel (0) target = $region13
    $region12: #{svhn_domain_classifier_forward.1} parent=1 // pred_region
      %s36 = ssub.s32 128, 128
      %37 = vsyncadd [#allocation5], %s36
      %s39 = sshll.u32 [#allocation4], 4
      %s40 = int_to_ptr.vmem [resolvable:$true] %s39
      %42 = dma.hbm_to_vmem [thread:$0]  %s2, 128, %s40, [#allocation5]
    $region13: #{svhn_domain_classifier_forward.1} parent=1 // pred_fallthru
      _
    // Predicated region
    $region14: #{svhn_domain_classifier_forward.1} parent=1 // pred_check
      _
    $region15: #{svhn_domain_classifier_forward.1} parent=1 // pred_check_branch
      %44 = sbr.rel (0) target = $region17
    $region16: #{svhn_domain_classifier_forward.1} parent=1 // pred_region
      %s46 = ssub.s32 128, 128
      %47 = vsyncadd [#allocation5], %s46
      %s49 = sshll.u32 [#allocation6], 4
      %s50 = int_to_ptr.vmem [resolvable:$true] %s49
      %52 = dma.hbm_to_vmem [thread:$0]  %s3, 128, %s50, [#allocation5]
    $region17: #{svhn_domain_classifier_forward.1} parent=1 // pred_fallthru
      _
    // Predicated region
    $region18: #{svhn_domain_classifier_forward.1} parent=1 // pred_check
      _
    $region19: #{svhn_domain_classifier_forward.1} parent=1 // pred_check_branch
      %54 = sbr.rel (0) target = $region21
    $region20: #{svhn_domain_classifier_forward.1} parent=1 // pred_region
      %s56 = ssub.s32 65536, 65536
      %57 = vsyncadd [#allocation8], %s56
      %s58 = sshll.u32 [#allocation7], 4
      %s59 = int_to_ptr.vmem [resolvable:$true] %s58
      %64 = dma.hbm_to_vmem [thread:$0]  %s4, 65536, %s59, [#allocation8], 512, 512, 32
    $region21: #{svhn_domain_classifier_forward.1} parent=1 // pred_fallthru
      _
    // Predicated region
    $region22: #{svhn_domain_classifier_forward.1} parent=1 // pred_check
      _
    $region23: #{svhn_domain_classifier_forward.1} parent=1 // pred_check_branch
      %66 = sbr.rel (0) target = $region25
    $region24: #{svhn_domain_classifier_forward.1} parent=1 // pred_region
      %s68 = ssub.s32 128, 128
      %69 = vsyncadd [#allocation8], %s68
      %s71 = sshll.u32 [#allocation9], 4
      %s72 = int_to_ptr.vmem [resolvable:$true] %s71
      %74 = dma.hbm_to_vmem [thread:$0]  %s5, 128, %s72, [#allocation8]
    $region25: #{svhn_domain_classifier_forward.1} parent=1 // pred_fallthru
      _
    // Predicated region
    $region26: #{svhn_domain_classifier_forward.1} parent=1 // pred_check
      _
    $region27: #{svhn_domain_classifier_forward.1} parent=1 // pred_check_branch
      %76 = sbr.rel (0) target = $region29
    $region28: #{svhn_domain_classifier_forward.1} parent=1 // pred_region
      %s78 = ssub.s32 128, 128
      %79 = vsyncadd [#allocation11], %s78
      %s81 = sshll.u32 [#allocation10], 4
      %s82 = int_to_ptr.vmem [resolvable:$true] %s81
      %84 = dma.hbm_to_vmem [thread:$0]  %s6, 128, %s82, [#allocation11]
    $region29: #{svhn_domain_classifier_forward.1} parent=1 // pred_fallthru
      _
    // Predicated region
    $region30: #{svhn_domain_classifier_forward.1} parent=1 // pred_check
      _
    $region31: #{svhn_domain_classifier_forward.1} parent=1 // pred_check_branch
      %86 = sbr.rel (0) target = $region33
    $region32: #{svhn_domain_classifier_forward.1} parent=1 // pred_region
      %s88 = ssub.s32 8192, 8192
      %89 = vsyncadd [#allocation11], %s88
      %s90 = sshll.u32 [#allocation12], 4
      %s91 = int_to_ptr.vmem [resolvable:$true] %s90
      %96 = dma.hbm_to_vmem [thread:$0]  %s7, 8192, %s91, [#allocation11], 64, 64, 4
    $region33: #{svhn_domain_classifier_forward.1} parent=1 // pred_fallthru
      _
    // Predicated region
    $region34: #{svhn_domain_classifier_forward.1} parent=1 // pred_check
      _
    $region35: #{svhn_domain_classifier_forward.1} parent=1 // pred_check_branch
      %98 = sbr.rel (0) target = $region37
    $region36: #{svhn_domain_classifier_forward.1} parent=1 // pred_region
      %s100 = ssub.s32 16, 16
      %101 = vsyncadd [#allocation14], %s100
      %s103 = sshll.u32 [#allocation13], 4
      %s104 = int_to_ptr.vmem [resolvable:$true] %s103
      %106 = dma.hbm_to_vmem [thread:$0]  %s8, 16, %s104, [#allocation14]
    $region37: #{svhn_domain_classifier_forward.1} parent=1 // pred_fallthru
      _
    // Predicated region
    $region38: #{svhn_domain_classifier_forward.1} parent=1 // pred_check
      _
    $region39: #{svhn_domain_classifier_forward.1} parent=1 // pred_check_branch
      %108 = sbr.rel (0) target = $region41
    $region40: #{svhn_domain_classifier_forward.1} parent=1 // pred_region
      %109 = dma.done [#allocation3], 131072
    $region41: #{svhn_domain_classifier_forward.1} parent=1 // pred_fallthru
      _
    // Predicated region
    $region42: #{svhn_domain_classifier_forward.1} parent=1 // pred_check
      _
    $region43: #{svhn_domain_classifier_forward.1} parent=1 // pred_check_branch
      %111 = sbr.rel (0) target = $region45
    $region44: #{svhn_domain_classifier_forward.1} parent=1 // pred_region
      %112 = dma.done [#allocation5], 128
    $region45: #{svhn_domain_classifier_forward.1} parent=1 // pred_fallthru
      _
    // Predicated region
    $region46: #{svhn_domain_classifier_forward.1} parent=1 // pred_check
      _
    $region47: #{svhn_domain_classifier_forward.1} parent=1 // pred_check_branch
      %114 = sbr.rel (0) target = $region49
    $region48: #{svhn_domain_classifier_forward.1} parent=1 // pred_region
      %115 = dma.done [#allocation5], 128
    $region49: #{svhn_domain_classifier_forward.1} parent=1 // pred_fallthru
      _
    // Predicated region
    $region50: #{svhn_domain_classifier_forward.1} parent=1 // pred_check
      _
    $region51: #{svhn_domain_classifier_forward.1} parent=1 // pred_check_branch
      %117 = sbr.rel (0) target = $region53
    $region52: #{svhn_domain_classifier_forward.1} parent=1 // pred_region
      %118 = dma.done [#allocation8], 65536
    $region53: #{svhn_domain_classifier_forward.1} parent=1 // pred_fallthru
      _
    // Predicated region
    $region54: #{svhn_domain_classifier_forward.1} parent=1 // pred_check
      _
    $region55: #{svhn_domain_classifier_forward.1} parent=1 // pred_check_branch
      %120 = sbr.rel (0) target = $region57
    $region56: #{svhn_domain_classifier_forward.1} parent=1 // pred_region
      %121 = dma.done [#allocation8], 128
    $region57: #{svhn_domain_classifier_forward.1} parent=1 // pred_fallthru
      _
    // Predicated region
    $region58: #{svhn_domain_classifier_forward.1} parent=1 // pred_check
      _
    $region59: #{svhn_domain_classifier_forward.1} parent=1 // pred_check_branch
      %123 = sbr.rel (0) target = $region61
    $region60: #{svhn_domain_classifier_forward.1} parent=1 // pred_region
      %124 = dma.done [#allocation11], 128
    $region61: #{svhn_domain_classifier_forward.1} parent=1 // pred_fallthru
      _
    // Predicated region
    $region62: #{svhn_domain_classifier_forward.1} parent=1 // pred_check
      _
    $region63: #{svhn_domain_classifier_forward.1} parent=1 // pred_check_branch
      %126 = sbr.rel (0) target = $region65
    $region64: #{svhn_domain_classifier_forward.1} parent=1 // pred_region
      %127 = dma.done [#allocation11], 8192
    $region65: #{svhn_domain_classifier_forward.1} parent=1 // pred_fallthru
      _
    // Predicated region
    $region66: #{svhn_domain_classifier_forward.1} parent=1 // pred_check
      _
    $region67: #{svhn_domain_classifier_forward.1} parent=1 // pred_check_branch
      %129 = sbr.rel (0) target = $region69
    $region68: #{svhn_domain_classifier_forward.1} parent=1 // pred_region
      %130 = dma.done [#allocation14], 16
    $region69: #{svhn_domain_classifier_forward.1} parent=1 // pred_fallthru
      _
    %v132 = vld [vmem:[%s0] sm:$0xff]
    %v133 = vld [vmem:[%s0 + $0x8] sm:$0xff]
    %v134 = vld [vmem:[%s0 + $0x10] sm:$0xff]
    %v135 = vld [vmem:[%s0 + $0x18] sm:$0xff]
    %v136 = vld [vmem:[%s0 + $0x20] sm:$0xff]
    %v137 = vld [vmem:[%s0 + $0x28] sm:$0xff]
    %v138 = vld [vmem:[%s0 + $0x30] sm:$0xff]
    %v139 = vld [vmem:[%s0 + $0x38] sm:$0xff]
    %v140 = vld [vmem:[%s0 + $0x40] sm:$0xff]
    %v141 = vld [vmem:[%s0 + $0x48] sm:$0xff]
    %v142 = vld [vmem:[%s0 + $0x50] sm:$0xff]
    %v143 = vld [vmem:[%s0 + $0x58] sm:$0xff]
    %v144 = vld [vmem:[%s0 + $0x60] sm:$0xff]
    %v145 = vld [vmem:[%s0 + $0x68] sm:$0xff]
    %v146 = vld [vmem:[%s0 + $0x70] sm:$0xff]
    %v147 = vld [vmem:[%s0 + $0x78] sm:$0xff]
    %v148 = vld [vmem:[#allocation2] sm:$0xff]
    %v149 = vld [vmem:[#allocation2 + $0x8] sm:$0xff]
    %v150 = vld [vmem:[#allocation2 + $0x10] sm:$0xff]
    %v151 = vld [vmem:[#allocation2 + $0x18] sm:$0xff]
    %v152 = vld [vmem:[#allocation2 + $0x20] sm:$0xff]
    %v153 = vld [vmem:[#allocation2 + $0x28] sm:$0xff]
    %v154 = vld [vmem:[#allocation2 + $0x30] sm:$0xff]
    %v155 = vld [vmem:[#allocation2 + $0x38] sm:$0xff]
    %v156 = vld [vmem:[#allocation2 + $0x40] sm:$0xff]
    %v157 = vld [vmem:[#allocation2 + $0x48] sm:$0xff]
    %v158 = vld [vmem:[#allocation2 + $0x50] sm:$0xff]
    %v159 = vld [vmem:[#allocation2 + $0x58] sm:$0xff]
    %v160 = vld [vmem:[#allocation2 + $0x60] sm:$0xff]
    %v161 = vld [vmem:[#allocation2 + $0x68] sm:$0xff]
    %v162 = vld [vmem:[#allocation2 + $0x70] sm:$0xff]
    %v163 = vld [vmem:[#allocation2 + $0x78] sm:$0xff]
    %v164 = vld [vmem:[#allocation2 + $0x80] sm:$0xff]
    %v165 = vld [vmem:[#allocation2 + $0x88] sm:$0xff]
    %v166 = vld [vmem:[#allocation2 + $0x90] sm:$0xff]
    %v167 = vld [vmem:[#allocation2 + $0x98] sm:$0xff]
    %v168 = vld [vmem:[#allocation2 + $0xa0] sm:$0xff]
    %v169 = vld [vmem:[#allocation2 + $0xa8] sm:$0xff]
    %v170 = vld [vmem:[#allocation2 + $0xb0] sm:$0xff]
    %v171 = vld [vmem:[#allocation2 + $0xb8] sm:$0xff]
    %v172 = vld [vmem:[#allocation2 + $0xc0] sm:$0xff]
    %v173 = vld [vmem:[#allocation2 + $0xc8] sm:$0xff]
    %v174 = vld [vmem:[#allocation2 + $0xd0] sm:$0xff]
    %v175 = vld [vmem:[#allocation2 + $0xd8] sm:$0xff]
    %v176 = vld [vmem:[#allocation2 + $0xe0] sm:$0xff]
    %v177 = vld [vmem:[#allocation2 + $0xe8] sm:$0xff]
    %v178 = vld [vmem:[#allocation2 + $0xf0] sm:$0xff]
    %v179 = vld [vmem:[#allocation2 + $0xf8] sm:$0xff]
    %v180 = vld [vmem:[#allocation2 + $0x100] sm:$0xff]
    %v181 = vld [vmem:[#allocation2 + $0x108] sm:$0xff]
    %v182 = vld [vmem:[#allocation2 + $0x110] sm:$0xff]
    %v183 = vld [vmem:[#allocation2 + $0x118] sm:$0xff]
    %v184 = vld [vmem:[#allocation2 + $0x120] sm:$0xff]
    %v185 = vld [vmem:[#allocation2 + $0x128] sm:$0xff]
    %v186 = vld [vmem:[#allocation2 + $0x130] sm:$0xff]
    %v187 = vld [vmem:[#allocation2 + $0x138] sm:$0xff]
    %v188 = vld [vmem:[#allocation2 + $0x140] sm:$0xff]
    %v189 = vld [vmem:[#allocation2 + $0x148] sm:$0xff]
    %v190 = vld [vmem:[#allocation2 + $0x150] sm:$0xff]
    %v191 = vld [vmem:[#allocation2 + $0x158] sm:$0xff]
    %v192 = vld [vmem:[#allocation2 + $0x160] sm:$0xff]
    %v193 = vld [vmem:[#allocation2 + $0x168] sm:$0xff]
    %v194 = vld [vmem:[#allocation2 + $0x170] sm:$0xff]
    %v195 = vld [vmem:[#allocation2 + $0x178] sm:$0xff]
    %v196 = vld [vmem:[#allocation2 + $0x180] sm:$0xff]
    %v197 = vld [vmem:[#allocation2 + $0x188] sm:$0xff]
    %v198 = vld [vmem:[#allocation2 + $0x190] sm:$0xff]
    %v199 = vld [vmem:[#allocation2 + $0x198] sm:$0xff]
    %v200 = vld [vmem:[#allocation2 + $0x1a0] sm:$0xff]
    %v201 = vld [vmem:[#allocation2 + $0x1a8] sm:$0xff]
    %v202 = vld [vmem:[#allocation2 + $0x1b0] sm:$0xff]
    %v203 = vld [vmem:[#allocation2 + $0x1b8] sm:$0xff]
    %v204 = vld [vmem:[#allocation2 + $0x1c0] sm:$0xff]
    %v205 = vld [vmem:[#allocation2 + $0x1c8] sm:$0xff]
    %v206 = vld [vmem:[#allocation2 + $0x1d0] sm:$0xff]
    %v207 = vld [vmem:[#allocation2 + $0x1d8] sm:$0xff]
    %v208 = vld [vmem:[#allocation2 + $0x1e0] sm:$0xff]
    %v209 = vld [vmem:[#allocation2 + $0x1e8] sm:$0xff]
    %v210 = vld [vmem:[#allocation2 + $0x1f0] sm:$0xff]
    %v211 = vld [vmem:[#allocation2 + $0x1f8] sm:$0xff]
    %v212 = vld [vmem:[#allocation2 + $0x200] sm:$0xff]
    %v213 = vld [vmem:[#allocation2 + $0x208] sm:$0xff]
    %v214 = vld [vmem:[#allocation2 + $0x210] sm:$0xff]
    %v215 = vld [vmem:[#allocation2 + $0x218] sm:$0xff]
    %v216 = vld [vmem:[#allocation2 + $0x220] sm:$0xff]
    %v217 = vld [vmem:[#allocation2 + $0x228] sm:$0xff]
    %v218 = vld [vmem:[#allocation2 + $0x230] sm:$0xff]
    %v219 = vld [vmem:[#allocation2 + $0x238] sm:$0xff]
    %v220 = vld [vmem:[#allocation2 + $0x240] sm:$0xff]
    %v221 = vld [vmem:[#allocation2 + $0x248] sm:$0xff]
    %v222 = vld [vmem:[#allocation2 + $0x250] sm:$0xff]
    %v223 = vld [vmem:[#allocation2 + $0x258] sm:$0xff]
    %v224 = vld [vmem:[#allocation2 + $0x260] sm:$0xff]
    %v225 = vld [vmem:[#allocation2 + $0x268] sm:$0xff]
    %v226 = vld [vmem:[#allocation2 + $0x270] sm:$0xff]
    %v227 = vld [vmem:[#allocation2 + $0x278] sm:$0xff]
    %v228 = vld [vmem:[#allocation2 + $0x280] sm:$0xff]
    %v229 = vld [vmem:[#allocation2 + $0x288] sm:$0xff]
    %v230 = vld [vmem:[#allocation2 + $0x290] sm:$0xff]
    %v231 = vld [vmem:[#allocation2 + $0x298] sm:$0xff]
    %v232 = vld [vmem:[#allocation2 + $0x2a0] sm:$0xff]
    %v233 = vld [vmem:[#allocation2 + $0x2a8] sm:$0xff]
    %v234 = vld [vmem:[#allocation2 + $0x2b0] sm:$0xff]
    %v235 = vld [vmem:[#allocation2 + $0x2b8] sm:$0xff]
    %v236 = vld [vmem:[#allocation2 + $0x2c0] sm:$0xff]
    %v237 = vld [vmem:[#allocation2 + $0x2c8] sm:$0xff]
    %v238 = vld [vmem:[#allocation2 + $0x2d0] sm:$0xff]
    %v239 = vld [vmem:[#allocation2 + $0x2d8] sm:$0xff]
    %v240 = vld [vmem:[#allocation2 + $0x2e0] sm:$0xff]
    %v241 = vld [vmem:[#allocation2 + $0x2e8] sm:$0xff]
    %v242 = vld [vmem:[#allocation2 + $0x2f0] sm:$0xff]
    %v243 = vld [vmem:[#allocation2 + $0x2f8] sm:$0xff]
    %v244 = vld [vmem:[#allocation2 + $0x300] sm:$0xff]
    %v245 = vld [vmem:[#allocation2 + $0x308] sm:$0xff]
    %v246 = vld [vmem:[#allocation2 + $0x310] sm:$0xff]
    %v247 = vld [vmem:[#allocation2 + $0x318] sm:$0xff]
    %v248 = vld [vmem:[#allocation2 + $0x320] sm:$0xff]
    %v249 = vld [vmem:[#allocation2 + $0x328] sm:$0xff]
    %v250 = vld [vmem:[#allocation2 + $0x330] sm:$0xff]
    %v251 = vld [vmem:[#allocation2 + $0x338] sm:$0xff]
    %v252 = vld [vmem:[#allocation2 + $0x340] sm:$0xff]
    %v253 = vld [vmem:[#allocation2 + $0x348] sm:$0xff]
    %v254 = vld [vmem:[#allocation2 + $0x350] sm:$0xff]
    %v255 = vld [vmem:[#allocation2 + $0x358] sm:$0xff]
    %v256 = vld [vmem:[#allocation2 + $0x360] sm:$0xff]
    %v257 = vld [vmem:[#allocation2 + $0x368] sm:$0xff]
    %v258 = vld [vmem:[#allocation2 + $0x370] sm:$0xff]
    %v259 = vld [vmem:[#allocation2 + $0x378] sm:$0xff]
    %v260 = vld [vmem:[#allocation2 + $0x380] sm:$0xff]
    %v261 = vld [vmem:[#allocation2 + $0x388] sm:$0xff]
    %v262 = vld [vmem:[#allocation2 + $0x390] sm:$0xff]
    %v263 = vld [vmem:[#allocation2 + $0x398] sm:$0xff]
    %v264 = vld [vmem:[#allocation2 + $0x3a0] sm:$0xff]
    %v265 = vld [vmem:[#allocation2 + $0x3a8] sm:$0xff]
    %v266 = vld [vmem:[#allocation2 + $0x3b0] sm:$0xff]
    %v267 = vld [vmem:[#allocation2 + $0x3b8] sm:$0xff]
    %v268 = vld [vmem:[#allocation2 + $0x3c0] sm:$0xff]
    %v269 = vld [vmem:[#allocation2 + $0x3c8] sm:$0xff]
    %v270 = vld [vmem:[#allocation2 + $0x3d0] sm:$0xff]
    %v271 = vld [vmem:[#allocation2 + $0x3d8] sm:$0xff]
    %v272 = vld [vmem:[#allocation2 + $0x3e0] sm:$0xff]
    %v273 = vld [vmem:[#allocation2 + $0x3e8] sm:$0xff]
    %v274 = vld [vmem:[#allocation2 + $0x3f0] sm:$0xff]
    %v275 = vld [vmem:[#allocation2 + $0x3f8] sm:$0xff]
    %v276 = vld [vmem:[#allocation2 + $0x400] sm:$0xff]
    %v277 = vld [vmem:[#allocation2 + $0x408] sm:$0xff]
    %v278 = vld [vmem:[#allocation2 + $0x410] sm:$0xff]
    %v279 = vld [vmem:[#allocation2 + $0x418] sm:$0xff]
    %v280 = vld [vmem:[#allocation2 + $0x420] sm:$0xff]
    %v281 = vld [vmem:[#allocation2 + $0x428] sm:$0xff]
    %v282 = vld [vmem:[#allocation2 + $0x430] sm:$0xff]
    %v283 = vld [vmem:[#allocation2 + $0x438] sm:$0xff]
    %v284 = vld [vmem:[#allocation2 + $0x440] sm:$0xff]
    %v285 = vld [vmem:[#allocation2 + $0x448] sm:$0xff]
    %v286 = vld [vmem:[#allocation2 + $0x450] sm:$0xff]
    %v287 = vld [vmem:[#allocation2 + $0x458] sm:$0xff]
    %v288 = vld [vmem:[#allocation2 + $0x460] sm:$0xff]
    %v289 = vld [vmem:[#allocation2 + $0x468] sm:$0xff]
    %v290 = vld [vmem:[#allocation2 + $0x470] sm:$0xff]
    %v291 = vld [vmem:[#allocation2 + $0x478] sm:$0xff]
    %v292 = vld [vmem:[#allocation2 + $0x480] sm:$0xff]
    %v293 = vld [vmem:[#allocation2 + $0x488] sm:$0xff]
    %v294 = vld [vmem:[#allocation2 + $0x490] sm:$0xff]
    %v295 = vld [vmem:[#allocation2 + $0x498] sm:$0xff]
    %v296 = vld [vmem:[#allocation2 + $0x4a0] sm:$0xff]
    %v297 = vld [vmem:[#allocation2 + $0x4a8] sm:$0xff]
    %v298 = vld [vmem:[#allocation2 + $0x4b0] sm:$0xff]
    %v299 = vld [vmem:[#allocation2 + $0x4b8] sm:$0xff]
    %v300 = vld [vmem:[#allocation2 + $0x4c0] sm:$0xff]
    %v301 = vld [vmem:[#allocation2 + $0x4c8] sm:$0xff]
    %v302 = vld [vmem:[#allocation2 + $0x4d0] sm:$0xff]
    %v303 = vld [vmem:[#allocation2 + $0x4d8] sm:$0xff]
    %v304 = vld [vmem:[#allocation2 + $0x4e0] sm:$0xff]
    %v305 = vld [vmem:[#allocation2 + $0x4e8] sm:$0xff]
    %v306 = vld [vmem:[#allocation2 + $0x4f0] sm:$0xff]
    %v307 = vld [vmem:[#allocation2 + $0x4f8] sm:$0xff]
    %v308 = vld [vmem:[#allocation2 + $0x500] sm:$0xff]
    %v309 = vld [vmem:[#allocation2 + $0x508] sm:$0xff]
    %v310 = vld [vmem:[#allocation2 + $0x510] sm:$0xff]
    %v311 = vld [vmem:[#allocation2 + $0x518] sm:$0xff]
    %v312 = vld [vmem:[#allocation2 + $0x520] sm:$0xff]
    %v313 = vld [vmem:[#allocation2 + $0x528] sm:$0xff]
    %v314 = vld [vmem:[#allocation2 + $0x530] sm:$0xff]
    %v315 = vld [vmem:[#allocation2 + $0x538] sm:$0xff]
    %v316 = vld [vmem:[#allocation2 + $0x540] sm:$0xff]
    %v317 = vld [vmem:[#allocation2 + $0x548] sm:$0xff]
    %v318 = vld [vmem:[#allocation2 + $0x550] sm:$0xff]
    %v319 = vld [vmem:[#allocation2 + $0x558] sm:$0xff]
    %v320 = vld [vmem:[#allocation2 + $0x560] sm:$0xff]
    %v321 = vld [vmem:[#allocation2 + $0x568] sm:$0xff]
    %v322 = vld [vmem:[#allocation2 + $0x570] sm:$0xff]
    %v323 = vld [vmem:[#allocation2 + $0x578] sm:$0xff]
    %v324 = vld [vmem:[#allocation2 + $0x580] sm:$0xff]
    %v325 = vld [vmem:[#allocation2 + $0x588] sm:$0xff]
    %v326 = vld [vmem:[#allocation2 + $0x590] sm:$0xff]
    %v327 = vld [vmem:[#allocation2 + $0x598] sm:$0xff]
    %v328 = vld [vmem:[#allocation2 + $0x5a0] sm:$0xff]
    %v329 = vld [vmem:[#allocation2 + $0x5a8] sm:$0xff]
    %v330 = vld [vmem:[#allocation2 + $0x5b0] sm:$0xff]
    %v331 = vld [vmem:[#allocation2 + $0x5b8] sm:$0xff]
    %v332 = vld [vmem:[#allocation2 + $0x5c0] sm:$0xff]
    %v333 = vld [vmem:[#allocation2 + $0x5c8] sm:$0xff]
    %v334 = vld [vmem:[#allocation2 + $0x5d0] sm:$0xff]
    %v335 = vld [vmem:[#allocation2 + $0x5d8] sm:$0xff]
    %v336 = vld [vmem:[#allocation2 + $0x5e0] sm:$0xff]
    %v337 = vld [vmem:[#allocation2 + $0x5e8] sm:$0xff]
    %v338 = vld [vmem:[#allocation2 + $0x5f0] sm:$0xff]
    %v339 = vld [vmem:[#allocation2 + $0x5f8] sm:$0xff]
    %v340 = vld [vmem:[#allocation2 + $0x600] sm:$0xff]
    %v341 = vld [vmem:[#allocation2 + $0x608] sm:$0xff]
    %v342 = vld [vmem:[#allocation2 + $0x610] sm:$0xff]
    %v343 = vld [vmem:[#allocation2 + $0x618] sm:$0xff]
    %v344 = vld [vmem:[#allocation2 + $0x620] sm:$0xff]
    %v345 = vld [vmem:[#allocation2 + $0x628] sm:$0xff]
    %v346 = vld [vmem:[#allocation2 + $0x630] sm:$0xff]
    %v347 = vld [vmem:[#allocation2 + $0x638] sm:$0xff]
    %v348 = vld [vmem:[#allocation2 + $0x640] sm:$0xff]
    %v349 = vld [vmem:[#allocation2 + $0x648] sm:$0xff]
    %v350 = vld [vmem:[#allocation2 + $0x650] sm:$0xff]
    %v351 = vld [vmem:[#allocation2 + $0x658] sm:$0xff]
    %v352 = vld [vmem:[#allocation2 + $0x660] sm:$0xff]
    %v353 = vld [vmem:[#allocation2 + $0x668] sm:$0xff]
    %v354 = vld [vmem:[#allocation2 + $0x670] sm:$0xff]
    %v355 = vld [vmem:[#allocation2 + $0x678] sm:$0xff]
    %v356 = vld [vmem:[#allocation2 + $0x680] sm:$0xff]
    %v357 = vld [vmem:[#allocation2 + $0x688] sm:$0xff]
    %v358 = vld [vmem:[#allocation2 + $0x690] sm:$0xff]
    %v359 = vld [vmem:[#allocation2 + $0x698] sm:$0xff]
    %v360 = vld [vmem:[#allocation2 + $0x6a0] sm:$0xff]
    %v361 = vld [vmem:[#allocation2 + $0x6a8] sm:$0xff]
    %v362 = vld [vmem:[#allocation2 + $0x6b0] sm:$0xff]
    %v363 = vld [vmem:[#allocation2 + $0x6b8] sm:$0xff]
    %v364 = vld [vmem:[#allocation2 + $0x6c0] sm:$0xff]
    %v365 = vld [vmem:[#allocation2 + $0x6c8] sm:$0xff]
    %v366 = vld [vmem:[#allocation2 + $0x6d0] sm:$0xff]
    %v367 = vld [vmem:[#allocation2 + $0x6d8] sm:$0xff]
    %v368 = vld [vmem:[#allocation2 + $0x6e0] sm:$0xff]
    %v369 = vld [vmem:[#allocation2 + $0x6e8] sm:$0xff]
    %v370 = vld [vmem:[#allocation2 + $0x6f0] sm:$0xff]
    %v371 = vld [vmem:[#allocation2 + $0x6f8] sm:$0xff]
    %v372 = vld [vmem:[#allocation2 + $0x700] sm:$0xff]
    %v373 = vld [vmem:[#allocation2 + $0x708] sm:$0xff]
    %v374 = vld [vmem:[#allocation2 + $0x710] sm:$0xff]
    %v375 = vld [vmem:[#allocation2 + $0x718] sm:$0xff]
    %v376 = vld [vmem:[#allocation2 + $0x720] sm:$0xff]
    %v377 = vld [vmem:[#allocation2 + $0x728] sm:$0xff]
    %v378 = vld [vmem:[#allocation2 + $0x730] sm:$0xff]
    %v379 = vld [vmem:[#allocation2 + $0x738] sm:$0xff]
    %v380 = vld [vmem:[#allocation2 + $0x740] sm:$0xff]
    %v381 = vld [vmem:[#allocation2 + $0x748] sm:$0xff]
    %v382 = vld [vmem:[#allocation2 + $0x750] sm:$0xff]
    %v383 = vld [vmem:[#allocation2 + $0x758] sm:$0xff]
    %v384 = vld [vmem:[#allocation2 + $0x760] sm:$0xff]
    %v385 = vld [vmem:[#allocation2 + $0x768] sm:$0xff]
    %v386 = vld [vmem:[#allocation2 + $0x770] sm:$0xff]
    %v387 = vld [vmem:[#allocation2 + $0x778] sm:$0xff]
    %v388 = vld [vmem:[#allocation2 + $0x780] sm:$0xff]
    %v389 = vld [vmem:[#allocation2 + $0x788] sm:$0xff]
    %v390 = vld [vmem:[#allocation2 + $0x790] sm:$0xff]
    %v391 = vld [vmem:[#allocation2 + $0x798] sm:$0xff]
    %v392 = vld [vmem:[#allocation2 + $0x7a0] sm:$0xff]
    %v393 = vld [vmem:[#allocation2 + $0x7a8] sm:$0xff]
    %v394 = vld [vmem:[#allocation2 + $0x7b0] sm:$0xff]
    %v395 = vld [vmem:[#allocation2 + $0x7b8] sm:$0xff]
    %v396 = vld [vmem:[#allocation2 + $0x7c0] sm:$0xff]
    %v397 = vld [vmem:[#allocation2 + $0x7c8] sm:$0xff]
    %v398 = vld [vmem:[#allocation2 + $0x7d0] sm:$0xff]
    %v399 = vld [vmem:[#allocation2 + $0x7d8] sm:$0xff]
    %v400 = vld [vmem:[#allocation2 + $0x7e0] sm:$0xff]
    %v401 = vld [vmem:[#allocation2 + $0x7e8] sm:$0xff]
    %v402 = vld [vmem:[#allocation2 + $0x7f0] sm:$0xff]
    %v403 = vld [vmem:[#allocation2 + $0x7f8] sm:$0xff]
    %v404 = vld [vmem:[#allocation2 + $0x800] sm:$0xff]
    %v405 = vld [vmem:[#allocation2 + $0x808] sm:$0xff]
    %v406 = vld [vmem:[#allocation2 + $0x810] sm:$0xff]
    %v407 = vld [vmem:[#allocation2 + $0x818] sm:$0xff]
    %v408 = vld [vmem:[#allocation2 + $0x820] sm:$0xff]
    %v409 = vld [vmem:[#allocation2 + $0x828] sm:$0xff]
    %v410 = vld [vmem:[#allocation2 + $0x830] sm:$0xff]
    %v411 = vld [vmem:[#allocation2 + $0x838] sm:$0xff]
    %v412 = vld [vmem:[#allocation2 + $0x840] sm:$0xff]
    %v413 = vld [vmem:[#allocation2 + $0x848] sm:$0xff]
    %v414 = vld [vmem:[#allocation2 + $0x850] sm:$0xff]
    %v415 = vld [vmem:[#allocation2 + $0x858] sm:$0xff]
    %v416 = vld [vmem:[#allocation2 + $0x860] sm:$0xff]
    %v417 = vld [vmem:[#allocation2 + $0x868] sm:$0xff]
    %v418 = vld [vmem:[#allocation2 + $0x870] sm:$0xff]
    %v419 = vld [vmem:[#allocation2 + $0x878] sm:$0xff]
    %v420 = vld [vmem:[#allocation2 + $0x880] sm:$0xff]
    %v421 = vld [vmem:[#allocation2 + $0x888] sm:$0xff]
    %v422 = vld [vmem:[#allocation2 + $0x890] sm:$0xff]
    %v423 = vld [vmem:[#allocation2 + $0x898] sm:$0xff]
    %v424 = vld [vmem:[#allocation2 + $0x8a0] sm:$0xff]
    %v425 = vld [vmem:[#allocation2 + $0x8a8] sm:$0xff]
    %v426 = vld [vmem:[#allocation2 + $0x8b0] sm:$0xff]
    %v427 = vld [vmem:[#allocation2 + $0x8b8] sm:$0xff]
    %v428 = vld [vmem:[#allocation2 + $0x8c0] sm:$0xff]
    %v429 = vld [vmem:[#allocation2 + $0x8c8] sm:$0xff]
    %v430 = vld [vmem:[#allocation2 + $0x8d0] sm:$0xff]
    %v431 = vld [vmem:[#allocation2 + $0x8d8] sm:$0xff]
    %v432 = vld [vmem:[#allocation2 + $0x8e0] sm:$0xff]
    %v433 = vld [vmem:[#allocation2 + $0x8e8] sm:$0xff]
    %v434 = vld [vmem:[#allocation2 + $0x8f0] sm:$0xff]
    %v435 = vld [vmem:[#allocation2 + $0x8f8] sm:$0xff]
    %v436 = vld [vmem:[#allocation2 + $0x900] sm:$0xff]
    %v437 = vld [vmem:[#allocation2 + $0x908] sm:$0xff]
    %v438 = vld [vmem:[#allocation2 + $0x910] sm:$0xff]
    %v439 = vld [vmem:[#allocation2 + $0x918] sm:$0xff]
    %v440 = vld [vmem:[#allocation2 + $0x920] sm:$0xff]
    %v441 = vld [vmem:[#allocation2 + $0x928] sm:$0xff]
    %v442 = vld [vmem:[#allocation2 + $0x930] sm:$0xff]
    %v443 = vld [vmem:[#allocation2 + $0x938] sm:$0xff]
    %v444 = vld [vmem:[#allocation2 + $0x940] sm:$0xff]
    %v445 = vld [vmem:[#allocation2 + $0x948] sm:$0xff]
    %v446 = vld [vmem:[#allocation2 + $0x950] sm:$0xff]
    %v447 = vld [vmem:[#allocation2 + $0x958] sm:$0xff]
    %v448 = vld [vmem:[#allocation2 + $0x960] sm:$0xff]
    %v449 = vld [vmem:[#allocation2 + $0x968] sm:$0xff]
    %v450 = vld [vmem:[#allocation2 + $0x970] sm:$0xff]
    %v451 = vld [vmem:[#allocation2 + $0x978] sm:$0xff]
    %v452 = vld [vmem:[#allocation2 + $0x980] sm:$0xff]
    %v453 = vld [vmem:[#allocation2 + $0x988] sm:$0xff]
    %v454 = vld [vmem:[#allocation2 + $0x990] sm:$0xff]
    %v455 = vld [vmem:[#allocation2 + $0x998] sm:$0xff]
    %v456 = vld [vmem:[#allocation2 + $0x9a0] sm:$0xff]
    %v457 = vld [vmem:[#allocation2 + $0x9a8] sm:$0xff]
    %v458 = vld [vmem:[#allocation2 + $0x9b0] sm:$0xff]
    %v459 = vld [vmem:[#allocation2 + $0x9b8] sm:$0xff]
    %v460 = vld [vmem:[#allocation2 + $0x9c0] sm:$0xff]
    %v461 = vld [vmem:[#allocation2 + $0x9c8] sm:$0xff]
    %v462 = vld [vmem:[#allocation2 + $0x9d0] sm:$0xff]
    %v463 = vld [vmem:[#allocation2 + $0x9d8] sm:$0xff]
    %v464 = vld [vmem:[#allocation2 + $0x9e0] sm:$0xff]
    %v465 = vld [vmem:[#allocation2 + $0x9e8] sm:$0xff]
    %v466 = vld [vmem:[#allocation2 + $0x9f0] sm:$0xff]
    %v467 = vld [vmem:[#allocation2 + $0x9f8] sm:$0xff]
    %v468 = vld [vmem:[#allocation2 + $0xa00] sm:$0xff]
    %v469 = vld [vmem:[#allocation2 + $0xa08] sm:$0xff]
    %v470 = vld [vmem:[#allocation2 + $0xa10] sm:$0xff]
    %v471 = vld [vmem:[#allocation2 + $0xa18] sm:$0xff]
    %v472 = vld [vmem:[#allocation2 + $0xa20] sm:$0xff]
    %v473 = vld [vmem:[#allocation2 + $0xa28] sm:$0xff]
    %v474 = vld [vmem:[#allocation2 + $0xa30] sm:$0xff]
    %v475 = vld [vmem:[#allocation2 + $0xa38] sm:$0xff]
    %v476 = vld [vmem:[#allocation2 + $0xa40] sm:$0xff]
    %v477 = vld [vmem:[#allocation2 + $0xa48] sm:$0xff]
    %v478 = vld [vmem:[#allocation2 + $0xa50] sm:$0xff]
    %v479 = vld [vmem:[#allocation2 + $0xa58] sm:$0xff]
    %v480 = vld [vmem:[#allocation2 + $0xa60] sm:$0xff]
    %v481 = vld [vmem:[#allocation2 + $0xa68] sm:$0xff]
    %v482 = vld [vmem:[#allocation2 + $0xa70] sm:$0xff]
    %v483 = vld [vmem:[#allocation2 + $0xa78] sm:$0xff]
    %v484 = vld [vmem:[#allocation2 + $0xa80] sm:$0xff]
    %v485 = vld [vmem:[#allocation2 + $0xa88] sm:$0xff]
    %v486 = vld [vmem:[#allocation2 + $0xa90] sm:$0xff]
    %v487 = vld [vmem:[#allocation2 + $0xa98] sm:$0xff]
    %v488 = vld [vmem:[#allocation2 + $0xaa0] sm:$0xff]
    %v489 = vld [vmem:[#allocation2 + $0xaa8] sm:$0xff]
    %v490 = vld [vmem:[#allocation2 + $0xab0] sm:$0xff]
    %v491 = vld [vmem:[#allocation2 + $0xab8] sm:$0xff]
    %v492 = vld [vmem:[#allocation2 + $0xac0] sm:$0xff]
    %v493 = vld [vmem:[#allocation2 + $0xac8] sm:$0xff]
    %v494 = vld [vmem:[#allocation2 + $0xad0] sm:$0xff]
    %v495 = vld [vmem:[#allocation2 + $0xad8] sm:$0xff]
    %v496 = vld [vmem:[#allocation2 + $0xae0] sm:$0xff]
    %v497 = vld [vmem:[#allocation2 + $0xae8] sm:$0xff]
    %v498 = vld [vmem:[#allocation2 + $0xaf0] sm:$0xff]
    %v499 = vld [vmem:[#allocation2 + $0xaf8] sm:$0xff]
    %v500 = vld [vmem:[#allocation2 + $0xb00] sm:$0xff]
    %v501 = vld [vmem:[#allocation2 + $0xb08] sm:$0xff]
    %v502 = vld [vmem:[#allocation2 + $0xb10] sm:$0xff]
    %v503 = vld [vmem:[#allocation2 + $0xb18] sm:$0xff]
    %v504 = vld [vmem:[#allocation2 + $0xb20] sm:$0xff]
    %v505 = vld [vmem:[#allocation2 + $0xb28] sm:$0xff]
    %v506 = vld [vmem:[#allocation2 + $0xb30] sm:$0xff]
    %v507 = vld [vmem:[#allocation2 + $0xb38] sm:$0xff]
    %v508 = vld [vmem:[#allocation2 + $0xb40] sm:$0xff]
    %v509 = vld [vmem:[#allocation2 + $0xb48] sm:$0xff]
    %v510 = vld [vmem:[#allocation2 + $0xb50] sm:$0xff]
    %v511 = vld [vmem:[#allocation2 + $0xb58] sm:$0xff]
    %v512 = vld [vmem:[#allocation2 + $0xb60] sm:$0xff]
    %v513 = vld [vmem:[#allocation2 + $0xb68] sm:$0xff]
    %v514 = vld [vmem:[#allocation2 + $0xb70] sm:$0xff]
    %v515 = vld [vmem:[#allocation2 + $0xb78] sm:$0xff]
    %v516 = vld [vmem:[#allocation2 + $0xb80] sm:$0xff]
    %v517 = vld [vmem:[#allocation2 + $0xb88] sm:$0xff]
    %v518 = vld [vmem:[#allocation2 + $0xb90] sm:$0xff]
    %v519 = vld [vmem:[#allocation2 + $0xb98] sm:$0xff]
    %v520 = vld [vmem:[#allocation2 + $0xba0] sm:$0xff]
    %v521 = vld [vmem:[#allocation2 + $0xba8] sm:$0xff]
    %v522 = vld [vmem:[#allocation2 + $0xbb0] sm:$0xff]
    %v523 = vld [vmem:[#allocation2 + $0xbb8] sm:$0xff]
    %v524 = vld [vmem:[#allocation2 + $0xbc0] sm:$0xff]
    %v525 = vld [vmem:[#allocation2 + $0xbc8] sm:$0xff]
    %v526 = vld [vmem:[#allocation2 + $0xbd0] sm:$0xff]
    %v527 = vld [vmem:[#allocation2 + $0xbd8] sm:$0xff]
    %v528 = vld [vmem:[#allocation2 + $0xbe0] sm:$0xff]
    %v529 = vld [vmem:[#allocation2 + $0xbe8] sm:$0xff]
    %v530 = vld [vmem:[#allocation2 + $0xbf0] sm:$0xff]
    %v531 = vld [vmem:[#allocation2 + $0xbf8] sm:$0xff]
    %v532 = vld [vmem:[#allocation2 + $0xc00] sm:$0xff]
    %v533 = vld [vmem:[#allocation2 + $0xc08] sm:$0xff]
    %v534 = vld [vmem:[#allocation2 + $0xc10] sm:$0xff]
    %v535 = vld [vmem:[#allocation2 + $0xc18] sm:$0xff]
    %v536 = vld [vmem:[#allocation2 + $0xc20] sm:$0xff]
    %v537 = vld [vmem:[#allocation2 + $0xc28] sm:$0xff]
    %v538 = vld [vmem:[#allocation2 + $0xc30] sm:$0xff]
    %v539 = vld [vmem:[#allocation2 + $0xc38] sm:$0xff]
    %v540 = vld [vmem:[#allocation2 + $0xc40] sm:$0xff]
    %v541 = vld [vmem:[#allocation2 + $0xc48] sm:$0xff]
    %v542 = vld [vmem:[#allocation2 + $0xc50] sm:$0xff]
    %v543 = vld [vmem:[#allocation2 + $0xc58] sm:$0xff]
    %v544 = vld [vmem:[#allocation2 + $0xc60] sm:$0xff]
    %v545 = vld [vmem:[#allocation2 + $0xc68] sm:$0xff]
    %v546 = vld [vmem:[#allocation2 + $0xc70] sm:$0xff]
    %v547 = vld [vmem:[#allocation2 + $0xc78] sm:$0xff]
    %v548 = vld [vmem:[#allocation2 + $0xc80] sm:$0xff]
    %v549 = vld [vmem:[#allocation2 + $0xc88] sm:$0xff]
    %v550 = vld [vmem:[#allocation2 + $0xc90] sm:$0xff]
    %v551 = vld [vmem:[#allocation2 + $0xc98] sm:$0xff]
    %v552 = vld [vmem:[#allocation2 + $0xca0] sm:$0xff]
    %v553 = vld [vmem:[#allocation2 + $0xca8] sm:$0xff]
    %v554 = vld [vmem:[#allocation2 + $0xcb0] sm:$0xff]
    %v555 = vld [vmem:[#allocation2 + $0xcb8] sm:$0xff]
    %v556 = vld [vmem:[#allocation2 + $0xcc0] sm:$0xff]
    %v557 = vld [vmem:[#allocation2 + $0xcc8] sm:$0xff]
    %v558 = vld [vmem:[#allocation2 + $0xcd0] sm:$0xff]
    %v559 = vld [vmem:[#allocation2 + $0xcd8] sm:$0xff]
    %v560 = vld [vmem:[#allocation2 + $0xce0] sm:$0xff]
    %v561 = vld [vmem:[#allocation2 + $0xce8] sm:$0xff]
    %v562 = vld [vmem:[#allocation2 + $0xcf0] sm:$0xff]
    %v563 = vld [vmem:[#allocation2 + $0xcf8] sm:$0xff]
    %v564 = vld [vmem:[#allocation2 + $0xd00] sm:$0xff]
    %v565 = vld [vmem:[#allocation2 + $0xd08] sm:$0xff]
    %v566 = vld [vmem:[#allocation2 + $0xd10] sm:$0xff]
    %v567 = vld [vmem:[#allocation2 + $0xd18] sm:$0xff]
    %v568 = vld [vmem:[#allocation2 + $0xd20] sm:$0xff]
    %v569 = vld [vmem:[#allocation2 + $0xd28] sm:$0xff]
    %v570 = vld [vmem:[#allocation2 + $0xd30] sm:$0xff]
    %v571 = vld [vmem:[#allocation2 + $0xd38] sm:$0xff]
    %v572 = vld [vmem:[#allocation2 + $0xd40] sm:$0xff]
    %v573 = vld [vmem:[#allocation2 + $0xd48] sm:$0xff]
    %v574 = vld [vmem:[#allocation2 + $0xd50] sm:$0xff]
    %v575 = vld [vmem:[#allocation2 + $0xd58] sm:$0xff]
    %v576 = vld [vmem:[#allocation2 + $0xd60] sm:$0xff]
    %v577 = vld [vmem:[#allocation2 + $0xd68] sm:$0xff]
    %v578 = vld [vmem:[#allocation2 + $0xd70] sm:$0xff]
    %v579 = vld [vmem:[#allocation2 + $0xd78] sm:$0xff]
    %v580 = vld [vmem:[#allocation2 + $0xd80] sm:$0xff]
    %v581 = vld [vmem:[#allocation2 + $0xd88] sm:$0xff]
    %v582 = vld [vmem:[#allocation2 + $0xd90] sm:$0xff]
    %v583 = vld [vmem:[#allocation2 + $0xd98] sm:$0xff]
    %v584 = vld [vmem:[#allocation2 + $0xda0] sm:$0xff]
    %v585 = vld [vmem:[#allocation2 + $0xda8] sm:$0xff]
    %v586 = vld [vmem:[#allocation2 + $0xdb0] sm:$0xff]
    %v587 = vld [vmem:[#allocation2 + $0xdb8] sm:$0xff]
    %v588 = vld [vmem:[#allocation2 + $0xdc0] sm:$0xff]
    %v589 = vld [vmem:[#allocation2 + $0xdc8] sm:$0xff]
    %v590 = vld [vmem:[#allocation2 + $0xdd0] sm:$0xff]
    %v591 = vld [vmem:[#allocation2 + $0xdd8] sm:$0xff]
    %v592 = vld [vmem:[#allocation2 + $0xde0] sm:$0xff]
    %v593 = vld [vmem:[#allocation2 + $0xde8] sm:$0xff]
    %v594 = vld [vmem:[#allocation2 + $0xdf0] sm:$0xff]
    %v595 = vld [vmem:[#allocation2 + $0xdf8] sm:$0xff]
    %v596 = vld [vmem:[#allocation2 + $0xe00] sm:$0xff]
    %v597 = vld [vmem:[#allocation2 + $0xe08] sm:$0xff]
    %v598 = vld [vmem:[#allocation2 + $0xe10] sm:$0xff]
    %v599 = vld [vmem:[#allocation2 + $0xe18] sm:$0xff]
    %v600 = vld [vmem:[#allocation2 + $0xe20] sm:$0xff]
    %v601 = vld [vmem:[#allocation2 + $0xe28] sm:$0xff]
    %v602 = vld [vmem:[#allocation2 + $0xe30] sm:$0xff]
    %v603 = vld [vmem:[#allocation2 + $0xe38] sm:$0xff]
    %v604 = vld [vmem:[#allocation2 + $0xe40] sm:$0xff]
    %v605 = vld [vmem:[#allocation2 + $0xe48] sm:$0xff]
    %v606 = vld [vmem:[#allocation2 + $0xe50] sm:$0xff]
    %v607 = vld [vmem:[#allocation2 + $0xe58] sm:$0xff]
    %v608 = vld [vmem:[#allocation2 + $0xe60] sm:$0xff]
    %v609 = vld [vmem:[#allocation2 + $0xe68] sm:$0xff]
    %v610 = vld [vmem:[#allocation2 + $0xe70] sm:$0xff]
    %v611 = vld [vmem:[#allocation2 + $0xe78] sm:$0xff]
    %v612 = vld [vmem:[#allocation2 + $0xe80] sm:$0xff]
    %v613 = vld [vmem:[#allocation2 + $0xe88] sm:$0xff]
    %v614 = vld [vmem:[#allocation2 + $0xe90] sm:$0xff]
    %v615 = vld [vmem:[#allocation2 + $0xe98] sm:$0xff]
    %v616 = vld [vmem:[#allocation2 + $0xea0] sm:$0xff]
    %v617 = vld [vmem:[#allocation2 + $0xea8] sm:$0xff]
    %v618 = vld [vmem:[#allocation2 + $0xeb0] sm:$0xff]
    %v619 = vld [vmem:[#allocation2 + $0xeb8] sm:$0xff]
    %v620 = vld [vmem:[#allocation2 + $0xec0] sm:$0xff]
    %v621 = vld [vmem:[#allocation2 + $0xec8] sm:$0xff]
    %v622 = vld [vmem:[#allocation2 + $0xed0] sm:$0xff]
    %v623 = vld [vmem:[#allocation2 + $0xed8] sm:$0xff]
    %v624 = vld [vmem:[#allocation2 + $0xee0] sm:$0xff]
    %v625 = vld [vmem:[#allocation2 + $0xee8] sm:$0xff]
    %v626 = vld [vmem:[#allocation2 + $0xef0] sm:$0xff]
    %v627 = vld [vmem:[#allocation2 + $0xef8] sm:$0xff]
    %v628 = vld [vmem:[#allocation2 + $0xf00] sm:$0xff]
    %v629 = vld [vmem:[#allocation2 + $0xf08] sm:$0xff]
    %v630 = vld [vmem:[#allocation2 + $0xf10] sm:$0xff]
    %v631 = vld [vmem:[#allocation2 + $0xf18] sm:$0xff]
    %v632 = vld [vmem:[#allocation2 + $0xf20] sm:$0xff]
    %v633 = vld [vmem:[#allocation2 + $0xf28] sm:$0xff]
    %v634 = vld [vmem:[#allocation2 + $0xf30] sm:$0xff]
    %v635 = vld [vmem:[#allocation2 + $0xf38] sm:$0xff]
    %v636 = vld [vmem:[#allocation2 + $0xf40] sm:$0xff]
    %v637 = vld [vmem:[#allocation2 + $0xf48] sm:$0xff]
    %v638 = vld [vmem:[#allocation2 + $0xf50] sm:$0xff]
    %v639 = vld [vmem:[#allocation2 + $0xf58] sm:$0xff]
    %v640 = vld [vmem:[#allocation2 + $0xf60] sm:$0xff]
    %v641 = vld [vmem:[#allocation2 + $0xf68] sm:$0xff]
    %v642 = vld [vmem:[#allocation2 + $0xf70] sm:$0xff]
    %v643 = vld [vmem:[#allocation2 + $0xf78] sm:$0xff]
    %v644 = vld [vmem:[#allocation2 + $0xf80] sm:$0xff]
    %v645 = vld [vmem:[#allocation2 + $0xf88] sm:$0xff]
    %v646 = vld [vmem:[#allocation2 + $0xf90] sm:$0xff]
    %v647 = vld [vmem:[#allocation2 + $0xf98] sm:$0xff]
    %v648 = vld [vmem:[#allocation2 + $0xfa0] sm:$0xff]
    %v649 = vld [vmem:[#allocation2 + $0xfa8] sm:$0xff]
    %v650 = vld [vmem:[#allocation2 + $0xfb0] sm:$0xff]
    %v651 = vld [vmem:[#allocation2 + $0xfb8] sm:$0xff]
    %v652 = vld [vmem:[#allocation2 + $0xfc0] sm:$0xff]
    %v653 = vld [vmem:[#allocation2 + $0xfc8] sm:$0xff]
    %v654 = vld [vmem:[#allocation2 + $0xfd0] sm:$0xff]
    %v655 = vld [vmem:[#allocation2 + $0xfd8] sm:$0xff]
    %v656 = vld [vmem:[#allocation2 + $0xfe0] sm:$0xff]
    %v657 = vld [vmem:[#allocation2 + $0xfe8] sm:$0xff]
    %v658 = vld [vmem:[#allocation2 + $0xff0] sm:$0xff]
    %v659 = vld [vmem:[#allocation2 + $0xff8] sm:$0xff]
    %v660 = vld [vmem:[#allocation2 + $0x1000] sm:$0xff]
    %v661 = vld [vmem:[#allocation2 + $0x1008] sm:$0xff]
    %v662 = vld [vmem:[#allocation2 + $0x1010] sm:$0xff]
    %v663 = vld [vmem:[#allocation2 + $0x1018] sm:$0xff]
    %v664 = vld [vmem:[#allocation2 + $0x1020] sm:$0xff]
    %v665 = vld [vmem:[#allocation2 + $0x1028] sm:$0xff]
    %v666 = vld [vmem:[#allocation2 + $0x1030] sm:$0xff]
    %v667 = vld [vmem:[#allocation2 + $0x1038] sm:$0xff]
    %v668 = vld [vmem:[#allocation2 + $0x1040] sm:$0xff]
    %v669 = vld [vmem:[#allocation2 + $0x1048] sm:$0xff]
    %v670 = vld [vmem:[#allocation2 + $0x1050] sm:$0xff]
    %v671 = vld [vmem:[#allocation2 + $0x1058] sm:$0xff]
    %v672 = vld [vmem:[#allocation2 + $0x1060] sm:$0xff]
    %v673 = vld [vmem:[#allocation2 + $0x1068] sm:$0xff]
    %v674 = vld [vmem:[#allocation2 + $0x1070] sm:$0xff]
    %v675 = vld [vmem:[#allocation2 + $0x1078] sm:$0xff]
    %v676 = vld [vmem:[#allocation2 + $0x1080] sm:$0xff]
    %v677 = vld [vmem:[#allocation2 + $0x1088] sm:$0xff]
    %v678 = vld [vmem:[#allocation2 + $0x1090] sm:$0xff]
    %v679 = vld [vmem:[#allocation2 + $0x1098] sm:$0xff]
    %v680 = vld [vmem:[#allocation2 + $0x10a0] sm:$0xff]
    %v681 = vld [vmem:[#allocation2 + $0x10a8] sm:$0xff]
    %v682 = vld [vmem:[#allocation2 + $0x10b0] sm:$0xff]
    %v683 = vld [vmem:[#allocation2 + $0x10b8] sm:$0xff]
    %v684 = vld [vmem:[#allocation2 + $0x10c0] sm:$0xff]
    %v685 = vld [vmem:[#allocation2 + $0x10c8] sm:$0xff]
    %v686 = vld [vmem:[#allocation2 + $0x10d0] sm:$0xff]
    %v687 = vld [vmem:[#allocation2 + $0x10d8] sm:$0xff]
    %v688 = vld [vmem:[#allocation2 + $0x10e0] sm:$0xff]
    %v689 = vld [vmem:[#allocation2 + $0x10e8] sm:$0xff]
    %v690 = vld [vmem:[#allocation2 + $0x10f0] sm:$0xff]
    %v691 = vld [vmem:[#allocation2 + $0x10f8] sm:$0xff]
    %v692 = vld [vmem:[#allocation2 + $0x1100] sm:$0xff]
    %v693 = vld [vmem:[#allocation2 + $0x1108] sm:$0xff]
    %v694 = vld [vmem:[#allocation2 + $0x1110] sm:$0xff]
    %v695 = vld [vmem:[#allocation2 + $0x1118] sm:$0xff]
    %v696 = vld [vmem:[#allocation2 + $0x1120] sm:$0xff]
    %v697 = vld [vmem:[#allocation2 + $0x1128] sm:$0xff]
    %v698 = vld [vmem:[#allocation2 + $0x1130] sm:$0xff]
    %v699 = vld [vmem:[#allocation2 + $0x1138] sm:$0xff]
    %v700 = vld [vmem:[#allocation2 + $0x1140] sm:$0xff]
    %v701 = vld [vmem:[#allocation2 + $0x1148] sm:$0xff]
    %v702 = vld [vmem:[#allocation2 + $0x1150] sm:$0xff]
    %v703 = vld [vmem:[#allocation2 + $0x1158] sm:$0xff]
    %v704 = vld [vmem:[#allocation2 + $0x1160] sm:$0xff]
    %v705 = vld [vmem:[#allocation2 + $0x1168] sm:$0xff]
    %v706 = vld [vmem:[#allocation2 + $0x1170] sm:$0xff]
    %v707 = vld [vmem:[#allocation2 + $0x1178] sm:$0xff]
    %v708 = vld [vmem:[#allocation2 + $0x1180] sm:$0xff]
    %v709 = vld [vmem:[#allocation2 + $0x1188] sm:$0xff]
    %v710 = vld [vmem:[#allocation2 + $0x1190] sm:$0xff]
    %v711 = vld [vmem:[#allocation2 + $0x1198] sm:$0xff]
    %v712 = vld [vmem:[#allocation2 + $0x11a0] sm:$0xff]
    %v713 = vld [vmem:[#allocation2 + $0x11a8] sm:$0xff]
    %v714 = vld [vmem:[#allocation2 + $0x11b0] sm:$0xff]
    %v715 = vld [vmem:[#allocation2 + $0x11b8] sm:$0xff]
    %v716 = vld [vmem:[#allocation2 + $0x11c0] sm:$0xff]
    %v717 = vld [vmem:[#allocation2 + $0x11c8] sm:$0xff]
    %v718 = vld [vmem:[#allocation2 + $0x11d0] sm:$0xff]
    %v719 = vld [vmem:[#allocation2 + $0x11d8] sm:$0xff]
    %v720 = vld [vmem:[#allocation2 + $0x11e0] sm:$0xff]
    %v721 = vld [vmem:[#allocation2 + $0x11e8] sm:$0xff]
    %v722 = vld [vmem:[#allocation2 + $0x11f0] sm:$0xff]
    %v723 = vld [vmem:[#allocation2 + $0x11f8] sm:$0xff]
    %v724 = vld [vmem:[#allocation2 + $0x1200] sm:$0xff]
    %v725 = vld [vmem:[#allocation2 + $0x1208] sm:$0xff]
    %v726 = vld [vmem:[#allocation2 + $0x1210] sm:$0xff]
    %v727 = vld [vmem:[#allocation2 + $0x1218] sm:$0xff]
    %v728 = vld [vmem:[#allocation2 + $0x1220] sm:$0xff]
    %v729 = vld [vmem:[#allocation2 + $0x1228] sm:$0xff]
    %v730 = vld [vmem:[#allocation2 + $0x1230] sm:$0xff]
    %v731 = vld [vmem:[#allocation2 + $0x1238] sm:$0xff]
    %v732 = vld [vmem:[#allocation2 + $0x1240] sm:$0xff]
    %v733 = vld [vmem:[#allocation2 + $0x1248] sm:$0xff]
    %v734 = vld [vmem:[#allocation2 + $0x1250] sm:$0xff]
    %v735 = vld [vmem:[#allocation2 + $0x1258] sm:$0xff]
    %v736 = vld [vmem:[#allocation2 + $0x1260] sm:$0xff]
    %v737 = vld [vmem:[#allocation2 + $0x1268] sm:$0xff]
    %v738 = vld [vmem:[#allocation2 + $0x1270] sm:$0xff]
    %v739 = vld [vmem:[#allocation2 + $0x1278] sm:$0xff]
    %v740 = vld [vmem:[#allocation2 + $0x1280] sm:$0xff]
    %v741 = vld [vmem:[#allocation2 + $0x1288] sm:$0xff]
    %v742 = vld [vmem:[#allocation2 + $0x1290] sm:$0xff]
    %v743 = vld [vmem:[#allocation2 + $0x1298] sm:$0xff]
    %v744 = vld [vmem:[#allocation2 + $0x12a0] sm:$0xff]
    %v745 = vld [vmem:[#allocation2 + $0x12a8] sm:$0xff]
    %v746 = vld [vmem:[#allocation2 + $0x12b0] sm:$0xff]
    %v747 = vld [vmem:[#allocation2 + $0x12b8] sm:$0xff]
    %v748 = vld [vmem:[#allocation2 + $0x12c0] sm:$0xff]
    %v749 = vld [vmem:[#allocation2 + $0x12c8] sm:$0xff]
    %v750 = vld [vmem:[#allocation2 + $0x12d0] sm:$0xff]
    %v751 = vld [vmem:[#allocation2 + $0x12d8] sm:$0xff]
    %v752 = vld [vmem:[#allocation2 + $0x12e0] sm:$0xff]
    %v753 = vld [vmem:[#allocation2 + $0x12e8] sm:$0xff]
    %v754 = vld [vmem:[#allocation2 + $0x12f0] sm:$0xff]
    %v755 = vld [vmem:[#allocation2 + $0x12f8] sm:$0xff]
    %v756 = vld [vmem:[#allocation2 + $0x1300] sm:$0xff]
    %v757 = vld [vmem:[#allocation2 + $0x1308] sm:$0xff]
    %v758 = vld [vmem:[#allocation2 + $0x1310] sm:$0xff]
    %v759 = vld [vmem:[#allocation2 + $0x1318] sm:$0xff]
    %v760 = vld [vmem:[#allocation2 + $0x1320] sm:$0xff]
    %v761 = vld [vmem:[#allocation2 + $0x1328] sm:$0xff]
    %v762 = vld [vmem:[#allocation2 + $0x1330] sm:$0xff]
    %v763 = vld [vmem:[#allocation2 + $0x1338] sm:$0xff]
    %v764 = vld [vmem:[#allocation2 + $0x1340] sm:$0xff]
    %v765 = vld [vmem:[#allocation2 + $0x1348] sm:$0xff]
    %v766 = vld [vmem:[#allocation2 + $0x1350] sm:$0xff]
    %v767 = vld [vmem:[#allocation2 + $0x1358] sm:$0xff]
    %v768 = vld [vmem:[#allocation2 + $0x1360] sm:$0xff]
    %v769 = vld [vmem:[#allocation2 + $0x1368] sm:$0xff]
    %v770 = vld [vmem:[#allocation2 + $0x1370] sm:$0xff]
    %v771 = vld [vmem:[#allocation2 + $0x1378] sm:$0xff]
    %v772 = vld [vmem:[#allocation2 + $0x1380] sm:$0xff]
    %v773 = vld [vmem:[#allocation2 + $0x1388] sm:$0xff]
    %v774 = vld [vmem:[#allocation2 + $0x1390] sm:$0xff]
    %v775 = vld [vmem:[#allocation2 + $0x1398] sm:$0xff]
    %v776 = vld [vmem:[#allocation2 + $0x13a0] sm:$0xff]
    %v777 = vld [vmem:[#allocation2 + $0x13a8] sm:$0xff]
    %v778 = vld [vmem:[#allocation2 + $0x13b0] sm:$0xff]
    %v779 = vld [vmem:[#allocation2 + $0x13b8] sm:$0xff]
    %v780 = vld [vmem:[#allocation2 + $0x13c0] sm:$0xff]
    %v781 = vld [vmem:[#allocation2 + $0x13c8] sm:$0xff]
    %v782 = vld [vmem:[#allocation2 + $0x13d0] sm:$0xff]
    %v783 = vld [vmem:[#allocation2 + $0x13d8] sm:$0xff]
    %v784 = vld [vmem:[#allocation2 + $0x13e0] sm:$0xff]
    %v785 = vld [vmem:[#allocation2 + $0x13e8] sm:$0xff]
    %v786 = vld [vmem:[#allocation2 + $0x13f0] sm:$0xff]
    %v787 = vld [vmem:[#allocation2 + $0x13f8] sm:$0xff]
    %v788 = vld [vmem:[#allocation2 + $0x1400] sm:$0xff]
    %v789 = vld [vmem:[#allocation2 + $0x1408] sm:$0xff]
    %v790 = vld [vmem:[#allocation2 + $0x1410] sm:$0xff]
    %v791 = vld [vmem:[#allocation2 + $0x1418] sm:$0xff]
    %v792 = vld [vmem:[#allocation2 + $0x1420] sm:$0xff]
    %v793 = vld [vmem:[#allocation2 + $0x1428] sm:$0xff]
    %v794 = vld [vmem:[#allocation2 + $0x1430] sm:$0xff]
    %v795 = vld [vmem:[#allocation2 + $0x1438] sm:$0xff]
    %v796 = vld [vmem:[#allocation2 + $0x1440] sm:$0xff]
    %v797 = vld [vmem:[#allocation2 + $0x1448] sm:$0xff]
    %v798 = vld [vmem:[#allocation2 + $0x1450] sm:$0xff]
    %v799 = vld [vmem:[#allocation2 + $0x1458] sm:$0xff]
    %v800 = vld [vmem:[#allocation2 + $0x1460] sm:$0xff]
    %v801 = vld [vmem:[#allocation2 + $0x1468] sm:$0xff]
    %v802 = vld [vmem:[#allocation2 + $0x1470] sm:$0xff]
    %v803 = vld [vmem:[#allocation2 + $0x1478] sm:$0xff]
    %v804 = vld [vmem:[#allocation2 + $0x1480] sm:$0xff]
    %v805 = vld [vmem:[#allocation2 + $0x1488] sm:$0xff]
    %v806 = vld [vmem:[#allocation2 + $0x1490] sm:$0xff]
    %v807 = vld [vmem:[#allocation2 + $0x1498] sm:$0xff]
    %v808 = vld [vmem:[#allocation2 + $0x14a0] sm:$0xff]
    %v809 = vld [vmem:[#allocation2 + $0x14a8] sm:$0xff]
    %v810 = vld [vmem:[#allocation2 + $0x14b0] sm:$0xff]
    %v811 = vld [vmem:[#allocation2 + $0x14b8] sm:$0xff]
    %v812 = vld [vmem:[#allocation2 + $0x14c0] sm:$0xff]
    %v813 = vld [vmem:[#allocation2 + $0x14c8] sm:$0xff]
    %v814 = vld [vmem:[#allocation2 + $0x14d0] sm:$0xff]
    %v815 = vld [vmem:[#allocation2 + $0x14d8] sm:$0xff]
    %v816 = vld [vmem:[#allocation2 + $0x14e0] sm:$0xff]
    %v817 = vld [vmem:[#allocation2 + $0x14e8] sm:$0xff]
    %v818 = vld [vmem:[#allocation2 + $0x14f0] sm:$0xff]
    %v819 = vld [vmem:[#allocation2 + $0x14f8] sm:$0xff]
    %v820 = vld [vmem:[#allocation2 + $0x1500] sm:$0xff]
    %v821 = vld [vmem:[#allocation2 + $0x1508] sm:$0xff]
    %v822 = vld [vmem:[#allocation2 + $0x1510] sm:$0xff]
    %v823 = vld [vmem:[#allocation2 + $0x1518] sm:$0xff]
    %v824 = vld [vmem:[#allocation2 + $0x1520] sm:$0xff]
    %v825 = vld [vmem:[#allocation2 + $0x1528] sm:$0xff]
    %v826 = vld [vmem:[#allocation2 + $0x1530] sm:$0xff]
    %v827 = vld [vmem:[#allocation2 + $0x1538] sm:$0xff]
    %v828 = vld [vmem:[#allocation2 + $0x1540] sm:$0xff]
    %v829 = vld [vmem:[#allocation2 + $0x1548] sm:$0xff]
    %v830 = vld [vmem:[#allocation2 + $0x1550] sm:$0xff]
    %v831 = vld [vmem:[#allocation2 + $0x1558] sm:$0xff]
    %v832 = vld [vmem:[#allocation2 + $0x1560] sm:$0xff]
    %v833 = vld [vmem:[#allocation2 + $0x1568] sm:$0xff]
    %v834 = vld [vmem:[#allocation2 + $0x1570] sm:$0xff]
    %v835 = vld [vmem:[#allocation2 + $0x1578] sm:$0xff]
    %v836 = vld [vmem:[#allocation2 + $0x1580] sm:$0xff]
    %v837 = vld [vmem:[#allocation2 + $0x1588] sm:$0xff]
    %v838 = vld [vmem:[#allocation2 + $0x1590] sm:$0xff]
    %v839 = vld [vmem:[#allocation2 + $0x1598] sm:$0xff]
    %v840 = vld [vmem:[#allocation2 + $0x15a0] sm:$0xff]
    %v841 = vld [vmem:[#allocation2 + $0x15a8] sm:$0xff]
    %v842 = vld [vmem:[#allocation2 + $0x15b0] sm:$0xff]
    %v843 = vld [vmem:[#allocation2 + $0x15b8] sm:$0xff]
    %v844 = vld [vmem:[#allocation2 + $0x15c0] sm:$0xff]
    %v845 = vld [vmem:[#allocation2 + $0x15c8] sm:$0xff]
    %v846 = vld [vmem:[#allocation2 + $0x15d0] sm:$0xff]
    %v847 = vld [vmem:[#allocation2 + $0x15d8] sm:$0xff]
    %v848 = vld [vmem:[#allocation2 + $0x15e0] sm:$0xff]
    %v849 = vld [vmem:[#allocation2 + $0x15e8] sm:$0xff]
    %v850 = vld [vmem:[#allocation2 + $0x15f0] sm:$0xff]
    %v851 = vld [vmem:[#allocation2 + $0x15f8] sm:$0xff]
    %v852 = vld [vmem:[#allocation2 + $0x1600] sm:$0xff]
    %v853 = vld [vmem:[#allocation2 + $0x1608] sm:$0xff]
    %v854 = vld [vmem:[#allocation2 + $0x1610] sm:$0xff]
    %v855 = vld [vmem:[#allocation2 + $0x1618] sm:$0xff]
    %v856 = vld [vmem:[#allocation2 + $0x1620] sm:$0xff]
    %v857 = vld [vmem:[#allocation2 + $0x1628] sm:$0xff]
    %v858 = vld [vmem:[#allocation2 + $0x1630] sm:$0xff]
    %v859 = vld [vmem:[#allocation2 + $0x1638] sm:$0xff]
    %v860 = vld [vmem:[#allocation2 + $0x1640] sm:$0xff]
    %v861 = vld [vmem:[#allocation2 + $0x1648] sm:$0xff]
    %v862 = vld [vmem:[#allocation2 + $0x1650] sm:$0xff]
    %v863 = vld [vmem:[#allocation2 + $0x1658] sm:$0xff]
    %v864 = vld [vmem:[#allocation2 + $0x1660] sm:$0xff]
    %v865 = vld [vmem:[#allocation2 + $0x1668] sm:$0xff]
    %v866 = vld [vmem:[#allocation2 + $0x1670] sm:$0xff]
    %v867 = vld [vmem:[#allocation2 + $0x1678] sm:$0xff]
    %v868 = vld [vmem:[#allocation2 + $0x1680] sm:$0xff]
    %v869 = vld [vmem:[#allocation2 + $0x1688] sm:$0xff]
    %v870 = vld [vmem:[#allocation2 + $0x1690] sm:$0xff]
    %v871 = vld [vmem:[#allocation2 + $0x1698] sm:$0xff]
    %v872 = vld [vmem:[#allocation2 + $0x16a0] sm:$0xff]
    %v873 = vld [vmem:[#allocation2 + $0x16a8] sm:$0xff]
    %v874 = vld [vmem:[#allocation2 + $0x16b0] sm:$0xff]
    %v875 = vld [vmem:[#allocation2 + $0x16b8] sm:$0xff]
    %v876 = vld [vmem:[#allocation2 + $0x16c0] sm:$0xff]
    %v877 = vld [vmem:[#allocation2 + $0x16c8] sm:$0xff]
    %v878 = vld [vmem:[#allocation2 + $0x16d0] sm:$0xff]
    %v879 = vld [vmem:[#allocation2 + $0x16d8] sm:$0xff]
    %v880 = vld [vmem:[#allocation2 + $0x16e0] sm:$0xff]
    %v881 = vld [vmem:[#allocation2 + $0x16e8] sm:$0xff]
    %v882 = vld [vmem:[#allocation2 + $0x16f0] sm:$0xff]
    %v883 = vld [vmem:[#allocation2 + $0x16f8] sm:$0xff]
    %v884 = vld [vmem:[#allocation2 + $0x1700] sm:$0xff]
    %v885 = vld [vmem:[#allocation2 + $0x1708] sm:$0xff]
    %v886 = vld [vmem:[#allocation2 + $0x1710] sm:$0xff]
    %v887 = vld [vmem:[#allocation2 + $0x1718] sm:$0xff]
    %v888 = vld [vmem:[#allocation2 + $0x1720] sm:$0xff]
    %v889 = vld [vmem:[#allocation2 + $0x1728] sm:$0xff]
    %v890 = vld [vmem:[#allocation2 + $0x1730] sm:$0xff]
    %v891 = vld [vmem:[#allocation2 + $0x1738] sm:$0xff]
    %v892 = vld [vmem:[#allocation2 + $0x1740] sm:$0xff]
    %v893 = vld [vmem:[#allocation2 + $0x1748] sm:$0xff]
    %v894 = vld [vmem:[#allocation2 + $0x1750] sm:$0xff]
    %v895 = vld [vmem:[#allocation2 + $0x1758] sm:$0xff]
    %v896 = vld [vmem:[#allocation2 + $0x1760] sm:$0xff]
    %v897 = vld [vmem:[#allocation2 + $0x1768] sm:$0xff]
    %v898 = vld [vmem:[#allocation2 + $0x1770] sm:$0xff]
    %v899 = vld [vmem:[#allocation2 + $0x1778] sm:$0xff]
    %v900 = vld [vmem:[#allocation2 + $0x1780] sm:$0xff]
    %v901 = vld [vmem:[#allocation2 + $0x1788] sm:$0xff]
    %v902 = vld [vmem:[#allocation2 + $0x1790] sm:$0xff]
    %v903 = vld [vmem:[#allocation2 + $0x1798] sm:$0xff]
    %v904 = vld [vmem:[#allocation2 + $0x17a0] sm:$0xff]
    %v905 = vld [vmem:[#allocation2 + $0x17a8] sm:$0xff]
    %v906 = vld [vmem:[#allocation2 + $0x17b0] sm:$0xff]
    %v907 = vld [vmem:[#allocation2 + $0x17b8] sm:$0xff]
    %v908 = vld [vmem:[#allocation2 + $0x17c0] sm:$0xff]
    %v909 = vld [vmem:[#allocation2 + $0x17c8] sm:$0xff]
    %v910 = vld [vmem:[#allocation2 + $0x17d0] sm:$0xff]
    %v911 = vld [vmem:[#allocation2 + $0x17d8] sm:$0xff]
    %v912 = vld [vmem:[#allocation2 + $0x17e0] sm:$0xff]
    %v913 = vld [vmem:[#allocation2 + $0x17e8] sm:$0xff]
    %v914 = vld [vmem:[#allocation2 + $0x17f0] sm:$0xff]
    %v915 = vld [vmem:[#allocation2 + $0x17f8] sm:$0xff]
    %v916 = vld [vmem:[#allocation2 + $0x1800] sm:$0xff]
    %v917 = vld [vmem:[#allocation2 + $0x1808] sm:$0xff]
    %v918 = vld [vmem:[#allocation2 + $0x1810] sm:$0xff]
    %v919 = vld [vmem:[#allocation2 + $0x1818] sm:$0xff]
    %v920 = vld [vmem:[#allocation2 + $0x1820] sm:$0xff]
    %v921 = vld [vmem:[#allocation2 + $0x1828] sm:$0xff]
    %v922 = vld [vmem:[#allocation2 + $0x1830] sm:$0xff]
    %v923 = vld [vmem:[#allocation2 + $0x1838] sm:$0xff]
    %v924 = vld [vmem:[#allocation2 + $0x1840] sm:$0xff]
    %v925 = vld [vmem:[#allocation2 + $0x1848] sm:$0xff]
    %v926 = vld [vmem:[#allocation2 + $0x1850] sm:$0xff]
    %v927 = vld [vmem:[#allocation2 + $0x1858] sm:$0xff]
    %v928 = vld [vmem:[#allocation2 + $0x1860] sm:$0xff]
    %v929 = vld [vmem:[#allocation2 + $0x1868] sm:$0xff]
    %v930 = vld [vmem:[#allocation2 + $0x1870] sm:$0xff]
    %v931 = vld [vmem:[#allocation2 + $0x1878] sm:$0xff]
    %v932 = vld [vmem:[#allocation2 + $0x1880] sm:$0xff]
    %v933 = vld [vmem:[#allocation2 + $0x1888] sm:$0xff]
    %v934 = vld [vmem:[#allocation2 + $0x1890] sm:$0xff]
    %v935 = vld [vmem:[#allocation2 + $0x1898] sm:$0xff]
    %v936 = vld [vmem:[#allocation2 + $0x18a0] sm:$0xff]
    %v937 = vld [vmem:[#allocation2 + $0x18a8] sm:$0xff]
    %v938 = vld [vmem:[#allocation2 + $0x18b0] sm:$0xff]
    %v939 = vld [vmem:[#allocation2 + $0x18b8] sm:$0xff]
    %v940 = vld [vmem:[#allocation2 + $0x18c0] sm:$0xff]
    %v941 = vld [vmem:[#allocation2 + $0x18c8] sm:$0xff]
    %v942 = vld [vmem:[#allocation2 + $0x18d0] sm:$0xff]
    %v943 = vld [vmem:[#allocation2 + $0x18d8] sm:$0xff]
    %v944 = vld [vmem:[#allocation2 + $0x18e0] sm:$0xff]
    %v945 = vld [vmem:[#allocation2 + $0x18e8] sm:$0xff]
    %v946 = vld [vmem:[#allocation2 + $0x18f0] sm:$0xff]
    %v947 = vld [vmem:[#allocation2 + $0x18f8] sm:$0xff]
    %v948 = vld [vmem:[#allocation2 + $0x1900] sm:$0xff]
    %v949 = vld [vmem:[#allocation2 + $0x1908] sm:$0xff]
    %v950 = vld [vmem:[#allocation2 + $0x1910] sm:$0xff]
    %v951 = vld [vmem:[#allocation2 + $0x1918] sm:$0xff]
    %v952 = vld [vmem:[#allocation2 + $0x1920] sm:$0xff]
    %v953 = vld [vmem:[#allocation2 + $0x1928] sm:$0xff]
    %v954 = vld [vmem:[#allocation2 + $0x1930] sm:$0xff]
    %v955 = vld [vmem:[#allocation2 + $0x1938] sm:$0xff]
    %v956 = vld [vmem:[#allocation2 + $0x1940] sm:$0xff]
    %v957 = vld [vmem:[#allocation2 + $0x1948] sm:$0xff]
    %v958 = vld [vmem:[#allocation2 + $0x1950] sm:$0xff]
    %v959 = vld [vmem:[#allocation2 + $0x1958] sm:$0xff]
    %v960 = vld [vmem:[#allocation2 + $0x1960] sm:$0xff]
    %v961 = vld [vmem:[#allocation2 + $0x1968] sm:$0xff]
    %v962 = vld [vmem:[#allocation2 + $0x1970] sm:$0xff]
    %v963 = vld [vmem:[#allocation2 + $0x1978] sm:$0xff]
    %v964 = vld [vmem:[#allocation2 + $0x1980] sm:$0xff]
    %v965 = vld [vmem:[#allocation2 + $0x1988] sm:$0xff]
    %v966 = vld [vmem:[#allocation2 + $0x1990] sm:$0xff]
    %v967 = vld [vmem:[#allocation2 + $0x1998] sm:$0xff]
    %v968 = vld [vmem:[#allocation2 + $0x19a0] sm:$0xff]
    %v969 = vld [vmem:[#allocation2 + $0x19a8] sm:$0xff]
    %v970 = vld [vmem:[#allocation2 + $0x19b0] sm:$0xff]
    %v971 = vld [vmem:[#allocation2 + $0x19b8] sm:$0xff]
    %v972 = vld [vmem:[#allocation2 + $0x19c0] sm:$0xff]
    %v973 = vld [vmem:[#allocation2 + $0x19c8] sm:$0xff]
    %v974 = vld [vmem:[#allocation2 + $0x19d0] sm:$0xff]
    %v975 = vld [vmem:[#allocation2 + $0x19d8] sm:$0xff]
    %v976 = vld [vmem:[#allocation2 + $0x19e0] sm:$0xff]
    %v977 = vld [vmem:[#allocation2 + $0x19e8] sm:$0xff]
    %v978 = vld [vmem:[#allocation2 + $0x19f0] sm:$0xff]
    %v979 = vld [vmem:[#allocation2 + $0x19f8] sm:$0xff]
    %v980 = vld [vmem:[#allocation2 + $0x1a00] sm:$0xff]
    %v981 = vld [vmem:[#allocation2 + $0x1a08] sm:$0xff]
    %v982 = vld [vmem:[#allocation2 + $0x1a10] sm:$0xff]
    %v983 = vld [vmem:[#allocation2 + $0x1a18] sm:$0xff]
    %v984 = vld [vmem:[#allocation2 + $0x1a20] sm:$0xff]
    %v985 = vld [vmem:[#allocation2 + $0x1a28] sm:$0xff]
    %v986 = vld [vmem:[#allocation2 + $0x1a30] sm:$0xff]
    %v987 = vld [vmem:[#allocation2 + $0x1a38] sm:$0xff]
    %v988 = vld [vmem:[#allocation2 + $0x1a40] sm:$0xff]
    %v989 = vld [vmem:[#allocation2 + $0x1a48] sm:$0xff]
    %v990 = vld [vmem:[#allocation2 + $0x1a50] sm:$0xff]
    %v991 = vld [vmem:[#allocation2 + $0x1a58] sm:$0xff]
    %v992 = vld [vmem:[#allocation2 + $0x1a60] sm:$0xff]
    %v993 = vld [vmem:[#allocation2 + $0x1a68] sm:$0xff]
    %v994 = vld [vmem:[#allocation2 + $0x1a70] sm:$0xff]
    %v995 = vld [vmem:[#allocation2 + $0x1a78] sm:$0xff]
    %v996 = vld [vmem:[#allocation2 + $0x1a80] sm:$0xff]
    %v997 = vld [vmem:[#allocation2 + $0x1a88] sm:$0xff]
    %v998 = vld [vmem:[#allocation2 + $0x1a90] sm:$0xff]
    %v999 = vld [vmem:[#allocation2 + $0x1a98] sm:$0xff]
    %v1000 = vld [vmem:[#allocation2 + $0x1aa0] sm:$0xff]
    %v1001 = vld [vmem:[#allocation2 + $0x1aa8] sm:$0xff]
    %v1002 = vld [vmem:[#allocation2 + $0x1ab0] sm:$0xff]
    %v1003 = vld [vmem:[#allocation2 + $0x1ab8] sm:$0xff]
    %v1004 = vld [vmem:[#allocation2 + $0x1ac0] sm:$0xff]
    %v1005 = vld [vmem:[#allocation2 + $0x1ac8] sm:$0xff]
    %v1006 = vld [vmem:[#allocation2 + $0x1ad0] sm:$0xff]
    %v1007 = vld [vmem:[#allocation2 + $0x1ad8] sm:$0xff]
    %v1008 = vld [vmem:[#allocation2 + $0x1ae0] sm:$0xff]
    %v1009 = vld [vmem:[#allocation2 + $0x1ae8] sm:$0xff]
    %v1010 = vld [vmem:[#allocation2 + $0x1af0] sm:$0xff]
    %v1011 = vld [vmem:[#allocation2 + $0x1af8] sm:$0xff]
    %v1012 = vld [vmem:[#allocation2 + $0x1b00] sm:$0xff]
    %v1013 = vld [vmem:[#allocation2 + $0x1b08] sm:$0xff]
    %v1014 = vld [vmem:[#allocation2 + $0x1b10] sm:$0xff]
    %v1015 = vld [vmem:[#allocation2 + $0x1b18] sm:$0xff]
    %v1016 = vld [vmem:[#allocation2 + $0x1b20] sm:$0xff]
    %v1017 = vld [vmem:[#allocation2 + $0x1b28] sm:$0xff]
    %v1018 = vld [vmem:[#allocation2 + $0x1b30] sm:$0xff]
    %v1019 = vld [vmem:[#allocation2 + $0x1b38] sm:$0xff]
    %v1020 = vld [vmem:[#allocation2 + $0x1b40] sm:$0xff]
    %v1021 = vld [vmem:[#allocation2 + $0x1b48] sm:$0xff]
    %v1022 = vld [vmem:[#allocation2 + $0x1b50] sm:$0xff]
    %v1023 = vld [vmem:[#allocation2 + $0x1b58] sm:$0xff]
    %v1024 = vld [vmem:[#allocation2 + $0x1b60] sm:$0xff]
    %v1025 = vld [vmem:[#allocation2 + $0x1b68] sm:$0xff]
    %v1026 = vld [vmem:[#allocation2 + $0x1b70] sm:$0xff]
    %v1027 = vld [vmem:[#allocation2 + $0x1b78] sm:$0xff]
    %v1028 = vld [vmem:[#allocation2 + $0x1b80] sm:$0xff]
    %v1029 = vld [vmem:[#allocation2 + $0x1b88] sm:$0xff]
    %v1030 = vld [vmem:[#allocation2 + $0x1b90] sm:$0xff]
    %v1031 = vld [vmem:[#allocation2 + $0x1b98] sm:$0xff]
    %v1032 = vld [vmem:[#allocation2 + $0x1ba0] sm:$0xff]
    %v1033 = vld [vmem:[#allocation2 + $0x1ba8] sm:$0xff]
    %v1034 = vld [vmem:[#allocation2 + $0x1bb0] sm:$0xff]
    %v1035 = vld [vmem:[#allocation2 + $0x1bb8] sm:$0xff]
    %v1036 = vld [vmem:[#allocation2 + $0x1bc0] sm:$0xff]
    %v1037 = vld [vmem:[#allocation2 + $0x1bc8] sm:$0xff]
    %v1038 = vld [vmem:[#allocation2 + $0x1bd0] sm:$0xff]
    %v1039 = vld [vmem:[#allocation2 + $0x1bd8] sm:$0xff]
    %v1040 = vld [vmem:[#allocation2 + $0x1be0] sm:$0xff]
    %v1041 = vld [vmem:[#allocation2 + $0x1be8] sm:$0xff]
    %v1042 = vld [vmem:[#allocation2 + $0x1bf0] sm:$0xff]
    %v1043 = vld [vmem:[#allocation2 + $0x1bf8] sm:$0xff]
    %v1044 = vld [vmem:[#allocation2 + $0x1c00] sm:$0xff]
    %v1045 = vld [vmem:[#allocation2 + $0x1c08] sm:$0xff]
    %v1046 = vld [vmem:[#allocation2 + $0x1c10] sm:$0xff]
    %v1047 = vld [vmem:[#allocation2 + $0x1c18] sm:$0xff]
    %v1048 = vld [vmem:[#allocation2 + $0x1c20] sm:$0xff]
    %v1049 = vld [vmem:[#allocation2 + $0x1c28] sm:$0xff]
    %v1050 = vld [vmem:[#allocation2 + $0x1c30] sm:$0xff]
    %v1051 = vld [vmem:[#allocation2 + $0x1c38] sm:$0xff]
    %v1052 = vld [vmem:[#allocation2 + $0x1c40] sm:$0xff]
    %v1053 = vld [vmem:[#allocation2 + $0x1c48] sm:$0xff]
    %v1054 = vld [vmem:[#allocation2 + $0x1c50] sm:$0xff]
    %v1055 = vld [vmem:[#allocation2 + $0x1c58] sm:$0xff]
    %v1056 = vld [vmem:[#allocation2 + $0x1c60] sm:$0xff]
    %v1057 = vld [vmem:[#allocation2 + $0x1c68] sm:$0xff]
    %v1058 = vld [vmem:[#allocation2 + $0x1c70] sm:$0xff]
    %v1059 = vld [vmem:[#allocation2 + $0x1c78] sm:$0xff]
    %v1060 = vld [vmem:[#allocation2 + $0x1c80] sm:$0xff]
    %v1061 = vld [vmem:[#allocation2 + $0x1c88] sm:$0xff]
    %v1062 = vld [vmem:[#allocation2 + $0x1c90] sm:$0xff]
    %v1063 = vld [vmem:[#allocation2 + $0x1c98] sm:$0xff]
    %v1064 = vld [vmem:[#allocation2 + $0x1ca0] sm:$0xff]
    %v1065 = vld [vmem:[#allocation2 + $0x1ca8] sm:$0xff]
    %v1066 = vld [vmem:[#allocation2 + $0x1cb0] sm:$0xff]
    %v1067 = vld [vmem:[#allocation2 + $0x1cb8] sm:$0xff]
    %v1068 = vld [vmem:[#allocation2 + $0x1cc0] sm:$0xff]
    %v1069 = vld [vmem:[#allocation2 + $0x1cc8] sm:$0xff]
    %v1070 = vld [vmem:[#allocation2 + $0x1cd0] sm:$0xff]
    %v1071 = vld [vmem:[#allocation2 + $0x1cd8] sm:$0xff]
    %v1072 = vld [vmem:[#allocation2 + $0x1ce0] sm:$0xff]
    %v1073 = vld [vmem:[#allocation2 + $0x1ce8] sm:$0xff]
    %v1074 = vld [vmem:[#allocation2 + $0x1cf0] sm:$0xff]
    %v1075 = vld [vmem:[#allocation2 + $0x1cf8] sm:$0xff]
    %v1076 = vld [vmem:[#allocation2 + $0x1d00] sm:$0xff]
    %v1077 = vld [vmem:[#allocation2 + $0x1d08] sm:$0xff]
    %v1078 = vld [vmem:[#allocation2 + $0x1d10] sm:$0xff]
    %v1079 = vld [vmem:[#allocation2 + $0x1d18] sm:$0xff]
    %v1080 = vld [vmem:[#allocation2 + $0x1d20] sm:$0xff]
    %v1081 = vld [vmem:[#allocation2 + $0x1d28] sm:$0xff]
    %v1082 = vld [vmem:[#allocation2 + $0x1d30] sm:$0xff]
    %v1083 = vld [vmem:[#allocation2 + $0x1d38] sm:$0xff]
    %v1084 = vld [vmem:[#allocation2 + $0x1d40] sm:$0xff]
    %v1085 = vld [vmem:[#allocation2 + $0x1d48] sm:$0xff]
    %v1086 = vld [vmem:[#allocation2 + $0x1d50] sm:$0xff]
    %v1087 = vld [vmem:[#allocation2 + $0x1d58] sm:$0xff]
    %v1088 = vld [vmem:[#allocation2 + $0x1d60] sm:$0xff]
    %v1089 = vld [vmem:[#allocation2 + $0x1d68] sm:$0xff]
    %v1090 = vld [vmem:[#allocation2 + $0x1d70] sm:$0xff]
    %v1091 = vld [vmem:[#allocation2 + $0x1d78] sm:$0xff]
    %v1092 = vld [vmem:[#allocation2 + $0x1d80] sm:$0xff]
    %v1093 = vld [vmem:[#allocation2 + $0x1d88] sm:$0xff]
    %v1094 = vld [vmem:[#allocation2 + $0x1d90] sm:$0xff]
    %v1095 = vld [vmem:[#allocation2 + $0x1d98] sm:$0xff]
    %v1096 = vld [vmem:[#allocation2 + $0x1da0] sm:$0xff]
    %v1097 = vld [vmem:[#allocation2 + $0x1da8] sm:$0xff]
    %v1098 = vld [vmem:[#allocation2 + $0x1db0] sm:$0xff]
    %v1099 = vld [vmem:[#allocation2 + $0x1db8] sm:$0xff]
    %v1100 = vld [vmem:[#allocation2 + $0x1dc0] sm:$0xff]
    %v1101 = vld [vmem:[#allocation2 + $0x1dc8] sm:$0xff]
    %v1102 = vld [vmem:[#allocation2 + $0x1dd0] sm:$0xff]
    %v1103 = vld [vmem:[#allocation2 + $0x1dd8] sm:$0xff]
    %v1104 = vld [vmem:[#allocation2 + $0x1de0] sm:$0xff]
    %v1105 = vld [vmem:[#allocation2 + $0x1de8] sm:$0xff]
    %v1106 = vld [vmem:[#allocation2 + $0x1df0] sm:$0xff]
    %v1107 = vld [vmem:[#allocation2 + $0x1df8] sm:$0xff]
    %v1108 = vld [vmem:[#allocation2 + $0x1e00] sm:$0xff]
    %v1109 = vld [vmem:[#allocation2 + $0x1e08] sm:$0xff]
    %v1110 = vld [vmem:[#allocation2 + $0x1e10] sm:$0xff]
    %v1111 = vld [vmem:[#allocation2 + $0x1e18] sm:$0xff]
    %v1112 = vld [vmem:[#allocation2 + $0x1e20] sm:$0xff]
    %v1113 = vld [vmem:[#allocation2 + $0x1e28] sm:$0xff]
    %v1114 = vld [vmem:[#allocation2 + $0x1e30] sm:$0xff]
    %v1115 = vld [vmem:[#allocation2 + $0x1e38] sm:$0xff]
    %v1116 = vld [vmem:[#allocation2 + $0x1e40] sm:$0xff]
    %v1117 = vld [vmem:[#allocation2 + $0x1e48] sm:$0xff]
    %v1118 = vld [vmem:[#allocation2 + $0x1e50] sm:$0xff]
    %v1119 = vld [vmem:[#allocation2 + $0x1e58] sm:$0xff]
    %v1120 = vld [vmem:[#allocation2 + $0x1e60] sm:$0xff]
    %v1121 = vld [vmem:[#allocation2 + $0x1e68] sm:$0xff]
    %v1122 = vld [vmem:[#allocation2 + $0x1e70] sm:$0xff]
    %v1123 = vld [vmem:[#allocation2 + $0x1e78] sm:$0xff]
    %v1124 = vld [vmem:[#allocation2 + $0x1e80] sm:$0xff]
    %v1125 = vld [vmem:[#allocation2 + $0x1e88] sm:$0xff]
    %v1126 = vld [vmem:[#allocation2 + $0x1e90] sm:$0xff]
    %v1127 = vld [vmem:[#allocation2 + $0x1e98] sm:$0xff]
    %v1128 = vld [vmem:[#allocation2 + $0x1ea0] sm:$0xff]
    %v1129 = vld [vmem:[#allocation2 + $0x1ea8] sm:$0xff]
    %v1130 = vld [vmem:[#allocation2 + $0x1eb0] sm:$0xff]
    %v1131 = vld [vmem:[#allocation2 + $0x1eb8] sm:$0xff]
    %v1132 = vld [vmem:[#allocation2 + $0x1ec0] sm:$0xff]
    %v1133 = vld [vmem:[#allocation2 + $0x1ec8] sm:$0xff]
    %v1134 = vld [vmem:[#allocation2 + $0x1ed0] sm:$0xff]
    %v1135 = vld [vmem:[#allocation2 + $0x1ed8] sm:$0xff]
    %v1136 = vld [vmem:[#allocation2 + $0x1ee0] sm:$0xff]
    %v1137 = vld [vmem:[#allocation2 + $0x1ee8] sm:$0xff]
    %v1138 = vld [vmem:[#allocation2 + $0x1ef0] sm:$0xff]
    %v1139 = vld [vmem:[#allocation2 + $0x1ef8] sm:$0xff]
    %v1140 = vld [vmem:[#allocation2 + $0x1f00] sm:$0xff]
    %v1141 = vld [vmem:[#allocation2 + $0x1f08] sm:$0xff]
    %v1142 = vld [vmem:[#allocation2 + $0x1f10] sm:$0xff]
    %v1143 = vld [vmem:[#allocation2 + $0x1f18] sm:$0xff]
    %v1144 = vld [vmem:[#allocation2 + $0x1f20] sm:$0xff]
    %v1145 = vld [vmem:[#allocation2 + $0x1f28] sm:$0xff]
    %v1146 = vld [vmem:[#allocation2 + $0x1f30] sm:$0xff]
    %v1147 = vld [vmem:[#allocation2 + $0x1f38] sm:$0xff]
    %v1148 = vld [vmem:[#allocation2 + $0x1f40] sm:$0xff]
    %v1149 = vld [vmem:[#allocation2 + $0x1f48] sm:$0xff]
    %v1150 = vld [vmem:[#allocation2 + $0x1f50] sm:$0xff]
    %v1151 = vld [vmem:[#allocation2 + $0x1f58] sm:$0xff]
    %v1152 = vld [vmem:[#allocation2 + $0x1f60] sm:$0xff]
    %v1153 = vld [vmem:[#allocation2 + $0x1f68] sm:$0xff]
    %v1154 = vld [vmem:[#allocation2 + $0x1f70] sm:$0xff]
    %v1155 = vld [vmem:[#allocation2 + $0x1f78] sm:$0xff]
    %v1156 = vld [vmem:[#allocation2 + $0x1f80] sm:$0xff]
    %v1157 = vld [vmem:[#allocation2 + $0x1f88] sm:$0xff]
    %v1158 = vld [vmem:[#allocation2 + $0x1f90] sm:$0xff]
    %v1159 = vld [vmem:[#allocation2 + $0x1f98] sm:$0xff]
    %v1160 = vld [vmem:[#allocation2 + $0x1fa0] sm:$0xff]
    %v1161 = vld [vmem:[#allocation2 + $0x1fa8] sm:$0xff]
    %v1162 = vld [vmem:[#allocation2 + $0x1fb0] sm:$0xff]
    %v1163 = vld [vmem:[#allocation2 + $0x1fb8] sm:$0xff]
    %v1164 = vld [vmem:[#allocation2 + $0x1fc0] sm:$0xff]
    %v1165 = vld [vmem:[#allocation2 + $0x1fc8] sm:$0xff]
    %v1166 = vld [vmem:[#allocation2 + $0x1fd0] sm:$0xff]
    %v1167 = vld [vmem:[#allocation2 + $0x1fd8] sm:$0xff]
    %v1168 = vld [vmem:[#allocation2 + $0x1fe0] sm:$0xff]
    %v1169 = vld [vmem:[#allocation2 + $0x1fe8] sm:$0xff]
    %v1170 = vld [vmem:[#allocation2 + $0x1ff0] sm:$0xff]
    %v1171 = vld [vmem:[#allocation2 + $0x1ff8] sm:$0xff]
    %v1188 = vunpack.c.l.b16 %v132
    %v1189 = vunpack.c.h.b16 %v132
    %v1190 = vunpack.c.l.b16 %v133
    %v1191 = vunpack.c.h.b16 %v133
    %v1192 = vunpack.c.l.b16 %v134
    %v1193 = vunpack.c.h.b16 %v134
    %v1194 = vunpack.c.l.b16 %v135
    %v1195 = vunpack.c.h.b16 %v135
    %v1196 = vunpack.c.l.b16 %v136
    %v1197 = vunpack.c.h.b16 %v136
    %v1198 = vunpack.c.l.b16 %v137
    %v1199 = vunpack.c.h.b16 %v137
    %v1200 = vunpack.c.l.b16 %v138
    %v1201 = vunpack.c.h.b16 %v138
    %v1202 = vunpack.c.l.b16 %v139
    %v1203 = vunpack.c.h.b16 %v139
    %v1204 = vunpack.c.l.b16 %v140
    %v1205 = vunpack.c.h.b16 %v140
    %v1206 = vunpack.c.l.b16 %v141
    %v1207 = vunpack.c.h.b16 %v141
    %v1208 = vunpack.c.l.b16 %v142
    %v1209 = vunpack.c.h.b16 %v142
    %v1210 = vunpack.c.l.b16 %v143
    %v1211 = vunpack.c.h.b16 %v143
    %v1212 = vunpack.c.l.b16 %v144
    %v1213 = vunpack.c.h.b16 %v144
    %v1214 = vunpack.c.l.b16 %v145
    %v1215 = vunpack.c.h.b16 %v145
    %v1216 = vunpack.c.l.b16 %v146
    %v1217 = vunpack.c.h.b16 %v146
    %v1218 = vunpack.c.l.b16 %v147
    %v1219 = vunpack.c.h.b16 %v147
    %v1220 = vpack.c.b16 %v1204, %v1188
    %v1221 = vpack.c.b16 %v1205, %v1189
    %v1222 = vpack.c.b16 %v1206, %v1190
    %v1223 = vpack.c.b16 %v1207, %v1191
    %v1224 = vpack.c.b16 %v1208, %v1192
    %v1225 = vpack.c.b16 %v1209, %v1193
    %v1226 = vpack.c.b16 %v1210, %v1194
    %v1227 = vpack.c.b16 %v1211, %v1195
    %v1228 = vpack.c.b16 %v1212, %v1196
    %v1229 = vpack.c.b16 %v1213, %v1197
    %v1230 = vpack.c.b16 %v1214, %v1198
    %v1231 = vpack.c.b16 %v1215, %v1199
    %v1232 = vpack.c.b16 %v1216, %v1200
    %v1233 = vpack.c.b16 %v1217, %v1201
    %v1234 = vpack.c.b16 %v1218, %v1202
    %v1235 = vpack.c.b16 %v1219, %v1203
    %v2276 = vunpack.c.l.b16 %v148
    %v2277 = vunpack.c.h.b16 %v148
    %v2278 = vunpack.c.l.b16 %v149
    %v2279 = vunpack.c.h.b16 %v149
    %v2280 = vunpack.c.l.b16 %v150
    %v2281 = vunpack.c.h.b16 %v150
    %v2282 = vunpack.c.l.b16 %v151
    %v2283 = vunpack.c.h.b16 %v151
    %v2284 = vunpack.c.l.b16 %v152
    %v2285 = vunpack.c.h.b16 %v152
    %v2286 = vunpack.c.l.b16 %v153
    %v2287 = vunpack.c.h.b16 %v153
    %v2288 = vunpack.c.l.b16 %v154
    %v2289 = vunpack.c.h.b16 %v154
    %v2290 = vunpack.c.l.b16 %v155
    %v2291 = vunpack.c.h.b16 %v155
    %v2292 = vunpack.c.l.b16 %v156
    %v2293 = vunpack.c.h.b16 %v156
    %v2294 = vunpack.c.l.b16 %v157
    %v2295 = vunpack.c.h.b16 %v157
    %v2296 = vunpack.c.l.b16 %v158
    %v2297 = vunpack.c.h.b16 %v158
    %v2298 = vunpack.c.l.b16 %v159
    %v2299 = vunpack.c.h.b16 %v159
    %v2300 = vunpack.c.l.b16 %v160
    %v2301 = vunpack.c.h.b16 %v160
    %v2302 = vunpack.c.l.b16 %v161
    %v2303 = vunpack.c.h.b16 %v161
    %v2304 = vunpack.c.l.b16 %v162
    %v2305 = vunpack.c.h.b16 %v162
    %v2306 = vunpack.c.l.b16 %v163
    %v2307 = vunpack.c.h.b16 %v163
    %v2308 = vunpack.c.l.b16 %v164
    %v2309 = vunpack.c.h.b16 %v164
    %v2310 = vunpack.c.l.b16 %v165
    %v2311 = vunpack.c.h.b16 %v165
    %v2312 = vunpack.c.l.b16 %v166
    %v2313 = vunpack.c.h.b16 %v166
    %v2314 = vunpack.c.l.b16 %v167
    %v2315 = vunpack.c.h.b16 %v167
    %v2316 = vunpack.c.l.b16 %v168
    %v2317 = vunpack.c.h.b16 %v168
    %v2318 = vunpack.c.l.b16 %v169
    %v2319 = vunpack.c.h.b16 %v169
    %v2320 = vunpack.c.l.b16 %v170
    %v2321 = vunpack.c.h.b16 %v170
    %v2322 = vunpack.c.l.b16 %v171
    %v2323 = vunpack.c.h.b16 %v171
    %v2324 = vunpack.c.l.b16 %v172
    %v2325 = vunpack.c.h.b16 %v172
    %v2326 = vunpack.c.l.b16 %v173
    %v2327 = vunpack.c.h.b16 %v173
    %v2328 = vunpack.c.l.b16 %v174
    %v2329 = vunpack.c.h.b16 %v174
    %v2330 = vunpack.c.l.b16 %v175
    %v2331 = vunpack.c.h.b16 %v175
    %v2332 = vunpack.c.l.b16 %v176
    %v2333 = vunpack.c.h.b16 %v176
    %v2334 = vunpack.c.l.b16 %v177
    %v2335 = vunpack.c.h.b16 %v177
    %v2336 = vunpack.c.l.b16 %v178
    %v2337 = vunpack.c.h.b16 %v178
    %v2338 = vunpack.c.l.b16 %v179
    %v2339 = vunpack.c.h.b16 %v179
    %v2340 = vunpack.c.l.b16 %v180
    %v2341 = vunpack.c.h.b16 %v180
    %v2342 = vunpack.c.l.b16 %v181
    %v2343 = vunpack.c.h.b16 %v181
    %v2344 = vunpack.c.l.b16 %v182
    %v2345 = vunpack.c.h.b16 %v182
    %v2346 = vunpack.c.l.b16 %v183
    %v2347 = vunpack.c.h.b16 %v183
    %v2348 = vunpack.c.l.b16 %v184
    %v2349 = vunpack.c.h.b16 %v184
    %v2350 = vunpack.c.l.b16 %v185
    %v2351 = vunpack.c.h.b16 %v185
    %v2352 = vunpack.c.l.b16 %v186
    %v2353 = vunpack.c.h.b16 %v186
    %v2354 = vunpack.c.l.b16 %v187
    %v2355 = vunpack.c.h.b16 %v187
    %v2356 = vunpack.c.l.b16 %v188
    %v2357 = vunpack.c.h.b16 %v188
    %v2358 = vunpack.c.l.b16 %v189
    %v2359 = vunpack.c.h.b16 %v189
    %v2360 = vunpack.c.l.b16 %v190
    %v2361 = vunpack.c.h.b16 %v190
    %v2362 = vunpack.c.l.b16 %v191
    %v2363 = vunpack.c.h.b16 %v191
    %v2364 = vunpack.c.l.b16 %v192
    %v2365 = vunpack.c.h.b16 %v192
    %v2366 = vunpack.c.l.b16 %v193
    %v2367 = vunpack.c.h.b16 %v193
    %v2368 = vunpack.c.l.b16 %v194
    %v2369 = vunpack.c.h.b16 %v194
    %v2370 = vunpack.c.l.b16 %v195
    %v2371 = vunpack.c.h.b16 %v195
    %v2372 = vunpack.c.l.b16 %v196
    %v2373 = vunpack.c.h.b16 %v196
    %v2374 = vunpack.c.l.b16 %v197
    %v2375 = vunpack.c.h.b16 %v197
    %v2376 = vunpack.c.l.b16 %v198
    %v2377 = vunpack.c.h.b16 %v198
    %v2378 = vunpack.c.l.b16 %v199
    %v2379 = vunpack.c.h.b16 %v199
    %v2380 = vunpack.c.l.b16 %v200
    %v2381 = vunpack.c.h.b16 %v200
    %v2382 = vunpack.c.l.b16 %v201
    %v2383 = vunpack.c.h.b16 %v201
    %v2384 = vunpack.c.l.b16 %v202
    %v2385 = vunpack.c.h.b16 %v202
    %v2386 = vunpack.c.l.b16 %v203
    %v2387 = vunpack.c.h.b16 %v203
    %v2388 = vunpack.c.l.b16 %v204
    %v2389 = vunpack.c.h.b16 %v204
    %v2390 = vunpack.c.l.b16 %v205
    %v2391 = vunpack.c.h.b16 %v205
    %v2392 = vunpack.c.l.b16 %v206
    %v2393 = vunpack.c.h.b16 %v206
    %v2394 = vunpack.c.l.b16 %v207
    %v2395 = vunpack.c.h.b16 %v207
    %v2396 = vunpack.c.l.b16 %v208
    %v2397 = vunpack.c.h.b16 %v208
    %v2398 = vunpack.c.l.b16 %v209
    %v2399 = vunpack.c.h.b16 %v209
    %v2400 = vunpack.c.l.b16 %v210
    %v2401 = vunpack.c.h.b16 %v210
    %v2402 = vunpack.c.l.b16 %v211
    %v2403 = vunpack.c.h.b16 %v211
    %v2404 = vunpack.c.l.b16 %v212
    %v2405 = vunpack.c.h.b16 %v212
    %v2406 = vunpack.c.l.b16 %v213
    %v2407 = vunpack.c.h.b16 %v213
    %v2408 = vunpack.c.l.b16 %v214
    %v2409 = vunpack.c.h.b16 %v214
    %v2410 = vunpack.c.l.b16 %v215
    %v2411 = vunpack.c.h.b16 %v215
    %v2412 = vunpack.c.l.b16 %v216
    %v2413 = vunpack.c.h.b16 %v216
    %v2414 = vunpack.c.l.b16 %v217
    %v2415 = vunpack.c.h.b16 %v217
    %v2416 = vunpack.c.l.b16 %v218
    %v2417 = vunpack.c.h.b16 %v218
    %v2418 = vunpack.c.l.b16 %v219
    %v2419 = vunpack.c.h.b16 %v219
    %v2420 = vunpack.c.l.b16 %v220
    %v2421 = vunpack.c.h.b16 %v220
    %v2422 = vunpack.c.l.b16 %v221
    %v2423 = vunpack.c.h.b16 %v221
    %v2424 = vunpack.c.l.b16 %v222
    %v2425 = vunpack.c.h.b16 %v222
    %v2426 = vunpack.c.l.b16 %v223
    %v2427 = vunpack.c.h.b16 %v223
    %v2428 = vunpack.c.l.b16 %v224
    %v2429 = vunpack.c.h.b16 %v224
    %v2430 = vunpack.c.l.b16 %v225
    %v2431 = vunpack.c.h.b16 %v225
    %v2432 = vunpack.c.l.b16 %v226
    %v2433 = vunpack.c.h.b16 %v226
    %v2434 = vunpack.c.l.b16 %v227
    %v2435 = vunpack.c.h.b16 %v227
    %v2436 = vunpack.c.l.b16 %v228
    %v2437 = vunpack.c.h.b16 %v228
    %v2438 = vunpack.c.l.b16 %v229
    %v2439 = vunpack.c.h.b16 %v229
    %v2440 = vunpack.c.l.b16 %v230
    %v2441 = vunpack.c.h.b16 %v230
    %v2442 = vunpack.c.l.b16 %v231
    %v2443 = vunpack.c.h.b16 %v231
    %v2444 = vunpack.c.l.b16 %v232
    %v2445 = vunpack.c.h.b16 %v232
    %v2446 = vunpack.c.l.b16 %v233
    %v2447 = vunpack.c.h.b16 %v233
    %v2448 = vunpack.c.l.b16 %v234
    %v2449 = vunpack.c.h.b16 %v234
    %v2450 = vunpack.c.l.b16 %v235
    %v2451 = vunpack.c.h.b16 %v235
    %v2452 = vunpack.c.l.b16 %v236
    %v2453 = vunpack.c.h.b16 %v236
    %v2454 = vunpack.c.l.b16 %v237
    %v2455 = vunpack.c.h.b16 %v237
    %v2456 = vunpack.c.l.b16 %v238
    %v2457 = vunpack.c.h.b16 %v238
    %v2458 = vunpack.c.l.b16 %v239
    %v2459 = vunpack.c.h.b16 %v239
    %v2460 = vunpack.c.l.b16 %v240
    %v2461 = vunpack.c.h.b16 %v240
    %v2462 = vunpack.c.l.b16 %v241
    %v2463 = vunpack.c.h.b16 %v241
    %v2464 = vunpack.c.l.b16 %v242
    %v2465 = vunpack.c.h.b16 %v242
    %v2466 = vunpack.c.l.b16 %v243
    %v2467 = vunpack.c.h.b16 %v243
    %v2468 = vunpack.c.l.b16 %v244
    %v2469 = vunpack.c.h.b16 %v244
    %v2470 = vunpack.c.l.b16 %v245
    %v2471 = vunpack.c.h.b16 %v245
    %v2472 = vunpack.c.l.b16 %v246
    %v2473 = vunpack.c.h.b16 %v246
    %v2474 = vunpack.c.l.b16 %v247
    %v2475 = vunpack.c.h.b16 %v247
    %v2476 = vunpack.c.l.b16 %v248
    %v2477 = vunpack.c.h.b16 %v248
    %v2478 = vunpack.c.l.b16 %v249
    %v2479 = vunpack.c.h.b16 %v249
    %v2480 = vunpack.c.l.b16 %v250
    %v2481 = vunpack.c.h.b16 %v250
    %v2482 = vunpack.c.l.b16 %v251
    %v2483 = vunpack.c.h.b16 %v251
    %v2484 = vunpack.c.l.b16 %v252
    %v2485 = vunpack.c.h.b16 %v252
    %v2486 = vunpack.c.l.b16 %v253
    %v2487 = vunpack.c.h.b16 %v253
    %v2488 = vunpack.c.l.b16 %v254
    %v2489 = vunpack.c.h.b16 %v254
    %v2490 = vunpack.c.l.b16 %v255
    %v2491 = vunpack.c.h.b16 %v255
    %v2492 = vunpack.c.l.b16 %v256
    %v2493 = vunpack.c.h.b16 %v256
    %v2494 = vunpack.c.l.b16 %v257
    %v2495 = vunpack.c.h.b16 %v257
    %v2496 = vunpack.c.l.b16 %v258
    %v2497 = vunpack.c.h.b16 %v258
    %v2498 = vunpack.c.l.b16 %v259
    %v2499 = vunpack.c.h.b16 %v259
    %v2500 = vunpack.c.l.b16 %v260
    %v2501 = vunpack.c.h.b16 %v260
    %v2502 = vunpack.c.l.b16 %v261
    %v2503 = vunpack.c.h.b16 %v261
    %v2504 = vunpack.c.l.b16 %v262
    %v2505 = vunpack.c.h.b16 %v262
    %v2506 = vunpack.c.l.b16 %v263
    %v2507 = vunpack.c.h.b16 %v263
    %v2508 = vunpack.c.l.b16 %v264
    %v2509 = vunpack.c.h.b16 %v264
    %v2510 = vunpack.c.l.b16 %v265
    %v2511 = vunpack.c.h.b16 %v265
    %v2512 = vunpack.c.l.b16 %v266
    %v2513 = vunpack.c.h.b16 %v266
    %v2514 = vunpack.c.l.b16 %v267
    %v2515 = vunpack.c.h.b16 %v267
    %v2516 = vunpack.c.l.b16 %v268
    %v2517 = vunpack.c.h.b16 %v268
    %v2518 = vunpack.c.l.b16 %v269
    %v2519 = vunpack.c.h.b16 %v269
    %v2520 = vunpack.c.l.b16 %v270
    %v2521 = vunpack.c.h.b16 %v270
    %v2522 = vunpack.c.l.b16 %v271
    %v2523 = vunpack.c.h.b16 %v271
    %v2524 = vunpack.c.l.b16 %v272
    %v2525 = vunpack.c.h.b16 %v272
    %v2526 = vunpack.c.l.b16 %v273
    %v2527 = vunpack.c.h.b16 %v273
    %v2528 = vunpack.c.l.b16 %v274
    %v2529 = vunpack.c.h.b16 %v274
    %v2530 = vunpack.c.l.b16 %v275
    %v2531 = vunpack.c.h.b16 %v275
    %v2532 = vunpack.c.l.b16 %v276
    %v2533 = vunpack.c.h.b16 %v276
    %v2534 = vunpack.c.l.b16 %v277
    %v2535 = vunpack.c.h.b16 %v277
    %v2536 = vunpack.c.l.b16 %v278
    %v2537 = vunpack.c.h.b16 %v278
    %v2538 = vunpack.c.l.b16 %v279
    %v2539 = vunpack.c.h.b16 %v279
    %v2540 = vunpack.c.l.b16 %v280
    %v2541 = vunpack.c.h.b16 %v280
    %v2542 = vunpack.c.l.b16 %v281
    %v2543 = vunpack.c.h.b16 %v281
    %v2544 = vunpack.c.l.b16 %v282
    %v2545 = vunpack.c.h.b16 %v282
    %v2546 = vunpack.c.l.b16 %v283
    %v2547 = vunpack.c.h.b16 %v283
    %v2548 = vunpack.c.l.b16 %v284
    %v2549 = vunpack.c.h.b16 %v284
    %v2550 = vunpack.c.l.b16 %v285
    %v2551 = vunpack.c.h.b16 %v285
    %v2552 = vunpack.c.l.b16 %v286
    %v2553 = vunpack.c.h.b16 %v286
    %v2554 = vunpack.c.l.b16 %v287
    %v2555 = vunpack.c.h.b16 %v287
    %v2556 = vunpack.c.l.b16 %v288
    %v2557 = vunpack.c.h.b16 %v288
    %v2558 = vunpack.c.l.b16 %v289
    %v2559 = vunpack.c.h.b16 %v289
    %v2560 = vunpack.c.l.b16 %v290
    %v2561 = vunpack.c.h.b16 %v290
    %v2562 = vunpack.c.l.b16 %v291
    %v2563 = vunpack.c.h.b16 %v291
    %v2564 = vunpack.c.l.b16 %v292
    %v2565 = vunpack.c.h.b16 %v292
    %v2566 = vunpack.c.l.b16 %v293
    %v2567 = vunpack.c.h.b16 %v293
    %v2568 = vunpack.c.l.b16 %v294
    %v2569 = vunpack.c.h.b16 %v294
    %v2570 = vunpack.c.l.b16 %v295
    %v2571 = vunpack.c.h.b16 %v295
    %v2572 = vunpack.c.l.b16 %v296
    %v2573 = vunpack.c.h.b16 %v296
    %v2574 = vunpack.c.l.b16 %v297
    %v2575 = vunpack.c.h.b16 %v297
    %v2576 = vunpack.c.l.b16 %v298
    %v2577 = vunpack.c.h.b16 %v298
    %v2578 = vunpack.c.l.b16 %v299
    %v2579 = vunpack.c.h.b16 %v299
    %v2580 = vunpack.c.l.b16 %v300
    %v2581 = vunpack.c.h.b16 %v300
    %v2582 = vunpack.c.l.b16 %v301
    %v2583 = vunpack.c.h.b16 %v301
    %v2584 = vunpack.c.l.b16 %v302
    %v2585 = vunpack.c.h.b16 %v302
    %v2586 = vunpack.c.l.b16 %v303
    %v2587 = vunpack.c.h.b16 %v303
    %v2588 = vunpack.c.l.b16 %v304
    %v2589 = vunpack.c.h.b16 %v304
    %v2590 = vunpack.c.l.b16 %v305
    %v2591 = vunpack.c.h.b16 %v305
    %v2592 = vunpack.c.l.b16 %v306
    %v2593 = vunpack.c.h.b16 %v306
    %v2594 = vunpack.c.l.b16 %v307
    %v2595 = vunpack.c.h.b16 %v307
    %v2596 = vunpack.c.l.b16 %v308
    %v2597 = vunpack.c.h.b16 %v308
    %v2598 = vunpack.c.l.b16 %v309
    %v2599 = vunpack.c.h.b16 %v309
    %v2600 = vunpack.c.l.b16 %v310
    %v2601 = vunpack.c.h.b16 %v310
    %v2602 = vunpack.c.l.b16 %v311
    %v2603 = vunpack.c.h.b16 %v311
    %v2604 = vunpack.c.l.b16 %v312
    %v2605 = vunpack.c.h.b16 %v312
    %v2606 = vunpack.c.l.b16 %v313
    %v2607 = vunpack.c.h.b16 %v313
    %v2608 = vunpack.c.l.b16 %v314
    %v2609 = vunpack.c.h.b16 %v314
    %v2610 = vunpack.c.l.b16 %v315
    %v2611 = vunpack.c.h.b16 %v315
    %v2612 = vunpack.c.l.b16 %v316
    %v2613 = vunpack.c.h.b16 %v316
    %v2614 = vunpack.c.l.b16 %v317
    %v2615 = vunpack.c.h.b16 %v317
    %v2616 = vunpack.c.l.b16 %v318
    %v2617 = vunpack.c.h.b16 %v318
    %v2618 = vunpack.c.l.b16 %v319
    %v2619 = vunpack.c.h.b16 %v319
    %v2620 = vunpack.c.l.b16 %v320
    %v2621 = vunpack.c.h.b16 %v320
    %v2622 = vunpack.c.l.b16 %v321
    %v2623 = vunpack.c.h.b16 %v321
    %v2624 = vunpack.c.l.b16 %v322
    %v2625 = vunpack.c.h.b16 %v322
    %v2626 = vunpack.c.l.b16 %v323
    %v2627 = vunpack.c.h.b16 %v323
    %v2628 = vunpack.c.l.b16 %v324
    %v2629 = vunpack.c.h.b16 %v324
    %v2630 = vunpack.c.l.b16 %v325
    %v2631 = vunpack.c.h.b16 %v325
    %v2632 = vunpack.c.l.b16 %v326
    %v2633 = vunpack.c.h.b16 %v326
    %v2634 = vunpack.c.l.b16 %v327
    %v2635 = vunpack.c.h.b16 %v327
    %v2636 = vunpack.c.l.b16 %v328
    %v2637 = vunpack.c.h.b16 %v328
    %v2638 = vunpack.c.l.b16 %v329
    %v2639 = vunpack.c.h.b16 %v329
    %v2640 = vunpack.c.l.b16 %v330
    %v2641 = vunpack.c.h.b16 %v330
    %v2642 = vunpack.c.l.b16 %v331
    %v2643 = vunpack.c.h.b16 %v331
    %v2644 = vunpack.c.l.b16 %v332
    %v2645 = vunpack.c.h.b16 %v332
    %v2646 = vunpack.c.l.b16 %v333
    %v2647 = vunpack.c.h.b16 %v333
    %v2648 = vunpack.c.l.b16 %v334
    %v2649 = vunpack.c.h.b16 %v334
    %v2650 = vunpack.c.l.b16 %v335
    %v2651 = vunpack.c.h.b16 %v335
    %v2652 = vunpack.c.l.b16 %v336
    %v2653 = vunpack.c.h.b16 %v336
    %v2654 = vunpack.c.l.b16 %v337
    %v2655 = vunpack.c.h.b16 %v337
    %v2656 = vunpack.c.l.b16 %v338
    %v2657 = vunpack.c.h.b16 %v338
    %v2658 = vunpack.c.l.b16 %v339
    %v2659 = vunpack.c.h.b16 %v339
    %v2660 = vunpack.c.l.b16 %v340
    %v2661 = vunpack.c.h.b16 %v340
    %v2662 = vunpack.c.l.b16 %v341
    %v2663 = vunpack.c.h.b16 %v341
    %v2664 = vunpack.c.l.b16 %v342
    %v2665 = vunpack.c.h.b16 %v342
    %v2666 = vunpack.c.l.b16 %v343
    %v2667 = vunpack.c.h.b16 %v343
    %v2668 = vunpack.c.l.b16 %v344
    %v2669 = vunpack.c.h.b16 %v344
    %v2670 = vunpack.c.l.b16 %v345
    %v2671 = vunpack.c.h.b16 %v345
    %v2672 = vunpack.c.l.b16 %v346
    %v2673 = vunpack.c.h.b16 %v346
    %v2674 = vunpack.c.l.b16 %v347
    %v2675 = vunpack.c.h.b16 %v347
    %v2676 = vunpack.c.l.b16 %v348
    %v2677 = vunpack.c.h.b16 %v348
    %v2678 = vunpack.c.l.b16 %v349
    %v2679 = vunpack.c.h.b16 %v349
    %v2680 = vunpack.c.l.b16 %v350
    %v2681 = vunpack.c.h.b16 %v350
    %v2682 = vunpack.c.l.b16 %v351
    %v2683 = vunpack.c.h.b16 %v351
    %v2684 = vunpack.c.l.b16 %v352
    %v2685 = vunpack.c.h.b16 %v352
    %v2686 = vunpack.c.l.b16 %v353
    %v2687 = vunpack.c.h.b16 %v353
    %v2688 = vunpack.c.l.b16 %v354
    %v2689 = vunpack.c.h.b16 %v354
    %v2690 = vunpack.c.l.b16 %v355
    %v2691 = vunpack.c.h.b16 %v355
    %v2692 = vunpack.c.l.b16 %v356
    %v2693 = vunpack.c.h.b16 %v356
    %v2694 = vunpack.c.l.b16 %v357
    %v2695 = vunpack.c.h.b16 %v357
    %v2696 = vunpack.c.l.b16 %v358
    %v2697 = vunpack.c.h.b16 %v358
    %v2698 = vunpack.c.l.b16 %v359
    %v2699 = vunpack.c.h.b16 %v359
    %v2700 = vunpack.c.l.b16 %v360
    %v2701 = vunpack.c.h.b16 %v360
    %v2702 = vunpack.c.l.b16 %v361
    %v2703 = vunpack.c.h.b16 %v361
    %v2704 = vunpack.c.l.b16 %v362
    %v2705 = vunpack.c.h.b16 %v362
    %v2706 = vunpack.c.l.b16 %v363
    %v2707 = vunpack.c.h.b16 %v363
    %v2708 = vunpack.c.l.b16 %v364
    %v2709 = vunpack.c.h.b16 %v364
    %v2710 = vunpack.c.l.b16 %v365
    %v2711 = vunpack.c.h.b16 %v365
    %v2712 = vunpack.c.l.b16 %v366
    %v2713 = vunpack.c.h.b16 %v366
    %v2714 = vunpack.c.l.b16 %v367
    %v2715 = vunpack.c.h.b16 %v367
    %v2716 = vunpack.c.l.b16 %v368
    %v2717 = vunpack.c.h.b16 %v368
    %v2718 = vunpack.c.l.b16 %v369
    %v2719 = vunpack.c.h.b16 %v369
    %v2720 = vunpack.c.l.b16 %v370
    %v2721 = vunpack.c.h.b16 %v370
    %v2722 = vunpack.c.l.b16 %v371
    %v2723 = vunpack.c.h.b16 %v371
    %v2724 = vunpack.c.l.b16 %v372
    %v2725 = vunpack.c.h.b16 %v372
    %v2726 = vunpack.c.l.b16 %v373
    %v2727 = vunpack.c.h.b16 %v373
    %v2728 = vunpack.c.l.b16 %v374
    %v2729 = vunpack.c.h.b16 %v374
    %v2730 = vunpack.c.l.b16 %v375
    %v2731 = vunpack.c.h.b16 %v375
    %v2732 = vunpack.c.l.b16 %v376
    %v2733 = vunpack.c.h.b16 %v376
    %v2734 = vunpack.c.l.b16 %v377
    %v2735 = vunpack.c.h.b16 %v377
    %v2736 = vunpack.c.l.b16 %v378
    %v2737 = vunpack.c.h.b16 %v378
    %v2738 = vunpack.c.l.b16 %v379
    %v2739 = vunpack.c.h.b16 %v379
    %v2740 = vunpack.c.l.b16 %v380
    %v2741 = vunpack.c.h.b16 %v380
    %v2742 = vunpack.c.l.b16 %v381
    %v2743 = vunpack.c.h.b16 %v381
    %v2744 = vunpack.c.l.b16 %v382
    %v2745 = vunpack.c.h.b16 %v382
    %v2746 = vunpack.c.l.b16 %v383
    %v2747 = vunpack.c.h.b16 %v383
    %v2748 = vunpack.c.l.b16 %v384
    %v2749 = vunpack.c.h.b16 %v384
    %v2750 = vunpack.c.l.b16 %v385
    %v2751 = vunpack.c.h.b16 %v385
    %v2752 = vunpack.c.l.b16 %v386
    %v2753 = vunpack.c.h.b16 %v386
    %v2754 = vunpack.c.l.b16 %v387
    %v2755 = vunpack.c.h.b16 %v387
    %v2756 = vunpack.c.l.b16 %v388
    %v2757 = vunpack.c.h.b16 %v388
    %v2758 = vunpack.c.l.b16 %v389
    %v2759 = vunpack.c.h.b16 %v389
    %v2760 = vunpack.c.l.b16 %v390
    %v2761 = vunpack.c.h.b16 %v390
    %v2762 = vunpack.c.l.b16 %v391
    %v2763 = vunpack.c.h.b16 %v391
    %v2764 = vunpack.c.l.b16 %v392
    %v2765 = vunpack.c.h.b16 %v392
    %v2766 = vunpack.c.l.b16 %v393
    %v2767 = vunpack.c.h.b16 %v393
    %v2768 = vunpack.c.l.b16 %v394
    %v2769 = vunpack.c.h.b16 %v394
    %v2770 = vunpack.c.l.b16 %v395
    %v2771 = vunpack.c.h.b16 %v395
    %v2772 = vunpack.c.l.b16 %v396
    %v2773 = vunpack.c.h.b16 %v396
    %v2774 = vunpack.c.l.b16 %v397
    %v2775 = vunpack.c.h.b16 %v397
    %v2776 = vunpack.c.l.b16 %v398
    %v2777 = vunpack.c.h.b16 %v398
    %v2778 = vunpack.c.l.b16 %v399
    %v2779 = vunpack.c.h.b16 %v399
    %v2780 = vunpack.c.l.b16 %v400
    %v2781 = vunpack.c.h.b16 %v400
    %v2782 = vunpack.c.l.b16 %v401
    %v2783 = vunpack.c.h.b16 %v401
    %v2784 = vunpack.c.l.b16 %v402
    %v2785 = vunpack.c.h.b16 %v402
    %v2786 = vunpack.c.l.b16 %v403
    %v2787 = vunpack.c.h.b16 %v403
    %v2788 = vunpack.c.l.b16 %v404
    %v2789 = vunpack.c.h.b16 %v404
    %v2790 = vunpack.c.l.b16 %v405
    %v2791 = vunpack.c.h.b16 %v405
    %v2792 = vunpack.c.l.b16 %v406
    %v2793 = vunpack.c.h.b16 %v406
    %v2794 = vunpack.c.l.b16 %v407
    %v2795 = vunpack.c.h.b16 %v407
    %v2796 = vunpack.c.l.b16 %v408
    %v2797 = vunpack.c.h.b16 %v408
    %v2798 = vunpack.c.l.b16 %v409
    %v2799 = vunpack.c.h.b16 %v409
    %v2800 = vunpack.c.l.b16 %v410
    %v2801 = vunpack.c.h.b16 %v410
    %v2802 = vunpack.c.l.b16 %v411
    %v2803 = vunpack.c.h.b16 %v411
    %v2804 = vunpack.c.l.b16 %v412
    %v2805 = vunpack.c.h.b16 %v412
    %v2806 = vunpack.c.l.b16 %v413
    %v2807 = vunpack.c.h.b16 %v413
    %v2808 = vunpack.c.l.b16 %v414
    %v2809 = vunpack.c.h.b16 %v414
    %v2810 = vunpack.c.l.b16 %v415
    %v2811 = vunpack.c.h.b16 %v415
    %v2812 = vunpack.c.l.b16 %v416
    %v2813 = vunpack.c.h.b16 %v416
    %v2814 = vunpack.c.l.b16 %v417
    %v2815 = vunpack.c.h.b16 %v417
    %v2816 = vunpack.c.l.b16 %v418
    %v2817 = vunpack.c.h.b16 %v418
    %v2818 = vunpack.c.l.b16 %v419
    %v2819 = vunpack.c.h.b16 %v419
    %v2820 = vunpack.c.l.b16 %v420
    %v2821 = vunpack.c.h.b16 %v420
    %v2822 = vunpack.c.l.b16 %v421
    %v2823 = vunpack.c.h.b16 %v421
    %v2824 = vunpack.c.l.b16 %v422
    %v2825 = vunpack.c.h.b16 %v422
    %v2826 = vunpack.c.l.b16 %v423
    %v2827 = vunpack.c.h.b16 %v423
    %v2828 = vunpack.c.l.b16 %v424
    %v2829 = vunpack.c.h.b16 %v424
    %v2830 = vunpack.c.l.b16 %v425
    %v2831 = vunpack.c.h.b16 %v425
    %v2832 = vunpack.c.l.b16 %v426
    %v2833 = vunpack.c.h.b16 %v426
    %v2834 = vunpack.c.l.b16 %v427
    %v2835 = vunpack.c.h.b16 %v427
    %v2836 = vunpack.c.l.b16 %v428
    %v2837 = vunpack.c.h.b16 %v428
    %v2838 = vunpack.c.l.b16 %v429
    %v2839 = vunpack.c.h.b16 %v429
    %v2840 = vunpack.c.l.b16 %v430
    %v2841 = vunpack.c.h.b16 %v430
    %v2842 = vunpack.c.l.b16 %v431
    %v2843 = vunpack.c.h.b16 %v431
    %v2844 = vunpack.c.l.b16 %v432
    %v2845 = vunpack.c.h.b16 %v432
    %v2846 = vunpack.c.l.b16 %v433
    %v2847 = vunpack.c.h.b16 %v433
    %v2848 = vunpack.c.l.b16 %v434
    %v2849 = vunpack.c.h.b16 %v434
    %v2850 = vunpack.c.l.b16 %v435
    %v2851 = vunpack.c.h.b16 %v435
    %v2852 = vunpack.c.l.b16 %v436
    %v2853 = vunpack.c.h.b16 %v436
    %v2854 = vunpack.c.l.b16 %v437
    %v2855 = vunpack.c.h.b16 %v437
    %v2856 = vunpack.c.l.b16 %v438
    %v2857 = vunpack.c.h.b16 %v438
    %v2858 = vunpack.c.l.b16 %v439
    %v2859 = vunpack.c.h.b16 %v439
    %v2860 = vunpack.c.l.b16 %v440
    %v2861 = vunpack.c.h.b16 %v440
    %v2862 = vunpack.c.l.b16 %v441
    %v2863 = vunpack.c.h.b16 %v441
    %v2864 = vunpack.c.l.b16 %v442
    %v2865 = vunpack.c.h.b16 %v442
    %v2866 = vunpack.c.l.b16 %v443
    %v2867 = vunpack.c.h.b16 %v443
    %v2868 = vunpack.c.l.b16 %v444
    %v2869 = vunpack.c.h.b16 %v444
    %v2870 = vunpack.c.l.b16 %v445
    %v2871 = vunpack.c.h.b16 %v445
    %v2872 = vunpack.c.l.b16 %v446
    %v2873 = vunpack.c.h.b16 %v446
    %v2874 = vunpack.c.l.b16 %v447
    %v2875 = vunpack.c.h.b16 %v447
    %v2876 = vunpack.c.l.b16 %v448
    %v2877 = vunpack.c.h.b16 %v448
    %v2878 = vunpack.c.l.b16 %v449
    %v2879 = vunpack.c.h.b16 %v449
    %v2880 = vunpack.c.l.b16 %v450
    %v2881 = vunpack.c.h.b16 %v450
    %v2882 = vunpack.c.l.b16 %v451
    %v2883 = vunpack.c.h.b16 %v451
    %v2884 = vunpack.c.l.b16 %v452
    %v2885 = vunpack.c.h.b16 %v452
    %v2886 = vunpack.c.l.b16 %v453
    %v2887 = vunpack.c.h.b16 %v453
    %v2888 = vunpack.c.l.b16 %v454
    %v2889 = vunpack.c.h.b16 %v454
    %v2890 = vunpack.c.l.b16 %v455
    %v2891 = vunpack.c.h.b16 %v455
    %v2892 = vunpack.c.l.b16 %v456
    %v2893 = vunpack.c.h.b16 %v456
    %v2894 = vunpack.c.l.b16 %v457
    %v2895 = vunpack.c.h.b16 %v457
    %v2896 = vunpack.c.l.b16 %v458
    %v2897 = vunpack.c.h.b16 %v458
    %v2898 = vunpack.c.l.b16 %v459
    %v2899 = vunpack.c.h.b16 %v459
    %v2900 = vunpack.c.l.b16 %v460
    %v2901 = vunpack.c.h.b16 %v460
    %v2902 = vunpack.c.l.b16 %v461
    %v2903 = vunpack.c.h.b16 %v461
    %v2904 = vunpack.c.l.b16 %v462
    %v2905 = vunpack.c.h.b16 %v462
    %v2906 = vunpack.c.l.b16 %v463
    %v2907 = vunpack.c.h.b16 %v463
    %v2908 = vunpack.c.l.b16 %v464
    %v2909 = vunpack.c.h.b16 %v464
    %v2910 = vunpack.c.l.b16 %v465
    %v2911 = vunpack.c.h.b16 %v465
    %v2912 = vunpack.c.l.b16 %v466
    %v2913 = vunpack.c.h.b16 %v466
    %v2914 = vunpack.c.l.b16 %v467
    %v2915 = vunpack.c.h.b16 %v467
    %v2916 = vunpack.c.l.b16 %v468
    %v2917 = vunpack.c.h.b16 %v468
    %v2918 = vunpack.c.l.b16 %v469
    %v2919 = vunpack.c.h.b16 %v469
    %v2920 = vunpack.c.l.b16 %v470
    %v2921 = vunpack.c.h.b16 %v470
    %v2922 = vunpack.c.l.b16 %v471
    %v2923 = vunpack.c.h.b16 %v471
    %v2924 = vunpack.c.l.b16 %v472
    %v2925 = vunpack.c.h.b16 %v472
    %v2926 = vunpack.c.l.b16 %v473
    %v2927 = vunpack.c.h.b16 %v473
    %v2928 = vunpack.c.l.b16 %v474
    %v2929 = vunpack.c.h.b16 %v474
    %v2930 = vunpack.c.l.b16 %v475
    %v2931 = vunpack.c.h.b16 %v475
    %v2932 = vunpack.c.l.b16 %v476
    %v2933 = vunpack.c.h.b16 %v476
    %v2934 = vunpack.c.l.b16 %v477
    %v2935 = vunpack.c.h.b16 %v477
    %v2936 = vunpack.c.l.b16 %v478
    %v2937 = vunpack.c.h.b16 %v478
    %v2938 = vunpack.c.l.b16 %v479
    %v2939 = vunpack.c.h.b16 %v479
    %v2940 = vunpack.c.l.b16 %v480
    %v2941 = vunpack.c.h.b16 %v480
    %v2942 = vunpack.c.l.b16 %v481
    %v2943 = vunpack.c.h.b16 %v481
    %v2944 = vunpack.c.l.b16 %v482
    %v2945 = vunpack.c.h.b16 %v482
    %v2946 = vunpack.c.l.b16 %v483
    %v2947 = vunpack.c.h.b16 %v483
    %v2948 = vunpack.c.l.b16 %v484
    %v2949 = vunpack.c.h.b16 %v484
    %v2950 = vunpack.c.l.b16 %v485
    %v2951 = vunpack.c.h.b16 %v485
    %v2952 = vunpack.c.l.b16 %v486
    %v2953 = vunpack.c.h.b16 %v486
    %v2954 = vunpack.c.l.b16 %v487
    %v2955 = vunpack.c.h.b16 %v487
    %v2956 = vunpack.c.l.b16 %v488
    %v2957 = vunpack.c.h.b16 %v488
    %v2958 = vunpack.c.l.b16 %v489
    %v2959 = vunpack.c.h.b16 %v489
    %v2960 = vunpack.c.l.b16 %v490
    %v2961 = vunpack.c.h.b16 %v490
    %v2962 = vunpack.c.l.b16 %v491
    %v2963 = vunpack.c.h.b16 %v491
    %v2964 = vunpack.c.l.b16 %v492
    %v2965 = vunpack.c.h.b16 %v492
    %v2966 = vunpack.c.l.b16 %v493
    %v2967 = vunpack.c.h.b16 %v493
    %v2968 = vunpack.c.l.b16 %v494
    %v2969 = vunpack.c.h.b16 %v494
    %v2970 = vunpack.c.l.b16 %v495
    %v2971 = vunpack.c.h.b16 %v495
    %v2972 = vunpack.c.l.b16 %v496
    %v2973 = vunpack.c.h.b16 %v496
    %v2974 = vunpack.c.l.b16 %v497
    %v2975 = vunpack.c.h.b16 %v497
    %v2976 = vunpack.c.l.b16 %v498
    %v2977 = vunpack.c.h.b16 %v498
    %v2978 = vunpack.c.l.b16 %v499
    %v2979 = vunpack.c.h.b16 %v499
    %v2980 = vunpack.c.l.b16 %v500
    %v2981 = vunpack.c.h.b16 %v500
    %v2982 = vunpack.c.l.b16 %v501
    %v2983 = vunpack.c.h.b16 %v501
    %v2984 = vunpack.c.l.b16 %v502
    %v2985 = vunpack.c.h.b16 %v502
    %v2986 = vunpack.c.l.b16 %v503
    %v2987 = vunpack.c.h.b16 %v503
    %v2988 = vunpack.c.l.b16 %v504
    %v2989 = vunpack.c.h.b16 %v504
    %v2990 = vunpack.c.l.b16 %v505
    %v2991 = vunpack.c.h.b16 %v505
    %v2992 = vunpack.c.l.b16 %v506
    %v2993 = vunpack.c.h.b16 %v506
    %v2994 = vunpack.c.l.b16 %v507
    %v2995 = vunpack.c.h.b16 %v507
    %v2996 = vunpack.c.l.b16 %v508
    %v2997 = vunpack.c.h.b16 %v508
    %v2998 = vunpack.c.l.b16 %v509
    %v2999 = vunpack.c.h.b16 %v509
    %v3000 = vunpack.c.l.b16 %v510
    %v3001 = vunpack.c.h.b16 %v510
    %v3002 = vunpack.c.l.b16 %v511
    %v3003 = vunpack.c.h.b16 %v511
    %v3004 = vunpack.c.l.b16 %v512
    %v3005 = vunpack.c.h.b16 %v512
    %v3006 = vunpack.c.l.b16 %v513
    %v3007 = vunpack.c.h.b16 %v513
    %v3008 = vunpack.c.l.b16 %v514
    %v3009 = vunpack.c.h.b16 %v514
    %v3010 = vunpack.c.l.b16 %v515
    %v3011 = vunpack.c.h.b16 %v515
    %v3012 = vunpack.c.l.b16 %v516
    %v3013 = vunpack.c.h.b16 %v516
    %v3014 = vunpack.c.l.b16 %v517
    %v3015 = vunpack.c.h.b16 %v517
    %v3016 = vunpack.c.l.b16 %v518
    %v3017 = vunpack.c.h.b16 %v518
    %v3018 = vunpack.c.l.b16 %v519
    %v3019 = vunpack.c.h.b16 %v519
    %v3020 = vunpack.c.l.b16 %v520
    %v3021 = vunpack.c.h.b16 %v520
    %v3022 = vunpack.c.l.b16 %v521
    %v3023 = vunpack.c.h.b16 %v521
    %v3024 = vunpack.c.l.b16 %v522
    %v3025 = vunpack.c.h.b16 %v522
    %v3026 = vunpack.c.l.b16 %v523
    %v3027 = vunpack.c.h.b16 %v523
    %v3028 = vunpack.c.l.b16 %v524
    %v3029 = vunpack.c.h.b16 %v524
    %v3030 = vunpack.c.l.b16 %v525
    %v3031 = vunpack.c.h.b16 %v525
    %v3032 = vunpack.c.l.b16 %v526
    %v3033 = vunpack.c.h.b16 %v526
    %v3034 = vunpack.c.l.b16 %v527
    %v3035 = vunpack.c.h.b16 %v527
    %v3036 = vunpack.c.l.b16 %v528
    %v3037 = vunpack.c.h.b16 %v528
    %v3038 = vunpack.c.l.b16 %v529
    %v3039 = vunpack.c.h.b16 %v529
    %v3040 = vunpack.c.l.b16 %v530
    %v3041 = vunpack.c.h.b16 %v530
    %v3042 = vunpack.c.l.b16 %v531
    %v3043 = vunpack.c.h.b16 %v531
    %v3044 = vunpack.c.l.b16 %v532
    %v3045 = vunpack.c.h.b16 %v532
    %v3046 = vunpack.c.l.b16 %v533
    %v3047 = vunpack.c.h.b16 %v533
    %v3048 = vunpack.c.l.b16 %v534
    %v3049 = vunpack.c.h.b16 %v534
    %v3050 = vunpack.c.l.b16 %v535
    %v3051 = vunpack.c.h.b16 %v535
    %v3052 = vunpack.c.l.b16 %v536
    %v3053 = vunpack.c.h.b16 %v536
    %v3054 = vunpack.c.l.b16 %v537
    %v3055 = vunpack.c.h.b16 %v537
    %v3056 = vunpack.c.l.b16 %v538
    %v3057 = vunpack.c.h.b16 %v538
    %v3058 = vunpack.c.l.b16 %v539
    %v3059 = vunpack.c.h.b16 %v539
    %v3060 = vunpack.c.l.b16 %v540
    %v3061 = vunpack.c.h.b16 %v540
    %v3062 = vunpack.c.l.b16 %v541
    %v3063 = vunpack.c.h.b16 %v541
    %v3064 = vunpack.c.l.b16 %v542
    %v3065 = vunpack.c.h.b16 %v542
    %v3066 = vunpack.c.l.b16 %v543
    %v3067 = vunpack.c.h.b16 %v543
    %v3068 = vunpack.c.l.b16 %v544
    %v3069 = vunpack.c.h.b16 %v544
    %v3070 = vunpack.c.l.b16 %v545
    %v3071 = vunpack.c.h.b16 %v545
    %v3072 = vunpack.c.l.b16 %v546
    %v3073 = vunpack.c.h.b16 %v546
    %v3074 = vunpack.c.l.b16 %v547
    %v3075 = vunpack.c.h.b16 %v547
    %v3076 = vunpack.c.l.b16 %v548
    %v3077 = vunpack.c.h.b16 %v548
    %v3078 = vunpack.c.l.b16 %v549
    %v3079 = vunpack.c.h.b16 %v549
    %v3080 = vunpack.c.l.b16 %v550
    %v3081 = vunpack.c.h.b16 %v550
    %v3082 = vunpack.c.l.b16 %v551
    %v3083 = vunpack.c.h.b16 %v551
    %v3084 = vunpack.c.l.b16 %v552
    %v3085 = vunpack.c.h.b16 %v552
    %v3086 = vunpack.c.l.b16 %v553
    %v3087 = vunpack.c.h.b16 %v553
    %v3088 = vunpack.c.l.b16 %v554
    %v3089 = vunpack.c.h.b16 %v554
    %v3090 = vunpack.c.l.b16 %v555
    %v3091 = vunpack.c.h.b16 %v555
    %v3092 = vunpack.c.l.b16 %v556
    %v3093 = vunpack.c.h.b16 %v556
    %v3094 = vunpack.c.l.b16 %v557
    %v3095 = vunpack.c.h.b16 %v557
    %v3096 = vunpack.c.l.b16 %v558
    %v3097 = vunpack.c.h.b16 %v558
    %v3098 = vunpack.c.l.b16 %v559
    %v3099 = vunpack.c.h.b16 %v559
    %v3100 = vunpack.c.l.b16 %v560
    %v3101 = vunpack.c.h.b16 %v560
    %v3102 = vunpack.c.l.b16 %v561
    %v3103 = vunpack.c.h.b16 %v561
    %v3104 = vunpack.c.l.b16 %v562
    %v3105 = vunpack.c.h.b16 %v562
    %v3106 = vunpack.c.l.b16 %v563
    %v3107 = vunpack.c.h.b16 %v563
    %v3108 = vunpack.c.l.b16 %v564
    %v3109 = vunpack.c.h.b16 %v564
    %v3110 = vunpack.c.l.b16 %v565
    %v3111 = vunpack.c.h.b16 %v565
    %v3112 = vunpack.c.l.b16 %v566
    %v3113 = vunpack.c.h.b16 %v566
    %v3114 = vunpack.c.l.b16 %v567
    %v3115 = vunpack.c.h.b16 %v567
    %v3116 = vunpack.c.l.b16 %v568
    %v3117 = vunpack.c.h.b16 %v568
    %v3118 = vunpack.c.l.b16 %v569
    %v3119 = vunpack.c.h.b16 %v569
    %v3120 = vunpack.c.l.b16 %v570
    %v3121 = vunpack.c.h.b16 %v570
    %v3122 = vunpack.c.l.b16 %v571
    %v3123 = vunpack.c.h.b16 %v571
    %v3124 = vunpack.c.l.b16 %v572
    %v3125 = vunpack.c.h.b16 %v572
    %v3126 = vunpack.c.l.b16 %v573
    %v3127 = vunpack.c.h.b16 %v573
    %v3128 = vunpack.c.l.b16 %v574
    %v3129 = vunpack.c.h.b16 %v574
    %v3130 = vunpack.c.l.b16 %v575
    %v3131 = vunpack.c.h.b16 %v575
    %v3132 = vunpack.c.l.b16 %v576
    %v3133 = vunpack.c.h.b16 %v576
    %v3134 = vunpack.c.l.b16 %v577
    %v3135 = vunpack.c.h.b16 %v577
    %v3136 = vunpack.c.l.b16 %v578
    %v3137 = vunpack.c.h.b16 %v578
    %v3138 = vunpack.c.l.b16 %v579
    %v3139 = vunpack.c.h.b16 %v579
    %v3140 = vunpack.c.l.b16 %v580
    %v3141 = vunpack.c.h.b16 %v580
    %v3142 = vunpack.c.l.b16 %v581
    %v3143 = vunpack.c.h.b16 %v581
    %v3144 = vunpack.c.l.b16 %v582
    %v3145 = vunpack.c.h.b16 %v582
    %v3146 = vunpack.c.l.b16 %v583
    %v3147 = vunpack.c.h.b16 %v583
    %v3148 = vunpack.c.l.b16 %v584
    %v3149 = vunpack.c.h.b16 %v584
    %v3150 = vunpack.c.l.b16 %v585
    %v3151 = vunpack.c.h.b16 %v585
    %v3152 = vunpack.c.l.b16 %v586
    %v3153 = vunpack.c.h.b16 %v586
    %v3154 = vunpack.c.l.b16 %v587
    %v3155 = vunpack.c.h.b16 %v587
    %v3156 = vunpack.c.l.b16 %v588
    %v3157 = vunpack.c.h.b16 %v588
    %v3158 = vunpack.c.l.b16 %v589
    %v3159 = vunpack.c.h.b16 %v589
    %v3160 = vunpack.c.l.b16 %v590
    %v3161 = vunpack.c.h.b16 %v590
    %v3162 = vunpack.c.l.b16 %v591
    %v3163 = vunpack.c.h.b16 %v591
    %v3164 = vunpack.c.l.b16 %v592
    %v3165 = vunpack.c.h.b16 %v592
    %v3166 = vunpack.c.l.b16 %v593
    %v3167 = vunpack.c.h.b16 %v593
    %v3168 = vunpack.c.l.b16 %v594
    %v3169 = vunpack.c.h.b16 %v594
    %v3170 = vunpack.c.l.b16 %v595
    %v3171 = vunpack.c.h.b16 %v595
    %v3172 = vunpack.c.l.b16 %v596
    %v3173 = vunpack.c.h.b16 %v596
    %v3174 = vunpack.c.l.b16 %v597
    %v3175 = vunpack.c.h.b16 %v597
    %v3176 = vunpack.c.l.b16 %v598
    %v3177 = vunpack.c.h.b16 %v598
    %v3178 = vunpack.c.l.b16 %v599
    %v3179 = vunpack.c.h.b16 %v599
    %v3180 = vunpack.c.l.b16 %v600
    %v3181 = vunpack.c.h.b16 %v600
    %v3182 = vunpack.c.l.b16 %v601
    %v3183 = vunpack.c.h.b16 %v601
    %v3184 = vunpack.c.l.b16 %v602
    %v3185 = vunpack.c.h.b16 %v602
    %v3186 = vunpack.c.l.b16 %v603
    %v3187 = vunpack.c.h.b16 %v603
    %v3188 = vunpack.c.l.b16 %v604
    %v3189 = vunpack.c.h.b16 %v604
    %v3190 = vunpack.c.l.b16 %v605
    %v3191 = vunpack.c.h.b16 %v605
    %v3192 = vunpack.c.l.b16 %v606
    %v3193 = vunpack.c.h.b16 %v606
    %v3194 = vunpack.c.l.b16 %v607
    %v3195 = vunpack.c.h.b16 %v607
    %v3196 = vunpack.c.l.b16 %v608
    %v3197 = vunpack.c.h.b16 %v608
    %v3198 = vunpack.c.l.b16 %v609
    %v3199 = vunpack.c.h.b16 %v609
    %v3200 = vunpack.c.l.b16 %v610
    %v3201 = vunpack.c.h.b16 %v610
    %v3202 = vunpack.c.l.b16 %v611
    %v3203 = vunpack.c.h.b16 %v611
    %v3204 = vunpack.c.l.b16 %v612
    %v3205 = vunpack.c.h.b16 %v612
    %v3206 = vunpack.c.l.b16 %v613
    %v3207 = vunpack.c.h.b16 %v613
    %v3208 = vunpack.c.l.b16 %v614
    %v3209 = vunpack.c.h.b16 %v614
    %v3210 = vunpack.c.l.b16 %v615
    %v3211 = vunpack.c.h.b16 %v615
    %v3212 = vunpack.c.l.b16 %v616
    %v3213 = vunpack.c.h.b16 %v616
    %v3214 = vunpack.c.l.b16 %v617
    %v3215 = vunpack.c.h.b16 %v617
    %v3216 = vunpack.c.l.b16 %v618
    %v3217 = vunpack.c.h.b16 %v618
    %v3218 = vunpack.c.l.b16 %v619
    %v3219 = vunpack.c.h.b16 %v619
    %v3220 = vunpack.c.l.b16 %v620
    %v3221 = vunpack.c.h.b16 %v620
    %v3222 = vunpack.c.l.b16 %v621
    %v3223 = vunpack.c.h.b16 %v621
    %v3224 = vunpack.c.l.b16 %v622
    %v3225 = vunpack.c.h.b16 %v622
    %v3226 = vunpack.c.l.b16 %v623
    %v3227 = vunpack.c.h.b16 %v623
    %v3228 = vunpack.c.l.b16 %v624
    %v3229 = vunpack.c.h.b16 %v624
    %v3230 = vunpack.c.l.b16 %v625
    %v3231 = vunpack.c.h.b16 %v625
    %v3232 = vunpack.c.l.b16 %v626
    %v3233 = vunpack.c.h.b16 %v626
    %v3234 = vunpack.c.l.b16 %v627
    %v3235 = vunpack.c.h.b16 %v627
    %v3236 = vunpack.c.l.b16 %v628
    %v3237 = vunpack.c.h.b16 %v628
    %v3238 = vunpack.c.l.b16 %v629
    %v3239 = vunpack.c.h.b16 %v629
    %v3240 = vunpack.c.l.b16 %v630
    %v3241 = vunpack.c.h.b16 %v630
    %v3242 = vunpack.c.l.b16 %v631
    %v3243 = vunpack.c.h.b16 %v631
    %v3244 = vunpack.c.l.b16 %v632
    %v3245 = vunpack.c.h.b16 %v632
    %v3246 = vunpack.c.l.b16 %v633
    %v3247 = vunpack.c.h.b16 %v633
    %v3248 = vunpack.c.l.b16 %v634
    %v3249 = vunpack.c.h.b16 %v634
    %v3250 = vunpack.c.l.b16 %v635
    %v3251 = vunpack.c.h.b16 %v635
    %v3252 = vunpack.c.l.b16 %v636
    %v3253 = vunpack.c.h.b16 %v636
    %v3254 = vunpack.c.l.b16 %v637
    %v3255 = vunpack.c.h.b16 %v637
    %v3256 = vunpack.c.l.b16 %v638
    %v3257 = vunpack.c.h.b16 %v638
    %v3258 = vunpack.c.l.b16 %v639
    %v3259 = vunpack.c.h.b16 %v639
    %v3260 = vunpack.c.l.b16 %v640
    %v3261 = vunpack.c.h.b16 %v640
    %v3262 = vunpack.c.l.b16 %v641
    %v3263 = vunpack.c.h.b16 %v641
    %v3264 = vunpack.c.l.b16 %v642
    %v3265 = vunpack.c.h.b16 %v642
    %v3266 = vunpack.c.l.b16 %v643
    %v3267 = vunpack.c.h.b16 %v643
    %v3268 = vunpack.c.l.b16 %v644
    %v3269 = vunpack.c.h.b16 %v644
    %v3270 = vunpack.c.l.b16 %v645
    %v3271 = vunpack.c.h.b16 %v645
    %v3272 = vunpack.c.l.b16 %v646
    %v3273 = vunpack.c.h.b16 %v646
    %v3274 = vunpack.c.l.b16 %v647
    %v3275 = vunpack.c.h.b16 %v647
    %v3276 = vunpack.c.l.b16 %v648
    %v3277 = vunpack.c.h.b16 %v648
    %v3278 = vunpack.c.l.b16 %v649
    %v3279 = vunpack.c.h.b16 %v649
    %v3280 = vunpack.c.l.b16 %v650
    %v3281 = vunpack.c.h.b16 %v650
    %v3282 = vunpack.c.l.b16 %v651
    %v3283 = vunpack.c.h.b16 %v651
    %v3284 = vunpack.c.l.b16 %v652
    %v3285 = vunpack.c.h.b16 %v652
    %v3286 = vunpack.c.l.b16 %v653
    %v3287 = vunpack.c.h.b16 %v653
    %v3288 = vunpack.c.l.b16 %v654
    %v3289 = vunpack.c.h.b16 %v654
    %v3290 = vunpack.c.l.b16 %v655
    %v3291 = vunpack.c.h.b16 %v655
    %v3292 = vunpack.c.l.b16 %v656
    %v3293 = vunpack.c.h.b16 %v656
    %v3294 = vunpack.c.l.b16 %v657
    %v3295 = vunpack.c.h.b16 %v657
    %v3296 = vunpack.c.l.b16 %v658
    %v3297 = vunpack.c.h.b16 %v658
    %v3298 = vunpack.c.l.b16 %v659
    %v3299 = vunpack.c.h.b16 %v659
    %v3300 = vunpack.c.l.b16 %v660
    %v3301 = vunpack.c.h.b16 %v660
    %v3302 = vunpack.c.l.b16 %v661
    %v3303 = vunpack.c.h.b16 %v661
    %v3304 = vunpack.c.l.b16 %v662
    %v3305 = vunpack.c.h.b16 %v662
    %v3306 = vunpack.c.l.b16 %v663
    %v3307 = vunpack.c.h.b16 %v663
    %v3308 = vunpack.c.l.b16 %v664
    %v3309 = vunpack.c.h.b16 %v664
    %v3310 = vunpack.c.l.b16 %v665
    %v3311 = vunpack.c.h.b16 %v665
    %v3312 = vunpack.c.l.b16 %v666
    %v3313 = vunpack.c.h.b16 %v666
    %v3314 = vunpack.c.l.b16 %v667
    %v3315 = vunpack.c.h.b16 %v667
    %v3316 = vunpack.c.l.b16 %v668
    %v3317 = vunpack.c.h.b16 %v668
    %v3318 = vunpack.c.l.b16 %v669
    %v3319 = vunpack.c.h.b16 %v669
    %v3320 = vunpack.c.l.b16 %v670
    %v3321 = vunpack.c.h.b16 %v670
    %v3322 = vunpack.c.l.b16 %v671
    %v3323 = vunpack.c.h.b16 %v671
    %v3324 = vunpack.c.l.b16 %v672
    %v3325 = vunpack.c.h.b16 %v672
    %v3326 = vunpack.c.l.b16 %v673
    %v3327 = vunpack.c.h.b16 %v673
    %v3328 = vunpack.c.l.b16 %v674
    %v3329 = vunpack.c.h.b16 %v674
    %v3330 = vunpack.c.l.b16 %v675
    %v3331 = vunpack.c.h.b16 %v675
    %v3332 = vunpack.c.l.b16 %v676
    %v3333 = vunpack.c.h.b16 %v676
    %v3334 = vunpack.c.l.b16 %v677
    %v3335 = vunpack.c.h.b16 %v677
    %v3336 = vunpack.c.l.b16 %v678
    %v3337 = vunpack.c.h.b16 %v678
    %v3338 = vunpack.c.l.b16 %v679
    %v3339 = vunpack.c.h.b16 %v679
    %v3340 = vunpack.c.l.b16 %v680
    %v3341 = vunpack.c.h.b16 %v680
    %v3342 = vunpack.c.l.b16 %v681
    %v3343 = vunpack.c.h.b16 %v681
    %v3344 = vunpack.c.l.b16 %v682
    %v3345 = vunpack.c.h.b16 %v682
    %v3346 = vunpack.c.l.b16 %v683
    %v3347 = vunpack.c.h.b16 %v683
    %v3348 = vunpack.c.l.b16 %v684
    %v3349 = vunpack.c.h.b16 %v684
    %v3350 = vunpack.c.l.b16 %v685
    %v3351 = vunpack.c.h.b16 %v685
    %v3352 = vunpack.c.l.b16 %v686
    %v3353 = vunpack.c.h.b16 %v686
    %v3354 = vunpack.c.l.b16 %v687
    %v3355 = vunpack.c.h.b16 %v687
    %v3356 = vunpack.c.l.b16 %v688
    %v3357 = vunpack.c.h.b16 %v688
    %v3358 = vunpack.c.l.b16 %v689
    %v3359 = vunpack.c.h.b16 %v689
    %v3360 = vunpack.c.l.b16 %v690
    %v3361 = vunpack.c.h.b16 %v690
    %v3362 = vunpack.c.l.b16 %v691
    %v3363 = vunpack.c.h.b16 %v691
    %v3364 = vunpack.c.l.b16 %v692
    %v3365 = vunpack.c.h.b16 %v692
    %v3366 = vunpack.c.l.b16 %v693
    %v3367 = vunpack.c.h.b16 %v693
    %v3368 = vunpack.c.l.b16 %v694
    %v3369 = vunpack.c.h.b16 %v694
    %v3370 = vunpack.c.l.b16 %v695
    %v3371 = vunpack.c.h.b16 %v695
    %v3372 = vunpack.c.l.b16 %v696
    %v3373 = vunpack.c.h.b16 %v696
    %v3374 = vunpack.c.l.b16 %v697
    %v3375 = vunpack.c.h.b16 %v697
    %v3376 = vunpack.c.l.b16 %v698
    %v3377 = vunpack.c.h.b16 %v698
    %v3378 = vunpack.c.l.b16 %v699
    %v3379 = vunpack.c.h.b16 %v699
    %v3380 = vunpack.c.l.b16 %v700
    %v3381 = vunpack.c.h.b16 %v700
    %v3382 = vunpack.c.l.b16 %v701
    %v3383 = vunpack.c.h.b16 %v701
    %v3384 = vunpack.c.l.b16 %v702
    %v3385 = vunpack.c.h.b16 %v702
    %v3386 = vunpack.c.l.b16 %v703
    %v3387 = vunpack.c.h.b16 %v703
    %v3388 = vunpack.c.l.b16 %v704
    %v3389 = vunpack.c.h.b16 %v704
    %v3390 = vunpack.c.l.b16 %v705
    %v3391 = vunpack.c.h.b16 %v705
    %v3392 = vunpack.c.l.b16 %v706
    %v3393 = vunpack.c.h.b16 %v706
    %v3394 = vunpack.c.l.b16 %v707
    %v3395 = vunpack.c.h.b16 %v707
    %v3396 = vunpack.c.l.b16 %v708
    %v3397 = vunpack.c.h.b16 %v708
    %v3398 = vunpack.c.l.b16 %v709
    %v3399 = vunpack.c.h.b16 %v709
    %v3400 = vunpack.c.l.b16 %v710
    %v3401 = vunpack.c.h.b16 %v710
    %v3402 = vunpack.c.l.b16 %v711
    %v3403 = vunpack.c.h.b16 %v711
    %v3404 = vunpack.c.l.b16 %v712
    %v3405 = vunpack.c.h.b16 %v712
    %v3406 = vunpack.c.l.b16 %v713
    %v3407 = vunpack.c.h.b16 %v713
    %v3408 = vunpack.c.l.b16 %v714
    %v3409 = vunpack.c.h.b16 %v714
    %v3410 = vunpack.c.l.b16 %v715
    %v3411 = vunpack.c.h.b16 %v715
    %v3412 = vunpack.c.l.b16 %v716
    %v3413 = vunpack.c.h.b16 %v716
    %v3414 = vunpack.c.l.b16 %v717
    %v3415 = vunpack.c.h.b16 %v717
    %v3416 = vunpack.c.l.b16 %v718
    %v3417 = vunpack.c.h.b16 %v718
    %v3418 = vunpack.c.l.b16 %v719
    %v3419 = vunpack.c.h.b16 %v719
    %v3420 = vunpack.c.l.b16 %v720
    %v3421 = vunpack.c.h.b16 %v720
    %v3422 = vunpack.c.l.b16 %v721
    %v3423 = vunpack.c.h.b16 %v721
    %v3424 = vunpack.c.l.b16 %v722
    %v3425 = vunpack.c.h.b16 %v722
    %v3426 = vunpack.c.l.b16 %v723
    %v3427 = vunpack.c.h.b16 %v723
    %v3428 = vunpack.c.l.b16 %v724
    %v3429 = vunpack.c.h.b16 %v724
    %v3430 = vunpack.c.l.b16 %v725
    %v3431 = vunpack.c.h.b16 %v725
    %v3432 = vunpack.c.l.b16 %v726
    %v3433 = vunpack.c.h.b16 %v726
    %v3434 = vunpack.c.l.b16 %v727
    %v3435 = vunpack.c.h.b16 %v727
    %v3436 = vunpack.c.l.b16 %v728
    %v3437 = vunpack.c.h.b16 %v728
    %v3438 = vunpack.c.l.b16 %v729
    %v3439 = vunpack.c.h.b16 %v729
    %v3440 = vunpack.c.l.b16 %v730
    %v3441 = vunpack.c.h.b16 %v730
    %v3442 = vunpack.c.l.b16 %v731
    %v3443 = vunpack.c.h.b16 %v731
    %v3444 = vunpack.c.l.b16 %v732
    %v3445 = vunpack.c.h.b16 %v732
    %v3446 = vunpack.c.l.b16 %v733
    %v3447 = vunpack.c.h.b16 %v733
    %v3448 = vunpack.c.l.b16 %v734
    %v3449 = vunpack.c.h.b16 %v734
    %v3450 = vunpack.c.l.b16 %v735
    %v3451 = vunpack.c.h.b16 %v735
    %v3452 = vunpack.c.l.b16 %v736
    %v3453 = vunpack.c.h.b16 %v736
    %v3454 = vunpack.c.l.b16 %v737
    %v3455 = vunpack.c.h.b16 %v737
    %v3456 = vunpack.c.l.b16 %v738
    %v3457 = vunpack.c.h.b16 %v738
    %v3458 = vunpack.c.l.b16 %v739
    %v3459 = vunpack.c.h.b16 %v739
    %v3460 = vunpack.c.l.b16 %v740
    %v3461 = vunpack.c.h.b16 %v740
    %v3462 = vunpack.c.l.b16 %v741
    %v3463 = vunpack.c.h.b16 %v741
    %v3464 = vunpack.c.l.b16 %v742
    %v3465 = vunpack.c.h.b16 %v742
    %v3466 = vunpack.c.l.b16 %v743
    %v3467 = vunpack.c.h.b16 %v743
    %v3468 = vunpack.c.l.b16 %v744
    %v3469 = vunpack.c.h.b16 %v744
    %v3470 = vunpack.c.l.b16 %v745
    %v3471 = vunpack.c.h.b16 %v745
    %v3472 = vunpack.c.l.b16 %v746
    %v3473 = vunpack.c.h.b16 %v746
    %v3474 = vunpack.c.l.b16 %v747
    %v3475 = vunpack.c.h.b16 %v747
    %v3476 = vunpack.c.l.b16 %v748
    %v3477 = vunpack.c.h.b16 %v748
    %v3478 = vunpack.c.l.b16 %v749
    %v3479 = vunpack.c.h.b16 %v749
    %v3480 = vunpack.c.l.b16 %v750
    %v3481 = vunpack.c.h.b16 %v750
    %v3482 = vunpack.c.l.b16 %v751
    %v3483 = vunpack.c.h.b16 %v751
    %v3484 = vunpack.c.l.b16 %v752
    %v3485 = vunpack.c.h.b16 %v752
    %v3486 = vunpack.c.l.b16 %v753
    %v3487 = vunpack.c.h.b16 %v753
    %v3488 = vunpack.c.l.b16 %v754
    %v3489 = vunpack.c.h.b16 %v754
    %v3490 = vunpack.c.l.b16 %v755
    %v3491 = vunpack.c.h.b16 %v755
    %v3492 = vunpack.c.l.b16 %v756
    %v3493 = vunpack.c.h.b16 %v756
    %v3494 = vunpack.c.l.b16 %v757
    %v3495 = vunpack.c.h.b16 %v757
    %v3496 = vunpack.c.l.b16 %v758
    %v3497 = vunpack.c.h.b16 %v758
    %v3498 = vunpack.c.l.b16 %v759
    %v3499 = vunpack.c.h.b16 %v759
    %v3500 = vunpack.c.l.b16 %v760
    %v3501 = vunpack.c.h.b16 %v760
    %v3502 = vunpack.c.l.b16 %v761
    %v3503 = vunpack.c.h.b16 %v761
    %v3504 = vunpack.c.l.b16 %v762
    %v3505 = vunpack.c.h.b16 %v762
    %v3506 = vunpack.c.l.b16 %v763
    %v3507 = vunpack.c.h.b16 %v763
    %v3508 = vunpack.c.l.b16 %v764
    %v3509 = vunpack.c.h.b16 %v764
    %v3510 = vunpack.c.l.b16 %v765
    %v3511 = vunpack.c.h.b16 %v765
    %v3512 = vunpack.c.l.b16 %v766
    %v3513 = vunpack.c.h.b16 %v766
    %v3514 = vunpack.c.l.b16 %v767
    %v3515 = vunpack.c.h.b16 %v767
    %v3516 = vunpack.c.l.b16 %v768
    %v3517 = vunpack.c.h.b16 %v768
    %v3518 = vunpack.c.l.b16 %v769
    %v3519 = vunpack.c.h.b16 %v769
    %v3520 = vunpack.c.l.b16 %v770
    %v3521 = vunpack.c.h.b16 %v770
    %v3522 = vunpack.c.l.b16 %v771
    %v3523 = vunpack.c.h.b16 %v771
    %v3524 = vunpack.c.l.b16 %v772
    %v3525 = vunpack.c.h.b16 %v772
    %v3526 = vunpack.c.l.b16 %v773
    %v3527 = vunpack.c.h.b16 %v773
    %v3528 = vunpack.c.l.b16 %v774
    %v3529 = vunpack.c.h.b16 %v774
    %v3530 = vunpack.c.l.b16 %v775
    %v3531 = vunpack.c.h.b16 %v775
    %v3532 = vunpack.c.l.b16 %v776
    %v3533 = vunpack.c.h.b16 %v776
    %v3534 = vunpack.c.l.b16 %v777
    %v3535 = vunpack.c.h.b16 %v777
    %v3536 = vunpack.c.l.b16 %v778
    %v3537 = vunpack.c.h.b16 %v778
    %v3538 = vunpack.c.l.b16 %v779
    %v3539 = vunpack.c.h.b16 %v779
    %v3540 = vunpack.c.l.b16 %v780
    %v3541 = vunpack.c.h.b16 %v780
    %v3542 = vunpack.c.l.b16 %v781
    %v3543 = vunpack.c.h.b16 %v781
    %v3544 = vunpack.c.l.b16 %v782
    %v3545 = vunpack.c.h.b16 %v782
    %v3546 = vunpack.c.l.b16 %v783
    %v3547 = vunpack.c.h.b16 %v783
    %v3548 = vunpack.c.l.b16 %v784
    %v3549 = vunpack.c.h.b16 %v784
    %v3550 = vunpack.c.l.b16 %v785
    %v3551 = vunpack.c.h.b16 %v785
    %v3552 = vunpack.c.l.b16 %v786
    %v3553 = vunpack.c.h.b16 %v786
    %v3554 = vunpack.c.l.b16 %v787
    %v3555 = vunpack.c.h.b16 %v787
    %v3556 = vunpack.c.l.b16 %v788
    %v3557 = vunpack.c.h.b16 %v788
    %v3558 = vunpack.c.l.b16 %v789
    %v3559 = vunpack.c.h.b16 %v789
    %v3560 = vunpack.c.l.b16 %v790
    %v3561 = vunpack.c.h.b16 %v790
    %v3562 = vunpack.c.l.b16 %v791
    %v3563 = vunpack.c.h.b16 %v791
    %v3564 = vunpack.c.l.b16 %v792
    %v3565 = vunpack.c.h.b16 %v792
    %v3566 = vunpack.c.l.b16 %v793
    %v3567 = vunpack.c.h.b16 %v793
    %v3568 = vunpack.c.l.b16 %v794
    %v3569 = vunpack.c.h.b16 %v794
    %v3570 = vunpack.c.l.b16 %v795
    %v3571 = vunpack.c.h.b16 %v795
    %v3572 = vunpack.c.l.b16 %v796
    %v3573 = vunpack.c.h.b16 %v796
    %v3574 = vunpack.c.l.b16 %v797
    %v3575 = vunpack.c.h.b16 %v797
    %v3576 = vunpack.c.l.b16 %v798
    %v3577 = vunpack.c.h.b16 %v798
    %v3578 = vunpack.c.l.b16 %v799
    %v3579 = vunpack.c.h.b16 %v799
    %v3580 = vunpack.c.l.b16 %v800
    %v3581 = vunpack.c.h.b16 %v800
    %v3582 = vunpack.c.l.b16 %v801
    %v3583 = vunpack.c.h.b16 %v801
    %v3584 = vunpack.c.l.b16 %v802
    %v3585 = vunpack.c.h.b16 %v802
    %v3586 = vunpack.c.l.b16 %v803
    %v3587 = vunpack.c.h.b16 %v803
    %v3588 = vunpack.c.l.b16 %v804
    %v3589 = vunpack.c.h.b16 %v804
    %v3590 = vunpack.c.l.b16 %v805
    %v3591 = vunpack.c.h.b16 %v805
    %v3592 = vunpack.c.l.b16 %v806
    %v3593 = vunpack.c.h.b16 %v806
    %v3594 = vunpack.c.l.b16 %v807
    %v3595 = vunpack.c.h.b16 %v807
    %v3596 = vunpack.c.l.b16 %v808
    %v3597 = vunpack.c.h.b16 %v808
    %v3598 = vunpack.c.l.b16 %v809
    %v3599 = vunpack.c.h.b16 %v809
    %v3600 = vunpack.c.l.b16 %v810
    %v3601 = vunpack.c.h.b16 %v810
    %v3602 = vunpack.c.l.b16 %v811
    %v3603 = vunpack.c.h.b16 %v811
    %v3604 = vunpack.c.l.b16 %v812
    %v3605 = vunpack.c.h.b16 %v812
    %v3606 = vunpack.c.l.b16 %v813
    %v3607 = vunpack.c.h.b16 %v813
    %v3608 = vunpack.c.l.b16 %v814
    %v3609 = vunpack.c.h.b16 %v814
    %v3610 = vunpack.c.l.b16 %v815
    %v3611 = vunpack.c.h.b16 %v815
    %v3612 = vunpack.c.l.b16 %v816
    %v3613 = vunpack.c.h.b16 %v816
    %v3614 = vunpack.c.l.b16 %v817
    %v3615 = vunpack.c.h.b16 %v817
    %v3616 = vunpack.c.l.b16 %v818
    %v3617 = vunpack.c.h.b16 %v818
    %v3618 = vunpack.c.l.b16 %v819
    %v3619 = vunpack.c.h.b16 %v819
    %v3620 = vunpack.c.l.b16 %v820
    %v3621 = vunpack.c.h.b16 %v820
    %v3622 = vunpack.c.l.b16 %v821
    %v3623 = vunpack.c.h.b16 %v821
    %v3624 = vunpack.c.l.b16 %v822
    %v3625 = vunpack.c.h.b16 %v822
    %v3626 = vunpack.c.l.b16 %v823
    %v3627 = vunpack.c.h.b16 %v823
    %v3628 = vunpack.c.l.b16 %v824
    %v3629 = vunpack.c.h.b16 %v824
    %v3630 = vunpack.c.l.b16 %v825
    %v3631 = vunpack.c.h.b16 %v825
    %v3632 = vunpack.c.l.b16 %v826
    %v3633 = vunpack.c.h.b16 %v826
    %v3634 = vunpack.c.l.b16 %v827
    %v3635 = vunpack.c.h.b16 %v827
    %v3636 = vunpack.c.l.b16 %v828
    %v3637 = vunpack.c.h.b16 %v828
    %v3638 = vunpack.c.l.b16 %v829
    %v3639 = vunpack.c.h.b16 %v829
    %v3640 = vunpack.c.l.b16 %v830
    %v3641 = vunpack.c.h.b16 %v830
    %v3642 = vunpack.c.l.b16 %v831
    %v3643 = vunpack.c.h.b16 %v831
    %v3644 = vunpack.c.l.b16 %v832
    %v3645 = vunpack.c.h.b16 %v832
    %v3646 = vunpack.c.l.b16 %v833
    %v3647 = vunpack.c.h.b16 %v833
    %v3648 = vunpack.c.l.b16 %v834
    %v3649 = vunpack.c.h.b16 %v834
    %v3650 = vunpack.c.l.b16 %v835
    %v3651 = vunpack.c.h.b16 %v835
    %v3652 = vunpack.c.l.b16 %v836
    %v3653 = vunpack.c.h.b16 %v836
    %v3654 = vunpack.c.l.b16 %v837
    %v3655 = vunpack.c.h.b16 %v837
    %v3656 = vunpack.c.l.b16 %v838
    %v3657 = vunpack.c.h.b16 %v838
    %v3658 = vunpack.c.l.b16 %v839
    %v3659 = vunpack.c.h.b16 %v839
    %v3660 = vunpack.c.l.b16 %v840
    %v3661 = vunpack.c.h.b16 %v840
    %v3662 = vunpack.c.l.b16 %v841
    %v3663 = vunpack.c.h.b16 %v841
    %v3664 = vunpack.c.l.b16 %v842
    %v3665 = vunpack.c.h.b16 %v842
    %v3666 = vunpack.c.l.b16 %v843
    %v3667 = vunpack.c.h.b16 %v843
    %v3668 = vunpack.c.l.b16 %v844
    %v3669 = vunpack.c.h.b16 %v844
    %v3670 = vunpack.c.l.b16 %v845
    %v3671 = vunpack.c.h.b16 %v845
    %v3672 = vunpack.c.l.b16 %v846
    %v3673 = vunpack.c.h.b16 %v846
    %v3674 = vunpack.c.l.b16 %v847
    %v3675 = vunpack.c.h.b16 %v847
    %v3676 = vunpack.c.l.b16 %v848
    %v3677 = vunpack.c.h.b16 %v848
    %v3678 = vunpack.c.l.b16 %v849
    %v3679 = vunpack.c.h.b16 %v849
    %v3680 = vunpack.c.l.b16 %v850
    %v3681 = vunpack.c.h.b16 %v850
    %v3682 = vunpack.c.l.b16 %v851
    %v3683 = vunpack.c.h.b16 %v851
    %v3684 = vunpack.c.l.b16 %v852
    %v3685 = vunpack.c.h.b16 %v852
    %v3686 = vunpack.c.l.b16 %v853
    %v3687 = vunpack.c.h.b16 %v853
    %v3688 = vunpack.c.l.b16 %v854
    %v3689 = vunpack.c.h.b16 %v854
    %v3690 = vunpack.c.l.b16 %v855
    %v3691 = vunpack.c.h.b16 %v855
    %v3692 = vunpack.c.l.b16 %v856
    %v3693 = vunpack.c.h.b16 %v856
    %v3694 = vunpack.c.l.b16 %v857
    %v3695 = vunpack.c.h.b16 %v857
    %v3696 = vunpack.c.l.b16 %v858
    %v3697 = vunpack.c.h.b16 %v858
    %v3698 = vunpack.c.l.b16 %v859
    %v3699 = vunpack.c.h.b16 %v859
    %v3700 = vunpack.c.l.b16 %v860
    %v3701 = vunpack.c.h.b16 %v860
    %v3702 = vunpack.c.l.b16 %v861
    %v3703 = vunpack.c.h.b16 %v861
    %v3704 = vunpack.c.l.b16 %v862
    %v3705 = vunpack.c.h.b16 %v862
    %v3706 = vunpack.c.l.b16 %v863
    %v3707 = vunpack.c.h.b16 %v863
    %v3708 = vunpack.c.l.b16 %v864
    %v3709 = vunpack.c.h.b16 %v864
    %v3710 = vunpack.c.l.b16 %v865
    %v3711 = vunpack.c.h.b16 %v865
    %v3712 = vunpack.c.l.b16 %v866
    %v3713 = vunpack.c.h.b16 %v866
    %v3714 = vunpack.c.l.b16 %v867
    %v3715 = vunpack.c.h.b16 %v867
    %v3716 = vunpack.c.l.b16 %v868
    %v3717 = vunpack.c.h.b16 %v868
    %v3718 = vunpack.c.l.b16 %v869
    %v3719 = vunpack.c.h.b16 %v869
    %v3720 = vunpack.c.l.b16 %v870
    %v3721 = vunpack.c.h.b16 %v870
    %v3722 = vunpack.c.l.b16 %v871
    %v3723 = vunpack.c.h.b16 %v871
    %v3724 = vunpack.c.l.b16 %v872
    %v3725 = vunpack.c.h.b16 %v872
    %v3726 = vunpack.c.l.b16 %v873
    %v3727 = vunpack.c.h.b16 %v873
    %v3728 = vunpack.c.l.b16 %v874
    %v3729 = vunpack.c.h.b16 %v874
    %v3730 = vunpack.c.l.b16 %v875
    %v3731 = vunpack.c.h.b16 %v875
    %v3732 = vunpack.c.l.b16 %v876
    %v3733 = vunpack.c.h.b16 %v876
    %v3734 = vunpack.c.l.b16 %v877
    %v3735 = vunpack.c.h.b16 %v877
    %v3736 = vunpack.c.l.b16 %v878
    %v3737 = vunpack.c.h.b16 %v878
    %v3738 = vunpack.c.l.b16 %v879
    %v3739 = vunpack.c.h.b16 %v879
    %v3740 = vunpack.c.l.b16 %v880
    %v3741 = vunpack.c.h.b16 %v880
    %v3742 = vunpack.c.l.b16 %v881
    %v3743 = vunpack.c.h.b16 %v881
    %v3744 = vunpack.c.l.b16 %v882
    %v3745 = vunpack.c.h.b16 %v882
    %v3746 = vunpack.c.l.b16 %v883
    %v3747 = vunpack.c.h.b16 %v883
    %v3748 = vunpack.c.l.b16 %v884
    %v3749 = vunpack.c.h.b16 %v884
    %v3750 = vunpack.c.l.b16 %v885
    %v3751 = vunpack.c.h.b16 %v885
    %v3752 = vunpack.c.l.b16 %v886
    %v3753 = vunpack.c.h.b16 %v886
    %v3754 = vunpack.c.l.b16 %v887
    %v3755 = vunpack.c.h.b16 %v887
    %v3756 = vunpack.c.l.b16 %v888
    %v3757 = vunpack.c.h.b16 %v888
    %v3758 = vunpack.c.l.b16 %v889
    %v3759 = vunpack.c.h.b16 %v889
    %v3760 = vunpack.c.l.b16 %v890
    %v3761 = vunpack.c.h.b16 %v890
    %v3762 = vunpack.c.l.b16 %v891
    %v3763 = vunpack.c.h.b16 %v891
    %v3764 = vunpack.c.l.b16 %v892
    %v3765 = vunpack.c.h.b16 %v892
    %v3766 = vunpack.c.l.b16 %v893
    %v3767 = vunpack.c.h.b16 %v893
    %v3768 = vunpack.c.l.b16 %v894
    %v3769 = vunpack.c.h.b16 %v894
    %v3770 = vunpack.c.l.b16 %v895
    %v3771 = vunpack.c.h.b16 %v895
    %v3772 = vunpack.c.l.b16 %v896
    %v3773 = vunpack.c.h.b16 %v896
    %v3774 = vunpack.c.l.b16 %v897
    %v3775 = vunpack.c.h.b16 %v897
    %v3776 = vunpack.c.l.b16 %v898
    %v3777 = vunpack.c.h.b16 %v898
    %v3778 = vunpack.c.l.b16 %v899
    %v3779 = vunpack.c.h.b16 %v899
    %v3780 = vunpack.c.l.b16 %v900
    %v3781 = vunpack.c.h.b16 %v900
    %v3782 = vunpack.c.l.b16 %v901
    %v3783 = vunpack.c.h.b16 %v901
    %v3784 = vunpack.c.l.b16 %v902
    %v3785 = vunpack.c.h.b16 %v902
    %v3786 = vunpack.c.l.b16 %v903
    %v3787 = vunpack.c.h.b16 %v903
    %v3788 = vunpack.c.l.b16 %v904
    %v3789 = vunpack.c.h.b16 %v904
    %v3790 = vunpack.c.l.b16 %v905
    %v3791 = vunpack.c.h.b16 %v905
    %v3792 = vunpack.c.l.b16 %v906
    %v3793 = vunpack.c.h.b16 %v906
    %v3794 = vunpack.c.l.b16 %v907
    %v3795 = vunpack.c.h.b16 %v907
    %v3796 = vunpack.c.l.b16 %v908
    %v3797 = vunpack.c.h.b16 %v908
    %v3798 = vunpack.c.l.b16 %v909
    %v3799 = vunpack.c.h.b16 %v909
    %v3800 = vunpack.c.l.b16 %v910
    %v3801 = vunpack.c.h.b16 %v910
    %v3802 = vunpack.c.l.b16 %v911
    %v3803 = vunpack.c.h.b16 %v911
    %v3804 = vunpack.c.l.b16 %v912
    %v3805 = vunpack.c.h.b16 %v912
    %v3806 = vunpack.c.l.b16 %v913
    %v3807 = vunpack.c.h.b16 %v913
    %v3808 = vunpack.c.l.b16 %v914
    %v3809 = vunpack.c.h.b16 %v914
    %v3810 = vunpack.c.l.b16 %v915
    %v3811 = vunpack.c.h.b16 %v915
    %v3812 = vunpack.c.l.b16 %v916
    %v3813 = vunpack.c.h.b16 %v916
    %v3814 = vunpack.c.l.b16 %v917
    %v3815 = vunpack.c.h.b16 %v917
    %v3816 = vunpack.c.l.b16 %v918
    %v3817 = vunpack.c.h.b16 %v918
    %v3818 = vunpack.c.l.b16 %v919
    %v3819 = vunpack.c.h.b16 %v919
    %v3820 = vunpack.c.l.b16 %v920
    %v3821 = vunpack.c.h.b16 %v920
    %v3822 = vunpack.c.l.b16 %v921
    %v3823 = vunpack.c.h.b16 %v921
    %v3824 = vunpack.c.l.b16 %v922
    %v3825 = vunpack.c.h.b16 %v922
    %v3826 = vunpack.c.l.b16 %v923
    %v3827 = vunpack.c.h.b16 %v923
    %v3828 = vunpack.c.l.b16 %v924
    %v3829 = vunpack.c.h.b16 %v924
    %v3830 = vunpack.c.l.b16 %v925
    %v3831 = vunpack.c.h.b16 %v925
    %v3832 = vunpack.c.l.b16 %v926
    %v3833 = vunpack.c.h.b16 %v926
    %v3834 = vunpack.c.l.b16 %v927
    %v3835 = vunpack.c.h.b16 %v927
    %v3836 = vunpack.c.l.b16 %v928
    %v3837 = vunpack.c.h.b16 %v928
    %v3838 = vunpack.c.l.b16 %v929
    %v3839 = vunpack.c.h.b16 %v929
    %v3840 = vunpack.c.l.b16 %v930
    %v3841 = vunpack.c.h.b16 %v930
    %v3842 = vunpack.c.l.b16 %v931
    %v3843 = vunpack.c.h.b16 %v931
    %v3844 = vunpack.c.l.b16 %v932
    %v3845 = vunpack.c.h.b16 %v932
    %v3846 = vunpack.c.l.b16 %v933
    %v3847 = vunpack.c.h.b16 %v933
    %v3848 = vunpack.c.l.b16 %v934
    %v3849 = vunpack.c.h.b16 %v934
    %v3850 = vunpack.c.l.b16 %v935
    %v3851 = vunpack.c.h.b16 %v935
    %v3852 = vunpack.c.l.b16 %v936
    %v3853 = vunpack.c.h.b16 %v936
    %v3854 = vunpack.c.l.b16 %v937
    %v3855 = vunpack.c.h.b16 %v937
    %v3856 = vunpack.c.l.b16 %v938
    %v3857 = vunpack.c.h.b16 %v938
    %v3858 = vunpack.c.l.b16 %v939
    %v3859 = vunpack.c.h.b16 %v939
    %v3860 = vunpack.c.l.b16 %v940
    %v3861 = vunpack.c.h.b16 %v940
    %v3862 = vunpack.c.l.b16 %v941
    %v3863 = vunpack.c.h.b16 %v941
    %v3864 = vunpack.c.l.b16 %v942
    %v3865 = vunpack.c.h.b16 %v942
    %v3866 = vunpack.c.l.b16 %v943
    %v3867 = vunpack.c.h.b16 %v943
    %v3868 = vunpack.c.l.b16 %v944
    %v3869 = vunpack.c.h.b16 %v944
    %v3870 = vunpack.c.l.b16 %v945
    %v3871 = vunpack.c.h.b16 %v945
    %v3872 = vunpack.c.l.b16 %v946
    %v3873 = vunpack.c.h.b16 %v946
    %v3874 = vunpack.c.l.b16 %v947
    %v3875 = vunpack.c.h.b16 %v947
    %v3876 = vunpack.c.l.b16 %v948
    %v3877 = vunpack.c.h.b16 %v948
    %v3878 = vunpack.c.l.b16 %v949
    %v3879 = vunpack.c.h.b16 %v949
    %v3880 = vunpack.c.l.b16 %v950
    %v3881 = vunpack.c.h.b16 %v950
    %v3882 = vunpack.c.l.b16 %v951
    %v3883 = vunpack.c.h.b16 %v951
    %v3884 = vunpack.c.l.b16 %v952
    %v3885 = vunpack.c.h.b16 %v952
    %v3886 = vunpack.c.l.b16 %v953
    %v3887 = vunpack.c.h.b16 %v953
    %v3888 = vunpack.c.l.b16 %v954
    %v3889 = vunpack.c.h.b16 %v954
    %v3890 = vunpack.c.l.b16 %v955
    %v3891 = vunpack.c.h.b16 %v955
    %v3892 = vunpack.c.l.b16 %v956
    %v3893 = vunpack.c.h.b16 %v956
    %v3894 = vunpack.c.l.b16 %v957
    %v3895 = vunpack.c.h.b16 %v957
    %v3896 = vunpack.c.l.b16 %v958
    %v3897 = vunpack.c.h.b16 %v958
    %v3898 = vunpack.c.l.b16 %v959
    %v3899 = vunpack.c.h.b16 %v959
    %v3900 = vunpack.c.l.b16 %v960
    %v3901 = vunpack.c.h.b16 %v960
    %v3902 = vunpack.c.l.b16 %v961
    %v3903 = vunpack.c.h.b16 %v961
    %v3904 = vunpack.c.l.b16 %v962
    %v3905 = vunpack.c.h.b16 %v962
    %v3906 = vunpack.c.l.b16 %v963
    %v3907 = vunpack.c.h.b16 %v963
    %v3908 = vunpack.c.l.b16 %v964
    %v3909 = vunpack.c.h.b16 %v964
    %v3910 = vunpack.c.l.b16 %v965
    %v3911 = vunpack.c.h.b16 %v965
    %v3912 = vunpack.c.l.b16 %v966
    %v3913 = vunpack.c.h.b16 %v966
    %v3914 = vunpack.c.l.b16 %v967
    %v3915 = vunpack.c.h.b16 %v967
    %v3916 = vunpack.c.l.b16 %v968
    %v3917 = vunpack.c.h.b16 %v968
    %v3918 = vunpack.c.l.b16 %v969
    %v3919 = vunpack.c.h.b16 %v969
    %v3920 = vunpack.c.l.b16 %v970
    %v3921 = vunpack.c.h.b16 %v970
    %v3922 = vunpack.c.l.b16 %v971
    %v3923 = vunpack.c.h.b16 %v971
    %v3924 = vunpack.c.l.b16 %v972
    %v3925 = vunpack.c.h.b16 %v972
    %v3926 = vunpack.c.l.b16 %v973
    %v3927 = vunpack.c.h.b16 %v973
    %v3928 = vunpack.c.l.b16 %v974
    %v3929 = vunpack.c.h.b16 %v974
    %v3930 = vunpack.c.l.b16 %v975
    %v3931 = vunpack.c.h.b16 %v975
    %v3932 = vunpack.c.l.b16 %v976
    %v3933 = vunpack.c.h.b16 %v976
    %v3934 = vunpack.c.l.b16 %v977
    %v3935 = vunpack.c.h.b16 %v977
    %v3936 = vunpack.c.l.b16 %v978
    %v3937 = vunpack.c.h.b16 %v978
    %v3938 = vunpack.c.l.b16 %v979
    %v3939 = vunpack.c.h.b16 %v979
    %v3940 = vunpack.c.l.b16 %v980
    %v3941 = vunpack.c.h.b16 %v980
    %v3942 = vunpack.c.l.b16 %v981
    %v3943 = vunpack.c.h.b16 %v981
    %v3944 = vunpack.c.l.b16 %v982
    %v3945 = vunpack.c.h.b16 %v982
    %v3946 = vunpack.c.l.b16 %v983
    %v3947 = vunpack.c.h.b16 %v983
    %v3948 = vunpack.c.l.b16 %v984
    %v3949 = vunpack.c.h.b16 %v984
    %v3950 = vunpack.c.l.b16 %v985
    %v3951 = vunpack.c.h.b16 %v985
    %v3952 = vunpack.c.l.b16 %v986
    %v3953 = vunpack.c.h.b16 %v986
    %v3954 = vunpack.c.l.b16 %v987
    %v3955 = vunpack.c.h.b16 %v987
    %v3956 = vunpack.c.l.b16 %v988
    %v3957 = vunpack.c.h.b16 %v988
    %v3958 = vunpack.c.l.b16 %v989
    %v3959 = vunpack.c.h.b16 %v989
    %v3960 = vunpack.c.l.b16 %v990
    %v3961 = vunpack.c.h.b16 %v990
    %v3962 = vunpack.c.l.b16 %v991
    %v3963 = vunpack.c.h.b16 %v991
    %v3964 = vunpack.c.l.b16 %v992
    %v3965 = vunpack.c.h.b16 %v992
    %v3966 = vunpack.c.l.b16 %v993
    %v3967 = vunpack.c.h.b16 %v993
    %v3968 = vunpack.c.l.b16 %v994
    %v3969 = vunpack.c.h.b16 %v994
    %v3970 = vunpack.c.l.b16 %v995
    %v3971 = vunpack.c.h.b16 %v995
    %v3972 = vunpack.c.l.b16 %v996
    %v3973 = vunpack.c.h.b16 %v996
    %v3974 = vunpack.c.l.b16 %v997
    %v3975 = vunpack.c.h.b16 %v997
    %v3976 = vunpack.c.l.b16 %v998
    %v3977 = vunpack.c.h.b16 %v998
    %v3978 = vunpack.c.l.b16 %v999
    %v3979 = vunpack.c.h.b16 %v999
    %v3980 = vunpack.c.l.b16 %v1000
    %v3981 = vunpack.c.h.b16 %v1000
    %v3982 = vunpack.c.l.b16 %v1001
    %v3983 = vunpack.c.h.b16 %v1001
    %v3984 = vunpack.c.l.b16 %v1002
    %v3985 = vunpack.c.h.b16 %v1002
    %v3986 = vunpack.c.l.b16 %v1003
    %v3987 = vunpack.c.h.b16 %v1003
    %v3988 = vunpack.c.l.b16 %v1004
    %v3989 = vunpack.c.h.b16 %v1004
    %v3990 = vunpack.c.l.b16 %v1005
    %v3991 = vunpack.c.h.b16 %v1005
    %v3992 = vunpack.c.l.b16 %v1006
    %v3993 = vunpack.c.h.b16 %v1006
    %v3994 = vunpack.c.l.b16 %v1007
    %v3995 = vunpack.c.h.b16 %v1007
    %v3996 = vunpack.c.l.b16 %v1008
    %v3997 = vunpack.c.h.b16 %v1008
    %v3998 = vunpack.c.l.b16 %v1009
    %v3999 = vunpack.c.h.b16 %v1009
    %v4000 = vunpack.c.l.b16 %v1010
    %v4001 = vunpack.c.h.b16 %v1010
    %v4002 = vunpack.c.l.b16 %v1011
    %v4003 = vunpack.c.h.b16 %v1011
    %v4004 = vunpack.c.l.b16 %v1012
    %v4005 = vunpack.c.h.b16 %v1012
    %v4006 = vunpack.c.l.b16 %v1013
    %v4007 = vunpack.c.h.b16 %v1013
    %v4008 = vunpack.c.l.b16 %v1014
    %v4009 = vunpack.c.h.b16 %v1014
    %v4010 = vunpack.c.l.b16 %v1015
    %v4011 = vunpack.c.h.b16 %v1015
    %v4012 = vunpack.c.l.b16 %v1016
    %v4013 = vunpack.c.h.b16 %v1016
    %v4014 = vunpack.c.l.b16 %v1017
    %v4015 = vunpack.c.h.b16 %v1017
    %v4016 = vunpack.c.l.b16 %v1018
    %v4017 = vunpack.c.h.b16 %v1018
    %v4018 = vunpack.c.l.b16 %v1019
    %v4019 = vunpack.c.h.b16 %v1019
    %v4020 = vunpack.c.l.b16 %v1020
    %v4021 = vunpack.c.h.b16 %v1020
    %v4022 = vunpack.c.l.b16 %v1021
    %v4023 = vunpack.c.h.b16 %v1021
    %v4024 = vunpack.c.l.b16 %v1022
    %v4025 = vunpack.c.h.b16 %v1022
    %v4026 = vunpack.c.l.b16 %v1023
    %v4027 = vunpack.c.h.b16 %v1023
    %v4028 = vunpack.c.l.b16 %v1024
    %v4029 = vunpack.c.h.b16 %v1024
    %v4030 = vunpack.c.l.b16 %v1025
    %v4031 = vunpack.c.h.b16 %v1025
    %v4032 = vunpack.c.l.b16 %v1026
    %v4033 = vunpack.c.h.b16 %v1026
    %v4034 = vunpack.c.l.b16 %v1027
    %v4035 = vunpack.c.h.b16 %v1027
    %v4036 = vunpack.c.l.b16 %v1028
    %v4037 = vunpack.c.h.b16 %v1028
    %v4038 = vunpack.c.l.b16 %v1029
    %v4039 = vunpack.c.h.b16 %v1029
    %v4040 = vunpack.c.l.b16 %v1030
    %v4041 = vunpack.c.h.b16 %v1030
    %v4042 = vunpack.c.l.b16 %v1031
    %v4043 = vunpack.c.h.b16 %v1031
    %v4044 = vunpack.c.l.b16 %v1032
    %v4045 = vunpack.c.h.b16 %v1032
    %v4046 = vunpack.c.l.b16 %v1033
    %v4047 = vunpack.c.h.b16 %v1033
    %v4048 = vunpack.c.l.b16 %v1034
    %v4049 = vunpack.c.h.b16 %v1034
    %v4050 = vunpack.c.l.b16 %v1035
    %v4051 = vunpack.c.h.b16 %v1035
    %v4052 = vunpack.c.l.b16 %v1036
    %v4053 = vunpack.c.h.b16 %v1036
    %v4054 = vunpack.c.l.b16 %v1037
    %v4055 = vunpack.c.h.b16 %v1037
    %v4056 = vunpack.c.l.b16 %v1038
    %v4057 = vunpack.c.h.b16 %v1038
    %v4058 = vunpack.c.l.b16 %v1039
    %v4059 = vunpack.c.h.b16 %v1039
    %v4060 = vunpack.c.l.b16 %v1040
    %v4061 = vunpack.c.h.b16 %v1040
    %v4062 = vunpack.c.l.b16 %v1041
    %v4063 = vunpack.c.h.b16 %v1041
    %v4064 = vunpack.c.l.b16 %v1042
    %v4065 = vunpack.c.h.b16 %v1042
    %v4066 = vunpack.c.l.b16 %v1043
    %v4067 = vunpack.c.h.b16 %v1043
    %v4068 = vunpack.c.l.b16 %v1044
    %v4069 = vunpack.c.h.b16 %v1044
    %v4070 = vunpack.c.l.b16 %v1045
    %v4071 = vunpack.c.h.b16 %v1045
    %v4072 = vunpack.c.l.b16 %v1046
    %v4073 = vunpack.c.h.b16 %v1046
    %v4074 = vunpack.c.l.b16 %v1047
    %v4075 = vunpack.c.h.b16 %v1047
    %v4076 = vunpack.c.l.b16 %v1048
    %v4077 = vunpack.c.h.b16 %v1048
    %v4078 = vunpack.c.l.b16 %v1049
    %v4079 = vunpack.c.h.b16 %v1049
    %v4080 = vunpack.c.l.b16 %v1050
    %v4081 = vunpack.c.h.b16 %v1050
    %v4082 = vunpack.c.l.b16 %v1051
    %v4083 = vunpack.c.h.b16 %v1051
    %v4084 = vunpack.c.l.b16 %v1052
    %v4085 = vunpack.c.h.b16 %v1052
    %v4086 = vunpack.c.l.b16 %v1053
    %v4087 = vunpack.c.h.b16 %v1053
    %v4088 = vunpack.c.l.b16 %v1054
    %v4089 = vunpack.c.h.b16 %v1054
    %v4090 = vunpack.c.l.b16 %v1055
    %v4091 = vunpack.c.h.b16 %v1055
    %v4092 = vunpack.c.l.b16 %v1056
    %v4093 = vunpack.c.h.b16 %v1056
    %v4094 = vunpack.c.l.b16 %v1057
    %v4095 = vunpack.c.h.b16 %v1057
    %v4096 = vunpack.c.l.b16 %v1058
    %v4097 = vunpack.c.h.b16 %v1058
    %v4098 = vunpack.c.l.b16 %v1059
    %v4099 = vunpack.c.h.b16 %v1059
    %v4100 = vunpack.c.l.b16 %v1060
    %v4101 = vunpack.c.h.b16 %v1060
    %v4102 = vunpack.c.l.b16 %v1061
    %v4103 = vunpack.c.h.b16 %v1061
    %v4104 = vunpack.c.l.b16 %v1062
    %v4105 = vunpack.c.h.b16 %v1062
    %v4106 = vunpack.c.l.b16 %v1063
    %v4107 = vunpack.c.h.b16 %v1063
    %v4108 = vunpack.c.l.b16 %v1064
    %v4109 = vunpack.c.h.b16 %v1064
    %v4110 = vunpack.c.l.b16 %v1065
    %v4111 = vunpack.c.h.b16 %v1065
    %v4112 = vunpack.c.l.b16 %v1066
    %v4113 = vunpack.c.h.b16 %v1066
    %v4114 = vunpack.c.l.b16 %v1067
    %v4115 = vunpack.c.h.b16 %v1067
    %v4116 = vunpack.c.l.b16 %v1068
    %v4117 = vunpack.c.h.b16 %v1068
    %v4118 = vunpack.c.l.b16 %v1069
    %v4119 = vunpack.c.h.b16 %v1069
    %v4120 = vunpack.c.l.b16 %v1070
    %v4121 = vunpack.c.h.b16 %v1070
    %v4122 = vunpack.c.l.b16 %v1071
    %v4123 = vunpack.c.h.b16 %v1071
    %v4124 = vunpack.c.l.b16 %v1072
    %v4125 = vunpack.c.h.b16 %v1072
    %v4126 = vunpack.c.l.b16 %v1073
    %v4127 = vunpack.c.h.b16 %v1073
    %v4128 = vunpack.c.l.b16 %v1074
    %v4129 = vunpack.c.h.b16 %v1074
    %v4130 = vunpack.c.l.b16 %v1075
    %v4131 = vunpack.c.h.b16 %v1075
    %v4132 = vunpack.c.l.b16 %v1076
    %v4133 = vunpack.c.h.b16 %v1076
    %v4134 = vunpack.c.l.b16 %v1077
    %v4135 = vunpack.c.h.b16 %v1077
    %v4136 = vunpack.c.l.b16 %v1078
    %v4137 = vunpack.c.h.b16 %v1078
    %v4138 = vunpack.c.l.b16 %v1079
    %v4139 = vunpack.c.h.b16 %v1079
    %v4140 = vunpack.c.l.b16 %v1080
    %v4141 = vunpack.c.h.b16 %v1080
    %v4142 = vunpack.c.l.b16 %v1081
    %v4143 = vunpack.c.h.b16 %v1081
    %v4144 = vunpack.c.l.b16 %v1082
    %v4145 = vunpack.c.h.b16 %v1082
    %v4146 = vunpack.c.l.b16 %v1083
    %v4147 = vunpack.c.h.b16 %v1083
    %v4148 = vunpack.c.l.b16 %v1084
    %v4149 = vunpack.c.h.b16 %v1084
    %v4150 = vunpack.c.l.b16 %v1085
    %v4151 = vunpack.c.h.b16 %v1085
    %v4152 = vunpack.c.l.b16 %v1086
    %v4153 = vunpack.c.h.b16 %v1086
    %v4154 = vunpack.c.l.b16 %v1087
    %v4155 = vunpack.c.h.b16 %v1087
    %v4156 = vunpack.c.l.b16 %v1088
    %v4157 = vunpack.c.h.b16 %v1088
    %v4158 = vunpack.c.l.b16 %v1089
    %v4159 = vunpack.c.h.b16 %v1089
    %v4160 = vunpack.c.l.b16 %v1090
    %v4161 = vunpack.c.h.b16 %v1090
    %v4162 = vunpack.c.l.b16 %v1091
    %v4163 = vunpack.c.h.b16 %v1091
    %v4164 = vunpack.c.l.b16 %v1092
    %v4165 = vunpack.c.h.b16 %v1092
    %v4166 = vunpack.c.l.b16 %v1093
    %v4167 = vunpack.c.h.b16 %v1093
    %v4168 = vunpack.c.l.b16 %v1094
    %v4169 = vunpack.c.h.b16 %v1094
    %v4170 = vunpack.c.l.b16 %v1095
    %v4171 = vunpack.c.h.b16 %v1095
    %v4172 = vunpack.c.l.b16 %v1096
    %v4173 = vunpack.c.h.b16 %v1096
    %v4174 = vunpack.c.l.b16 %v1097
    %v4175 = vunpack.c.h.b16 %v1097
    %v4176 = vunpack.c.l.b16 %v1098
    %v4177 = vunpack.c.h.b16 %v1098
    %v4178 = vunpack.c.l.b16 %v1099
    %v4179 = vunpack.c.h.b16 %v1099
    %v4180 = vunpack.c.l.b16 %v1100
    %v4181 = vunpack.c.h.b16 %v1100
    %v4182 = vunpack.c.l.b16 %v1101
    %v4183 = vunpack.c.h.b16 %v1101
    %v4184 = vunpack.c.l.b16 %v1102
    %v4185 = vunpack.c.h.b16 %v1102
    %v4186 = vunpack.c.l.b16 %v1103
    %v4187 = vunpack.c.h.b16 %v1103
    %v4188 = vunpack.c.l.b16 %v1104
    %v4189 = vunpack.c.h.b16 %v1104
    %v4190 = vunpack.c.l.b16 %v1105
    %v4191 = vunpack.c.h.b16 %v1105
    %v4192 = vunpack.c.l.b16 %v1106
    %v4193 = vunpack.c.h.b16 %v1106
    %v4194 = vunpack.c.l.b16 %v1107
    %v4195 = vunpack.c.h.b16 %v1107
    %v4196 = vunpack.c.l.b16 %v1108
    %v4197 = vunpack.c.h.b16 %v1108
    %v4198 = vunpack.c.l.b16 %v1109
    %v4199 = vunpack.c.h.b16 %v1109
    %v4200 = vunpack.c.l.b16 %v1110
    %v4201 = vunpack.c.h.b16 %v1110
    %v4202 = vunpack.c.l.b16 %v1111
    %v4203 = vunpack.c.h.b16 %v1111
    %v4204 = vunpack.c.l.b16 %v1112
    %v4205 = vunpack.c.h.b16 %v1112
    %v4206 = vunpack.c.l.b16 %v1113
    %v4207 = vunpack.c.h.b16 %v1113
    %v4208 = vunpack.c.l.b16 %v1114
    %v4209 = vunpack.c.h.b16 %v1114
    %v4210 = vunpack.c.l.b16 %v1115
    %v4211 = vunpack.c.h.b16 %v1115
    %v4212 = vunpack.c.l.b16 %v1116
    %v4213 = vunpack.c.h.b16 %v1116
    %v4214 = vunpack.c.l.b16 %v1117
    %v4215 = vunpack.c.h.b16 %v1117
    %v4216 = vunpack.c.l.b16 %v1118
    %v4217 = vunpack.c.h.b16 %v1118
    %v4218 = vunpack.c.l.b16 %v1119
    %v4219 = vunpack.c.h.b16 %v1119
    %v4220 = vunpack.c.l.b16 %v1120
    %v4221 = vunpack.c.h.b16 %v1120
    %v4222 = vunpack.c.l.b16 %v1121
    %v4223 = vunpack.c.h.b16 %v1121
    %v4224 = vunpack.c.l.b16 %v1122
    %v4225 = vunpack.c.h.b16 %v1122
    %v4226 = vunpack.c.l.b16 %v1123
    %v4227 = vunpack.c.h.b16 %v1123
    %v4228 = vunpack.c.l.b16 %v1124
    %v4229 = vunpack.c.h.b16 %v1124
    %v4230 = vunpack.c.l.b16 %v1125
    %v4231 = vunpack.c.h.b16 %v1125
    %v4232 = vunpack.c.l.b16 %v1126
    %v4233 = vunpack.c.h.b16 %v1126
    %v4234 = vunpack.c.l.b16 %v1127
    %v4235 = vunpack.c.h.b16 %v1127
    %v4236 = vunpack.c.l.b16 %v1128
    %v4237 = vunpack.c.h.b16 %v1128
    %v4238 = vunpack.c.l.b16 %v1129
    %v4239 = vunpack.c.h.b16 %v1129
    %v4240 = vunpack.c.l.b16 %v1130
    %v4241 = vunpack.c.h.b16 %v1130
    %v4242 = vunpack.c.l.b16 %v1131
    %v4243 = vunpack.c.h.b16 %v1131
    %v4244 = vunpack.c.l.b16 %v1132
    %v4245 = vunpack.c.h.b16 %v1132
    %v4246 = vunpack.c.l.b16 %v1133
    %v4247 = vunpack.c.h.b16 %v1133
    %v4248 = vunpack.c.l.b16 %v1134
    %v4249 = vunpack.c.h.b16 %v1134
    %v4250 = vunpack.c.l.b16 %v1135
    %v4251 = vunpack.c.h.b16 %v1135
    %v4252 = vunpack.c.l.b16 %v1136
    %v4253 = vunpack.c.h.b16 %v1136
    %v4254 = vunpack.c.l.b16 %v1137
    %v4255 = vunpack.c.h.b16 %v1137
    %v4256 = vunpack.c.l.b16 %v1138
    %v4257 = vunpack.c.h.b16 %v1138
    %v4258 = vunpack.c.l.b16 %v1139
    %v4259 = vunpack.c.h.b16 %v1139
    %v4260 = vunpack.c.l.b16 %v1140
    %v4261 = vunpack.c.h.b16 %v1140
    %v4262 = vunpack.c.l.b16 %v1141
    %v4263 = vunpack.c.h.b16 %v1141
    %v4264 = vunpack.c.l.b16 %v1142
    %v4265 = vunpack.c.h.b16 %v1142
    %v4266 = vunpack.c.l.b16 %v1143
    %v4267 = vunpack.c.h.b16 %v1143
    %v4268 = vunpack.c.l.b16 %v1144
    %v4269 = vunpack.c.h.b16 %v1144
    %v4270 = vunpack.c.l.b16 %v1145
    %v4271 = vunpack.c.h.b16 %v1145
    %v4272 = vunpack.c.l.b16 %v1146
    %v4273 = vunpack.c.h.b16 %v1146
    %v4274 = vunpack.c.l.b16 %v1147
    %v4275 = vunpack.c.h.b16 %v1147
    %v4276 = vunpack.c.l.b16 %v1148
    %v4277 = vunpack.c.h.b16 %v1148
    %v4278 = vunpack.c.l.b16 %v1149
    %v4279 = vunpack.c.h.b16 %v1149
    %v4280 = vunpack.c.l.b16 %v1150
    %v4281 = vunpack.c.h.b16 %v1150
    %v4282 = vunpack.c.l.b16 %v1151
    %v4283 = vunpack.c.h.b16 %v1151
    %v4284 = vunpack.c.l.b16 %v1152
    %v4285 = vunpack.c.h.b16 %v1152
    %v4286 = vunpack.c.l.b16 %v1153
    %v4287 = vunpack.c.h.b16 %v1153
    %v4288 = vunpack.c.l.b16 %v1154
    %v4289 = vunpack.c.h.b16 %v1154
    %v4290 = vunpack.c.l.b16 %v1155
    %v4291 = vunpack.c.h.b16 %v1155
    %v4292 = vunpack.c.l.b16 %v1156
    %v4293 = vunpack.c.h.b16 %v1156
    %v4294 = vunpack.c.l.b16 %v1157
    %v4295 = vunpack.c.h.b16 %v1157
    %v4296 = vunpack.c.l.b16 %v1158
    %v4297 = vunpack.c.h.b16 %v1158
    %v4298 = vunpack.c.l.b16 %v1159
    %v4299 = vunpack.c.h.b16 %v1159
    %v4300 = vunpack.c.l.b16 %v1160
    %v4301 = vunpack.c.h.b16 %v1160
    %v4302 = vunpack.c.l.b16 %v1161
    %v4303 = vunpack.c.h.b16 %v1161
    %v4304 = vunpack.c.l.b16 %v1162
    %v4305 = vunpack.c.h.b16 %v1162
    %v4306 = vunpack.c.l.b16 %v1163
    %v4307 = vunpack.c.h.b16 %v1163
    %v4308 = vunpack.c.l.b16 %v1164
    %v4309 = vunpack.c.h.b16 %v1164
    %v4310 = vunpack.c.l.b16 %v1165
    %v4311 = vunpack.c.h.b16 %v1165
    %v4312 = vunpack.c.l.b16 %v1166
    %v4313 = vunpack.c.h.b16 %v1166
    %v4314 = vunpack.c.l.b16 %v1167
    %v4315 = vunpack.c.h.b16 %v1167
    %v4316 = vunpack.c.l.b16 %v1168
    %v4317 = vunpack.c.h.b16 %v1168
    %v4318 = vunpack.c.l.b16 %v1169
    %v4319 = vunpack.c.h.b16 %v1169
    %v4320 = vunpack.c.l.b16 %v1170
    %v4321 = vunpack.c.h.b16 %v1170
    %v4322 = vunpack.c.l.b16 %v1171
    %v4323 = vunpack.c.h.b16 %v1171
    %v4324 = vpack.c.b16 %v2284, %v2276
    %v4325 = vpack.c.b16 %v2285, %v2277
    %v4326 = vpack.c.b16 %v2286, %v2278
    %v4327 = vpack.c.b16 %v2287, %v2279
    %v4328 = vpack.c.b16 %v2288, %v2280
    %v4329 = vpack.c.b16 %v2289, %v2281
    %v4330 = vpack.c.b16 %v2290, %v2282
    %v4331 = vpack.c.b16 %v2291, %v2283
    %v4332 = vpack.c.b16 %v2300, %v2292
    %v4333 = vpack.c.b16 %v2301, %v2293
    %v4334 = vpack.c.b16 %v2302, %v2294
    %v4335 = vpack.c.b16 %v2303, %v2295
    %v4336 = vpack.c.b16 %v2304, %v2296
    %v4337 = vpack.c.b16 %v2305, %v2297
    %v4338 = vpack.c.b16 %v2306, %v2298
    %v4339 = vpack.c.b16 %v2307, %v2299
    %v4340 = vpack.c.b16 %v2316, %v2308
    %v4341 = vpack.c.b16 %v2317, %v2309
    %v4342 = vpack.c.b16 %v2318, %v2310
    %v4343 = vpack.c.b16 %v2319, %v2311
    %v4344 = vpack.c.b16 %v2320, %v2312
    %v4345 = vpack.c.b16 %v2321, %v2313
    %v4346 = vpack.c.b16 %v2322, %v2314
    %v4347 = vpack.c.b16 %v2323, %v2315
    %v4348 = vpack.c.b16 %v2332, %v2324
    %v4349 = vpack.c.b16 %v2333, %v2325
    %v4350 = vpack.c.b16 %v2334, %v2326
    %v4351 = vpack.c.b16 %v2335, %v2327
    %v4352 = vpack.c.b16 %v2336, %v2328
    %v4353 = vpack.c.b16 %v2337, %v2329
    %v4354 = vpack.c.b16 %v2338, %v2330
    %v4355 = vpack.c.b16 %v2339, %v2331
    %v4356 = vpack.c.b16 %v2348, %v2340
    %v4357 = vpack.c.b16 %v2349, %v2341
    %v4358 = vpack.c.b16 %v2350, %v2342
    %v4359 = vpack.c.b16 %v2351, %v2343
    %v4360 = vpack.c.b16 %v2352, %v2344
    %v4361 = vpack.c.b16 %v2353, %v2345
    %v4362 = vpack.c.b16 %v2354, %v2346
    %v4363 = vpack.c.b16 %v2355, %v2347
    %v4364 = vpack.c.b16 %v2364, %v2356
    %v4365 = vpack.c.b16 %v2365, %v2357
    %v4366 = vpack.c.b16 %v2366, %v2358
    %v4367 = vpack.c.b16 %v2367, %v2359
    %v4368 = vpack.c.b16 %v2368, %v2360
    %v4369 = vpack.c.b16 %v2369, %v2361
    %v4370 = vpack.c.b16 %v2370, %v2362
    %v4371 = vpack.c.b16 %v2371, %v2363
    %v4372 = vpack.c.b16 %v2380, %v2372
    %v4373 = vpack.c.b16 %v2381, %v2373
    %v4374 = vpack.c.b16 %v2382, %v2374
    %v4375 = vpack.c.b16 %v2383, %v2375
    %v4376 = vpack.c.b16 %v2384, %v2376
    %v4377 = vpack.c.b16 %v2385, %v2377
    %v4378 = vpack.c.b16 %v2386, %v2378
    %v4379 = vpack.c.b16 %v2387, %v2379
    %v4380 = vpack.c.b16 %v2396, %v2388
    %v4381 = vpack.c.b16 %v2397, %v2389
    %v4382 = vpack.c.b16 %v2398, %v2390
    %v4383 = vpack.c.b16 %v2399, %v2391
    %v4384 = vpack.c.b16 %v2400, %v2392
    %v4385 = vpack.c.b16 %v2401, %v2393
    %v4386 = vpack.c.b16 %v2402, %v2394
    %v4387 = vpack.c.b16 %v2403, %v2395
    %v4388 = vpack.c.b16 %v2412, %v2404
    %v4389 = vpack.c.b16 %v2413, %v2405
    %v4390 = vpack.c.b16 %v2414, %v2406
    %v4391 = vpack.c.b16 %v2415, %v2407
    %v4392 = vpack.c.b16 %v2416, %v2408
    %v4393 = vpack.c.b16 %v2417, %v2409
    %v4394 = vpack.c.b16 %v2418, %v2410
    %v4395 = vpack.c.b16 %v2419, %v2411
    %v4396 = vpack.c.b16 %v2428, %v2420
    %v4397 = vpack.c.b16 %v2429, %v2421
    %v4398 = vpack.c.b16 %v2430, %v2422
    %v4399 = vpack.c.b16 %v2431, %v2423
    %v4400 = vpack.c.b16 %v2432, %v2424
    %v4401 = vpack.c.b16 %v2433, %v2425
    %v4402 = vpack.c.b16 %v2434, %v2426
    %v4403 = vpack.c.b16 %v2435, %v2427
    %v4404 = vpack.c.b16 %v2444, %v2436
    %v4405 = vpack.c.b16 %v2445, %v2437
    %v4406 = vpack.c.b16 %v2446, %v2438
    %v4407 = vpack.c.b16 %v2447, %v2439
    %v4408 = vpack.c.b16 %v2448, %v2440
    %v4409 = vpack.c.b16 %v2449, %v2441
    %v4410 = vpack.c.b16 %v2450, %v2442
    %v4411 = vpack.c.b16 %v2451, %v2443
    %v4412 = vpack.c.b16 %v2460, %v2452
    %v4413 = vpack.c.b16 %v2461, %v2453
    %v4414 = vpack.c.b16 %v2462, %v2454
    %v4415 = vpack.c.b16 %v2463, %v2455
    %v4416 = vpack.c.b16 %v2464, %v2456
    %v4417 = vpack.c.b16 %v2465, %v2457
    %v4418 = vpack.c.b16 %v2466, %v2458
    %v4419 = vpack.c.b16 %v2467, %v2459
    %v4420 = vpack.c.b16 %v2476, %v2468
    %v4421 = vpack.c.b16 %v2477, %v2469
    %v4422 = vpack.c.b16 %v2478, %v2470
    %v4423 = vpack.c.b16 %v2479, %v2471
    %v4424 = vpack.c.b16 %v2480, %v2472
    %v4425 = vpack.c.b16 %v2481, %v2473
    %v4426 = vpack.c.b16 %v2482, %v2474
    %v4427 = vpack.c.b16 %v2483, %v2475
    %v4428 = vpack.c.b16 %v2492, %v2484
    %v4429 = vpack.c.b16 %v2493, %v2485
    %v4430 = vpack.c.b16 %v2494, %v2486
    %v4431 = vpack.c.b16 %v2495, %v2487
    %v4432 = vpack.c.b16 %v2496, %v2488
    %v4433 = vpack.c.b16 %v2497, %v2489
    %v4434 = vpack.c.b16 %v2498, %v2490
    %v4435 = vpack.c.b16 %v2499, %v2491
    %v4436 = vpack.c.b16 %v2508, %v2500
    %v4437 = vpack.c.b16 %v2509, %v2501
    %v4438 = vpack.c.b16 %v2510, %v2502
    %v4439 = vpack.c.b16 %v2511, %v2503
    %v4440 = vpack.c.b16 %v2512, %v2504
    %v4441 = vpack.c.b16 %v2513, %v2505
    %v4442 = vpack.c.b16 %v2514, %v2506
    %v4443 = vpack.c.b16 %v2515, %v2507
    %v4444 = vpack.c.b16 %v2524, %v2516
    %v4445 = vpack.c.b16 %v2525, %v2517
    %v4446 = vpack.c.b16 %v2526, %v2518
    %v4447 = vpack.c.b16 %v2527, %v2519
    %v4448 = vpack.c.b16 %v2528, %v2520
    %v4449 = vpack.c.b16 %v2529, %v2521
    %v4450 = vpack.c.b16 %v2530, %v2522
    %v4451 = vpack.c.b16 %v2531, %v2523
    %v4452 = vpack.c.b16 %v2540, %v2532
    %v4453 = vpack.c.b16 %v2541, %v2533
    %v4454 = vpack.c.b16 %v2542, %v2534
    %v4455 = vpack.c.b16 %v2543, %v2535
    %v4456 = vpack.c.b16 %v2544, %v2536
    %v4457 = vpack.c.b16 %v2545, %v2537
    %v4458 = vpack.c.b16 %v2546, %v2538
    %v4459 = vpack.c.b16 %v2547, %v2539
    %v4460 = vpack.c.b16 %v2556, %v2548
    %v4461 = vpack.c.b16 %v2557, %v2549
    %v4462 = vpack.c.b16 %v2558, %v2550
    %v4463 = vpack.c.b16 %v2559, %v2551
    %v4464 = vpack.c.b16 %v2560, %v2552
    %v4465 = vpack.c.b16 %v2561, %v2553
    %v4466 = vpack.c.b16 %v2562, %v2554
    %v4467 = vpack.c.b16 %v2563, %v2555
    %v4468 = vpack.c.b16 %v2572, %v2564
    %v4469 = vpack.c.b16 %v2573, %v2565
    %v4470 = vpack.c.b16 %v2574, %v2566
    %v4471 = vpack.c.b16 %v2575, %v2567
    %v4472 = vpack.c.b16 %v2576, %v2568
    %v4473 = vpack.c.b16 %v2577, %v2569
    %v4474 = vpack.c.b16 %v2578, %v2570
    %v4475 = vpack.c.b16 %v2579, %v2571
    %v4476 = vpack.c.b16 %v2588, %v2580
    %v4477 = vpack.c.b16 %v2589, %v2581
    %v4478 = vpack.c.b16 %v2590, %v2582
    %v4479 = vpack.c.b16 %v2591, %v2583
    %v4480 = vpack.c.b16 %v2592, %v2584
    %v4481 = vpack.c.b16 %v2593, %v2585
    %v4482 = vpack.c.b16 %v2594, %v2586
    %v4483 = vpack.c.b16 %v2595, %v2587
    %v4484 = vpack.c.b16 %v2604, %v2596
    %v4485 = vpack.c.b16 %v2605, %v2597
    %v4486 = vpack.c.b16 %v2606, %v2598
    %v4487 = vpack.c.b16 %v2607, %v2599
    %v4488 = vpack.c.b16 %v2608, %v2600
    %v4489 = vpack.c.b16 %v2609, %v2601
    %v4490 = vpack.c.b16 %v2610, %v2602
    %v4491 = vpack.c.b16 %v2611, %v2603
    %v4492 = vpack.c.b16 %v2620, %v2612
    %v4493 = vpack.c.b16 %v2621, %v2613
    %v4494 = vpack.c.b16 %v2622, %v2614
    %v4495 = vpack.c.b16 %v2623, %v2615
    %v4496 = vpack.c.b16 %v2624, %v2616
    %v4497 = vpack.c.b16 %v2625, %v2617
    %v4498 = vpack.c.b16 %v2626, %v2618
    %v4499 = vpack.c.b16 %v2627, %v2619
    %v4500 = vpack.c.b16 %v2636, %v2628
    %v4501 = vpack.c.b16 %v2637, %v2629
    %v4502 = vpack.c.b16 %v2638, %v2630
    %v4503 = vpack.c.b16 %v2639, %v2631
    %v4504 = vpack.c.b16 %v2640, %v2632
    %v4505 = vpack.c.b16 %v2641, %v2633
    %v4506 = vpack.c.b16 %v2642, %v2634
    %v4507 = vpack.c.b16 %v2643, %v2635
    %v4508 = vpack.c.b16 %v2652, %v2644
    %v4509 = vpack.c.b16 %v2653, %v2645
    %v4510 = vpack.c.b16 %v2654, %v2646
    %v4511 = vpack.c.b16 %v2655, %v2647
    %v4512 = vpack.c.b16 %v2656, %v2648
    %v4513 = vpack.c.b16 %v2657, %v2649
    %v4514 = vpack.c.b16 %v2658, %v2650
    %v4515 = vpack.c.b16 %v2659, %v2651
    %v4516 = vpack.c.b16 %v2668, %v2660
    %v4517 = vpack.c.b16 %v2669, %v2661
    %v4518 = vpack.c.b16 %v2670, %v2662
    %v4519 = vpack.c.b16 %v2671, %v2663
    %v4520 = vpack.c.b16 %v2672, %v2664
    %v4521 = vpack.c.b16 %v2673, %v2665
    %v4522 = vpack.c.b16 %v2674, %v2666
    %v4523 = vpack.c.b16 %v2675, %v2667
    %v4524 = vpack.c.b16 %v2684, %v2676
    %v4525 = vpack.c.b16 %v2685, %v2677
    %v4526 = vpack.c.b16 %v2686, %v2678
    %v4527 = vpack.c.b16 %v2687, %v2679
    %v4528 = vpack.c.b16 %v2688, %v2680
    %v4529 = vpack.c.b16 %v2689, %v2681
    %v4530 = vpack.c.b16 %v2690, %v2682
    %v4531 = vpack.c.b16 %v2691, %v2683
    %v4532 = vpack.c.b16 %v2700, %v2692
    %v4533 = vpack.c.b16 %v2701, %v2693
    %v4534 = vpack.c.b16 %v2702, %v2694
    %v4535 = vpack.c.b16 %v2703, %v2695
    %v4536 = vpack.c.b16 %v2704, %v2696
    %v4537 = vpack.c.b16 %v2705, %v2697
    %v4538 = vpack.c.b16 %v2706, %v2698
    %v4539 = vpack.c.b16 %v2707, %v2699
    %v4540 = vpack.c.b16 %v2716, %v2708
    %v4541 = vpack.c.b16 %v2717, %v2709
    %v4542 = vpack.c.b16 %v2718, %v2710
    %v4543 = vpack.c.b16 %v2719, %v2711
    %v4544 = vpack.c.b16 %v2720, %v2712
    %v4545 = vpack.c.b16 %v2721, %v2713
    %v4546 = vpack.c.b16 %v2722, %v2714
    %v4547 = vpack.c.b16 %v2723, %v2715
    %v4548 = vpack.c.b16 %v2732, %v2724
    %v4549 = vpack.c.b16 %v2733, %v2725
    %v4550 = vpack.c.b16 %v2734, %v2726
    %v4551 = vpack.c.b16 %v2735, %v2727
    %v4552 = vpack.c.b16 %v2736, %v2728
    %v4553 = vpack.c.b16 %v2737, %v2729
    %v4554 = vpack.c.b16 %v2738, %v2730
    %v4555 = vpack.c.b16 %v2739, %v2731
    %v4556 = vpack.c.b16 %v2748, %v2740
    %v4557 = vpack.c.b16 %v2749, %v2741
    %v4558 = vpack.c.b16 %v2750, %v2742
    %v4559 = vpack.c.b16 %v2751, %v2743
    %v4560 = vpack.c.b16 %v2752, %v2744
    %v4561 = vpack.c.b16 %v2753, %v2745
    %v4562 = vpack.c.b16 %v2754, %v2746
    %v4563 = vpack.c.b16 %v2755, %v2747
    %v4564 = vpack.c.b16 %v2764, %v2756
    %v4565 = vpack.c.b16 %v2765, %v2757
    %v4566 = vpack.c.b16 %v2766, %v2758
    %v4567 = vpack.c.b16 %v2767, %v2759
    %v4568 = vpack.c.b16 %v2768, %v2760
    %v4569 = vpack.c.b16 %v2769, %v2761
    %v4570 = vpack.c.b16 %v2770, %v2762
    %v4571 = vpack.c.b16 %v2771, %v2763
    %v4572 = vpack.c.b16 %v2780, %v2772
    %v4573 = vpack.c.b16 %v2781, %v2773
    %v4574 = vpack.c.b16 %v2782, %v2774
    %v4575 = vpack.c.b16 %v2783, %v2775
    %v4576 = vpack.c.b16 %v2784, %v2776
    %v4577 = vpack.c.b16 %v2785, %v2777
    %v4578 = vpack.c.b16 %v2786, %v2778
    %v4579 = vpack.c.b16 %v2787, %v2779
    %v4580 = vpack.c.b16 %v2796, %v2788
    %v4581 = vpack.c.b16 %v2797, %v2789
    %v4582 = vpack.c.b16 %v2798, %v2790
    %v4583 = vpack.c.b16 %v2799, %v2791
    %v4584 = vpack.c.b16 %v2800, %v2792
    %v4585 = vpack.c.b16 %v2801, %v2793
    %v4586 = vpack.c.b16 %v2802, %v2794
    %v4587 = vpack.c.b16 %v2803, %v2795
    %v4588 = vpack.c.b16 %v2812, %v2804
    %v4589 = vpack.c.b16 %v2813, %v2805
    %v4590 = vpack.c.b16 %v2814, %v2806
    %v4591 = vpack.c.b16 %v2815, %v2807
    %v4592 = vpack.c.b16 %v2816, %v2808
    %v4593 = vpack.c.b16 %v2817, %v2809
    %v4594 = vpack.c.b16 %v2818, %v2810
    %v4595 = vpack.c.b16 %v2819, %v2811
    %v4596 = vpack.c.b16 %v2828, %v2820
    %v4597 = vpack.c.b16 %v2829, %v2821
    %v4598 = vpack.c.b16 %v2830, %v2822
    %v4599 = vpack.c.b16 %v2831, %v2823
    %v4600 = vpack.c.b16 %v2832, %v2824
    %v4601 = vpack.c.b16 %v2833, %v2825
    %v4602 = vpack.c.b16 %v2834, %v2826
    %v4603 = vpack.c.b16 %v2835, %v2827
    %v4604 = vpack.c.b16 %v2844, %v2836
    %v4605 = vpack.c.b16 %v2845, %v2837
    %v4606 = vpack.c.b16 %v2846, %v2838
    %v4607 = vpack.c.b16 %v2847, %v2839
    %v4608 = vpack.c.b16 %v2848, %v2840
    %v4609 = vpack.c.b16 %v2849, %v2841
    %v4610 = vpack.c.b16 %v2850, %v2842
    %v4611 = vpack.c.b16 %v2851, %v2843
    %v4612 = vpack.c.b16 %v2860, %v2852
    %v4613 = vpack.c.b16 %v2861, %v2853
    %v4614 = vpack.c.b16 %v2862, %v2854
    %v4615 = vpack.c.b16 %v2863, %v2855
    %v4616 = vpack.c.b16 %v2864, %v2856
    %v4617 = vpack.c.b16 %v2865, %v2857
    %v4618 = vpack.c.b16 %v2866, %v2858
    %v4619 = vpack.c.b16 %v2867, %v2859
    %v4620 = vpack.c.b16 %v2876, %v2868
    %v4621 = vpack.c.b16 %v2877, %v2869
    %v4622 = vpack.c.b16 %v2878, %v2870
    %v4623 = vpack.c.b16 %v2879, %v2871
    %v4624 = vpack.c.b16 %v2880, %v2872
    %v4625 = vpack.c.b16 %v2881, %v2873
    %v4626 = vpack.c.b16 %v2882, %v2874
    %v4627 = vpack.c.b16 %v2883, %v2875
    %v4628 = vpack.c.b16 %v2892, %v2884
    %v4629 = vpack.c.b16 %v2893, %v2885
    %v4630 = vpack.c.b16 %v2894, %v2886
    %v4631 = vpack.c.b16 %v2895, %v2887
    %v4632 = vpack.c.b16 %v2896, %v2888
    %v4633 = vpack.c.b16 %v2897, %v2889
    %v4634 = vpack.c.b16 %v2898, %v2890
    %v4635 = vpack.c.b16 %v2899, %v2891
    %v4636 = vpack.c.b16 %v2908, %v2900
    %v4637 = vpack.c.b16 %v2909, %v2901
    %v4638 = vpack.c.b16 %v2910, %v2902
    %v4639 = vpack.c.b16 %v2911, %v2903
    %v4640 = vpack.c.b16 %v2912, %v2904
    %v4641 = vpack.c.b16 %v2913, %v2905
    %v4642 = vpack.c.b16 %v2914, %v2906
    %v4643 = vpack.c.b16 %v2915, %v2907
    %v4644 = vpack.c.b16 %v2924, %v2916
    %v4645 = vpack.c.b16 %v2925, %v2917
    %v4646 = vpack.c.b16 %v2926, %v2918
    %v4647 = vpack.c.b16 %v2927, %v2919
    %v4648 = vpack.c.b16 %v2928, %v2920
    %v4649 = vpack.c.b16 %v2929, %v2921
    %v4650 = vpack.c.b16 %v2930, %v2922
    %v4651 = vpack.c.b16 %v2931, %v2923
    %v4652 = vpack.c.b16 %v2940, %v2932
    %v4653 = vpack.c.b16 %v2941, %v2933
    %v4654 = vpack.c.b16 %v2942, %v2934
    %v4655 = vpack.c.b16 %v2943, %v2935
    %v4656 = vpack.c.b16 %v2944, %v2936
    %v4657 = vpack.c.b16 %v2945, %v2937
    %v4658 = vpack.c.b16 %v2946, %v2938
    %v4659 = vpack.c.b16 %v2947, %v2939
    %v4660 = vpack.c.b16 %v2956, %v2948
    %v4661 = vpack.c.b16 %v2957, %v2949
    %v4662 = vpack.c.b16 %v2958, %v2950
    %v4663 = vpack.c.b16 %v2959, %v2951
    %v4664 = vpack.c.b16 %v2960, %v2952
    %v4665 = vpack.c.b16 %v2961, %v2953
    %v4666 = vpack.c.b16 %v2962, %v2954
    %v4667 = vpack.c.b16 %v2963, %v2955
    %v4668 = vpack.c.b16 %v2972, %v2964
    %v4669 = vpack.c.b16 %v2973, %v2965
    %v4670 = vpack.c.b16 %v2974, %v2966
    %v4671 = vpack.c.b16 %v2975, %v2967
    %v4672 = vpack.c.b16 %v2976, %v2968
    %v4673 = vpack.c.b16 %v2977, %v2969
    %v4674 = vpack.c.b16 %v2978, %v2970
    %v4675 = vpack.c.b16 %v2979, %v2971
    %v4676 = vpack.c.b16 %v2988, %v2980
    %v4677 = vpack.c.b16 %v2989, %v2981
    %v4678 = vpack.c.b16 %v2990, %v2982
    %v4679 = vpack.c.b16 %v2991, %v2983
    %v4680 = vpack.c.b16 %v2992, %v2984
    %v4681 = vpack.c.b16 %v2993, %v2985
    %v4682 = vpack.c.b16 %v2994, %v2986
    %v4683 = vpack.c.b16 %v2995, %v2987
    %v4684 = vpack.c.b16 %v3004, %v2996
    %v4685 = vpack.c.b16 %v3005, %v2997
    %v4686 = vpack.c.b16 %v3006, %v2998
    %v4687 = vpack.c.b16 %v3007, %v2999
    %v4688 = vpack.c.b16 %v3008, %v3000
    %v4689 = vpack.c.b16 %v3009, %v3001
    %v4690 = vpack.c.b16 %v3010, %v3002
    %v4691 = vpack.c.b16 %v3011, %v3003
    %v4692 = vpack.c.b16 %v3020, %v3012
    %v4693 = vpack.c.b16 %v3021, %v3013
    %v4694 = vpack.c.b16 %v3022, %v3014
    %v4695 = vpack.c.b16 %v3023, %v3015
    %v4696 = vpack.c.b16 %v3024, %v3016
    %v4697 = vpack.c.b16 %v3025, %v3017
    %v4698 = vpack.c.b16 %v3026, %v3018
    %v4699 = vpack.c.b16 %v3027, %v3019
    %v4700 = vpack.c.b16 %v3036, %v3028
    %v4701 = vpack.c.b16 %v3037, %v3029
    %v4702 = vpack.c.b16 %v3038, %v3030
    %v4703 = vpack.c.b16 %v3039, %v3031
    %v4704 = vpack.c.b16 %v3040, %v3032
    %v4705 = vpack.c.b16 %v3041, %v3033
    %v4706 = vpack.c.b16 %v3042, %v3034
    %v4707 = vpack.c.b16 %v3043, %v3035
    %v4708 = vpack.c.b16 %v3052, %v3044
    %v4709 = vpack.c.b16 %v3053, %v3045
    %v4710 = vpack.c.b16 %v3054, %v3046
    %v4711 = vpack.c.b16 %v3055, %v3047
    %v4712 = vpack.c.b16 %v3056, %v3048
    %v4713 = vpack.c.b16 %v3057, %v3049
    %v4714 = vpack.c.b16 %v3058, %v3050
    %v4715 = vpack.c.b16 %v3059, %v3051
    %v4716 = vpack.c.b16 %v3068, %v3060
    %v4717 = vpack.c.b16 %v3069, %v3061
    %v4718 = vpack.c.b16 %v3070, %v3062
    %v4719 = vpack.c.b16 %v3071, %v3063
    %v4720 = vpack.c.b16 %v3072, %v3064
    %v4721 = vpack.c.b16 %v3073, %v3065
    %v4722 = vpack.c.b16 %v3074, %v3066
    %v4723 = vpack.c.b16 %v3075, %v3067
    %v4724 = vpack.c.b16 %v3084, %v3076
    %v4725 = vpack.c.b16 %v3085, %v3077
    %v4726 = vpack.c.b16 %v3086, %v3078
    %v4727 = vpack.c.b16 %v3087, %v3079
    %v4728 = vpack.c.b16 %v3088, %v3080
    %v4729 = vpack.c.b16 %v3089, %v3081
    %v4730 = vpack.c.b16 %v3090, %v3082
    %v4731 = vpack.c.b16 %v3091, %v3083
    %v4732 = vpack.c.b16 %v3100, %v3092
    %v4733 = vpack.c.b16 %v3101, %v3093
    %v4734 = vpack.c.b16 %v3102, %v3094
    %v4735 = vpack.c.b16 %v3103, %v3095
    %v4736 = vpack.c.b16 %v3104, %v3096
    %v4737 = vpack.c.b16 %v3105, %v3097
    %v4738 = vpack.c.b16 %v3106, %v3098
    %v4739 = vpack.c.b16 %v3107, %v3099
    %v4740 = vpack.c.b16 %v3116, %v3108
    %v4741 = vpack.c.b16 %v3117, %v3109
    %v4742 = vpack.c.b16 %v3118, %v3110
    %v4743 = vpack.c.b16 %v3119, %v3111
    %v4744 = vpack.c.b16 %v3120, %v3112
    %v4745 = vpack.c.b16 %v3121, %v3113
    %v4746 = vpack.c.b16 %v3122, %v3114
    %v4747 = vpack.c.b16 %v3123, %v3115
    %v4748 = vpack.c.b16 %v3132, %v3124
    %v4749 = vpack.c.b16 %v3133, %v3125
    %v4750 = vpack.c.b16 %v3134, %v3126
    %v4751 = vpack.c.b16 %v3135, %v3127
    %v4752 = vpack.c.b16 %v3136, %v3128
    %v4753 = vpack.c.b16 %v3137, %v3129
    %v4754 = vpack.c.b16 %v3138, %v3130
    %v4755 = vpack.c.b16 %v3139, %v3131
    %v4756 = vpack.c.b16 %v3148, %v3140
    %v4757 = vpack.c.b16 %v3149, %v3141
    %v4758 = vpack.c.b16 %v3150, %v3142
    %v4759 = vpack.c.b16 %v3151, %v3143
    %v4760 = vpack.c.b16 %v3152, %v3144
    %v4761 = vpack.c.b16 %v3153, %v3145
    %v4762 = vpack.c.b16 %v3154, %v3146
    %v4763 = vpack.c.b16 %v3155, %v3147
    %v4764 = vpack.c.b16 %v3164, %v3156
    %v4765 = vpack.c.b16 %v3165, %v3157
    %v4766 = vpack.c.b16 %v3166, %v3158
    %v4767 = vpack.c.b16 %v3167, %v3159
    %v4768 = vpack.c.b16 %v3168, %v3160
    %v4769 = vpack.c.b16 %v3169, %v3161
    %v4770 = vpack.c.b16 %v3170, %v3162
    %v4771 = vpack.c.b16 %v3171, %v3163
    %v4772 = vpack.c.b16 %v3180, %v3172
    %v4773 = vpack.c.b16 %v3181, %v3173
    %v4774 = vpack.c.b16 %v3182, %v3174
    %v4775 = vpack.c.b16 %v3183, %v3175
    %v4776 = vpack.c.b16 %v3184, %v3176
    %v4777 = vpack.c.b16 %v3185, %v3177
    %v4778 = vpack.c.b16 %v3186, %v3178
    %v4779 = vpack.c.b16 %v3187, %v3179
    %v4780 = vpack.c.b16 %v3196, %v3188
    %v4781 = vpack.c.b16 %v3197, %v3189
    %v4782 = vpack.c.b16 %v3198, %v3190
    %v4783 = vpack.c.b16 %v3199, %v3191
    %v4784 = vpack.c.b16 %v3200, %v3192
    %v4785 = vpack.c.b16 %v3201, %v3193
    %v4786 = vpack.c.b16 %v3202, %v3194
    %v4787 = vpack.c.b16 %v3203, %v3195
    %v4788 = vpack.c.b16 %v3212, %v3204
    %v4789 = vpack.c.b16 %v3213, %v3205
    %v4790 = vpack.c.b16 %v3214, %v3206
    %v4791 = vpack.c.b16 %v3215, %v3207
    %v4792 = vpack.c.b16 %v3216, %v3208
    %v4793 = vpack.c.b16 %v3217, %v3209
    %v4794 = vpack.c.b16 %v3218, %v3210
    %v4795 = vpack.c.b16 %v3219, %v3211
    %v4796 = vpack.c.b16 %v3228, %v3220
    %v4797 = vpack.c.b16 %v3229, %v3221
    %v4798 = vpack.c.b16 %v3230, %v3222
    %v4799 = vpack.c.b16 %v3231, %v3223
    %v4800 = vpack.c.b16 %v3232, %v3224
    %v4801 = vpack.c.b16 %v3233, %v3225
    %v4802 = vpack.c.b16 %v3234, %v3226
    %v4803 = vpack.c.b16 %v3235, %v3227
    %v4804 = vpack.c.b16 %v3244, %v3236
    %v4805 = vpack.c.b16 %v3245, %v3237
    %v4806 = vpack.c.b16 %v3246, %v3238
    %v4807 = vpack.c.b16 %v3247, %v3239
    %v4808 = vpack.c.b16 %v3248, %v3240
    %v4809 = vpack.c.b16 %v3249, %v3241
    %v4810 = vpack.c.b16 %v3250, %v3242
    %v4811 = vpack.c.b16 %v3251, %v3243
    %v4812 = vpack.c.b16 %v3260, %v3252
    %v4813 = vpack.c.b16 %v3261, %v3253
    %v4814 = vpack.c.b16 %v3262, %v3254
    %v4815 = vpack.c.b16 %v3263, %v3255
    %v4816 = vpack.c.b16 %v3264, %v3256
    %v4817 = vpack.c.b16 %v3265, %v3257
    %v4818 = vpack.c.b16 %v3266, %v3258
    %v4819 = vpack.c.b16 %v3267, %v3259
    %v4820 = vpack.c.b16 %v3276, %v3268
    %v4821 = vpack.c.b16 %v3277, %v3269
    %v4822 = vpack.c.b16 %v3278, %v3270
    %v4823 = vpack.c.b16 %v3279, %v3271
    %v4824 = vpack.c.b16 %v3280, %v3272
    %v4825 = vpack.c.b16 %v3281, %v3273
    %v4826 = vpack.c.b16 %v3282, %v3274
    %v4827 = vpack.c.b16 %v3283, %v3275
    %v4828 = vpack.c.b16 %v3292, %v3284
    %v4829 = vpack.c.b16 %v3293, %v3285
    %v4830 = vpack.c.b16 %v3294, %v3286
    %v4831 = vpack.c.b16 %v3295, %v3287
    %v4832 = vpack.c.b16 %v3296, %v3288
    %v4833 = vpack.c.b16 %v3297, %v3289
    %v4834 = vpack.c.b16 %v3298, %v3290
    %v4835 = vpack.c.b16 %v3299, %v3291
    %v4836 = vpack.c.b16 %v3308, %v3300
    %v4837 = vpack.c.b16 %v3309, %v3301
    %v4838 = vpack.c.b16 %v3310, %v3302
    %v4839 = vpack.c.b16 %v3311, %v3303
    %v4840 = vpack.c.b16 %v3312, %v3304
    %v4841 = vpack.c.b16 %v3313, %v3305
    %v4842 = vpack.c.b16 %v3314, %v3306
    %v4843 = vpack.c.b16 %v3315, %v3307
    %v4844 = vpack.c.b16 %v3324, %v3316
    %v4845 = vpack.c.b16 %v3325, %v3317
    %v4846 = vpack.c.b16 %v3326, %v3318
    %v4847 = vpack.c.b16 %v3327, %v3319
    %v4848 = vpack.c.b16 %v3328, %v3320
    %v4849 = vpack.c.b16 %v3329, %v3321
    %v4850 = vpack.c.b16 %v3330, %v3322
    %v4851 = vpack.c.b16 %v3331, %v3323
    %v4852 = vpack.c.b16 %v3340, %v3332
    %v4853 = vpack.c.b16 %v3341, %v3333
    %v4854 = vpack.c.b16 %v3342, %v3334
    %v4855 = vpack.c.b16 %v3343, %v3335
    %v4856 = vpack.c.b16 %v3344, %v3336
    %v4857 = vpack.c.b16 %v3345, %v3337
    %v4858 = vpack.c.b16 %v3346, %v3338
    %v4859 = vpack.c.b16 %v3347, %v3339
    %v4860 = vpack.c.b16 %v3356, %v3348
    %v4861 = vpack.c.b16 %v3357, %v3349
    %v4862 = vpack.c.b16 %v3358, %v3350
    %v4863 = vpack.c.b16 %v3359, %v3351
    %v4864 = vpack.c.b16 %v3360, %v3352
    %v4865 = vpack.c.b16 %v3361, %v3353
    %v4866 = vpack.c.b16 %v3362, %v3354
    %v4867 = vpack.c.b16 %v3363, %v3355
    %v4868 = vpack.c.b16 %v3372, %v3364
    %v4869 = vpack.c.b16 %v3373, %v3365
    %v4870 = vpack.c.b16 %v3374, %v3366
    %v4871 = vpack.c.b16 %v3375, %v3367
    %v4872 = vpack.c.b16 %v3376, %v3368
    %v4873 = vpack.c.b16 %v3377, %v3369
    %v4874 = vpack.c.b16 %v3378, %v3370
    %v4875 = vpack.c.b16 %v3379, %v3371
    %v4876 = vpack.c.b16 %v3388, %v3380
    %v4877 = vpack.c.b16 %v3389, %v3381
    %v4878 = vpack.c.b16 %v3390, %v3382
    %v4879 = vpack.c.b16 %v3391, %v3383
    %v4880 = vpack.c.b16 %v3392, %v3384
    %v4881 = vpack.c.b16 %v3393, %v3385
    %v4882 = vpack.c.b16 %v3394, %v3386
    %v4883 = vpack.c.b16 %v3395, %v3387
    %v4884 = vpack.c.b16 %v3404, %v3396
    %v4885 = vpack.c.b16 %v3405, %v3397
    %v4886 = vpack.c.b16 %v3406, %v3398
    %v4887 = vpack.c.b16 %v3407, %v3399
    %v4888 = vpack.c.b16 %v3408, %v3400
    %v4889 = vpack.c.b16 %v3409, %v3401
    %v4890 = vpack.c.b16 %v3410, %v3402
    %v4891 = vpack.c.b16 %v3411, %v3403
    %v4892 = vpack.c.b16 %v3420, %v3412
    %v4893 = vpack.c.b16 %v3421, %v3413
    %v4894 = vpack.c.b16 %v3422, %v3414
    %v4895 = vpack.c.b16 %v3423, %v3415
    %v4896 = vpack.c.b16 %v3424, %v3416
    %v4897 = vpack.c.b16 %v3425, %v3417
    %v4898 = vpack.c.b16 %v3426, %v3418
    %v4899 = vpack.c.b16 %v3427, %v3419
    %v4900 = vpack.c.b16 %v3436, %v3428
    %v4901 = vpack.c.b16 %v3437, %v3429
    %v4902 = vpack.c.b16 %v3438, %v3430
    %v4903 = vpack.c.b16 %v3439, %v3431
    %v4904 = vpack.c.b16 %v3440, %v3432
    %v4905 = vpack.c.b16 %v3441, %v3433
    %v4906 = vpack.c.b16 %v3442, %v3434
    %v4907 = vpack.c.b16 %v3443, %v3435
    %v4908 = vpack.c.b16 %v3452, %v3444
    %v4909 = vpack.c.b16 %v3453, %v3445
    %v4910 = vpack.c.b16 %v3454, %v3446
    %v4911 = vpack.c.b16 %v3455, %v3447
    %v4912 = vpack.c.b16 %v3456, %v3448
    %v4913 = vpack.c.b16 %v3457, %v3449
    %v4914 = vpack.c.b16 %v3458, %v3450
    %v4915 = vpack.c.b16 %v3459, %v3451
    %v4916 = vpack.c.b16 %v3468, %v3460
    %v4917 = vpack.c.b16 %v3469, %v3461
    %v4918 = vpack.c.b16 %v3470, %v3462
    %v4919 = vpack.c.b16 %v3471, %v3463
    %v4920 = vpack.c.b16 %v3472, %v3464
    %v4921 = vpack.c.b16 %v3473, %v3465
    %v4922 = vpack.c.b16 %v3474, %v3466
    %v4923 = vpack.c.b16 %v3475, %v3467
    %v4924 = vpack.c.b16 %v3484, %v3476
    %v4925 = vpack.c.b16 %v3485, %v3477
    %v4926 = vpack.c.b16 %v3486, %v3478
    %v4927 = vpack.c.b16 %v3487, %v3479
    %v4928 = vpack.c.b16 %v3488, %v3480
    %v4929 = vpack.c.b16 %v3489, %v3481
    %v4930 = vpack.c.b16 %v3490, %v3482
    %v4931 = vpack.c.b16 %v3491, %v3483
    %v4932 = vpack.c.b16 %v3500, %v3492
    %v4933 = vpack.c.b16 %v3501, %v3493
    %v4934 = vpack.c.b16 %v3502, %v3494
    %v4935 = vpack.c.b16 %v3503, %v3495
    %v4936 = vpack.c.b16 %v3504, %v3496
    %v4937 = vpack.c.b16 %v3505, %v3497
    %v4938 = vpack.c.b16 %v3506, %v3498
    %v4939 = vpack.c.b16 %v3507, %v3499
    %v4940 = vpack.c.b16 %v3516, %v3508
    %v4941 = vpack.c.b16 %v3517, %v3509
    %v4942 = vpack.c.b16 %v3518, %v3510
    %v4943 = vpack.c.b16 %v3519, %v3511
    %v4944 = vpack.c.b16 %v3520, %v3512
    %v4945 = vpack.c.b16 %v3521, %v3513
    %v4946 = vpack.c.b16 %v3522, %v3514
    %v4947 = vpack.c.b16 %v3523, %v3515
    %v4948 = vpack.c.b16 %v3532, %v3524
    %v4949 = vpack.c.b16 %v3533, %v3525
    %v4950 = vpack.c.b16 %v3534, %v3526
    %v4951 = vpack.c.b16 %v3535, %v3527
    %v4952 = vpack.c.b16 %v3536, %v3528
    %v4953 = vpack.c.b16 %v3537, %v3529
    %v4954 = vpack.c.b16 %v3538, %v3530
    %v4955 = vpack.c.b16 %v3539, %v3531
    %v4956 = vpack.c.b16 %v3548, %v3540
    %v4957 = vpack.c.b16 %v3549, %v3541
    %v4958 = vpack.c.b16 %v3550, %v3542
    %v4959 = vpack.c.b16 %v3551, %v3543
    %v4960 = vpack.c.b16 %v3552, %v3544
    %v4961 = vpack.c.b16 %v3553, %v3545
    %v4962 = vpack.c.b16 %v3554, %v3546
    %v4963 = vpack.c.b16 %v3555, %v3547
    %v4964 = vpack.c.b16 %v3564, %v3556
    %v4965 = vpack.c.b16 %v3565, %v3557
    %v4966 = vpack.c.b16 %v3566, %v3558
    %v4967 = vpack.c.b16 %v3567, %v3559
    %v4968 = vpack.c.b16 %v3568, %v3560
    %v4969 = vpack.c.b16 %v3569, %v3561
    %v4970 = vpack.c.b16 %v3570, %v3562
    %v4971 = vpack.c.b16 %v3571, %v3563
    %v4972 = vpack.c.b16 %v3580, %v3572
    %v4973 = vpack.c.b16 %v3581, %v3573
    %v4974 = vpack.c.b16 %v3582, %v3574
    %v4975 = vpack.c.b16 %v3583, %v3575
    %v4976 = vpack.c.b16 %v3584, %v3576
    %v4977 = vpack.c.b16 %v3585, %v3577
    %v4978 = vpack.c.b16 %v3586, %v3578
    %v4979 = vpack.c.b16 %v3587, %v3579
    %v4980 = vpack.c.b16 %v3596, %v3588
    %v4981 = vpack.c.b16 %v3597, %v3589
    %v4982 = vpack.c.b16 %v3598, %v3590
    %v4983 = vpack.c.b16 %v3599, %v3591
    %v4984 = vpack.c.b16 %v3600, %v3592
    %v4985 = vpack.c.b16 %v3601, %v3593
    %v4986 = vpack.c.b16 %v3602, %v3594
    %v4987 = vpack.c.b16 %v3603, %v3595
    %v4988 = vpack.c.b16 %v3612, %v3604
    %v4989 = vpack.c.b16 %v3613, %v3605
    %v4990 = vpack.c.b16 %v3614, %v3606
    %v4991 = vpack.c.b16 %v3615, %v3607
    %v4992 = vpack.c.b16 %v3616, %v3608
    %v4993 = vpack.c.b16 %v3617, %v3609
    %v4994 = vpack.c.b16 %v3618, %v3610
    %v4995 = vpack.c.b16 %v3619, %v3611
    %v4996 = vpack.c.b16 %v3628, %v3620
    %v4997 = vpack.c.b16 %v3629, %v3621
    %v4998 = vpack.c.b16 %v3630, %v3622
    %v4999 = vpack.c.b16 %v3631, %v3623
    %v5000 = vpack.c.b16 %v3632, %v3624
    %v5001 = vpack.c.b16 %v3633, %v3625
    %v5002 = vpack.c.b16 %v3634, %v3626
    %v5003 = vpack.c.b16 %v3635, %v3627
    %v5004 = vpack.c.b16 %v3644, %v3636
    %v5005 = vpack.c.b16 %v3645, %v3637
    %v5006 = vpack.c.b16 %v3646, %v3638
    %v5007 = vpack.c.b16 %v3647, %v3639
    %v5008 = vpack.c.b16 %v3648, %v3640
    %v5009 = vpack.c.b16 %v3649, %v3641
    %v5010 = vpack.c.b16 %v3650, %v3642
    %v5011 = vpack.c.b16 %v3651, %v3643
    %v5012 = vpack.c.b16 %v3660, %v3652
    %v5013 = vpack.c.b16 %v3661, %v3653
    %v5014 = vpack.c.b16 %v3662, %v3654
    %v5015 = vpack.c.b16 %v3663, %v3655
    %v5016 = vpack.c.b16 %v3664, %v3656
    %v5017 = vpack.c.b16 %v3665, %v3657
    %v5018 = vpack.c.b16 %v3666, %v3658
    %v5019 = vpack.c.b16 %v3667, %v3659
    %v5020 = vpack.c.b16 %v3676, %v3668
    %v5021 = vpack.c.b16 %v3677, %v3669
    %v5022 = vpack.c.b16 %v3678, %v3670
    %v5023 = vpack.c.b16 %v3679, %v3671
    %v5024 = vpack.c.b16 %v3680, %v3672
    %v5025 = vpack.c.b16 %v3681, %v3673
    %v5026 = vpack.c.b16 %v3682, %v3674
    %v5027 = vpack.c.b16 %v3683, %v3675
    %v5028 = vpack.c.b16 %v3692, %v3684
    %v5029 = vpack.c.b16 %v3693, %v3685
    %v5030 = vpack.c.b16 %v3694, %v3686
    %v5031 = vpack.c.b16 %v3695, %v3687
    %v5032 = vpack.c.b16 %v3696, %v3688
    %v5033 = vpack.c.b16 %v3697, %v3689
    %v5034 = vpack.c.b16 %v3698, %v3690
    %v5035 = vpack.c.b16 %v3699, %v3691
    %v5036 = vpack.c.b16 %v3708, %v3700
    %v5037 = vpack.c.b16 %v3709, %v3701
    %v5038 = vpack.c.b16 %v3710, %v3702
    %v5039 = vpack.c.b16 %v3711, %v3703
    %v5040 = vpack.c.b16 %v3712, %v3704
    %v5041 = vpack.c.b16 %v3713, %v3705
    %v5042 = vpack.c.b16 %v3714, %v3706
    %v5043 = vpack.c.b16 %v3715, %v3707
    %v5044 = vpack.c.b16 %v3724, %v3716
    %v5045 = vpack.c.b16 %v3725, %v3717
    %v5046 = vpack.c.b16 %v3726, %v3718
    %v5047 = vpack.c.b16 %v3727, %v3719
    %v5048 = vpack.c.b16 %v3728, %v3720
    %v5049 = vpack.c.b16 %v3729, %v3721
    %v5050 = vpack.c.b16 %v3730, %v3722
    %v5051 = vpack.c.b16 %v3731, %v3723
    %v5052 = vpack.c.b16 %v3740, %v3732
    %v5053 = vpack.c.b16 %v3741, %v3733
    %v5054 = vpack.c.b16 %v3742, %v3734
    %v5055 = vpack.c.b16 %v3743, %v3735
    %v5056 = vpack.c.b16 %v3744, %v3736
    %v5057 = vpack.c.b16 %v3745, %v3737
    %v5058 = vpack.c.b16 %v3746, %v3738
    %v5059 = vpack.c.b16 %v3747, %v3739
    %v5060 = vpack.c.b16 %v3756, %v3748
    %v5061 = vpack.c.b16 %v3757, %v3749
    %v5062 = vpack.c.b16 %v3758, %v3750
    %v5063 = vpack.c.b16 %v3759, %v3751
    %v5064 = vpack.c.b16 %v3760, %v3752
    %v5065 = vpack.c.b16 %v3761, %v3753
    %v5066 = vpack.c.b16 %v3762, %v3754
    %v5067 = vpack.c.b16 %v3763, %v3755
    %v5068 = vpack.c.b16 %v3772, %v3764
    %v5069 = vpack.c.b16 %v3773, %v3765
    %v5070 = vpack.c.b16 %v3774, %v3766
    %v5071 = vpack.c.b16 %v3775, %v3767
    %v5072 = vpack.c.b16 %v3776, %v3768
    %v5073 = vpack.c.b16 %v3777, %v3769
    %v5074 = vpack.c.b16 %v3778, %v3770
    %v5075 = vpack.c.b16 %v3779, %v3771
    %v5076 = vpack.c.b16 %v3788, %v3780
    %v5077 = vpack.c.b16 %v3789, %v3781
    %v5078 = vpack.c.b16 %v3790, %v3782
    %v5079 = vpack.c.b16 %v3791, %v3783
    %v5080 = vpack.c.b16 %v3792, %v3784
    %v5081 = vpack.c.b16 %v3793, %v3785
    %v5082 = vpack.c.b16 %v3794, %v3786
    %v5083 = vpack.c.b16 %v3795, %v3787
    %v5084 = vpack.c.b16 %v3804, %v3796
    %v5085 = vpack.c.b16 %v3805, %v3797
    %v5086 = vpack.c.b16 %v3806, %v3798
    %v5087 = vpack.c.b16 %v3807, %v3799
    %v5088 = vpack.c.b16 %v3808, %v3800
    %v5089 = vpack.c.b16 %v3809, %v3801
    %v5090 = vpack.c.b16 %v3810, %v3802
    %v5091 = vpack.c.b16 %v3811, %v3803
    %v5092 = vpack.c.b16 %v3820, %v3812
    %v5093 = vpack.c.b16 %v3821, %v3813
    %v5094 = vpack.c.b16 %v3822, %v3814
    %v5095 = vpack.c.b16 %v3823, %v3815
    %v5096 = vpack.c.b16 %v3824, %v3816
    %v5097 = vpack.c.b16 %v3825, %v3817
    %v5098 = vpack.c.b16 %v3826, %v3818
    %v5099 = vpack.c.b16 %v3827, %v3819
    %v5100 = vpack.c.b16 %v3836, %v3828
    %v5101 = vpack.c.b16 %v3837, %v3829
    %v5102 = vpack.c.b16 %v3838, %v3830
    %v5103 = vpack.c.b16 %v3839, %v3831
    %v5104 = vpack.c.b16 %v3840, %v3832
    %v5105 = vpack.c.b16 %v3841, %v3833
    %v5106 = vpack.c.b16 %v3842, %v3834
    %v5107 = vpack.c.b16 %v3843, %v3835
    %v5108 = vpack.c.b16 %v3852, %v3844
    %v5109 = vpack.c.b16 %v3853, %v3845
    %v5110 = vpack.c.b16 %v3854, %v3846
    %v5111 = vpack.c.b16 %v3855, %v3847
    %v5112 = vpack.c.b16 %v3856, %v3848
    %v5113 = vpack.c.b16 %v3857, %v3849
    %v5114 = vpack.c.b16 %v3858, %v3850
    %v5115 = vpack.c.b16 %v3859, %v3851
    %v5116 = vpack.c.b16 %v3868, %v3860
    %v5117 = vpack.c.b16 %v3869, %v3861
    %v5118 = vpack.c.b16 %v3870, %v3862
    %v5119 = vpack.c.b16 %v3871, %v3863
    %v5120 = vpack.c.b16 %v3872, %v3864
    %v5121 = vpack.c.b16 %v3873, %v3865
    %v5122 = vpack.c.b16 %v3874, %v3866
    %v5123 = vpack.c.b16 %v3875, %v3867
    %v5124 = vpack.c.b16 %v3884, %v3876
    %v5125 = vpack.c.b16 %v3885, %v3877
    %v5126 = vpack.c.b16 %v3886, %v3878
    %v5127 = vpack.c.b16 %v3887, %v3879
    %v5128 = vpack.c.b16 %v3888, %v3880
    %v5129 = vpack.c.b16 %v3889, %v3881
    %v5130 = vpack.c.b16 %v3890, %v3882
    %v5131 = vpack.c.b16 %v3891, %v3883
    %v5132 = vpack.c.b16 %v3900, %v3892
    %v5133 = vpack.c.b16 %v3901, %v3893
    %v5134 = vpack.c.b16 %v3902, %v3894
    %v5135 = vpack.c.b16 %v3903, %v3895
    %v5136 = vpack.c.b16 %v3904, %v3896
    %v5137 = vpack.c.b16 %v3905, %v3897
    %v5138 = vpack.c.b16 %v3906, %v3898
    %v5139 = vpack.c.b16 %v3907, %v3899
    %v5140 = vpack.c.b16 %v3916, %v3908
    %v5141 = vpack.c.b16 %v3917, %v3909
    %v5142 = vpack.c.b16 %v3918, %v3910
    %v5143 = vpack.c.b16 %v3919, %v3911
    %v5144 = vpack.c.b16 %v3920, %v3912
    %v5145 = vpack.c.b16 %v3921, %v3913
    %v5146 = vpack.c.b16 %v3922, %v3914
    %v5147 = vpack.c.b16 %v3923, %v3915
    %v5148 = vpack.c.b16 %v3932, %v3924
    %v5149 = vpack.c.b16 %v3933, %v3925
    %v5150 = vpack.c.b16 %v3934, %v3926
    %v5151 = vpack.c.b16 %v3935, %v3927
    %v5152 = vpack.c.b16 %v3936, %v3928
    %v5153 = vpack.c.b16 %v3937, %v3929
    %v5154 = vpack.c.b16 %v3938, %v3930
    %v5155 = vpack.c.b16 %v3939, %v3931
    %v5156 = vpack.c.b16 %v3948, %v3940
    %v5157 = vpack.c.b16 %v3949, %v3941
    %v5158 = vpack.c.b16 %v3950, %v3942
    %v5159 = vpack.c.b16 %v3951, %v3943
    %v5160 = vpack.c.b16 %v3952, %v3944
    %v5161 = vpack.c.b16 %v3953, %v3945
    %v5162 = vpack.c.b16 %v3954, %v3946
    %v5163 = vpack.c.b16 %v3955, %v3947
    %v5164 = vpack.c.b16 %v3964, %v3956
    %v5165 = vpack.c.b16 %v3965, %v3957
    %v5166 = vpack.c.b16 %v3966, %v3958
    %v5167 = vpack.c.b16 %v3967, %v3959
    %v5168 = vpack.c.b16 %v3968, %v3960
    %v5169 = vpack.c.b16 %v3969, %v3961
    %v5170 = vpack.c.b16 %v3970, %v3962
    %v5171 = vpack.c.b16 %v3971, %v3963
    %v5172 = vpack.c.b16 %v3980, %v3972
    %v5173 = vpack.c.b16 %v3981, %v3973
    %v5174 = vpack.c.b16 %v3982, %v3974
    %v5175 = vpack.c.b16 %v3983, %v3975
    %v5176 = vpack.c.b16 %v3984, %v3976
    %v5177 = vpack.c.b16 %v3985, %v3977
    %v5178 = vpack.c.b16 %v3986, %v3978
    %v5179 = vpack.c.b16 %v3987, %v3979
    %v5180 = vpack.c.b16 %v3996, %v3988
    %v5181 = vpack.c.b16 %v3997, %v3989
    %v5182 = vpack.c.b16 %v3998, %v3990
    %v5183 = vpack.c.b16 %v3999, %v3991
    %v5184 = vpack.c.b16 %v4000, %v3992
    %v5185 = vpack.c.b16 %v4001, %v3993
    %v5186 = vpack.c.b16 %v4002, %v3994
    %v5187 = vpack.c.b16 %v4003, %v3995
    %v5188 = vpack.c.b16 %v4012, %v4004
    %v5189 = vpack.c.b16 %v4013, %v4005
    %v5190 = vpack.c.b16 %v4014, %v4006
    %v5191 = vpack.c.b16 %v4015, %v4007
    %v5192 = vpack.c.b16 %v4016, %v4008
    %v5193 = vpack.c.b16 %v4017, %v4009
    %v5194 = vpack.c.b16 %v4018, %v4010
    %v5195 = vpack.c.b16 %v4019, %v4011
    %v5196 = vpack.c.b16 %v4028, %v4020
    %v5197 = vpack.c.b16 %v4029, %v4021
    %v5198 = vpack.c.b16 %v4030, %v4022
    %v5199 = vpack.c.b16 %v4031, %v4023
    %v5200 = vpack.c.b16 %v4032, %v4024
    %v5201 = vpack.c.b16 %v4033, %v4025
    %v5202 = vpack.c.b16 %v4034, %v4026
    %v5203 = vpack.c.b16 %v4035, %v4027
    %v5204 = vpack.c.b16 %v4044, %v4036
    %v5205 = vpack.c.b16 %v4045, %v4037
    %v5206 = vpack.c.b16 %v4046, %v4038
    %v5207 = vpack.c.b16 %v4047, %v4039
    %v5208 = vpack.c.b16 %v4048, %v4040
    %v5209 = vpack.c.b16 %v4049, %v4041
    %v5210 = vpack.c.b16 %v4050, %v4042
    %v5211 = vpack.c.b16 %v4051, %v4043
    %v5212 = vpack.c.b16 %v4060, %v4052
    %v5213 = vpack.c.b16 %v4061, %v4053
    %v5214 = vpack.c.b16 %v4062, %v4054
    %v5215 = vpack.c.b16 %v4063, %v4055
    %v5216 = vpack.c.b16 %v4064, %v4056
    %v5217 = vpack.c.b16 %v4065, %v4057
    %v5218 = vpack.c.b16 %v4066, %v4058
    %v5219 = vpack.c.b16 %v4067, %v4059
    %v5220 = vpack.c.b16 %v4076, %v4068
    %v5221 = vpack.c.b16 %v4077, %v4069
    %v5222 = vpack.c.b16 %v4078, %v4070
    %v5223 = vpack.c.b16 %v4079, %v4071
    %v5224 = vpack.c.b16 %v4080, %v4072
    %v5225 = vpack.c.b16 %v4081, %v4073
    %v5226 = vpack.c.b16 %v4082, %v4074
    %v5227 = vpack.c.b16 %v4083, %v4075
    %v5228 = vpack.c.b16 %v4092, %v4084
    %v5229 = vpack.c.b16 %v4093, %v4085
    %v5230 = vpack.c.b16 %v4094, %v4086
    %v5231 = vpack.c.b16 %v4095, %v4087
    %v5232 = vpack.c.b16 %v4096, %v4088
    %v5233 = vpack.c.b16 %v4097, %v4089
    %v5234 = vpack.c.b16 %v4098, %v4090
    %v5235 = vpack.c.b16 %v4099, %v4091
    %v5236 = vpack.c.b16 %v4108, %v4100
    %v5237 = vpack.c.b16 %v4109, %v4101
    %v5238 = vpack.c.b16 %v4110, %v4102
    %v5239 = vpack.c.b16 %v4111, %v4103
    %v5240 = vpack.c.b16 %v4112, %v4104
    %v5241 = vpack.c.b16 %v4113, %v4105
    %v5242 = vpack.c.b16 %v4114, %v4106
    %v5243 = vpack.c.b16 %v4115, %v4107
    %v5244 = vpack.c.b16 %v4124, %v4116
    %v5245 = vpack.c.b16 %v4125, %v4117
    %v5246 = vpack.c.b16 %v4126, %v4118
    %v5247 = vpack.c.b16 %v4127, %v4119
    %v5248 = vpack.c.b16 %v4128, %v4120
    %v5249 = vpack.c.b16 %v4129, %v4121
    %v5250 = vpack.c.b16 %v4130, %v4122
    %v5251 = vpack.c.b16 %v4131, %v4123
    %v5252 = vpack.c.b16 %v4140, %v4132
    %v5253 = vpack.c.b16 %v4141, %v4133
    %v5254 = vpack.c.b16 %v4142, %v4134
    %v5255 = vpack.c.b16 %v4143, %v4135
    %v5256 = vpack.c.b16 %v4144, %v4136
    %v5257 = vpack.c.b16 %v4145, %v4137
    %v5258 = vpack.c.b16 %v4146, %v4138
    %v5259 = vpack.c.b16 %v4147, %v4139
    %v5260 = vpack.c.b16 %v4156, %v4148
    %v5261 = vpack.c.b16 %v4157, %v4149
    %v5262 = vpack.c.b16 %v4158, %v4150
    %v5263 = vpack.c.b16 %v4159, %v4151
    %v5264 = vpack.c.b16 %v4160, %v4152
    %v5265 = vpack.c.b16 %v4161, %v4153
    %v5266 = vpack.c.b16 %v4162, %v4154
    %v5267 = vpack.c.b16 %v4163, %v4155
    %v5268 = vpack.c.b16 %v4172, %v4164
    %v5269 = vpack.c.b16 %v4173, %v4165
    %v5270 = vpack.c.b16 %v4174, %v4166
    %v5271 = vpack.c.b16 %v4175, %v4167
    %v5272 = vpack.c.b16 %v4176, %v4168
    %v5273 = vpack.c.b16 %v4177, %v4169
    %v5274 = vpack.c.b16 %v4178, %v4170
    %v5275 = vpack.c.b16 %v4179, %v4171
    %v5276 = vpack.c.b16 %v4188, %v4180
    %v5277 = vpack.c.b16 %v4189, %v4181
    %v5278 = vpack.c.b16 %v4190, %v4182
    %v5279 = vpack.c.b16 %v4191, %v4183
    %v5280 = vpack.c.b16 %v4192, %v4184
    %v5281 = vpack.c.b16 %v4193, %v4185
    %v5282 = vpack.c.b16 %v4194, %v4186
    %v5283 = vpack.c.b16 %v4195, %v4187
    %v5284 = vpack.c.b16 %v4204, %v4196
    %v5285 = vpack.c.b16 %v4205, %v4197
    %v5286 = vpack.c.b16 %v4206, %v4198
    %v5287 = vpack.c.b16 %v4207, %v4199
    %v5288 = vpack.c.b16 %v4208, %v4200
    %v5289 = vpack.c.b16 %v4209, %v4201
    %v5290 = vpack.c.b16 %v4210, %v4202
    %v5291 = vpack.c.b16 %v4211, %v4203
    %v5292 = vpack.c.b16 %v4220, %v4212
    %v5293 = vpack.c.b16 %v4221, %v4213
    %v5294 = vpack.c.b16 %v4222, %v4214
    %v5295 = vpack.c.b16 %v4223, %v4215
    %v5296 = vpack.c.b16 %v4224, %v4216
    %v5297 = vpack.c.b16 %v4225, %v4217
    %v5298 = vpack.c.b16 %v4226, %v4218
    %v5299 = vpack.c.b16 %v4227, %v4219
    %v5300 = vpack.c.b16 %v4236, %v4228
    %v5301 = vpack.c.b16 %v4237, %v4229
    %v5302 = vpack.c.b16 %v4238, %v4230
    %v5303 = vpack.c.b16 %v4239, %v4231
    %v5304 = vpack.c.b16 %v4240, %v4232
    %v5305 = vpack.c.b16 %v4241, %v4233
    %v5306 = vpack.c.b16 %v4242, %v4234
    %v5307 = vpack.c.b16 %v4243, %v4235
    %v5308 = vpack.c.b16 %v4252, %v4244
    %v5309 = vpack.c.b16 %v4253, %v4245
    %v5310 = vpack.c.b16 %v4254, %v4246
    %v5311 = vpack.c.b16 %v4255, %v4247
    %v5312 = vpack.c.b16 %v4256, %v4248
    %v5313 = vpack.c.b16 %v4257, %v4249
    %v5314 = vpack.c.b16 %v4258, %v4250
    %v5315 = vpack.c.b16 %v4259, %v4251
    %v5316 = vpack.c.b16 %v4268, %v4260
    %v5317 = vpack.c.b16 %v4269, %v4261
    %v5318 = vpack.c.b16 %v4270, %v4262
    %v5319 = vpack.c.b16 %v4271, %v4263
    %v5320 = vpack.c.b16 %v4272, %v4264
    %v5321 = vpack.c.b16 %v4273, %v4265
    %v5322 = vpack.c.b16 %v4274, %v4266
    %v5323 = vpack.c.b16 %v4275, %v4267
    %v5324 = vpack.c.b16 %v4284, %v4276
    %v5325 = vpack.c.b16 %v4285, %v4277
    %v5326 = vpack.c.b16 %v4286, %v4278
    %v5327 = vpack.c.b16 %v4287, %v4279
    %v5328 = vpack.c.b16 %v4288, %v4280
    %v5329 = vpack.c.b16 %v4289, %v4281
    %v5330 = vpack.c.b16 %v4290, %v4282
    %v5331 = vpack.c.b16 %v4291, %v4283
    %v5332 = vpack.c.b16 %v4300, %v4292
    %v5333 = vpack.c.b16 %v4301, %v4293
    %v5334 = vpack.c.b16 %v4302, %v4294
    %v5335 = vpack.c.b16 %v4303, %v4295
    %v5336 = vpack.c.b16 %v4304, %v4296
    %v5337 = vpack.c.b16 %v4305, %v4297
    %v5338 = vpack.c.b16 %v4306, %v4298
    %v5339 = vpack.c.b16 %v4307, %v4299
    %v5340 = vpack.c.b16 %v4316, %v4308
    %v5341 = vpack.c.b16 %v4317, %v4309
    %v5342 = vpack.c.b16 %v4318, %v4310
    %v5343 = vpack.c.b16 %v4319, %v4311
    %v5344 = vpack.c.b16 %v4320, %v4312
    %v5345 = vpack.c.b16 %v4321, %v4313
    %v5346 = vpack.c.b16 %v4322, %v4314
    %v5347 = vpack.c.b16 %v4323, %v4315
    %6372 = vmatprep.subr.bf16.mxu0 %v4325
    %6373 = vmatpush1.bf16.msra.mxu0 %v4324
    %6374 = vmatprep.subr.bf16.mxu0 %v4333
    %6375 = vmatpush1.bf16.msra.mxu0 %v4332
    %6376 = vmatprep.subr.bf16.mxu0 %v4341
    %6377 = vmatpush1.bf16.msra.mxu0 %v4340
    %6378 = vmatprep.subr.bf16.mxu0 %v4349
    %6379 = vmatpush1.bf16.msra.mxu0 %v4348
    %6380 = vmatprep.subr.bf16.mxu0 %v4357
    %6381 = vmatpush1.bf16.msra.mxu0 %v4356
    %6382 = vmatprep.subr.bf16.mxu0 %v4365
    %6383 = vmatpush1.bf16.msra.mxu0 %v4364
    %6384 = vmatprep.subr.bf16.mxu0 %v4373
    %6385 = vmatpush1.bf16.msra.mxu0 %v4372
    %6386 = vmatprep.subr.bf16.mxu0 %v4381
    %6387 = vmatpush1.bf16.msra.mxu0 %v4380
    %6388 = vmatprep.subr.bf16.mxu0 %v4389
    %6389 = vmatpush1.bf16.msra.mxu0 %v4388
    %6390 = vmatprep.subr.bf16.mxu0 %v4397
    %6391 = vmatpush1.bf16.msra.mxu0 %v4396
    %6392 = vmatprep.subr.bf16.mxu0 %v4405
    %6393 = vmatpush1.bf16.msra.mxu0 %v4404
    %6394 = vmatprep.subr.bf16.mxu0 %v4413
    %6395 = vmatpush1.bf16.msra.mxu0 %v4412
    %6396 = vmatprep.subr.bf16.mxu0 %v4421
    %6397 = vmatpush1.bf16.msra.mxu0 %v4420
    %6398 = vmatprep.subr.bf16.mxu0 %v4429
    %6399 = vmatpush1.bf16.msra.mxu0 %v4428
    %6400 = vmatprep.subr.bf16.mxu0 %v4437
    %6401 = vmatpush1.bf16.msra.mxu0 %v4436
    %6402 = vmatprep.subr.bf16.mxu0 %v4445
    %6403 = vmatpush1.bf16.msra.mxu0 %v4444
    %6404 = vmatprep.mubr.bf16.mxu0 %v1221
    %6405 = vmatmul.mubr.bf16.gmra.mrb[0].mxu0 %v1220
    %v6406 = vpop.f32.mrb[0].mxu0
    %v6407 = vadd.f32 0.0, %v6406
    %v6408 = vpop.f32.mrb[0].mxu0
    %v6409 = vadd.f32 0.0, %v6408
    %v6410 = vpop.f32.mrb[0].mxu0
    %v6411 = vadd.f32 0.0, %v6410
    %v6412 = vpop.f32.mrb[0].mxu0
    %v6413 = vadd.f32 0.0, %v6412
    %6414 = vdwg.mxu0
    %6415 = vmatprep.subr.bf16.mxu0 %v4453
    %6416 = vmatpush1.bf16.msra.mxu0 %v4452
    %6417 = vmatprep.subr.bf16.mxu0 %v4461
    %6418 = vmatpush1.bf16.msra.mxu0 %v4460
    %6419 = vmatprep.subr.bf16.mxu0 %v4469
    %6420 = vmatpush1.bf16.msra.mxu0 %v4468
    %6421 = vmatprep.subr.bf16.mxu0 %v4477
    %6422 = vmatpush1.bf16.msra.mxu0 %v4476
    %6423 = vmatprep.subr.bf16.mxu0 %v4485
    %6424 = vmatpush1.bf16.msra.mxu0 %v4484
    %6425 = vmatprep.subr.bf16.mxu0 %v4493
    %6426 = vmatpush1.bf16.msra.mxu0 %v4492
    %6427 = vmatprep.subr.bf16.mxu0 %v4501
    %6428 = vmatpush1.bf16.msra.mxu0 %v4500
    %6429 = vmatprep.subr.bf16.mxu0 %v4509
    %6430 = vmatpush1.bf16.msra.mxu0 %v4508
    %6431 = vmatprep.subr.bf16.mxu0 %v4517
    %6432 = vmatpush1.bf16.msra.mxu0 %v4516
    %6433 = vmatprep.subr.bf16.mxu0 %v4525
    %6434 = vmatpush1.bf16.msra.mxu0 %v4524
    %6435 = vmatprep.subr.bf16.mxu0 %v4533
    %6436 = vmatpush1.bf16.msra.mxu0 %v4532
    %6437 = vmatprep.subr.bf16.mxu0 %v4541
    %6438 = vmatpush1.bf16.msra.mxu0 %v4540
    %6439 = vmatprep.subr.bf16.mxu0 %v4549
    %6440 = vmatpush1.bf16.msra.mxu0 %v4548
    %6441 = vmatprep.subr.bf16.mxu0 %v4557
    %6442 = vmatpush1.bf16.msra.mxu0 %v4556
    %6443 = vmatprep.subr.bf16.mxu0 %v4565
    %6444 = vmatpush1.bf16.msra.mxu0 %v4564
    %6445 = vmatprep.subr.bf16.mxu0 %v4573
    %6446 = vmatpush1.bf16.msra.mxu0 %v4572
    %6447 = vmatprep.mubr.bf16.mxu0 %v1223
    %6448 = vmatmul.mubr.bf16.gmra.mrb[0].mxu0 %v1222
    %v6449 = vpop.f32.mrb[0].mxu0
    %v6450 = vadd.f32 %v6407, %v6449
    %v6451 = vpop.f32.mrb[0].mxu0
    %v6452 = vadd.f32 %v6409, %v6451
    %v6453 = vpop.f32.mrb[0].mxu0
    %v6454 = vadd.f32 %v6411, %v6453
    %v6455 = vpop.f32.mrb[0].mxu0
    %v6456 = vadd.f32 %v6413, %v6455
    %6457 = vdwg.mxu0
    %6458 = vmatprep.subr.bf16.mxu0 %v4581
    %6459 = vmatpush1.bf16.msra.mxu0 %v4580
    %6460 = vmatprep.subr.bf16.mxu0 %v4589
    %6461 = vmatpush1.bf16.msra.mxu0 %v4588
    %6462 = vmatprep.subr.bf16.mxu0 %v4597
    %6463 = vmatpush1.bf16.msra.mxu0 %v4596
    %6464 = vmatprep.subr.bf16.mxu0 %v4605
    %6465 = vmatpush1.bf16.msra.mxu0 %v4604
    %6466 = vmatprep.subr.bf16.mxu0 %v4613
    %6467 = vmatpush1.bf16.msra.mxu0 %v4612
    %6468 = vmatprep.subr.bf16.mxu0 %v4621
    %6469 = vmatpush1.bf16.msra.mxu0 %v4620
    %6470 = vmatprep.subr.bf16.mxu0 %v4629
    %6471 = vmatpush1.bf16.msra.mxu0 %v4628
    %6472 = vmatprep.subr.bf16.mxu0 %v4637
    %6473 = vmatpush1.bf16.msra.mxu0 %v4636
    %6474 = vmatprep.subr.bf16.mxu0 %v4645
    %6475 = vmatpush1.bf16.msra.mxu0 %v4644
    %6476 = vmatprep.subr.bf16.mxu0 %v4653
    %6477 = vmatpush1.bf16.msra.mxu0 %v4652
    %6478 = vmatprep.subr.bf16.mxu0 %v4661
    %6479 = vmatpush1.bf16.msra.mxu0 %v4660
    %6480 = vmatprep.subr.bf16.mxu0 %v4669
    %6481 = vmatpush1.bf16.msra.mxu0 %v4668
    %6482 = vmatprep.subr.bf16.mxu0 %v4677
    %6483 = vmatpush1.bf16.msra.mxu0 %v4676
    %6484 = vmatprep.subr.bf16.mxu0 %v4685
    %6485 = vmatpush1.bf16.msra.mxu0 %v4684
    %6486 = vmatprep.subr.bf16.mxu0 %v4693
    %6487 = vmatpush1.bf16.msra.mxu0 %v4692
    %6488 = vmatprep.subr.bf16.mxu0 %v4701
    %6489 = vmatpush1.bf16.msra.mxu0 %v4700
    %6490 = vmatprep.mubr.bf16.mxu0 %v1225
    %6491 = vmatmul.mubr.bf16.gmra.mrb[0].mxu0 %v1224
    %v6492 = vpop.f32.mrb[0].mxu0
    %v6493 = vadd.f32 %v6450, %v6492
    %v6494 = vpop.f32.mrb[0].mxu0
    %v6495 = vadd.f32 %v6452, %v6494
    %v6496 = vpop.f32.mrb[0].mxu0
    %v6497 = vadd.f32 %v6454, %v6496
    %v6498 = vpop.f32.mrb[0].mxu0
    %v6499 = vadd.f32 %v6456, %v6498
    %6500 = vdwg.mxu0
    %6501 = vmatprep.subr.bf16.mxu0 %v4709
    %6502 = vmatpush1.bf16.msra.mxu0 %v4708
    %6503 = vmatprep.subr.bf16.mxu0 %v4717
    %6504 = vmatpush1.bf16.msra.mxu0 %v4716
    %6505 = vmatprep.subr.bf16.mxu0 %v4725
    %6506 = vmatpush1.bf16.msra.mxu0 %v4724
    %6507 = vmatprep.subr.bf16.mxu0 %v4733
    %6508 = vmatpush1.bf16.msra.mxu0 %v4732
    %6509 = vmatprep.subr.bf16.mxu0 %v4741
    %6510 = vmatpush1.bf16.msra.mxu0 %v4740
    %6511 = vmatprep.subr.bf16.mxu0 %v4749
    %6512 = vmatpush1.bf16.msra.mxu0 %v4748
    %6513 = vmatprep.subr.bf16.mxu0 %v4757
    %6514 = vmatpush1.bf16.msra.mxu0 %v4756
    %6515 = vmatprep.subr.bf16.mxu0 %v4765
    %6516 = vmatpush1.bf16.msra.mxu0 %v4764
    %6517 = vmatprep.subr.bf16.mxu0 %v4773
    %6518 = vmatpush1.bf16.msra.mxu0 %v4772
    %6519 = vmatprep.subr.bf16.mxu0 %v4781
    %6520 = vmatpush1.bf16.msra.mxu0 %v4780
    %6521 = vmatprep.subr.bf16.mxu0 %v4789
    %6522 = vmatpush1.bf16.msra.mxu0 %v4788
    %6523 = vmatprep.subr.bf16.mxu0 %v4797
    %6524 = vmatpush1.bf16.msra.mxu0 %v4796
    %6525 = vmatprep.subr.bf16.mxu0 %v4805
    %6526 = vmatpush1.bf16.msra.mxu0 %v4804
    %6527 = vmatprep.subr.bf16.mxu0 %v4813
    %6528 = vmatpush1.bf16.msra.mxu0 %v4812
    %6529 = vmatprep.subr.bf16.mxu0 %v4821
    %6530 = vmatpush1.bf16.msra.mxu0 %v4820
    %6531 = vmatprep.subr.bf16.mxu0 %v4829
    %6532 = vmatpush1.bf16.msra.mxu0 %v4828
    %6533 = vmatprep.mubr.bf16.mxu0 %v1227
    %6534 = vmatmul.mubr.bf16.gmra.mrb[0].mxu0 %v1226
    %v6535 = vpop.f32.mrb[0].mxu0
    %v6536 = vadd.f32 %v6493, %v6535
    %v6537 = vpop.f32.mrb[0].mxu0
    %v6538 = vadd.f32 %v6495, %v6537
    %v6539 = vpop.f32.mrb[0].mxu0
    %v6540 = vadd.f32 %v6497, %v6539
    %v6541 = vpop.f32.mrb[0].mxu0
    %v6542 = vadd.f32 %v6499, %v6541
    %6543 = vdwg.mxu0
    %6544 = vmatprep.subr.bf16.mxu0 %v4837
    %6545 = vmatpush1.bf16.msra.mxu0 %v4836
    %6546 = vmatprep.subr.bf16.mxu0 %v4845
    %6547 = vmatpush1.bf16.msra.mxu0 %v4844
    %6548 = vmatprep.subr.bf16.mxu0 %v4853
    %6549 = vmatpush1.bf16.msra.mxu0 %v4852
    %6550 = vmatprep.subr.bf16.mxu0 %v4861
    %6551 = vmatpush1.bf16.msra.mxu0 %v4860
    %6552 = vmatprep.subr.bf16.mxu0 %v4869
    %6553 = vmatpush1.bf16.msra.mxu0 %v4868
    %6554 = vmatprep.subr.bf16.mxu0 %v4877
    %6555 = vmatpush1.bf16.msra.mxu0 %v4876
    %6556 = vmatprep.subr.bf16.mxu0 %v4885
    %6557 = vmatpush1.bf16.msra.mxu0 %v4884
    %6558 = vmatprep.subr.bf16.mxu0 %v4893
    %6559 = vmatpush1.bf16.msra.mxu0 %v4892
    %6560 = vmatprep.subr.bf16.mxu0 %v4901
    %6561 = vmatpush1.bf16.msra.mxu0 %v4900
    %6562 = vmatprep.subr.bf16.mxu0 %v4909
    %6563 = vmatpush1.bf16.msra.mxu0 %v4908
    %6564 = vmatprep.subr.bf16.mxu0 %v4917
    %6565 = vmatpush1.bf16.msra.mxu0 %v4916
    %6566 = vmatprep.subr.bf16.mxu0 %v4925
    %6567 = vmatpush1.bf16.msra.mxu0 %v4924
    %6568 = vmatprep.subr.bf16.mxu0 %v4933
    %6569 = vmatpush1.bf16.msra.mxu0 %v4932
    %6570 = vmatprep.subr.bf16.mxu0 %v4941
    %6571 = vmatpush1.bf16.msra.mxu0 %v4940
    %6572 = vmatprep.subr.bf16.mxu0 %v4949
    %6573 = vmatpush1.bf16.msra.mxu0 %v4948
    %6574 = vmatprep.subr.bf16.mxu0 %v4957
    %6575 = vmatpush1.bf16.msra.mxu0 %v4956
    %6576 = vmatprep.mubr.bf16.mxu0 %v1229
    %6577 = vmatmul.mubr.bf16.gmra.mrb[0].mxu0 %v1228
    %v6578 = vpop.f32.mrb[0].mxu0
    %v6579 = vadd.f32 %v6536, %v6578
    %v6580 = vpop.f32.mrb[0].mxu0
    %v6581 = vadd.f32 %v6538, %v6580
    %v6582 = vpop.f32.mrb[0].mxu0
    %v6583 = vadd.f32 %v6540, %v6582
    %v6584 = vpop.f32.mrb[0].mxu0
    %v6585 = vadd.f32 %v6542, %v6584
    %6586 = vdwg.mxu0
    %6587 = vmatprep.subr.bf16.mxu0 %v4965
    %6588 = vmatpush1.bf16.msra.mxu0 %v4964
    %6589 = vmatprep.subr.bf16.mxu0 %v4973
    %6590 = vmatpush1.bf16.msra.mxu0 %v4972
    %6591 = vmatprep.subr.bf16.mxu0 %v4981
    %6592 = vmatpush1.bf16.msra.mxu0 %v4980
    %6593 = vmatprep.subr.bf16.mxu0 %v4989
    %6594 = vmatpush1.bf16.msra.mxu0 %v4988
    %6595 = vmatprep.subr.bf16.mxu0 %v4997
    %6596 = vmatpush1.bf16.msra.mxu0 %v4996
    %6597 = vmatprep.subr.bf16.mxu0 %v5005
    %6598 = vmatpush1.bf16.msra.mxu0 %v5004
    %6599 = vmatprep.subr.bf16.mxu0 %v5013
    %6600 = vmatpush1.bf16.msra.mxu0 %v5012
    %6601 = vmatprep.subr.bf16.mxu0 %v5021
    %6602 = vmatpush1.bf16.msra.mxu0 %v5020
    %6603 = vmatprep.subr.bf16.mxu0 %v5029
    %6604 = vmatpush1.bf16.msra.mxu0 %v5028
    %6605 = vmatprep.subr.bf16.mxu0 %v5037
    %6606 = vmatpush1.bf16.msra.mxu0 %v5036
    %6607 = vmatprep.subr.bf16.mxu0 %v5045
    %6608 = vmatpush1.bf16.msra.mxu0 %v5044
    %6609 = vmatprep.subr.bf16.mxu0 %v5053
    %6610 = vmatpush1.bf16.msra.mxu0 %v5052
    %6611 = vmatprep.subr.bf16.mxu0 %v5061
    %6612 = vmatpush1.bf16.msra.mxu0 %v5060
    %6613 = vmatprep.subr.bf16.mxu0 %v5069
    %6614 = vmatpush1.bf16.msra.mxu0 %v5068
    %6615 = vmatprep.subr.bf16.mxu0 %v5077
    %6616 = vmatpush1.bf16.msra.mxu0 %v5076
    %6617 = vmatprep.subr.bf16.mxu0 %v5085
    %6618 = vmatpush1.bf16.msra.mxu0 %v5084
    %6619 = vmatprep.mubr.bf16.mxu0 %v1231
    %6620 = vmatmul.mubr.bf16.gmra.mrb[0].mxu0 %v1230
    %v6621 = vpop.f32.mrb[0].mxu0
    %v6622 = vadd.f32 %v6579, %v6621
    %v6623 = vpop.f32.mrb[0].mxu0
    %v6624 = vadd.f32 %v6581, %v6623
    %v6625 = vpop.f32.mrb[0].mxu0
    %v6626 = vadd.f32 %v6583, %v6625
    %v6627 = vpop.f32.mrb[0].mxu0
    %v6628 = vadd.f32 %v6585, %v6627
    %6629 = vdwg.mxu0
    %6630 = vmatprep.subr.bf16.mxu0 %v5093
    %6631 = vmatpush1.bf16.msra.mxu0 %v5092
    %6632 = vmatprep.subr.bf16.mxu0 %v5101
    %6633 = vmatpush1.bf16.msra.mxu0 %v5100
    %6634 = vmatprep.subr.bf16.mxu0 %v5109
    %6635 = vmatpush1.bf16.msra.mxu0 %v5108
    %6636 = vmatprep.subr.bf16.mxu0 %v5117
    %6637 = vmatpush1.bf16.msra.mxu0 %v5116
    %6638 = vmatprep.subr.bf16.mxu0 %v5125
    %6639 = vmatpush1.bf16.msra.mxu0 %v5124
    %6640 = vmatprep.subr.bf16.mxu0 %v5133
    %6641 = vmatpush1.bf16.msra.mxu0 %v5132
    %6642 = vmatprep.subr.bf16.mxu0 %v5141
    %6643 = vmatpush1.bf16.msra.mxu0 %v5140
    %6644 = vmatprep.subr.bf16.mxu0 %v5149
    %6645 = vmatpush1.bf16.msra.mxu0 %v5148
    %6646 = vmatprep.subr.bf16.mxu0 %v5157
    %6647 = vmatpush1.bf16.msra.mxu0 %v5156
    %6648 = vmatprep.subr.bf16.mxu0 %v5165
    %6649 = vmatpush1.bf16.msra.mxu0 %v5164
    %6650 = vmatprep.subr.bf16.mxu0 %v5173
    %6651 = vmatpush1.bf16.msra.mxu0 %v5172
    %6652 = vmatprep.subr.bf16.mxu0 %v5181
    %6653 = vmatpush1.bf16.msra.mxu0 %v5180
    %6654 = vmatprep.subr.bf16.mxu0 %v5189
    %6655 = vmatpush1.bf16.msra.mxu0 %v5188
    %6656 = vmatprep.subr.bf16.mxu0 %v5197
    %6657 = vmatpush1.bf16.msra.mxu0 %v5196
    %6658 = vmatprep.subr.bf16.mxu0 %v5205
    %6659 = vmatpush1.bf16.msra.mxu0 %v5204
    %6660 = vmatprep.subr.bf16.mxu0 %v5213
    %6661 = vmatpush1.bf16.msra.mxu0 %v5212
    %6662 = vmatprep.mubr.bf16.mxu0 %v1233
    %6663 = vmatmul.mubr.bf16.gmra.mrb[0].mxu0 %v1232
    %v6664 = vpop.f32.mrb[0].mxu0
    %v6665 = vadd.f32 %v6622, %v6664
    %v6666 = vpop.f32.mrb[0].mxu0
    %v6667 = vadd.f32 %v6624, %v6666
    %v6668 = vpop.f32.mrb[0].mxu0
    %v6669 = vadd.f32 %v6626, %v6668
    %v6670 = vpop.f32.mrb[0].mxu0
    %v6671 = vadd.f32 %v6628, %v6670
    %6672 = vdwg.mxu0
    %6673 = vmatprep.subr.bf16.mxu0 %v5221
    %6674 = vmatpush1.bf16.msra.mxu0 %v5220
    %6675 = vmatprep.subr.bf16.mxu0 %v5229
    %6676 = vmatpush1.bf16.msra.mxu0 %v5228
    %6677 = vmatprep.subr.bf16.mxu0 %v5237
    %6678 = vmatpush1.bf16.msra.mxu0 %v5236
    %6679 = vmatprep.subr.bf16.mxu0 %v5245
    %6680 = vmatpush1.bf16.msra.mxu0 %v5244
    %6681 = vmatprep.subr.bf16.mxu0 %v5253
    %6682 = vmatpush1.bf16.msra.mxu0 %v5252
    %6683 = vmatprep.subr.bf16.mxu0 %v5261
    %6684 = vmatpush1.bf16.msra.mxu0 %v5260
    %6685 = vmatprep.subr.bf16.mxu0 %v5269
    %6686 = vmatpush1.bf16.msra.mxu0 %v5268
    %6687 = vmatprep.subr.bf16.mxu0 %v5277
    %6688 = vmatpush1.bf16.msra.mxu0 %v5276
    %6689 = vmatprep.subr.bf16.mxu0 %v5285
    %6690 = vmatpush1.bf16.msra.mxu0 %v5284
    %6691 = vmatprep.subr.bf16.mxu0 %v5293
    %6692 = vmatpush1.bf16.msra.mxu0 %v5292
    %6693 = vmatprep.subr.bf16.mxu0 %v5301
    %6694 = vmatpush1.bf16.msra.mxu0 %v5300
    %6695 = vmatprep.subr.bf16.mxu0 %v5309
    %6696 = vmatpush1.bf16.msra.mxu0 %v5308
    %6697 = vmatprep.subr.bf16.mxu0 %v5317
    %6698 = vmatpush1.bf16.msra.mxu0 %v5316
    %6699 = vmatprep.subr.bf16.mxu0 %v5325
    %6700 = vmatpush1.bf16.msra.mxu0 %v5324
    %6701 = vmatprep.subr.bf16.mxu0 %v5333
    %6702 = vmatpush1.bf16.msra.mxu0 %v5332
    %6703 = vmatprep.subr.bf16.mxu0 %v5341
    %6704 = vmatpush1.bf16.msra.mxu0 %v5340
    %6705 = vmatprep.mubr.bf16.mxu0 %v1235
    %6706 = vmatmul.mubr.bf16.gmra.mrb[0].mxu0 %v1234
    %v6707 = vpop.f32.mrb[0].mxu0
    %v6708 = vadd.f32 %v6665, %v6707
    %v6709 = vpop.f32.mrb[0].mxu0
    %v6710 = vadd.f32 %v6667, %v6709
    %v6711 = vpop.f32.mrb[0].mxu0
    %v6712 = vadd.f32 %v6669, %v6711
    %v6713 = vpop.f32.mrb[0].mxu0
    %v6714 = vadd.f32 %v6671, %v6713
    %6715 = vdwg.mxu0
    %6716 = vmatprep.subr.bf16.mxu0 %v4327
    %6717 = vmatpush1.bf16.msra.mxu0 %v4326
    %6718 = vmatprep.subr.bf16.mxu0 %v4335
    %6719 = vmatpush1.bf16.msra.mxu0 %v4334
    %6720 = vmatprep.subr.bf16.mxu0 %v4343
    %6721 = vmatpush1.bf16.msra.mxu0 %v4342
    %6722 = vmatprep.subr.bf16.mxu0 %v4351
    %6723 = vmatpush1.bf16.msra.mxu0 %v4350
    %6724 = vmatprep.subr.bf16.mxu0 %v4359
    %6725 = vmatpush1.bf16.msra.mxu0 %v4358
    %6726 = vmatprep.subr.bf16.mxu0 %v4367
    %6727 = vmatpush1.bf16.msra.mxu0 %v4366
    %6728 = vmatprep.subr.bf16.mxu0 %v4375
    %6729 = vmatpush1.bf16.msra.mxu0 %v4374
    %6730 = vmatprep.subr.bf16.mxu0 %v4383
    %6731 = vmatpush1.bf16.msra.mxu0 %v4382
    %6732 = vmatprep.subr.bf16.mxu0 %v4391
    %6733 = vmatpush1.bf16.msra.mxu0 %v4390
    %6734 = vmatprep.subr.bf16.mxu0 %v4399
    %6735 = vmatpush1.bf16.msra.mxu0 %v4398
    %6736 = vmatprep.subr.bf16.mxu0 %v4407
    %6737 = vmatpush1.bf16.msra.mxu0 %v4406
    %6738 = vmatprep.subr.bf16.mxu0 %v4415
    %6739 = vmatpush1.bf16.msra.mxu0 %v4414
    %6740 = vmatprep.subr.bf16.mxu0 %v4423
    %6741 = vmatpush1.bf16.msra.mxu0 %v4422
    %6742 = vmatprep.subr.bf16.mxu0 %v4431
    %6743 = vmatpush1.bf16.msra.mxu0 %v4430
    %6744 = vmatprep.subr.bf16.mxu0 %v4439
    %6745 = vmatpush1.bf16.msra.mxu0 %v4438
    %6746 = vmatprep.subr.bf16.mxu0 %v4447
    %6747 = vmatpush1.bf16.msra.mxu0 %v4446
    %6748 = vmatprep.mubr.bf16.mxu0 %v1221
    %6749 = vmatmul.mubr.bf16.gmra.mrb[0].mxu0 %v1220
    %v6750 = vpop.f32.mrb[0].mxu0
    %v6751 = vadd.f32 0.0, %v6750
    %v6752 = vpop.f32.mrb[0].mxu0
    %v6753 = vadd.f32 0.0, %v6752
    %v6754 = vpop.f32.mrb[0].mxu0
    %v6755 = vadd.f32 0.0, %v6754
    %v6756 = vpop.f32.mrb[0].mxu0
    %v6757 = vadd.f32 0.0, %v6756
    %6758 = vdwg.mxu0
    %6759 = vmatprep.subr.bf16.mxu0 %v4455
    %6760 = vmatpush1.bf16.msra.mxu0 %v4454
    %6761 = vmatprep.subr.bf16.mxu0 %v4463
    %6762 = vmatpush1.bf16.msra.mxu0 %v4462
    %6763 = vmatprep.subr.bf16.mxu0 %v4471
    %6764 = vmatpush1.bf16.msra.mxu0 %v4470
    %6765 = vmatprep.subr.bf16.mxu0 %v4479
    %6766 = vmatpush1.bf16.msra.mxu0 %v4478
    %6767 = vmatprep.subr.bf16.mxu0 %v4487
    %6768 = vmatpush1.bf16.msra.mxu0 %v4486
    %6769 = vmatprep.subr.bf16.mxu0 %v4495
    %6770 = vmatpush1.bf16.msra.mxu0 %v4494
    %6771 = vmatprep.subr.bf16.mxu0 %v4503
    %6772 = vmatpush1.bf16.msra.mxu0 %v4502
    %6773 = vmatprep.subr.bf16.mxu0 %v4511
    %6774 = vmatpush1.bf16.msra.mxu0 %v4510
    %6775 = vmatprep.subr.bf16.mxu0 %v4519
    %6776 = vmatpush1.bf16.msra.mxu0 %v4518
    %6777 = vmatprep.subr.bf16.mxu0 %v4527
    %6778 = vmatpush1.bf16.msra.mxu0 %v4526
    %6779 = vmatprep.subr.bf16.mxu0 %v4535
    %6780 = vmatpush1.bf16.msra.mxu0 %v4534
    %6781 = vmatprep.subr.bf16.mxu0 %v4543
    %6782 = vmatpush1.bf16.msra.mxu0 %v4542
    %6783 = vmatprep.subr.bf16.mxu0 %v4551
    %6784 = vmatpush1.bf16.msra.mxu0 %v4550
    %6785 = vmatprep.subr.bf16.mxu0 %v4559
    %6786 = vmatpush1.bf16.msra.mxu0 %v4558
    %6787 = vmatprep.subr.bf16.mxu0 %v4567
    %6788 = vmatpush1.bf16.msra.mxu0 %v4566
    %6789 = vmatprep.subr.bf16.mxu0 %v4575
    %6790 = vmatpush1.bf16.msra.mxu0 %v4574
    %6791 = vmatprep.mubr.bf16.mxu0 %v1223
    %6792 = vmatmul.mubr.bf16.gmra.mrb[0].mxu0 %v1222
    %v6793 = vpop.f32.mrb[0].mxu0
    %v6794 = vadd.f32 %v6751, %v6793
    %v6795 = vpop.f32.mrb[0].mxu0
    %v6796 = vadd.f32 %v6753, %v6795
    %v6797 = vpop.f32.mrb[0].mxu0
    %v6798 = vadd.f32 %v6755, %v6797
    %v6799 = vpop.f32.mrb[0].mxu0
    %v6800 = vadd.f32 %v6757, %v6799
    %6801 = vdwg.mxu0
    %6802 = vmatprep.subr.bf16.mxu0 %v4583
    %6803 = vmatpush1.bf16.msra.mxu0 %v4582
    %6804 = vmatprep.subr.bf16.mxu0 %v4591
    %6805 = vmatpush1.bf16.msra.mxu0 %v4590
    %6806 = vmatprep.subr.bf16.mxu0 %v4599
    %6807 = vmatpush1.bf16.msra.mxu0 %v4598
    %6808 = vmatprep.subr.bf16.mxu0 %v4607
    %6809 = vmatpush1.bf16.msra.mxu0 %v4606
    %6810 = vmatprep.subr.bf16.mxu0 %v4615
    %6811 = vmatpush1.bf16.msra.mxu0 %v4614
    %6812 = vmatprep.subr.bf16.mxu0 %v4623
    %6813 = vmatpush1.bf16.msra.mxu0 %v4622
    %6814 = vmatprep.subr.bf16.mxu0 %v4631
    %6815 = vmatpush1.bf16.msra.mxu0 %v4630
    %6816 = vmatprep.subr.bf16.mxu0 %v4639
    %6817 = vmatpush1.bf16.msra.mxu0 %v4638
    %6818 = vmatprep.subr.bf16.mxu0 %v4647
    %6819 = vmatpush1.bf16.msra.mxu0 %v4646
    %6820 = vmatprep.subr.bf16.mxu0 %v4655
    %6821 = vmatpush1.bf16.msra.mxu0 %v4654
    %6822 = vmatprep.subr.bf16.mxu0 %v4663
    %6823 = vmatpush1.bf16.msra.mxu0 %v4662
    %6824 = vmatprep.subr.bf16.mxu0 %v4671
    %6825 = vmatpush1.bf16.msra.mxu0 %v4670
    %6826 = vmatprep.subr.bf16.mxu0 %v4679
    %6827 = vmatpush1.bf16.msra.mxu0 %v4678
    %6828 = vmatprep.subr.bf16.mxu0 %v4687
    %6829 = vmatpush1.bf16.msra.mxu0 %v4686
    %6830 = vmatprep.subr.bf16.mxu0 %v4695
    %6831 = vmatpush1.bf16.msra.mxu0 %v4694
    %6832 = vmatprep.subr.bf16.mxu0 %v4703
    %6833 = vmatpush1.bf16.msra.mxu0 %v4702
    %6834 = vmatprep.mubr.bf16.mxu0 %v1225
    %6835 = vmatmul.mubr.bf16.gmra.mrb[0].mxu0 %v1224
    %v6836 = vpop.f32.mrb[0].mxu0
    %v6837 = vadd.f32 %v6794, %v6836
    %v6838 = vpop.f32.mrb[0].mxu0
    %v6839 = vadd.f32 %v6796, %v6838
    %v6840 = vpop.f32.mrb[0].mxu0
    %v6841 = vadd.f32 %v6798, %v6840
    %v6842 = vpop.f32.mrb[0].mxu0
    %v6843 = vadd.f32 %v6800, %v6842
    %6844 = vdwg.mxu0
    %6845 = vmatprep.subr.bf16.mxu0 %v4711
    %6846 = vmatpush1.bf16.msra.mxu0 %v4710
    %6847 = vmatprep.subr.bf16.mxu0 %v4719
    %6848 = vmatpush1.bf16.msra.mxu0 %v4718
    %6849 = vmatprep.subr.bf16.mxu0 %v4727
    %6850 = vmatpush1.bf16.msra.mxu0 %v4726
    %6851 = vmatprep.subr.bf16.mxu0 %v4735
    %6852 = vmatpush1.bf16.msra.mxu0 %v4734
    %6853 = vmatprep.subr.bf16.mxu0 %v4743
    %6854 = vmatpush1.bf16.msra.mxu0 %v4742
    %6855 = vmatprep.subr.bf16.mxu0 %v4751
    %6856 = vmatpush1.bf16.msra.mxu0 %v4750
    %6857 = vmatprep.subr.bf16.mxu0 %v4759
    %6858 = vmatpush1.bf16.msra.mxu0 %v4758
    %6859 = vmatprep.subr.bf16.mxu0 %v4767
    %6860 = vmatpush1.bf16.msra.mxu0 %v4766
    %6861 = vmatprep.subr.bf16.mxu0 %v4775
    %6862 = vmatpush1.bf16.msra.mxu0 %v4774
    %6863 = vmatprep.subr.bf16.mxu0 %v4783
    %6864 = vmatpush1.bf16.msra.mxu0 %v4782
    %6865 = vmatprep.subr.bf16.mxu0 %v4791
    %6866 = vmatpush1.bf16.msra.mxu0 %v4790
    %6867 = vmatprep.subr.bf16.mxu0 %v4799
    %6868 = vmatpush1.bf16.msra.mxu0 %v4798
    %6869 = vmatprep.subr.bf16.mxu0 %v4807
    %6870 = vmatpush1.bf16.msra.mxu0 %v4806
    %6871 = vmatprep.subr.bf16.mxu0 %v4815
    %6872 = vmatpush1.bf16.msra.mxu0 %v4814
    %6873 = vmatprep.subr.bf16.mxu0 %v4823
    %6874 = vmatpush1.bf16.msra.mxu0 %v4822
    %6875 = vmatprep.subr.bf16.mxu0 %v4831
    %6876 = vmatpush1.bf16.msra.mxu0 %v4830
    %6877 = vmatprep.mubr.bf16.mxu0 %v1227
    %6878 = vmatmul.mubr.bf16.gmra.mrb[0].mxu0 %v1226
    %v6879 = vpop.f32.mrb[0].mxu0
    %v6880 = vadd.f32 %v6837, %v6879
    %v6881 = vpop.f32.mrb[0].mxu0
    %v6882 = vadd.f32 %v6839, %v6881
    %v6883 = vpop.f32.mrb[0].mxu0
    %v6884 = vadd.f32 %v6841, %v6883
    %v6885 = vpop.f32.mrb[0].mxu0
    %v6886 = vadd.f32 %v6843, %v6885
    %6887 = vdwg.mxu0
    %6888 = vmatprep.subr.bf16.mxu0 %v4839
    %6889 = vmatpush1.bf16.msra.mxu0 %v4838
    %6890 = vmatprep.subr.bf16.mxu0 %v4847
    %6891 = vmatpush1.bf16.msra.mxu0 %v4846
    %6892 = vmatprep.subr.bf16.mxu0 %v4855
    %6893 = vmatpush1.bf16.msra.mxu0 %v4854
    %6894 = vmatprep.subr.bf16.mxu0 %v4863
    %6895 = vmatpush1.bf16.msra.mxu0 %v4862
    %6896 = vmatprep.subr.bf16.mxu0 %v4871
    %6897 = vmatpush1.bf16.msra.mxu0 %v4870
    %6898 = vmatprep.subr.bf16.mxu0 %v4879
    %6899 = vmatpush1.bf16.msra.mxu0 %v4878
    %6900 = vmatprep.subr.bf16.mxu0 %v4887
    %6901 = vmatpush1.bf16.msra.mxu0 %v4886
    %6902 = vmatprep.subr.bf16.mxu0 %v4895
    %6903 = vmatpush1.bf16.msra.mxu0 %v4894
    %6904 = vmatprep.subr.bf16.mxu0 %v4903
    %6905 = vmatpush1.bf16.msra.mxu0 %v4902
    %6906 = vmatprep.subr.bf16.mxu0 %v4911
    %6907 = vmatpush1.bf16.msra.mxu0 %v4910
    %6908 = vmatprep.subr.bf16.mxu0 %v4919
    %6909 = vmatpush1.bf16.msra.mxu0 %v4918
    %6910 = vmatprep.subr.bf16.mxu0 %v4927
    %6911 = vmatpush1.bf16.msra.mxu0 %v4926
    %6912 = vmatprep.subr.bf16.mxu0 %v4935
    %6913 = vmatpush1.bf16.msra.mxu0 %v4934
    %6914 = vmatprep.subr.bf16.mxu0 %v4943
    %6915 = vmatpush1.bf16.msra.mxu0 %v4942
    %6916 = vmatprep.subr.bf16.mxu0 %v4951
    %6917 = vmatpush1.bf16.msra.mxu0 %v4950
    %6918 = vmatprep.subr.bf16.mxu0 %v4959
    %6919 = vmatpush1.bf16.msra.mxu0 %v4958
    %6920 = vmatprep.mubr.bf16.mxu0 %v1229
    %6921 = vmatmul.mubr.bf16.gmra.mrb[0].mxu0 %v1228
    %v6922 = vpop.f32.mrb[0].mxu0
    %v6923 = vadd.f32 %v6880, %v6922
    %v6924 = vpop.f32.mrb[0].mxu0
    %v6925 = vadd.f32 %v6882, %v6924
    %v6926 = vpop.f32.mrb[0].mxu0
    %v6927 = vadd.f32 %v6884, %v6926
    %v6928 = vpop.f32.mrb[0].mxu0
    %v6929 = vadd.f32 %v6886, %v6928
    %6930 = vdwg.mxu0
    %6931 = vmatprep.subr.bf16.mxu0 %v4967
    %6932 = vmatpush1.bf16.msra.mxu0 %v4966
    %6933 = vmatprep.subr.bf16.mxu0 %v4975
    %6934 = vmatpush1.bf16.msra.mxu0 %v4974
    %6935 = vmatprep.subr.bf16.mxu0 %v4983
    %6936 = vmatpush1.bf16.msra.mxu0 %v4982
    %6937 = vmatprep.subr.bf16.mxu0 %v4991
    %6938 = vmatpush1.bf16.msra.mxu0 %v4990
    %6939 = vmatprep.subr.bf16.mxu0 %v4999
    %6940 = vmatpush1.bf16.msra.mxu0 %v4998
    %6941 = vmatprep.subr.bf16.mxu0 %v5007
    %6942 = vmatpush1.bf16.msra.mxu0 %v5006
    %6943 = vmatprep.subr.bf16.mxu0 %v5015
    %6944 = vmatpush1.bf16.msra.mxu0 %v5014
    %6945 = vmatprep.subr.bf16.mxu0 %v5023
    %6946 = vmatpush1.bf16.msra.mxu0 %v5022
    %6947 = vmatprep.subr.bf16.mxu0 %v5031
    %6948 = vmatpush1.bf16.msra.mxu0 %v5030
    %6949 = vmatprep.subr.bf16.mxu0 %v5039
    %6950 = vmatpush1.bf16.msra.mxu0 %v5038
    %6951 = vmatprep.subr.bf16.mxu0 %v5047
    %6952 = vmatpush1.bf16.msra.mxu0 %v5046
    %6953 = vmatprep.subr.bf16.mxu0 %v5055
    %6954 = vmatpush1.bf16.msra.mxu0 %v5054
    %6955 = vmatprep.subr.bf16.mxu0 %v5063
    %6956 = vmatpush1.bf16.msra.mxu0 %v5062
    %6957 = vmatprep.subr.bf16.mxu0 %v5071
    %6958 = vmatpush1.bf16.msra.mxu0 %v5070
    %6959 = vmatprep.subr.bf16.mxu0 %v5079
    %6960 = vmatpush1.bf16.msra.mxu0 %v5078
    %6961 = vmatprep.subr.bf16.mxu0 %v5087
    %6962 = vmatpush1.bf16.msra.mxu0 %v5086
    %6963 = vmatprep.mubr.bf16.mxu0 %v1231
    %6964 = vmatmul.mubr.bf16.gmra.mrb[0].mxu0 %v1230
    %v6965 = vpop.f32.mrb[0].mxu0
    %v6966 = vadd.f32 %v6923, %v6965
    %v6967 = vpop.f32.mrb[0].mxu0
    %v6968 = vadd.f32 %v6925, %v6967
    %v6969 = vpop.f32.mrb[0].mxu0
    %v6970 = vadd.f32 %v6927, %v6969
    %v6971 = vpop.f32.mrb[0].mxu0
    %v6972 = vadd.f32 %v6929, %v6971
    %6973 = vdwg.mxu0
    %6974 = vmatprep.subr.bf16.mxu0 %v5095
    %6975 = vmatpush1.bf16.msra.mxu0 %v5094
    %6976 = vmatprep.subr.bf16.mxu0 %v5103
    %6977 = vmatpush1.bf16.msra.mxu0 %v5102
    %6978 = vmatprep.subr.bf16.mxu0 %v5111
    %6979 = vmatpush1.bf16.msra.mxu0 %v5110
    %6980 = vmatprep.subr.bf16.mxu0 %v5119
    %6981 = vmatpush1.bf16.msra.mxu0 %v5118
    %6982 = vmatprep.subr.bf16.mxu0 %v5127
    %6983 = vmatpush1.bf16.msra.mxu0 %v5126
    %6984 = vmatprep.subr.bf16.mxu0 %v5135
    %6985 = vmatpush1.bf16.msra.mxu0 %v5134
    %6986 = vmatprep.subr.bf16.mxu0 %v5143
    %6987 = vmatpush1.bf16.msra.mxu0 %v5142
    %6988 = vmatprep.subr.bf16.mxu0 %v5151
    %6989 = vmatpush1.bf16.msra.mxu0 %v5150
    %6990 = vmatprep.subr.bf16.mxu0 %v5159
    %6991 = vmatpush1.bf16.msra.mxu0 %v5158
    %6992 = vmatprep.subr.bf16.mxu0 %v5167
    %6993 = vmatpush1.bf16.msra.mxu0 %v5166
    %6994 = vmatprep.subr.bf16.mxu0 %v5175
    %6995 = vmatpush1.bf16.msra.mxu0 %v5174
    %6996 = vmatprep.subr.bf16.mxu0 %v5183
    %6997 = vmatpush1.bf16.msra.mxu0 %v5182
    %6998 = vmatprep.subr.bf16.mxu0 %v5191
    %6999 = vmatpush1.bf16.msra.mxu0 %v5190
    %7000 = vmatprep.subr.bf16.mxu0 %v5199
    %7001 = vmatpush1.bf16.msra.mxu0 %v5198
    %7002 = vmatprep.subr.bf16.mxu0 %v5207
    %7003 = vmatpush1.bf16.msra.mxu0 %v5206
    %7004 = vmatprep.subr.bf16.mxu0 %v5215
    %7005 = vmatpush1.bf16.msra.mxu0 %v5214
    %7006 = vmatprep.mubr.bf16.mxu0 %v1233
    %7007 = vmatmul.mubr.bf16.gmra.mrb[0].mxu0 %v1232
    %v7008 = vpop.f32.mrb[0].mxu0
    %v7009 = vadd.f32 %v6966, %v7008
    %v7010 = vpop.f32.mrb[0].mxu0
    %v7011 = vadd.f32 %v6968, %v7010
    %v7012 = vpop.f32.mrb[0].mxu0
    %v7013 = vadd.f32 %v6970, %v7012
    %v7014 = vpop.f32.mrb[0].mxu0
    %v7015 = vadd.f32 %v6972, %v7014
    %7016 = vdwg.mxu0
    %7017 = vmatprep.subr.bf16.mxu0 %v5223
    %7018 = vmatpush1.bf16.msra.mxu0 %v5222
    %7019 = vmatprep.subr.bf16.mxu0 %v5231
    %7020 = vmatpush1.bf16.msra.mxu0 %v5230
    %7021 = vmatprep.subr.bf16.mxu0 %v5239
    %7022 = vmatpush1.bf16.msra.mxu0 %v5238
    %7023 = vmatprep.subr.bf16.mxu0 %v5247
    %7024 = vmatpush1.bf16.msra.mxu0 %v5246
    %7025 = vmatprep.subr.bf16.mxu0 %v5255
    %7026 = vmatpush1.bf16.msra.mxu0 %v5254
    %7027 = vmatprep.subr.bf16.mxu0 %v5263
    %7028 = vmatpush1.bf16.msra.mxu0 %v5262
    %7029 = vmatprep.subr.bf16.mxu0 %v5271
    %7030 = vmatpush1.bf16.msra.mxu0 %v5270
    %7031 = vmatprep.subr.bf16.mxu0 %v5279
    %7032 = vmatpush1.bf16.msra.mxu0 %v5278
    %7033 = vmatprep.subr.bf16.mxu0 %v5287
    %7034 = vmatpush1.bf16.msra.mxu0 %v5286
    %7035 = vmatprep.subr.bf16.mxu0 %v5295
    %7036 = vmatpush1.bf16.msra.mxu0 %v5294
    %7037 = vmatprep.subr.bf16.mxu0 %v5303
    %7038 = vmatpush1.bf16.msra.mxu0 %v5302
    %7039 = vmatprep.subr.bf16.mxu0 %v5311
    %7040 = vmatpush1.bf16.msra.mxu0 %v5310
    %7041 = vmatprep.subr.bf16.mxu0 %v5319
    %7042 = vmatpush1.bf16.msra.mxu0 %v5318
    %7043 = vmatprep.subr.bf16.mxu0 %v5327
    %7044 = vmatpush1.bf16.msra.mxu0 %v5326
    %7045 = vmatprep.subr.bf16.mxu0 %v5335
    %7046 = vmatpush1.bf16.msra.mxu0 %v5334
    %7047 = vmatprep.subr.bf16.mxu0 %v5343
    %7048 = vmatpush1.bf16.msra.mxu0 %v5342
    %7049 = vmatprep.mubr.bf16.mxu0 %v1235
    %7050 = vmatmul.mubr.bf16.gmra.mrb[0].mxu0 %v1234
    %v7051 = vpop.f32.mrb[0].mxu0
    %v7052 = vadd.f32 %v7009, %v7051
    %v7053 = vpop.f32.mrb[0].mxu0
    %v7054 = vadd.f32 %v7011, %v7053
    %v7055 = vpop.f32.mrb[0].mxu0
    %v7056 = vadd.f32 %v7013, %v7055
    %v7057 = vpop.f32.mrb[0].mxu0
    %v7058 = vadd.f32 %v7015, %v7057
    %7059 = vdwg.mxu0
    %7060 = vmatprep.subr.bf16.mxu0 %v4329
    %7061 = vmatpush1.bf16.msra.mxu0 %v4328
    %7062 = vmatprep.subr.bf16.mxu0 %v4337
    %7063 = vmatpush1.bf16.msra.mxu0 %v4336
    %7064 = vmatprep.subr.bf16.mxu0 %v4345
    %7065 = vmatpush1.bf16.msra.mxu0 %v4344
    %7066 = vmatprep.subr.bf16.mxu0 %v4353
    %7067 = vmatpush1.bf16.msra.mxu0 %v4352
    %7068 = vmatprep.subr.bf16.mxu0 %v4361
    %7069 = vmatpush1.bf16.msra.mxu0 %v4360
    %7070 = vmatprep.subr.bf16.mxu0 %v4369
    %7071 = vmatpush1.bf16.msra.mxu0 %v4368
    %7072 = vmatprep.subr.bf16.mxu0 %v4377
    %7073 = vmatpush1.bf16.msra.mxu0 %v4376
    %7074 = vmatprep.subr.bf16.mxu0 %v4385
    %7075 = vmatpush1.bf16.msra.mxu0 %v4384
    %7076 = vmatprep.subr.bf16.mxu0 %v4393
    %7077 = vmatpush1.bf16.msra.mxu0 %v4392
    %7078 = vmatprep.subr.bf16.mxu0 %v4401
    %7079 = vmatpush1.bf16.msra.mxu0 %v4400
    %7080 = vmatprep.subr.bf16.mxu0 %v4409
    %7081 = vmatpush1.bf16.msra.mxu0 %v4408
    %7082 = vmatprep.subr.bf16.mxu0 %v4417
    %7083 = vmatpush1.bf16.msra.mxu0 %v4416
    %7084 = vmatprep.subr.bf16.mxu0 %v4425
    %7085 = vmatpush1.bf16.msra.mxu0 %v4424
    %7086 = vmatprep.subr.bf16.mxu0 %v4433
    %7087 = vmatpush1.bf16.msra.mxu0 %v4432
    %7088 = vmatprep.subr.bf16.mxu0 %v4441
    %7089 = vmatpush1.bf16.msra.mxu0 %v4440
    %7090 = vmatprep.subr.bf16.mxu0 %v4449
    %7091 = vmatpush1.bf16.msra.mxu0 %v4448
    %7092 = vmatprep.mubr.bf16.mxu0 %v1221
    %7093 = vmatmul.mubr.bf16.gmra.mrb[0].mxu0 %v1220
    %v7094 = vpop.f32.mrb[0].mxu0
    %v7095 = vadd.f32 0.0, %v7094
    %v7096 = vpop.f32.mrb[0].mxu0
    %v7097 = vadd.f32 0.0, %v7096
    %v7098 = vpop.f32.mrb[0].mxu0
    %v7099 = vadd.f32 0.0, %v7098
    %v7100 = vpop.f32.mrb[0].mxu0
    %v7101 = vadd.f32 0.0, %v7100
    %7102 = vdwg.mxu0
    %7103 = vmatprep.subr.bf16.mxu0 %v4457
    %7104 = vmatpush1.bf16.msra.mxu0 %v4456
    %7105 = vmatprep.subr.bf16.mxu0 %v4465
    %7106 = vmatpush1.bf16.msra.mxu0 %v4464
    %7107 = vmatprep.subr.bf16.mxu0 %v4473
    %7108 = vmatpush1.bf16.msra.mxu0 %v4472
    %7109 = vmatprep.subr.bf16.mxu0 %v4481
    %7110 = vmatpush1.bf16.msra.mxu0 %v4480
    %7111 = vmatprep.subr.bf16.mxu0 %v4489
    %7112 = vmatpush1.bf16.msra.mxu0 %v4488
    %7113 = vmatprep.subr.bf16.mxu0 %v4497
    %7114 = vmatpush1.bf16.msra.mxu0 %v4496
    %7115 = vmatprep.subr.bf16.mxu0 %v4505
    %7116 = vmatpush1.bf16.msra.mxu0 %v4504
    %7117 = vmatprep.subr.bf16.mxu0 %v4513
    %7118 = vmatpush1.bf16.msra.mxu0 %v4512
    %7119 = vmatprep.subr.bf16.mxu0 %v4521
    %7120 = vmatpush1.bf16.msra.mxu0 %v4520
    %7121 = vmatprep.subr.bf16.mxu0 %v4529
    %7122 = vmatpush1.bf16.msra.mxu0 %v4528
    %7123 = vmatprep.subr.bf16.mxu0 %v4537
    %7124 = vmatpush1.bf16.msra.mxu0 %v4536
    %7125 = vmatprep.subr.bf16.mxu0 %v4545
    %7126 = vmatpush1.bf16.msra.mxu0 %v4544
    %7127 = vmatprep.subr.bf16.mxu0 %v4553
    %7128 = vmatpush1.bf16.msra.mxu0 %v4552
    %7129 = vmatprep.subr.bf16.mxu0 %v4561
    %7130 = vmatpush1.bf16.msra.mxu0 %v4560
    %7131 = vmatprep.subr.bf16.mxu0 %v4569
    %7132 = vmatpush1.bf16.msra.mxu0 %v4568
    %7133 = vmatprep.subr.bf16.mxu0 %v4577
    %7134 = vmatpush1.bf16.msra.mxu0 %v4576
    %7135 = vmatprep.mubr.bf16.mxu0 %v1223
    %7136 = vmatmul.mubr.bf16.gmra.mrb[0].mxu0 %v1222
    %v7137 = vpop.f32.mrb[0].mxu0
    %v7138 = vadd.f32 %v7095, %v7137
    %v7139 = vpop.f32.mrb[0].mxu0
    %v7140 = vadd.f32 %v7097, %v7139
    %v7141 = vpop.f32.mrb[0].mxu0
    %v7142 = vadd.f32 %v7099, %v7141
    %v7143 = vpop.f32.mrb[0].mxu0
    %v7144 = vadd.f32 %v7101, %v7143
    %7145 = vdwg.mxu0
    %7146 = vmatprep.subr.bf16.mxu0 %v4585
    %7147 = vmatpush1.bf16.msra.mxu0 %v4584
    %7148 = vmatprep.subr.bf16.mxu0 %v4593
    %7149 = vmatpush1.bf16.msra.mxu0 %v4592
    %7150 = vmatprep.subr.bf16.mxu0 %v4601
    %7151 = vmatpush1.bf16.msra.mxu0 %v4600
    %7152 = vmatprep.subr.bf16.mxu0 %v4609
    %7153 = vmatpush1.bf16.msra.mxu0 %v4608
    %7154 = vmatprep.subr.bf16.mxu0 %v4617
    %7155 = vmatpush1.bf16.msra.mxu0 %v4616
    %7156 = vmatprep.subr.bf16.mxu0 %v4625
    %7157 = vmatpush1.bf16.msra.mxu0 %v4624
    %7158 = vmatprep.subr.bf16.mxu0 %v4633
    %7159 = vmatpush1.bf16.msra.mxu0 %v4632
    %7160 = vmatprep.subr.bf16.mxu0 %v4641
    %7161 = vmatpush1.bf16.msra.mxu0 %v4640
    %7162 = vmatprep.subr.bf16.mxu0 %v4649
    %7163 = vmatpush1.bf16.msra.mxu0 %v4648
    %7164 = vmatprep.subr.bf16.mxu0 %v4657
    %7165 = vmatpush1.bf16.msra.mxu0 %v4656
    %7166 = vmatprep.subr.bf16.mxu0 %v4665
    %7167 = vmatpush1.bf16.msra.mxu0 %v4664
    %7168 = vmatprep.subr.bf16.mxu0 %v4673
    %7169 = vmatpush1.bf16.msra.mxu0 %v4672
    %7170 = vmatprep.subr.bf16.mxu0 %v4681
    %7171 = vmatpush1.bf16.msra.mxu0 %v4680
    %7172 = vmatprep.subr.bf16.mxu0 %v4689
    %7173 = vmatpush1.bf16.msra.mxu0 %v4688
    %7174 = vmatprep.subr.bf16.mxu0 %v4697
    %7175 = vmatpush1.bf16.msra.mxu0 %v4696
    %7176 = vmatprep.subr.bf16.mxu0 %v4705
    %7177 = vmatpush1.bf16.msra.mxu0 %v4704
    %7178 = vmatprep.mubr.bf16.mxu0 %v1225
    %7179 = vmatmul.mubr.bf16.gmra.mrb[0].mxu0 %v1224
    %v7180 = vpop.f32.mrb[0].mxu0
    %v7181 = vadd.f32 %v7138, %v7180
    %v7182 = vpop.f32.mrb[0].mxu0
    %v7183 = vadd.f32 %v7140, %v7182
    %v7184 = vpop.f32.mrb[0].mxu0
    %v7185 = vadd.f32 %v7142, %v7184
    %v7186 = vpop.f32.mrb[0].mxu0
    %v7187 = vadd.f32 %v7144, %v7186
    %7188 = vdwg.mxu0
    %7189 = vmatprep.subr.bf16.mxu0 %v4713
    %7190 = vmatpush1.bf16.msra.mxu0 %v4712
    %7191 = vmatprep.subr.bf16.mxu0 %v4721
    %7192 = vmatpush1.bf16.msra.mxu0 %v4720
    %7193 = vmatprep.subr.bf16.mxu0 %v4729
    %7194 = vmatpush1.bf16.msra.mxu0 %v4728
    %7195 = vmatprep.subr.bf16.mxu0 %v4737
    %7196 = vmatpush1.bf16.msra.mxu0 %v4736
    %7197 = vmatprep.subr.bf16.mxu0 %v4745
    %7198 = vmatpush1.bf16.msra.mxu0 %v4744
    %7199 = vmatprep.subr.bf16.mxu0 %v4753
    %7200 = vmatpush1.bf16.msra.mxu0 %v4752
    %7201 = vmatprep.subr.bf16.mxu0 %v4761
    %7202 = vmatpush1.bf16.msra.mxu0 %v4760
    %7203 = vmatprep.subr.bf16.mxu0 %v4769
    %7204 = vmatpush1.bf16.msra.mxu0 %v4768
    %7205 = vmatprep.subr.bf16.mxu0 %v4777
    %7206 = vmatpush1.bf16.msra.mxu0 %v4776
    %7207 = vmatprep.subr.bf16.mxu0 %v4785
    %7208 = vmatpush1.bf16.msra.mxu0 %v4784
    %7209 = vmatprep.subr.bf16.mxu0 %v4793
    %7210 = vmatpush1.bf16.msra.mxu0 %v4792
    %7211 = vmatprep.subr.bf16.mxu0 %v4801
    %7212 = vmatpush1.bf16.msra.mxu0 %v4800
    %7213 = vmatprep.subr.bf16.mxu0 %v4809
    %7214 = vmatpush1.bf16.msra.mxu0 %v4808
    %7215 = vmatprep.subr.bf16.mxu0 %v4817
    %7216 = vmatpush1.bf16.msra.mxu0 %v4816
    %7217 = vmatprep.subr.bf16.mxu0 %v4825
    %7218 = vmatpush1.bf16.msra.mxu0 %v4824
    %7219 = vmatprep.subr.bf16.mxu0 %v4833
    %7220 = vmatpush1.bf16.msra.mxu0 %v4832
    %7221 = vmatprep.mubr.bf16.mxu0 %v1227
    %7222 = vmatmul.mubr.bf16.gmra.mrb[0].mxu0 %v1226
    %v7223 = vpop.f32.mrb[0].mxu0
    %v7224 = vadd.f32 %v7181, %v7223
    %v7225 = vpop.f32.mrb[0].mxu0
    %v7226 = vadd.f32 %v7183, %v7225
    %v7227 = vpop.f32.mrb[0].mxu0
    %v7228 = vadd.f32 %v7185, %v7227
    %v7229 = vpop.f32.mrb[0].mxu0
    %v7230 = vadd.f32 %v7187, %v7229
    %7231 = vdwg.mxu0
    %7232 = vmatprep.subr.bf16.mxu0 %v4841
    %7233 = vmatpush1.bf16.msra.mxu0 %v4840
    %7234 = vmatprep.subr.bf16.mxu0 %v4849
    %7235 = vmatpush1.bf16.msra.mxu0 %v4848
    %7236 = vmatprep.subr.bf16.mxu0 %v4857
    %7237 = vmatpush1.bf16.msra.mxu0 %v4856
    %7238 = vmatprep.subr.bf16.mxu0 %v4865
    %7239 = vmatpush1.bf16.msra.mxu0 %v4864
    %7240 = vmatprep.subr.bf16.mxu0 %v4873
    %7241 = vmatpush1.bf16.msra.mxu0 %v4872
    %7242 = vmatprep.subr.bf16.mxu0 %v4881
    %7243 = vmatpush1.bf16.msra.mxu0 %v4880
    %7244 = vmatprep.subr.bf16.mxu0 %v4889
    %7245 = vmatpush1.bf16.msra.mxu0 %v4888
    %7246 = vmatprep.subr.bf16.mxu0 %v4897
    %7247 = vmatpush1.bf16.msra.mxu0 %v4896
    %7248 = vmatprep.subr.bf16.mxu0 %v4905
    %7249 = vmatpush1.bf16.msra.mxu0 %v4904
    %7250 = vmatprep.subr.bf16.mxu0 %v4913
    %7251 = vmatpush1.bf16.msra.mxu0 %v4912
    %7252 = vmatprep.subr.bf16.mxu0 %v4921
    %7253 = vmatpush1.bf16.msra.mxu0 %v4920
    %7254 = vmatprep.subr.bf16.mxu0 %v4929
    %7255 = vmatpush1.bf16.msra.mxu0 %v4928
    %7256 = vmatprep.subr.bf16.mxu0 %v4937
    %7257 = vmatpush1.bf16.msra.mxu0 %v4936
    %7258 = vmatprep.subr.bf16.mxu0 %v4945
    %7259 = vmatpush1.bf16.msra.mxu0 %v4944
    %7260 = vmatprep.subr.bf16.mxu0 %v4953
    %7261 = vmatpush1.bf16.msra.mxu0 %v4952
    %7262 = vmatprep.subr.bf16.mxu0 %v4961
    %7263 = vmatpush1.bf16.msra.mxu0 %v4960
    %7264 = vmatprep.mubr.bf16.mxu0 %v1229
    %7265 = vmatmul.mubr.bf16.gmra.mrb[0].mxu0 %v1228
    %v7266 = vpop.f32.mrb[0].mxu0
    %v7267 = vadd.f32 %v7224, %v7266
    %v7268 = vpop.f32.mrb[0].mxu0
    %v7269 = vadd.f32 %v7226, %v7268
    %v7270 = vpop.f32.mrb[0].mxu0
    %v7271 = vadd.f32 %v7228, %v7270
    %v7272 = vpop.f32.mrb[0].mxu0
    %v7273 = vadd.f32 %v7230, %v7272
    %7274 = vdwg.mxu0
    %7275 = vmatprep.subr.bf16.mxu0 %v4969
    %7276 = vmatpush1.bf16.msra.mxu0 %v4968
    %7277 = vmatprep.subr.bf16.mxu0 %v4977
    %7278 = vmatpush1.bf16.msra.mxu0 %v4976
    %7279 = vmatprep.subr.bf16.mxu0 %v4985
    %7280 = vmatpush1.bf16.msra.mxu0 %v4984
    %7281 = vmatprep.subr.bf16.mxu0 %v4993
    %7282 = vmatpush1.bf16.msra.mxu0 %v4992
    %7283 = vmatprep.subr.bf16.mxu0 %v5001
    %7284 = vmatpush1.bf16.msra.mxu0 %v5000
    %7285 = vmatprep.subr.bf16.mxu0 %v5009
    %7286 = vmatpush1.bf16.msra.mxu0 %v5008
    %7287 = vmatprep.subr.bf16.mxu0 %v5017
    %7288 = vmatpush1.bf16.msra.mxu0 %v5016
    %7289 = vmatprep.subr.bf16.mxu0 %v5025
    %7290 = vmatpush1.bf16.msra.mxu0 %v5024
    %7291 = vmatprep.subr.bf16.mxu0 %v5033
    %7292 = vmatpush1.bf16.msra.mxu0 %v5032
    %7293 = vmatprep.subr.bf16.mxu0 %v5041
    %7294 = vmatpush1.bf16.msra.mxu0 %v5040
    %7295 = vmatprep.subr.bf16.mxu0 %v5049
    %7296 = vmatpush1.bf16.msra.mxu0 %v5048
    %7297 = vmatprep.subr.bf16.mxu0 %v5057
    %7298 = vmatpush1.bf16.msra.mxu0 %v5056
    %7299 = vmatprep.subr.bf16.mxu0 %v5065
    %7300 = vmatpush1.bf16.msra.mxu0 %v5064
    %7301 = vmatprep.subr.bf16.mxu0 %v5073
    %7302 = vmatpush1.bf16.msra.mxu0 %v5072
    %7303 = vmatprep.subr.bf16.mxu0 %v5081
    %7304 = vmatpush1.bf16.msra.mxu0 %v5080
    %7305 = vmatprep.subr.bf16.mxu0 %v5089
    %7306 = vmatpush1.bf16.msra.mxu0 %v5088
    %7307 = vmatprep.mubr.bf16.mxu0 %v1231
    %7308 = vmatmul.mubr.bf16.gmra.mrb[0].mxu0 %v1230
    %v7309 = vpop.f32.mrb[0].mxu0
    %v7310 = vadd.f32 %v7267, %v7309
    %v7311 = vpop.f32.mrb[0].mxu0
    %v7312 = vadd.f32 %v7269, %v7311
    %v7313 = vpop.f32.mrb[0].mxu0
    %v7314 = vadd.f32 %v7271, %v7313
    %v7315 = vpop.f32.mrb[0].mxu0
    %v7316 = vadd.f32 %v7273, %v7315
    %7317 = vdwg.mxu0
    %7318 = vmatprep.subr.bf16.mxu0 %v5097
    %7319 = vmatpush1.bf16.msra.mxu0 %v5096
    %7320 = vmatprep.subr.bf16.mxu0 %v5105
    %7321 = vmatpush1.bf16.msra.mxu0 %v5104
    %7322 = vmatprep.subr.bf16.mxu0 %v5113
    %7323 = vmatpush1.bf16.msra.mxu0 %v5112
    %7324 = vmatprep.subr.bf16.mxu0 %v5121
    %7325 = vmatpush1.bf16.msra.mxu0 %v5120
    %7326 = vmatprep.subr.bf16.mxu0 %v5129
    %7327 = vmatpush1.bf16.msra.mxu0 %v5128
    %7328 = vmatprep.subr.bf16.mxu0 %v5137
    %7329 = vmatpush1.bf16.msra.mxu0 %v5136
    %7330 = vmatprep.subr.bf16.mxu0 %v5145
    %7331 = vmatpush1.bf16.msra.mxu0 %v5144
    %7332 = vmatprep.subr.bf16.mxu0 %v5153
    %7333 = vmatpush1.bf16.msra.mxu0 %v5152
    %7334 = vmatprep.subr.bf16.mxu0 %v5161
    %7335 = vmatpush1.bf16.msra.mxu0 %v5160
    %7336 = vmatprep.subr.bf16.mxu0 %v5169
    %7337 = vmatpush1.bf16.msra.mxu0 %v5168
    %7338 = vmatprep.subr.bf16.mxu0 %v5177
    %7339 = vmatpush1.bf16.msra.mxu0 %v5176
    %7340 = vmatprep.subr.bf16.mxu0 %v5185
    %7341 = vmatpush1.bf16.msra.mxu0 %v5184
    %7342 = vmatprep.subr.bf16.mxu0 %v5193
    %7343 = vmatpush1.bf16.msra.mxu0 %v5192
    %7344 = vmatprep.subr.bf16.mxu0 %v5201
    %7345 = vmatpush1.bf16.msra.mxu0 %v5200
    %7346 = vmatprep.subr.bf16.mxu0 %v5209
    %7347 = vmatpush1.bf16.msra.mxu0 %v5208
    %7348 = vmatprep.subr.bf16.mxu0 %v5217
    %7349 = vmatpush1.bf16.msra.mxu0 %v5216
    %7350 = vmatprep.mubr.bf16.mxu0 %v1233
    %7351 = vmatmul.mubr.bf16.gmra.mrb[0].mxu0 %v1232
    %v7352 = vpop.f32.mrb[0].mxu0
    %v7353 = vadd.f32 %v7310, %v7352
    %v7354 = vpop.f32.mrb[0].mxu0
    %v7355 = vadd.f32 %v7312, %v7354
    %v7356 = vpop.f32.mrb[0].mxu0
    %v7357 = vadd.f32 %v7314, %v7356
    %v7358 = vpop.f32.mrb[0].mxu0
    %v7359 = vadd.f32 %v7316, %v7358
    %7360 = vdwg.mxu0
    %7361 = vmatprep.subr.bf16.mxu0 %v5225
    %7362 = vmatpush1.bf16.msra.mxu0 %v5224
    %7363 = vmatprep.subr.bf16.mxu0 %v5233
    %7364 = vmatpush1.bf16.msra.mxu0 %v5232
    %7365 = vmatprep.subr.bf16.mxu0 %v5241
    %7366 = vmatpush1.bf16.msra.mxu0 %v5240
    %7367 = vmatprep.subr.bf16.mxu0 %v5249
    %7368 = vmatpush1.bf16.msra.mxu0 %v5248
    %7369 = vmatprep.subr.bf16.mxu0 %v5257
    %7370 = vmatpush1.bf16.msra.mxu0 %v5256
    %7371 = vmatprep.subr.bf16.mxu0 %v5265
    %7372 = vmatpush1.bf16.msra.mxu0 %v5264
    %7373 = vmatprep.subr.bf16.mxu0 %v5273
    %7374 = vmatpush1.bf16.msra.mxu0 %v5272
    %7375 = vmatprep.subr.bf16.mxu0 %v5281
    %7376 = vmatpush1.bf16.msra.mxu0 %v5280
    %7377 = vmatprep.subr.bf16.mxu0 %v5289
    %7378 = vmatpush1.bf16.msra.mxu0 %v5288
    %7379 = vmatprep.subr.bf16.mxu0 %v5297
    %7380 = vmatpush1.bf16.msra.mxu0 %v5296
    %7381 = vmatprep.subr.bf16.mxu0 %v5305
    %7382 = vmatpush1.bf16.msra.mxu0 %v5304
    %7383 = vmatprep.subr.bf16.mxu0 %v5313
    %7384 = vmatpush1.bf16.msra.mxu0 %v5312
    %7385 = vmatprep.subr.bf16.mxu0 %v5321
    %7386 = vmatpush1.bf16.msra.mxu0 %v5320
    %7387 = vmatprep.subr.bf16.mxu0 %v5329
    %7388 = vmatpush1.bf16.msra.mxu0 %v5328
    %7389 = vmatprep.subr.bf16.mxu0 %v5337
    %7390 = vmatpush1.bf16.msra.mxu0 %v5336
    %7391 = vmatprep.subr.bf16.mxu0 %v5345
    %7392 = vmatpush1.bf16.msra.mxu0 %v5344
    %7393 = vmatprep.mubr.bf16.mxu0 %v1235
    %7394 = vmatmul.mubr.bf16.gmra.mrb[0].mxu0 %v1234
    %v7395 = vpop.f32.mrb[0].mxu0
    %v7396 = vadd.f32 %v7353, %v7395
    %v7397 = vpop.f32.mrb[0].mxu0
    %v7398 = vadd.f32 %v7355, %v7397
    %v7399 = vpop.f32.mrb[0].mxu0
    %v7400 = vadd.f32 %v7357, %v7399
    %v7401 = vpop.f32.mrb[0].mxu0
    %v7402 = vadd.f32 %v7359, %v7401
    %7403 = vdwg.mxu0
    %7404 = vmatprep.subr.bf16.mxu0 %v4331
    %7405 = vmatpush1.bf16.msra.mxu0 %v4330
    %7406 = vmatprep.subr.bf16.mxu0 %v4339
    %7407 = vmatpush1.bf16.msra.mxu0 %v4338
    %7408 = vmatprep.subr.bf16.mxu0 %v4347
    %7409 = vmatpush1.bf16.msra.mxu0 %v4346
    %7410 = vmatprep.subr.bf16.mxu0 %v4355
    %7411 = vmatpush1.bf16.msra.mxu0 %v4354
    %7412 = vmatprep.subr.bf16.mxu0 %v4363
    %7413 = vmatpush1.bf16.msra.mxu0 %v4362
    %7414 = vmatprep.subr.bf16.mxu0 %v4371
    %7415 = vmatpush1.bf16.msra.mxu0 %v4370
    %7416 = vmatprep.subr.bf16.mxu0 %v4379
    %7417 = vmatpush1.bf16.msra.mxu0 %v4378
    %7418 = vmatprep.subr.bf16.mxu0 %v4387
    %7419 = vmatpush1.bf16.msra.mxu0 %v4386
    %7420 = vmatprep.subr.bf16.mxu0 %v4395
    %7421 = vmatpush1.bf16.msra.mxu0 %v4394
    %7422 = vmatprep.subr.bf16.mxu0 %v4403
    %7423 = vmatpush1.bf16.msra.mxu0 %v4402
    %7424 = vmatprep.subr.bf16.mxu0 %v4411
    %7425 = vmatpush1.bf16.msra.mxu0 %v4410
    %7426 = vmatprep.subr.bf16.mxu0 %v4419
    %7427 = vmatpush1.bf16.msra.mxu0 %v4418
    %7428 = vmatprep.subr.bf16.mxu0 %v4427
    %7429 = vmatpush1.bf16.msra.mxu0 %v4426
    %7430 = vmatprep.subr.bf16.mxu0 %v4435
    %7431 = vmatpush1.bf16.msra.mxu0 %v4434
    %7432 = vmatprep.subr.bf16.mxu0 %v4443
    %7433 = vmatpush1.bf16.msra.mxu0 %v4442
    %7434 = vmatprep.subr.bf16.mxu0 %v4451
    %7435 = vmatpush1.bf16.msra.mxu0 %v4450
    %7436 = vmatprep.mubr.bf16.mxu0 %v1221
    %7437 = vmatmul.mubr.bf16.gmra.mrb[0].mxu0 %v1220
    %v7438 = vpop.f32.mrb[0].mxu0
    %v7439 = vadd.f32 0.0, %v7438
    %v7440 = vpop.f32.mrb[0].mxu0
    %v7441 = vadd.f32 0.0, %v7440
    %v7442 = vpop.f32.mrb[0].mxu0
    %v7443 = vadd.f32 0.0, %v7442
    %v7444 = vpop.f32.mrb[0].mxu0
    %v7445 = vadd.f32 0.0, %v7444
    %7446 = vdwg.mxu0
    %7447 = vmatprep.subr.bf16.mxu0 %v4459
    %7448 = vmatpush1.bf16.msra.mxu0 %v4458
    %7449 = vmatprep.subr.bf16.mxu0 %v4467
    %7450 = vmatpush1.bf16.msra.mxu0 %v4466
    %7451 = vmatprep.subr.bf16.mxu0 %v4475
    %7452 = vmatpush1.bf16.msra.mxu0 %v4474
    %7453 = vmatprep.subr.bf16.mxu0 %v4483
    %7454 = vmatpush1.bf16.msra.mxu0 %v4482
    %7455 = vmatprep.subr.bf16.mxu0 %v4491
    %7456 = vmatpush1.bf16.msra.mxu0 %v4490
    %7457 = vmatprep.subr.bf16.mxu0 %v4499
    %7458 = vmatpush1.bf16.msra.mxu0 %v4498
    %7459 = vmatprep.subr.bf16.mxu0 %v4507
    %7460 = vmatpush1.bf16.msra.mxu0 %v4506
    %7461 = vmatprep.subr.bf16.mxu0 %v4515
    %7462 = vmatpush1.bf16.msra.mxu0 %v4514
    %7463 = vmatprep.subr.bf16.mxu0 %v4523
    %7464 = vmatpush1.bf16.msra.mxu0 %v4522
    %7465 = vmatprep.subr.bf16.mxu0 %v4531
    %7466 = vmatpush1.bf16.msra.mxu0 %v4530
    %7467 = vmatprep.subr.bf16.mxu0 %v4539
    %7468 = vmatpush1.bf16.msra.mxu0 %v4538
    %7469 = vmatprep.subr.bf16.mxu0 %v4547
    %7470 = vmatpush1.bf16.msra.mxu0 %v4546
    %7471 = vmatprep.subr.bf16.mxu0 %v4555
    %7472 = vmatpush1.bf16.msra.mxu0 %v4554
    %7473 = vmatprep.subr.bf16.mxu0 %v4563
    %7474 = vmatpush1.bf16.msra.mxu0 %v4562
    %7475 = vmatprep.subr.bf16.mxu0 %v4571
    %7476 = vmatpush1.bf16.msra.mxu0 %v4570
    %7477 = vmatprep.subr.bf16.mxu0 %v4579
    %7478 = vmatpush1.bf16.msra.mxu0 %v4578
    %7479 = vmatprep.mubr.bf16.mxu0 %v1223
    %7480 = vmatmul.mubr.bf16.gmra.mrb[0].mxu0 %v1222
    %v7481 = vpop.f32.mrb[0].mxu0
    %v7482 = vadd.f32 %v7439, %v7481
    %v7483 = vpop.f32.mrb[0].mxu0
    %v7484 = vadd.f32 %v7441, %v7483
    %v7485 = vpop.f32.mrb[0].mxu0
    %v7486 = vadd.f32 %v7443, %v7485
    %v7487 = vpop.f32.mrb[0].mxu0
    %v7488 = vadd.f32 %v7445, %v7487
    %7489 = vdwg.mxu0
    %7490 = vmatprep.subr.bf16.mxu0 %v4587
    %7491 = vmatpush1.bf16.msra.mxu0 %v4586
    %7492 = vmatprep.subr.bf16.mxu0 %v4595
    %7493 = vmatpush1.bf16.msra.mxu0 %v4594
    %7494 = vmatprep.subr.bf16.mxu0 %v4603
    %7495 = vmatpush1.bf16.msra.mxu0 %v4602
    %7496 = vmatprep.subr.bf16.mxu0 %v4611
    %7497 = vmatpush1.bf16.msra.mxu0 %v4610
    %7498 = vmatprep.subr.bf16.mxu0 %v4619
    %7499 = vmatpush1.bf16.msra.mxu0 %v4618
    %7500 = vmatprep.subr.bf16.mxu0 %v4627
    %7501 = vmatpush1.bf16.msra.mxu0 %v4626
    %7502 = vmatprep.subr.bf16.mxu0 %v4635
    %7503 = vmatpush1.bf16.msra.mxu0 %v4634
    %7504 = vmatprep.subr.bf16.mxu0 %v4643
    %7505 = vmatpush1.bf16.msra.mxu0 %v4642
    %7506 = vmatprep.subr.bf16.mxu0 %v4651
    %7507 = vmatpush1.bf16.msra.mxu0 %v4650
    %7508 = vmatprep.subr.bf16.mxu0 %v4659
    %7509 = vmatpush1.bf16.msra.mxu0 %v4658
    %7510 = vmatprep.subr.bf16.mxu0 %v4667
    %7511 = vmatpush1.bf16.msra.mxu0 %v4666
    %7512 = vmatprep.subr.bf16.mxu0 %v4675
    %7513 = vmatpush1.bf16.msra.mxu0 %v4674
    %7514 = vmatprep.subr.bf16.mxu0 %v4683
    %7515 = vmatpush1.bf16.msra.mxu0 %v4682
    %7516 = vmatprep.subr.bf16.mxu0 %v4691
    %7517 = vmatpush1.bf16.msra.mxu0 %v4690
    %7518 = vmatprep.subr.bf16.mxu0 %v4699
    %7519 = vmatpush1.bf16.msra.mxu0 %v4698
    %7520 = vmatprep.subr.bf16.mxu0 %v4707
    %7521 = vmatpush1.bf16.msra.mxu0 %v4706
    %7522 = vmatprep.mubr.bf16.mxu0 %v1225
    %7523 = vmatmul.mubr.bf16.gmra.mrb[0].mxu0 %v1224
    %v7524 = vpop.f32.mrb[0].mxu0
    %v7525 = vadd.f32 %v7482, %v7524
    %v7526 = vpop.f32.mrb[0].mxu0
    %v7527 = vadd.f32 %v7484, %v7526
    %v7528 = vpop.f32.mrb[0].mxu0
    %v7529 = vadd.f32 %v7486, %v7528
    %v7530 = vpop.f32.mrb[0].mxu0
    %v7531 = vadd.f32 %v7488, %v7530
    %7532 = vdwg.mxu0
    %7533 = vmatprep.subr.bf16.mxu0 %v4715
    %7534 = vmatpush1.bf16.msra.mxu0 %v4714
    %7535 = vmatprep.subr.bf16.mxu0 %v4723
    %7536 = vmatpush1.bf16.msra.mxu0 %v4722
    %7537 = vmatprep.subr.bf16.mxu0 %v4731
    %7538 = vmatpush1.bf16.msra.mxu0 %v4730
    %7539 = vmatprep.subr.bf16.mxu0 %v4739
    %7540 = vmatpush1.bf16.msra.mxu0 %v4738
    %7541 = vmatprep.subr.bf16.mxu0 %v4747
    %7542 = vmatpush1.bf16.msra.mxu0 %v4746
    %7543 = vmatprep.subr.bf16.mxu0 %v4755
    %7544 = vmatpush1.bf16.msra.mxu0 %v4754
    %7545 = vmatprep.subr.bf16.mxu0 %v4763
    %7546 = vmatpush1.bf16.msra.mxu0 %v4762
    %7547 = vmatprep.subr.bf16.mxu0 %v4771
    %7548 = vmatpush1.bf16.msra.mxu0 %v4770
    %7549 = vmatprep.subr.bf16.mxu0 %v4779
    %7550 = vmatpush1.bf16.msra.mxu0 %v4778
    %7551 = vmatprep.subr.bf16.mxu0 %v4787
    %7552 = vmatpush1.bf16.msra.mxu0 %v4786
    %7553 = vmatprep.subr.bf16.mxu0 %v4795
    %7554 = vmatpush1.bf16.msra.mxu0 %v4794
    %7555 = vmatprep.subr.bf16.mxu0 %v4803
    %7556 = vmatpush1.bf16.msra.mxu0 %v4802
    %7557 = vmatprep.subr.bf16.mxu0 %v4811
    %7558 = vmatpush1.bf16.msra.mxu0 %v4810
    %7559 = vmatprep.subr.bf16.mxu0 %v4819
    %7560 = vmatpush1.bf16.msra.mxu0 %v4818
    %7561 = vmatprep.subr.bf16.mxu0 %v4827
    %7562 = vmatpush1.bf16.msra.mxu0 %v4826
    %7563 = vmatprep.subr.bf16.mxu0 %v4835
    %7564 = vmatpush1.bf16.msra.mxu0 %v4834
    %7565 = vmatprep.mubr.bf16.mxu0 %v1227
    %7566 = vmatmul.mubr.bf16.gmra.mrb[0].mxu0 %v1226
    %v7567 = vpop.f32.mrb[0].mxu0
    %v7568 = vadd.f32 %v7525, %v7567
    %v7569 = vpop.f32.mrb[0].mxu0
    %v7570 = vadd.f32 %v7527, %v7569
    %v7571 = vpop.f32.mrb[0].mxu0
    %v7572 = vadd.f32 %v7529, %v7571
    %v7573 = vpop.f32.mrb[0].mxu0
    %v7574 = vadd.f32 %v7531, %v7573
    %7575 = vdwg.mxu0
    %7576 = vmatprep.subr.bf16.mxu0 %v4843
    %7577 = vmatpush1.bf16.msra.mxu0 %v4842
    %7578 = vmatprep.subr.bf16.mxu0 %v4851
    %7579 = vmatpush1.bf16.msra.mxu0 %v4850
    %7580 = vmatprep.subr.bf16.mxu0 %v4859
    %7581 = vmatpush1.bf16.msra.mxu0 %v4858
    %7582 = vmatprep.subr.bf16.mxu0 %v4867
    %7583 = vmatpush1.bf16.msra.mxu0 %v4866
    %7584 = vmatprep.subr.bf16.mxu0 %v4875
    %7585 = vmatpush1.bf16.msra.mxu0 %v4874
    %7586 = vmatprep.subr.bf16.mxu0 %v4883
    %7587 = vmatpush1.bf16.msra.mxu0 %v4882
    %7588 = vmatprep.subr.bf16.mxu0 %v4891
    %7589 = vmatpush1.bf16.msra.mxu0 %v4890
    %7590 = vmatprep.subr.bf16.mxu0 %v4899
    %7591 = vmatpush1.bf16.msra.mxu0 %v4898
    %7592 = vmatprep.subr.bf16.mxu0 %v4907
    %7593 = vmatpush1.bf16.msra.mxu0 %v4906
    %7594 = vmatprep.subr.bf16.mxu0 %v4915
    %7595 = vmatpush1.bf16.msra.mxu0 %v4914
    %7596 = vmatprep.subr.bf16.mxu0 %v4923
    %7597 = vmatpush1.bf16.msra.mxu0 %v4922
    %7598 = vmatprep.subr.bf16.mxu0 %v4931
    %7599 = vmatpush1.bf16.msra.mxu0 %v4930
    %7600 = vmatprep.subr.bf16.mxu0 %v4939
    %7601 = vmatpush1.bf16.msra.mxu0 %v4938
    %7602 = vmatprep.subr.bf16.mxu0 %v4947
    %7603 = vmatpush1.bf16.msra.mxu0 %v4946
    %7604 = vmatprep.subr.bf16.mxu0 %v4955
    %7605 = vmatpush1.bf16.msra.mxu0 %v4954
    %7606 = vmatprep.subr.bf16.mxu0 %v4963
    %7607 = vmatpush1.bf16.msra.mxu0 %v4962
    %7608 = vmatprep.mubr.bf16.mxu0 %v1229
    %7609 = vmatmul.mubr.bf16.gmra.mrb[0].mxu0 %v1228
    %v7610 = vpop.f32.mrb[0].mxu0
    %v7611 = vadd.f32 %v7568, %v7610
    %v7612 = vpop.f32.mrb[0].mxu0
    %v7613 = vadd.f32 %v7570, %v7612
    %v7614 = vpop.f32.mrb[0].mxu0
    %v7615 = vadd.f32 %v7572, %v7614
    %v7616 = vpop.f32.mrb[0].mxu0
    %v7617 = vadd.f32 %v7574, %v7616
    %7618 = vdwg.mxu0
    %7619 = vmatprep.subr.bf16.mxu0 %v4971
    %7620 = vmatpush1.bf16.msra.mxu0 %v4970
    %7621 = vmatprep.subr.bf16.mxu0 %v4979
    %7622 = vmatpush1.bf16.msra.mxu0 %v4978
    %7623 = vmatprep.subr.bf16.mxu0 %v4987
    %7624 = vmatpush1.bf16.msra.mxu0 %v4986
    %7625 = vmatprep.subr.bf16.mxu0 %v4995
    %7626 = vmatpush1.bf16.msra.mxu0 %v4994
    %7627 = vmatprep.subr.bf16.mxu0 %v5003
    %7628 = vmatpush1.bf16.msra.mxu0 %v5002
    %7629 = vmatprep.subr.bf16.mxu0 %v5011
    %7630 = vmatpush1.bf16.msra.mxu0 %v5010
    %7631 = vmatprep.subr.bf16.mxu0 %v5019
    %7632 = vmatpush1.bf16.msra.mxu0 %v5018
    %7633 = vmatprep.subr.bf16.mxu0 %v5027
    %7634 = vmatpush1.bf16.msra.mxu0 %v5026
    %7635 = vmatprep.subr.bf16.mxu0 %v5035
    %7636 = vmatpush1.bf16.msra.mxu0 %v5034
    %7637 = vmatprep.subr.bf16.mxu0 %v5043
    %7638 = vmatpush1.bf16.msra.mxu0 %v5042
    %7639 = vmatprep.subr.bf16.mxu0 %v5051
    %7640 = vmatpush1.bf16.msra.mxu0 %v5050
    %7641 = vmatprep.subr.bf16.mxu0 %v5059
    %7642 = vmatpush1.bf16.msra.mxu0 %v5058
    %7643 = vmatprep.subr.bf16.mxu0 %v5067
    %7644 = vmatpush1.bf16.msra.mxu0 %v5066
    %7645 = vmatprep.subr.bf16.mxu0 %v5075
    %7646 = vmatpush1.bf16.msra.mxu0 %v5074
    %7647 = vmatprep.subr.bf16.mxu0 %v5083
    %7648 = vmatpush1.bf16.msra.mxu0 %v5082
    %7649 = vmatprep.subr.bf16.mxu0 %v5091
    %7650 = vmatpush1.bf16.msra.mxu0 %v5090
    %7651 = vmatprep.mubr.bf16.mxu0 %v1231
    %7652 = vmatmul.mubr.bf16.gmra.mrb[0].mxu0 %v1230
    %v7653 = vpop.f32.mrb[0].mxu0
    %v7654 = vadd.f32 %v7611, %v7653
    %v7655 = vpop.f32.mrb[0].mxu0
    %v7656 = vadd.f32 %v7613, %v7655
    %v7657 = vpop.f32.mrb[0].mxu0
    %v7658 = vadd.f32 %v7615, %v7657
    %v7659 = vpop.f32.mrb[0].mxu0
    %v7660 = vadd.f32 %v7617, %v7659
    %7661 = vdwg.mxu0
    %7662 = vmatprep.subr.bf16.mxu0 %v5099
    %7663 = vmatpush1.bf16.msra.mxu0 %v5098
    %7664 = vmatprep.subr.bf16.mxu0 %v5107
    %7665 = vmatpush1.bf16.msra.mxu0 %v5106
    %7666 = vmatprep.subr.bf16.mxu0 %v5115
    %7667 = vmatpush1.bf16.msra.mxu0 %v5114
    %7668 = vmatprep.subr.bf16.mxu0 %v5123
    %7669 = vmatpush1.bf16.msra.mxu0 %v5122
    %7670 = vmatprep.subr.bf16.mxu0 %v5131
    %7671 = vmatpush1.bf16.msra.mxu0 %v5130
    %7672 = vmatprep.subr.bf16.mxu0 %v5139
    %7673 = vmatpush1.bf16.msra.mxu0 %v5138
    %7674 = vmatprep.subr.bf16.mxu0 %v5147
    %7675 = vmatpush1.bf16.msra.mxu0 %v5146
    %7676 = vmatprep.subr.bf16.mxu0 %v5155
    %7677 = vmatpush1.bf16.msra.mxu0 %v5154
    %7678 = vmatprep.subr.bf16.mxu0 %v5163
    %7679 = vmatpush1.bf16.msra.mxu0 %v5162
    %7680 = vmatprep.subr.bf16.mxu0 %v5171
    %7681 = vmatpush1.bf16.msra.mxu0 %v5170
    %7682 = vmatprep.subr.bf16.mxu0 %v5179
    %7683 = vmatpush1.bf16.msra.mxu0 %v5178
    %7684 = vmatprep.subr.bf16.mxu0 %v5187
    %7685 = vmatpush1.bf16.msra.mxu0 %v5186
    %7686 = vmatprep.subr.bf16.mxu0 %v5195
    %7687 = vmatpush1.bf16.msra.mxu0 %v5194
    %7688 = vmatprep.subr.bf16.mxu0 %v5203
    %7689 = vmatpush1.bf16.msra.mxu0 %v5202
    %7690 = vmatprep.subr.bf16.mxu0 %v5211
    %7691 = vmatpush1.bf16.msra.mxu0 %v5210
    %7692 = vmatprep.subr.bf16.mxu0 %v5219
    %7693 = vmatpush1.bf16.msra.mxu0 %v5218
    %7694 = vmatprep.mubr.bf16.mxu0 %v1233
    %7695 = vmatmul.mubr.bf16.gmra.mrb[0].mxu0 %v1232
    %v7696 = vpop.f32.mrb[0].mxu0
    %v7697 = vadd.f32 %v7654, %v7696
    %v7698 = vpop.f32.mrb[0].mxu0
    %v7699 = vadd.f32 %v7656, %v7698
    %v7700 = vpop.f32.mrb[0].mxu0
    %v7701 = vadd.f32 %v7658, %v7700
    %v7702 = vpop.f32.mrb[0].mxu0
    %v7703 = vadd.f32 %v7660, %v7702
    %7704 = vdwg.mxu0
    %7705 = vmatprep.subr.bf16.mxu0 %v5227
    %7706 = vmatpush1.bf16.msra.mxu0 %v5226
    %7707 = vmatprep.subr.bf16.mxu0 %v5235
    %7708 = vmatpush1.bf16.msra.mxu0 %v5234
    %7709 = vmatprep.subr.bf16.mxu0 %v5243
    %7710 = vmatpush1.bf16.msra.mxu0 %v5242
    %7711 = vmatprep.subr.bf16.mxu0 %v5251
    %7712 = vmatpush1.bf16.msra.mxu0 %v5250
    %7713 = vmatprep.subr.bf16.mxu0 %v5259
    %7714 = vmatpush1.bf16.msra.mxu0 %v5258
    %7715 = vmatprep.subr.bf16.mxu0 %v5267
    %7716 = vmatpush1.bf16.msra.mxu0 %v5266
    %7717 = vmatprep.subr.bf16.mxu0 %v5275
    %7718 = vmatpush1.bf16.msra.mxu0 %v5274
    %7719 = vmatprep.subr.bf16.mxu0 %v5283
    %7720 = vmatpush1.bf16.msra.mxu0 %v5282
    %7721 = vmatprep.subr.bf16.mxu0 %v5291
    %7722 = vmatpush1.bf16.msra.mxu0 %v5290
    %7723 = vmatprep.subr.bf16.mxu0 %v5299
    %7724 = vmatpush1.bf16.msra.mxu0 %v5298
    %7725 = vmatprep.subr.bf16.mxu0 %v5307
    %7726 = vmatpush1.bf16.msra.mxu0 %v5306
    %7727 = vmatprep.subr.bf16.mxu0 %v5315
    %7728 = vmatpush1.bf16.msra.mxu0 %v5314
    %7729 = vmatprep.subr.bf16.mxu0 %v5323
    %7730 = vmatpush1.bf16.msra.mxu0 %v5322
    %7731 = vmatprep.subr.bf16.mxu0 %v5331
    %7732 = vmatpush1.bf16.msra.mxu0 %v5330
    %7733 = vmatprep.subr.bf16.mxu0 %v5339
    %7734 = vmatpush1.bf16.msra.mxu0 %v5338
    %7735 = vmatprep.subr.bf16.mxu0 %v5347
    %7736 = vmatpush1.bf16.msra.mxu0 %v5346
    %7737 = vmatprep.mubr.bf16.mxu0 %v1235
    %7738 = vmatmul.mubr.bf16.gmra.mrb[0].mxu0 %v1234
    %v7739 = vpop.f32.mrb[0].mxu0
    %v7740 = vadd.f32 %v7697, %v7739
    %v7741 = vpop.f32.mrb[0].mxu0
    %v7742 = vadd.f32 %v7699, %v7741
    %v7743 = vpop.f32.mrb[0].mxu0
    %v7744 = vadd.f32 %v7701, %v7743
    %v7745 = vpop.f32.mrb[0].mxu0
    %v7746 = vadd.f32 %v7703, %v7745
    %7747 = vdwg.mxu0
    %v7748 = vld [vmem:[#allocation4] sm:$0xff]
    %v7750 = vlaneseq
    %v7751 = vshrl.u32 %v7750, 7
    %v7752 = vsub.s32 0, %v7751
    %v7753 = vrot.slane %v7748, %v7752
    %v7754 = vlaneseq
    %v7755 = vshrl.u32 %v7754, 7
    %v7756 = vsub.s32 1, %v7755
    %v7757 = vrot.slane %v7748, %v7756
    %v7758 = vlaneseq
    %v7759 = vshrl.u32 %v7758, 7
    %v7760 = vsub.s32 2, %v7759
    %v7761 = vrot.slane %v7748, %v7760
    %v7762 = vlaneseq
    %v7763 = vshrl.u32 %v7762, 7
    %v7764 = vsub.s32 3, %v7763
    %v7765 = vrot.slane %v7748, %v7764
    %v7766 = vlaneseq
    %v7767 = vshrl.u32 %v7766, 7
    %v7768 = vsub.s32 4, %v7767
    %v7769 = vrot.slane %v7748, %v7768
    %v7770 = vlaneseq
    %v7771 = vshrl.u32 %v7770, 7
    %v7772 = vsub.s32 5, %v7771
    %v7773 = vrot.slane %v7748, %v7772
    %v7774 = vlaneseq
    %v7775 = vshrl.u32 %v7774, 7
    %v7776 = vsub.s32 6, %v7775
    %v7777 = vrot.slane %v7748, %v7776
    %v7778 = vlaneseq
    %v7779 = vshrl.u32 %v7778, 7
    %v7780 = vsub.s32 7, %v7779
    %v7781 = vrot.slane %v7748, %v7780
    %v7790 = vmul.f32 %v6708, %v7753
    %v7791 = vmul.f32 %v6710, %v7757
    %v7792 = vmul.f32 %v7052, %v7761
    %v7793 = vmul.f32 %v7054, %v7765
    %v7794 = vmul.f32 %v7396, %v7769
    %v7795 = vmul.f32 %v7398, %v7773
    %v7796 = vmul.f32 %v7740, %v7777
    %v7797 = vmul.f32 %v7742, %v7781
    %v7798 = vmul.f32 %v6712, %v7753
    %v7799 = vmul.f32 %v6714, %v7757
    %v7800 = vmul.f32 %v7056, %v7761
    %v7801 = vmul.f32 %v7058, %v7765
    %v7802 = vmul.f32 %v7400, %v7769
    %v7803 = vmul.f32 %v7402, %v7773
    %v7804 = vmul.f32 %v7744, %v7777
    %v7805 = vmul.f32 %v7746, %v7781
    %v7806 = vld [vmem:[#allocation6] sm:$0xff]
    %v7808 = vlaneseq
    %v7809 = vshrl.u32 %v7808, 7
    %v7810 = vsub.s32 0, %v7809
    %v7811 = vrot.slane %v7806, %v7810
    %v7812 = vlaneseq
    %v7813 = vshrl.u32 %v7812, 7
    %v7814 = vsub.s32 1, %v7813
    %v7815 = vrot.slane %v7806, %v7814
    %v7816 = vlaneseq
    %v7817 = vshrl.u32 %v7816, 7
    %v7818 = vsub.s32 2, %v7817
    %v7819 = vrot.slane %v7806, %v7818
    %v7820 = vlaneseq
    %v7821 = vshrl.u32 %v7820, 7
    %v7822 = vsub.s32 3, %v7821
    %v7823 = vrot.slane %v7806, %v7822
    %v7824 = vlaneseq
    %v7825 = vshrl.u32 %v7824, 7
    %v7826 = vsub.s32 4, %v7825
    %v7827 = vrot.slane %v7806, %v7826
    %v7828 = vlaneseq
    %v7829 = vshrl.u32 %v7828, 7
    %v7830 = vsub.s32 5, %v7829
    %v7831 = vrot.slane %v7806, %v7830
    %v7832 = vlaneseq
    %v7833 = vshrl.u32 %v7832, 7
    %v7834 = vsub.s32 6, %v7833
    %v7835 = vrot.slane %v7806, %v7834
    %v7836 = vlaneseq
    %v7837 = vshrl.u32 %v7836, 7
    %v7838 = vsub.s32 7, %v7837
    %v7839 = vrot.slane %v7806, %v7838
    %v7848 = vadd.f32 %v7790, %v7811
    %v7849 = vadd.f32 %v7791, %v7815
    %v7850 = vadd.f32 %v7792, %v7819
    %v7851 = vadd.f32 %v7793, %v7823
    %v7852 = vadd.f32 %v7794, %v7827
    %v7853 = vadd.f32 %v7795, %v7831
    %v7854 = vadd.f32 %v7796, %v7835
    %v7855 = vadd.f32 %v7797, %v7839
    %v7856 = vadd.f32 %v7798, %v7811
    %v7857 = vadd.f32 %v7799, %v7815
    %v7858 = vadd.f32 %v7800, %v7819
    %v7859 = vadd.f32 %v7801, %v7823
    %v7860 = vadd.f32 %v7802, %v7827
    %v7861 = vadd.f32 %v7803, %v7831
    %v7862 = vadd.f32 %v7804, %v7835
    %v7863 = vadd.f32 %v7805, %v7839
    %v7864 = vmax.f32 %v7848, 0.0
    %v7865 = vmax.f32 %v7849, 0.0
    %v7866 = vmax.f32 %v7850, 0.0
    %v7867 = vmax.f32 %v7851, 0.0
    %v7868 = vmax.f32 %v7852, 0.0
    %v7869 = vmax.f32 %v7853, 0.0
    %v7870 = vmax.f32 %v7854, 0.0
    %v7871 = vmax.f32 %v7855, 0.0
    %v7872 = vmax.f32 %v7856, 0.0
    %v7873 = vmax.f32 %v7857, 0.0
    %v7874 = vmax.f32 %v7858, 0.0
    %v7875 = vmax.f32 %v7859, 0.0
    %v7876 = vmax.f32 %v7860, 0.0
    %v7877 = vmax.f32 %v7861, 0.0
    %v7878 = vmax.f32 %v7862, 0.0
    %v7879 = vmax.f32 %v7863, 0.0
    %v7880 = vpack.c.bf16 %v7872, %v7864
    %v7881 = vpack.c.bf16 %v7873, %v7865
    %v7882 = vpack.c.bf16 %v7874, %v7866
    %v7883 = vpack.c.bf16 %v7875, %v7867
    %v7884 = vpack.c.bf16 %v7876, %v7868
    %v7885 = vpack.c.bf16 %v7877, %v7869
    %v7886 = vpack.c.bf16 %v7878, %v7870
    %v7887 = vpack.c.bf16 %v7879, %v7871
    %v7888 = vld [vmem:[#allocation7] sm:$0xff]
    %v7889 = vld [vmem:[#allocation7 + $0x8] sm:$0xff]
    %v7890 = vld [vmem:[#allocation7 + $0x10] sm:$0xff]
    %v7891 = vld [vmem:[#allocation7 + $0x18] sm:$0xff]
    %v7892 = vld [vmem:[#allocation7 + $0x20] sm:$0xff]
    %v7893 = vld [vmem:[#allocation7 + $0x28] sm:$0xff]
    %v7894 = vld [vmem:[#allocation7 + $0x30] sm:$0xff]
    %v7895 = vld [vmem:[#allocation7 + $0x38] sm:$0xff]
    %v7896 = vld [vmem:[#allocation7 + $0x40] sm:$0xff]
    %v7897 = vld [vmem:[#allocation7 + $0x48] sm:$0xff]
    %v7898 = vld [vmem:[#allocation7 + $0x50] sm:$0xff]
    %v7899 = vld [vmem:[#allocation7 + $0x58] sm:$0xff]
    %v7900 = vld [vmem:[#allocation7 + $0x60] sm:$0xff]
    %v7901 = vld [vmem:[#allocation7 + $0x68] sm:$0xff]
    %v7902 = vld [vmem:[#allocation7 + $0x70] sm:$0xff]
    %v7903 = vld [vmem:[#allocation7 + $0x78] sm:$0xff]
    %v7904 = vld [vmem:[#allocation7 + $0x80] sm:$0xff]
    %v7905 = vld [vmem:[#allocation7 + $0x88] sm:$0xff]
    %v7906 = vld [vmem:[#allocation7 + $0x90] sm:$0xff]
    %v7907 = vld [vmem:[#allocation7 + $0x98] sm:$0xff]
    %v7908 = vld [vmem:[#allocation7 + $0xa0] sm:$0xff]
    %v7909 = vld [vmem:[#allocation7 + $0xa8] sm:$0xff]
    %v7910 = vld [vmem:[#allocation7 + $0xb0] sm:$0xff]
    %v7911 = vld [vmem:[#allocation7 + $0xb8] sm:$0xff]
    %v7912 = vld [vmem:[#allocation7 + $0xc0] sm:$0xff]
    %v7913 = vld [vmem:[#allocation7 + $0xc8] sm:$0xff]
    %v7914 = vld [vmem:[#allocation7 + $0xd0] sm:$0xff]
    %v7915 = vld [vmem:[#allocation7 + $0xd8] sm:$0xff]
    %v7916 = vld [vmem:[#allocation7 + $0xe0] sm:$0xff]
    %v7917 = vld [vmem:[#allocation7 + $0xe8] sm:$0xff]
    %v7918 = vld [vmem:[#allocation7 + $0xf0] sm:$0xff]
    %v7919 = vld [vmem:[#allocation7 + $0xf8] sm:$0xff]
    %v7920 = vld [vmem:[#allocation7 + $0x100] sm:$0xff]
    %v7921 = vld [vmem:[#allocation7 + $0x108] sm:$0xff]
    %v7922 = vld [vmem:[#allocation7 + $0x110] sm:$0xff]
    %v7923 = vld [vmem:[#allocation7 + $0x118] sm:$0xff]
    %v7924 = vld [vmem:[#allocation7 + $0x120] sm:$0xff]
    %v7925 = vld [vmem:[#allocation7 + $0x128] sm:$0xff]
    %v7926 = vld [vmem:[#allocation7 + $0x130] sm:$0xff]
    %v7927 = vld [vmem:[#allocation7 + $0x138] sm:$0xff]
    %v7928 = vld [vmem:[#allocation7 + $0x140] sm:$0xff]
    %v7929 = vld [vmem:[#allocation7 + $0x148] sm:$0xff]
    %v7930 = vld [vmem:[#allocation7 + $0x150] sm:$0xff]
    %v7931 = vld [vmem:[#allocation7 + $0x158] sm:$0xff]
    %v7932 = vld [vmem:[#allocation7 + $0x160] sm:$0xff]
    %v7933 = vld [vmem:[#allocation7 + $0x168] sm:$0xff]
    %v7934 = vld [vmem:[#allocation7 + $0x170] sm:$0xff]
    %v7935 = vld [vmem:[#allocation7 + $0x178] sm:$0xff]
    %v7936 = vld [vmem:[#allocation7 + $0x180] sm:$0xff]
    %v7937 = vld [vmem:[#allocation7 + $0x188] sm:$0xff]
    %v7938 = vld [vmem:[#allocation7 + $0x190] sm:$0xff]
    %v7939 = vld [vmem:[#allocation7 + $0x198] sm:$0xff]
    %v7940 = vld [vmem:[#allocation7 + $0x1a0] sm:$0xff]
    %v7941 = vld [vmem:[#allocation7 + $0x1a8] sm:$0xff]
    %v7942 = vld [vmem:[#allocation7 + $0x1b0] sm:$0xff]
    %v7943 = vld [vmem:[#allocation7 + $0x1b8] sm:$0xff]
    %v7944 = vld [vmem:[#allocation7 + $0x1c0] sm:$0xff]
    %v7945 = vld [vmem:[#allocation7 + $0x1c8] sm:$0xff]
    %v7946 = vld [vmem:[#allocation7 + $0x1d0] sm:$0xff]
    %v7947 = vld [vmem:[#allocation7 + $0x1d8] sm:$0xff]
    %v7948 = vld [vmem:[#allocation7 + $0x1e0] sm:$0xff]
    %v7949 = vld [vmem:[#allocation7 + $0x1e8] sm:$0xff]
    %v7950 = vld [vmem:[#allocation7 + $0x1f0] sm:$0xff]
    %v7951 = vld [vmem:[#allocation7 + $0x1f8] sm:$0xff]
    %v7952 = vld [vmem:[#allocation7 + $0x200] sm:$0xff]
    %v7953 = vld [vmem:[#allocation7 + $0x208] sm:$0xff]
    %v7954 = vld [vmem:[#allocation7 + $0x210] sm:$0xff]
    %v7955 = vld [vmem:[#allocation7 + $0x218] sm:$0xff]
    %v7956 = vld [vmem:[#allocation7 + $0x220] sm:$0xff]
    %v7957 = vld [vmem:[#allocation7 + $0x228] sm:$0xff]
    %v7958 = vld [vmem:[#allocation7 + $0x230] sm:$0xff]
    %v7959 = vld [vmem:[#allocation7 + $0x238] sm:$0xff]
    %v7960 = vld [vmem:[#allocation7 + $0x240] sm:$0xff]
    %v7961 = vld [vmem:[#allocation7 + $0x248] sm:$0xff]
    %v7962 = vld [vmem:[#allocation7 + $0x250] sm:$0xff]
    %v7963 = vld [vmem:[#allocation7 + $0x258] sm:$0xff]
    %v7964 = vld [vmem:[#allocation7 + $0x260] sm:$0xff]
    %v7965 = vld [vmem:[#allocation7 + $0x268] sm:$0xff]
    %v7966 = vld [vmem:[#allocation7 + $0x270] sm:$0xff]
    %v7967 = vld [vmem:[#allocation7 + $0x278] sm:$0xff]
    %v7968 = vld [vmem:[#allocation7 + $0x280] sm:$0xff]
    %v7969 = vld [vmem:[#allocation7 + $0x288] sm:$0xff]
    %v7970 = vld [vmem:[#allocation7 + $0x290] sm:$0xff]
    %v7971 = vld [vmem:[#allocation7 + $0x298] sm:$0xff]
    %v7972 = vld [vmem:[#allocation7 + $0x2a0] sm:$0xff]
    %v7973 = vld [vmem:[#allocation7 + $0x2a8] sm:$0xff]
    %v7974 = vld [vmem:[#allocation7 + $0x2b0] sm:$0xff]
    %v7975 = vld [vmem:[#allocation7 + $0x2b8] sm:$0xff]
    %v7976 = vld [vmem:[#allocation7 + $0x2c0] sm:$0xff]
    %v7977 = vld [vmem:[#allocation7 + $0x2c8] sm:$0xff]
    %v7978 = vld [vmem:[#allocation7 + $0x2d0] sm:$0xff]
    %v7979 = vld [vmem:[#allocation7 + $0x2d8] sm:$0xff]
    %v7980 = vld [vmem:[#allocation7 + $0x2e0] sm:$0xff]
    %v7981 = vld [vmem:[#allocation7 + $0x2e8] sm:$0xff]
    %v7982 = vld [vmem:[#allocation7 + $0x2f0] sm:$0xff]
    %v7983 = vld [vmem:[#allocation7 + $0x2f8] sm:$0xff]
    %v7984 = vld [vmem:[#allocation7 + $0x300] sm:$0xff]
    %v7985 = vld [vmem:[#allocation7 + $0x308] sm:$0xff]
    %v7986 = vld [vmem:[#allocation7 + $0x310] sm:$0xff]
    %v7987 = vld [vmem:[#allocation7 + $0x318] sm:$0xff]
    %v7988 = vld [vmem:[#allocation7 + $0x320] sm:$0xff]
    %v7989 = vld [vmem:[#allocation7 + $0x328] sm:$0xff]
    %v7990 = vld [vmem:[#allocation7 + $0x330] sm:$0xff]
    %v7991 = vld [vmem:[#allocation7 + $0x338] sm:$0xff]
    %v7992 = vld [vmem:[#allocation7 + $0x340] sm:$0xff]
    %v7993 = vld [vmem:[#allocation7 + $0x348] sm:$0xff]
    %v7994 = vld [vmem:[#allocation7 + $0x350] sm:$0xff]
    %v7995 = vld [vmem:[#allocation7 + $0x358] sm:$0xff]
    %v7996 = vld [vmem:[#allocation7 + $0x360] sm:$0xff]
    %v7997 = vld [vmem:[#allocation7 + $0x368] sm:$0xff]
    %v7998 = vld [vmem:[#allocation7 + $0x370] sm:$0xff]
    %v7999 = vld [vmem:[#allocation7 + $0x378] sm:$0xff]
    %v8000 = vld [vmem:[#allocation7 + $0x380] sm:$0xff]
    %v8001 = vld [vmem:[#allocation7 + $0x388] sm:$0xff]
    %v8002 = vld [vmem:[#allocation7 + $0x390] sm:$0xff]
    %v8003 = vld [vmem:[#allocation7 + $0x398] sm:$0xff]
    %v8004 = vld [vmem:[#allocation7 + $0x3a0] sm:$0xff]
    %v8005 = vld [vmem:[#allocation7 + $0x3a8] sm:$0xff]
    %v8006 = vld [vmem:[#allocation7 + $0x3b0] sm:$0xff]
    %v8007 = vld [vmem:[#allocation7 + $0x3b8] sm:$0xff]
    %v8008 = vld [vmem:[#allocation7 + $0x3c0] sm:$0xff]
    %v8009 = vld [vmem:[#allocation7 + $0x3c8] sm:$0xff]
    %v8010 = vld [vmem:[#allocation7 + $0x3d0] sm:$0xff]
    %v8011 = vld [vmem:[#allocation7 + $0x3d8] sm:$0xff]
    %v8012 = vld [vmem:[#allocation7 + $0x3e0] sm:$0xff]
    %v8013 = vld [vmem:[#allocation7 + $0x3e8] sm:$0xff]
    %v8014 = vld [vmem:[#allocation7 + $0x3f0] sm:$0xff]
    %v8015 = vld [vmem:[#allocation7 + $0x3f8] sm:$0xff]
    %v8016 = vld [vmem:[#allocation7 + $0x400] sm:$0xff]
    %v8017 = vld [vmem:[#allocation7 + $0x408] sm:$0xff]
    %v8018 = vld [vmem:[#allocation7 + $0x410] sm:$0xff]
    %v8019 = vld [vmem:[#allocation7 + $0x418] sm:$0xff]
    %v8020 = vld [vmem:[#allocation7 + $0x420] sm:$0xff]
    %v8021 = vld [vmem:[#allocation7 + $0x428] sm:$0xff]
    %v8022 = vld [vmem:[#allocation7 + $0x430] sm:$0xff]
    %v8023 = vld [vmem:[#allocation7 + $0x438] sm:$0xff]
    %v8024 = vld [vmem:[#allocation7 + $0x440] sm:$0xff]
    %v8025 = vld [vmem:[#allocation7 + $0x448] sm:$0xff]
    %v8026 = vld [vmem:[#allocation7 + $0x450] sm:$0xff]
    %v8027 = vld [vmem:[#allocation7 + $0x458] sm:$0xff]
    %v8028 = vld [vmem:[#allocation7 + $0x460] sm:$0xff]
    %v8029 = vld [vmem:[#allocation7 + $0x468] sm:$0xff]
    %v8030 = vld [vmem:[#allocation7 + $0x470] sm:$0xff]
    %v8031 = vld [vmem:[#allocation7 + $0x478] sm:$0xff]
    %v8032 = vld [vmem:[#allocation7 + $0x480] sm:$0xff]
    %v8033 = vld [vmem:[#allocation7 + $0x488] sm:$0xff]
    %v8034 = vld [vmem:[#allocation7 + $0x490] sm:$0xff]
    %v8035 = vld [vmem:[#allocation7 + $0x498] sm:$0xff]
    %v8036 = vld [vmem:[#allocation7 + $0x4a0] sm:$0xff]
    %v8037 = vld [vmem:[#allocation7 + $0x4a8] sm:$0xff]
    %v8038 = vld [vmem:[#allocation7 + $0x4b0] sm:$0xff]
    %v8039 = vld [vmem:[#allocation7 + $0x4b8] sm:$0xff]
    %v8040 = vld [vmem:[#allocation7 + $0x4c0] sm:$0xff]
    %v8041 = vld [vmem:[#allocation7 + $0x4c8] sm:$0xff]
    %v8042 = vld [vmem:[#allocation7 + $0x4d0] sm:$0xff]
    %v8043 = vld [vmem:[#allocation7 + $0x4d8] sm:$0xff]
    %v8044 = vld [vmem:[#allocation7 + $0x4e0] sm:$0xff]
    %v8045 = vld [vmem:[#allocation7 + $0x4e8] sm:$0xff]
    %v8046 = vld [vmem:[#allocation7 + $0x4f0] sm:$0xff]
    %v8047 = vld [vmem:[#allocation7 + $0x4f8] sm:$0xff]
    %v8048 = vld [vmem:[#allocation7 + $0x500] sm:$0xff]
    %v8049 = vld [vmem:[#allocation7 + $0x508] sm:$0xff]
    %v8050 = vld [vmem:[#allocation7 + $0x510] sm:$0xff]
    %v8051 = vld [vmem:[#allocation7 + $0x518] sm:$0xff]
    %v8052 = vld [vmem:[#allocation7 + $0x520] sm:$0xff]
    %v8053 = vld [vmem:[#allocation7 + $0x528] sm:$0xff]
    %v8054 = vld [vmem:[#allocation7 + $0x530] sm:$0xff]
    %v8055 = vld [vmem:[#allocation7 + $0x538] sm:$0xff]
    %v8056 = vld [vmem:[#allocation7 + $0x540] sm:$0xff]
    %v8057 = vld [vmem:[#allocation7 + $0x548] sm:$0xff]
    %v8058 = vld [vmem:[#allocation7 + $0x550] sm:$0xff]
    %v8059 = vld [vmem:[#allocation7 + $0x558] sm:$0xff]
    %v8060 = vld [vmem:[#allocation7 + $0x560] sm:$0xff]
    %v8061 = vld [vmem:[#allocation7 + $0x568] sm:$0xff]
    %v8062 = vld [vmem:[#allocation7 + $0x570] sm:$0xff]
    %v8063 = vld [vmem:[#allocation7 + $0x578] sm:$0xff]
    %v8064 = vld [vmem:[#allocation7 + $0x580] sm:$0xff]
    %v8065 = vld [vmem:[#allocation7 + $0x588] sm:$0xff]
    %v8066 = vld [vmem:[#allocation7 + $0x590] sm:$0xff]
    %v8067 = vld [vmem:[#allocation7 + $0x598] sm:$0xff]
    %v8068 = vld [vmem:[#allocation7 + $0x5a0] sm:$0xff]
    %v8069 = vld [vmem:[#allocation7 + $0x5a8] sm:$0xff]
    %v8070 = vld [vmem:[#allocation7 + $0x5b0] sm:$0xff]
    %v8071 = vld [vmem:[#allocation7 + $0x5b8] sm:$0xff]
    %v8072 = vld [vmem:[#allocation7 + $0x5c0] sm:$0xff]
    %v8073 = vld [vmem:[#allocation7 + $0x5c8] sm:$0xff]
    %v8074 = vld [vmem:[#allocation7 + $0x5d0] sm:$0xff]
    %v8075 = vld [vmem:[#allocation7 + $0x5d8] sm:$0xff]
    %v8076 = vld [vmem:[#allocation7 + $0x5e0] sm:$0xff]
    %v8077 = vld [vmem:[#allocation7 + $0x5e8] sm:$0xff]
    %v8078 = vld [vmem:[#allocation7 + $0x5f0] sm:$0xff]
    %v8079 = vld [vmem:[#allocation7 + $0x5f8] sm:$0xff]
    %v8080 = vld [vmem:[#allocation7 + $0x600] sm:$0xff]
    %v8081 = vld [vmem:[#allocation7 + $0x608] sm:$0xff]
    %v8082 = vld [vmem:[#allocation7 + $0x610] sm:$0xff]
    %v8083 = vld [vmem:[#allocation7 + $0x618] sm:$0xff]
    %v8084 = vld [vmem:[#allocation7 + $0x620] sm:$0xff]
    %v8085 = vld [vmem:[#allocation7 + $0x628] sm:$0xff]
    %v8086 = vld [vmem:[#allocation7 + $0x630] sm:$0xff]
    %v8087 = vld [vmem:[#allocation7 + $0x638] sm:$0xff]
    %v8088 = vld [vmem:[#allocation7 + $0x640] sm:$0xff]
    %v8089 = vld [vmem:[#allocation7 + $0x648] sm:$0xff]
    %v8090 = vld [vmem:[#allocation7 + $0x650] sm:$0xff]
    %v8091 = vld [vmem:[#allocation7 + $0x658] sm:$0xff]
    %v8092 = vld [vmem:[#allocation7 + $0x660] sm:$0xff]
    %v8093 = vld [vmem:[#allocation7 + $0x668] sm:$0xff]
    %v8094 = vld [vmem:[#allocation7 + $0x670] sm:$0xff]
    %v8095 = vld [vmem:[#allocation7 + $0x678] sm:$0xff]
    %v8096 = vld [vmem:[#allocation7 + $0x680] sm:$0xff]
    %v8097 = vld [vmem:[#allocation7 + $0x688] sm:$0xff]
    %v8098 = vld [vmem:[#allocation7 + $0x690] sm:$0xff]
    %v8099 = vld [vmem:[#allocation7 + $0x698] sm:$0xff]
    %v8100 = vld [vmem:[#allocation7 + $0x6a0] sm:$0xff]
    %v8101 = vld [vmem:[#allocation7 + $0x6a8] sm:$0xff]
    %v8102 = vld [vmem:[#allocation7 + $0x6b0] sm:$0xff]
    %v8103 = vld [vmem:[#allocation7 + $0x6b8] sm:$0xff]
    %v8104 = vld [vmem:[#allocation7 + $0x6c0] sm:$0xff]
    %v8105 = vld [vmem:[#allocation7 + $0x6c8] sm:$0xff]
    %v8106 = vld [vmem:[#allocation7 + $0x6d0] sm:$0xff]
    %v8107 = vld [vmem:[#allocation7 + $0x6d8] sm:$0xff]
    %v8108 = vld [vmem:[#allocation7 + $0x6e0] sm:$0xff]
    %v8109 = vld [vmem:[#allocation7 + $0x6e8] sm:$0xff]
    %v8110 = vld [vmem:[#allocation7 + $0x6f0] sm:$0xff]
    %v8111 = vld [vmem:[#allocation7 + $0x6f8] sm:$0xff]
    %v8112 = vld [vmem:[#allocation7 + $0x700] sm:$0xff]
    %v8113 = vld [vmem:[#allocation7 + $0x708] sm:$0xff]
    %v8114 = vld [vmem:[#allocation7 + $0x710] sm:$0xff]
    %v8115 = vld [vmem:[#allocation7 + $0x718] sm:$0xff]
    %v8116 = vld [vmem:[#allocation7 + $0x720] sm:$0xff]
    %v8117 = vld [vmem:[#allocation7 + $0x728] sm:$0xff]
    %v8118 = vld [vmem:[#allocation7 + $0x730] sm:$0xff]
    %v8119 = vld [vmem:[#allocation7 + $0x738] sm:$0xff]
    %v8120 = vld [vmem:[#allocation7 + $0x740] sm:$0xff]
    %v8121 = vld [vmem:[#allocation7 + $0x748] sm:$0xff]
    %v8122 = vld [vmem:[#allocation7 + $0x750] sm:$0xff]
    %v8123 = vld [vmem:[#allocation7 + $0x758] sm:$0xff]
    %v8124 = vld [vmem:[#allocation7 + $0x760] sm:$0xff]
    %v8125 = vld [vmem:[#allocation7 + $0x768] sm:$0xff]
    %v8126 = vld [vmem:[#allocation7 + $0x770] sm:$0xff]
    %v8127 = vld [vmem:[#allocation7 + $0x778] sm:$0xff]
    %v8128 = vld [vmem:[#allocation7 + $0x780] sm:$0xff]
    %v8129 = vld [vmem:[#allocation7 + $0x788] sm:$0xff]
    %v8130 = vld [vmem:[#allocation7 + $0x790] sm:$0xff]
    %v8131 = vld [vmem:[#allocation7 + $0x798] sm:$0xff]
    %v8132 = vld [vmem:[#allocation7 + $0x7a0] sm:$0xff]
    %v8133 = vld [vmem:[#allocation7 + $0x7a8] sm:$0xff]
    %v8134 = vld [vmem:[#allocation7 + $0x7b0] sm:$0xff]
    %v8135 = vld [vmem:[#allocation7 + $0x7b8] sm:$0xff]
    %v8136 = vld [vmem:[#allocation7 + $0x7c0] sm:$0xff]
    %v8137 = vld [vmem:[#allocation7 + $0x7c8] sm:$0xff]
    %v8138 = vld [vmem:[#allocation7 + $0x7d0] sm:$0xff]
    %v8139 = vld [vmem:[#allocation7 + $0x7d8] sm:$0xff]
    %v8140 = vld [vmem:[#allocation7 + $0x7e0] sm:$0xff]
    %v8141 = vld [vmem:[#allocation7 + $0x7e8] sm:$0xff]
    %v8142 = vld [vmem:[#allocation7 + $0x7f0] sm:$0xff]
    %v8143 = vld [vmem:[#allocation7 + $0x7f8] sm:$0xff]
    %v8144 = vld [vmem:[#allocation7 + $0x800] sm:$0xff]
    %v8145 = vld [vmem:[#allocation7 + $0x808] sm:$0xff]
    %v8146 = vld [vmem:[#allocation7 + $0x810] sm:$0xff]
    %v8147 = vld [vmem:[#allocation7 + $0x818] sm:$0xff]
    %v8148 = vld [vmem:[#allocation7 + $0x820] sm:$0xff]
    %v8149 = vld [vmem:[#allocation7 + $0x828] sm:$0xff]
    %v8150 = vld [vmem:[#allocation7 + $0x830] sm:$0xff]
    %v8151 = vld [vmem:[#allocation7 + $0x838] sm:$0xff]
    %v8152 = vld [vmem:[#allocation7 + $0x840] sm:$0xff]
    %v8153 = vld [vmem:[#allocation7 + $0x848] sm:$0xff]
    %v8154 = vld [vmem:[#allocation7 + $0x850] sm:$0xff]
    %v8155 = vld [vmem:[#allocation7 + $0x858] sm:$0xff]
    %v8156 = vld [vmem:[#allocation7 + $0x860] sm:$0xff]
    %v8157 = vld [vmem:[#allocation7 + $0x868] sm:$0xff]
    %v8158 = vld [vmem:[#allocation7 + $0x870] sm:$0xff]
    %v8159 = vld [vmem:[#allocation7 + $0x878] sm:$0xff]
    %v8160 = vld [vmem:[#allocation7 + $0x880] sm:$0xff]
    %v8161 = vld [vmem:[#allocation7 + $0x888] sm:$0xff]
    %v8162 = vld [vmem:[#allocation7 + $0x890] sm:$0xff]
    %v8163 = vld [vmem:[#allocation7 + $0x898] sm:$0xff]
    %v8164 = vld [vmem:[#allocation7 + $0x8a0] sm:$0xff]
    %v8165 = vld [vmem:[#allocation7 + $0x8a8] sm:$0xff]
    %v8166 = vld [vmem:[#allocation7 + $0x8b0] sm:$0xff]
    %v8167 = vld [vmem:[#allocation7 + $0x8b8] sm:$0xff]
    %v8168 = vld [vmem:[#allocation7 + $0x8c0] sm:$0xff]
    %v8169 = vld [vmem:[#allocation7 + $0x8c8] sm:$0xff]
    %v8170 = vld [vmem:[#allocation7 + $0x8d0] sm:$0xff]
    %v8171 = vld [vmem:[#allocation7 + $0x8d8] sm:$0xff]
    %v8172 = vld [vmem:[#allocation7 + $0x8e0] sm:$0xff]
    %v8173 = vld [vmem:[#allocation7 + $0x8e8] sm:$0xff]
    %v8174 = vld [vmem:[#allocation7 + $0x8f0] sm:$0xff]
    %v8175 = vld [vmem:[#allocation7 + $0x8f8] sm:$0xff]
    %v8176 = vld [vmem:[#allocation7 + $0x900] sm:$0xff]
    %v8177 = vld [vmem:[#allocation7 + $0x908] sm:$0xff]
    %v8178 = vld [vmem:[#allocation7 + $0x910] sm:$0xff]
    %v8179 = vld [vmem:[#allocation7 + $0x918] sm:$0xff]
    %v8180 = vld [vmem:[#allocation7 + $0x920] sm:$0xff]
    %v8181 = vld [vmem:[#allocation7 + $0x928] sm:$0xff]
    %v8182 = vld [vmem:[#allocation7 + $0x930] sm:$0xff]
    %v8183 = vld [vmem:[#allocation7 + $0x938] sm:$0xff]
    %v8184 = vld [vmem:[#allocation7 + $0x940] sm:$0xff]
    %v8185 = vld [vmem:[#allocation7 + $0x948] sm:$0xff]
    %v8186 = vld [vmem:[#allocation7 + $0x950] sm:$0xff]
    %v8187 = vld [vmem:[#allocation7 + $0x958] sm:$0xff]
    %v8188 = vld [vmem:[#allocation7 + $0x960] sm:$0xff]
    %v8189 = vld [vmem:[#allocation7 + $0x968] sm:$0xff]
    %v8190 = vld [vmem:[#allocation7 + $0x970] sm:$0xff]
    %v8191 = vld [vmem:[#allocation7 + $0x978] sm:$0xff]
    %v8192 = vld [vmem:[#allocation7 + $0x980] sm:$0xff]
    %v8193 = vld [vmem:[#allocation7 + $0x988] sm:$0xff]
    %v8194 = vld [vmem:[#allocation7 + $0x990] sm:$0xff]
    %v8195 = vld [vmem:[#allocation7 + $0x998] sm:$0xff]
    %v8196 = vld [vmem:[#allocation7 + $0x9a0] sm:$0xff]
    %v8197 = vld [vmem:[#allocation7 + $0x9a8] sm:$0xff]
    %v8198 = vld [vmem:[#allocation7 + $0x9b0] sm:$0xff]
    %v8199 = vld [vmem:[#allocation7 + $0x9b8] sm:$0xff]
    %v8200 = vld [vmem:[#allocation7 + $0x9c0] sm:$0xff]
    %v8201 = vld [vmem:[#allocation7 + $0x9c8] sm:$0xff]
    %v8202 = vld [vmem:[#allocation7 + $0x9d0] sm:$0xff]
    %v8203 = vld [vmem:[#allocation7 + $0x9d8] sm:$0xff]
    %v8204 = vld [vmem:[#allocation7 + $0x9e0] sm:$0xff]
    %v8205 = vld [vmem:[#allocation7 + $0x9e8] sm:$0xff]
    %v8206 = vld [vmem:[#allocation7 + $0x9f0] sm:$0xff]
    %v8207 = vld [vmem:[#allocation7 + $0x9f8] sm:$0xff]
    %v8208 = vld [vmem:[#allocation7 + $0xa00] sm:$0xff]
    %v8209 = vld [vmem:[#allocation7 + $0xa08] sm:$0xff]
    %v8210 = vld [vmem:[#allocation7 + $0xa10] sm:$0xff]
    %v8211 = vld [vmem:[#allocation7 + $0xa18] sm:$0xff]
    %v8212 = vld [vmem:[#allocation7 + $0xa20] sm:$0xff]
    %v8213 = vld [vmem:[#allocation7 + $0xa28] sm:$0xff]
    %v8214 = vld [vmem:[#allocation7 + $0xa30] sm:$0xff]
    %v8215 = vld [vmem:[#allocation7 + $0xa38] sm:$0xff]
    %v8216 = vld [vmem:[#allocation7 + $0xa40] sm:$0xff]
    %v8217 = vld [vmem:[#allocation7 + $0xa48] sm:$0xff]
    %v8218 = vld [vmem:[#allocation7 + $0xa50] sm:$0xff]
    %v8219 = vld [vmem:[#allocation7 + $0xa58] sm:$0xff]
    %v8220 = vld [vmem:[#allocation7 + $0xa60] sm:$0xff]
    %v8221 = vld [vmem:[#allocation7 + $0xa68] sm:$0xff]
    %v8222 = vld [vmem:[#allocation7 + $0xa70] sm:$0xff]
    %v8223 = vld [vmem:[#allocation7 + $0xa78] sm:$0xff]
    %v8224 = vld [vmem:[#allocation7 + $0xa80] sm:$0xff]
    %v8225 = vld [vmem:[#allocation7 + $0xa88] sm:$0xff]
    %v8226 = vld [vmem:[#allocation7 + $0xa90] sm:$0xff]
    %v8227 = vld [vmem:[#allocation7 + $0xa98] sm:$0xff]
    %v8228 = vld [vmem:[#allocation7 + $0xaa0] sm:$0xff]
    %v8229 = vld [vmem:[#allocation7 + $0xaa8] sm:$0xff]
    %v8230 = vld [vmem:[#allocation7 + $0xab0] sm:$0xff]
    %v8231 = vld [vmem:[#allocation7 + $0xab8] sm:$0xff]
    %v8232 = vld [vmem:[#allocation7 + $0xac0] sm:$0xff]
    %v8233 = vld [vmem:[#allocation7 + $0xac8] sm:$0xff]
    %v8234 = vld [vmem:[#allocation7 + $0xad0] sm:$0xff]
    %v8235 = vld [vmem:[#allocation7 + $0xad8] sm:$0xff]
    %v8236 = vld [vmem:[#allocation7 + $0xae0] sm:$0xff]
    %v8237 = vld [vmem:[#allocation7 + $0xae8] sm:$0xff]
    %v8238 = vld [vmem:[#allocation7 + $0xaf0] sm:$0xff]
    %v8239 = vld [vmem:[#allocation7 + $0xaf8] sm:$0xff]
    %v8240 = vld [vmem:[#allocation7 + $0xb00] sm:$0xff]
    %v8241 = vld [vmem:[#allocation7 + $0xb08] sm:$0xff]
    %v8242 = vld [vmem:[#allocation7 + $0xb10] sm:$0xff]
    %v8243 = vld [vmem:[#allocation7 + $0xb18] sm:$0xff]
    %v8244 = vld [vmem:[#allocation7 + $0xb20] sm:$0xff]
    %v8245 = vld [vmem:[#allocation7 + $0xb28] sm:$0xff]
    %v8246 = vld [vmem:[#allocation7 + $0xb30] sm:$0xff]
    %v8247 = vld [vmem:[#allocation7 + $0xb38] sm:$0xff]
    %v8248 = vld [vmem:[#allocation7 + $0xb40] sm:$0xff]
    %v8249 = vld [vmem:[#allocation7 + $0xb48] sm:$0xff]
    %v8250 = vld [vmem:[#allocation7 + $0xb50] sm:$0xff]
    %v8251 = vld [vmem:[#allocation7 + $0xb58] sm:$0xff]
    %v8252 = vld [vmem:[#allocation7 + $0xb60] sm:$0xff]
    %v8253 = vld [vmem:[#allocation7 + $0xb68] sm:$0xff]
    %v8254 = vld [vmem:[#allocation7 + $0xb70] sm:$0xff]
    %v8255 = vld [vmem:[#allocation7 + $0xb78] sm:$0xff]
    %v8256 = vld [vmem:[#allocation7 + $0xb80] sm:$0xff]
    %v8257 = vld [vmem:[#allocation7 + $0xb88] sm:$0xff]
    %v8258 = vld [vmem:[#allocation7 + $0xb90] sm:$0xff]
    %v8259 = vld [vmem:[#allocation7 + $0xb98] sm:$0xff]
    %v8260 = vld [vmem:[#allocation7 + $0xba0] sm:$0xff]
    %v8261 = vld [vmem:[#allocation7 + $0xba8] sm:$0xff]
    %v8262 = vld [vmem:[#allocation7 + $0xbb0] sm:$0xff]
    %v8263 = vld [vmem:[#allocation7 + $0xbb8] sm:$0xff]
    %v8264 = vld [vmem:[#allocation7 + $0xbc0] sm:$0xff]
    %v8265 = vld [vmem:[#allocation7 + $0xbc8] sm:$0xff]
    %v8266 = vld [vmem:[#allocation7 + $0xbd0] sm:$0xff]
    %v8267 = vld [vmem:[#allocation7 + $0xbd8] sm:$0xff]
    %v8268 = vld [vmem:[#allocation7 + $0xbe0] sm:$0xff]
    %v8269 = vld [vmem:[#allocation7 + $0xbe8] sm:$0xff]
    %v8270 = vld [vmem:[#allocation7 + $0xbf0] sm:$0xff]
    %v8271 = vld [vmem:[#allocation7 + $0xbf8] sm:$0xff]
    %v8272 = vld [vmem:[#allocation7 + $0xc00] sm:$0xff]
    %v8273 = vld [vmem:[#allocation7 + $0xc08] sm:$0xff]
    %v8274 = vld [vmem:[#allocation7 + $0xc10] sm:$0xff]
    %v8275 = vld [vmem:[#allocation7 + $0xc18] sm:$0xff]
    %v8276 = vld [vmem:[#allocation7 + $0xc20] sm:$0xff]
    %v8277 = vld [vmem:[#allocation7 + $0xc28] sm:$0xff]
    %v8278 = vld [vmem:[#allocation7 + $0xc30] sm:$0xff]
    %v8279 = vld [vmem:[#allocation7 + $0xc38] sm:$0xff]
    %v8280 = vld [vmem:[#allocation7 + $0xc40] sm:$0xff]
    %v8281 = vld [vmem:[#allocation7 + $0xc48] sm:$0xff]
    %v8282 = vld [vmem:[#allocation7 + $0xc50] sm:$0xff]
    %v8283 = vld [vmem:[#allocation7 + $0xc58] sm:$0xff]
    %v8284 = vld [vmem:[#allocation7 + $0xc60] sm:$0xff]
    %v8285 = vld [vmem:[#allocation7 + $0xc68] sm:$0xff]
    %v8286 = vld [vmem:[#allocation7 + $0xc70] sm:$0xff]
    %v8287 = vld [vmem:[#allocation7 + $0xc78] sm:$0xff]
    %v8288 = vld [vmem:[#allocation7 + $0xc80] sm:$0xff]
    %v8289 = vld [vmem:[#allocation7 + $0xc88] sm:$0xff]
    %v8290 = vld [vmem:[#allocation7 + $0xc90] sm:$0xff]
    %v8291 = vld [vmem:[#allocation7 + $0xc98] sm:$0xff]
    %v8292 = vld [vmem:[#allocation7 + $0xca0] sm:$0xff]
    %v8293 = vld [vmem:[#allocation7 + $0xca8] sm:$0xff]
    %v8294 = vld [vmem:[#allocation7 + $0xcb0] sm:$0xff]
    %v8295 = vld [vmem:[#allocation7 + $0xcb8] sm:$0xff]
    %v8296 = vld [vmem:[#allocation7 + $0xcc0] sm:$0xff]
    %v8297 = vld [vmem:[#allocation7 + $0xcc8] sm:$0xff]
    %v8298 = vld [vmem:[#allocation7 + $0xcd0] sm:$0xff]
    %v8299 = vld [vmem:[#allocation7 + $0xcd8] sm:$0xff]
    %v8300 = vld [vmem:[#allocation7 + $0xce0] sm:$0xff]
    %v8301 = vld [vmem:[#allocation7 + $0xce8] sm:$0xff]
    %v8302 = vld [vmem:[#allocation7 + $0xcf0] sm:$0xff]
    %v8303 = vld [vmem:[#allocation7 + $0xcf8] sm:$0xff]
    %v8304 = vld [vmem:[#allocation7 + $0xd00] sm:$0xff]
    %v8305 = vld [vmem:[#allocation7 + $0xd08] sm:$0xff]
    %v8306 = vld [vmem:[#allocation7 + $0xd10] sm:$0xff]
    %v8307 = vld [vmem:[#allocation7 + $0xd18] sm:$0xff]
    %v8308 = vld [vmem:[#allocation7 + $0xd20] sm:$0xff]
    %v8309 = vld [vmem:[#allocation7 + $0xd28] sm:$0xff]
    %v8310 = vld [vmem:[#allocation7 + $0xd30] sm:$0xff]
    %v8311 = vld [vmem:[#allocation7 + $0xd38] sm:$0xff]
    %v8312 = vld [vmem:[#allocation7 + $0xd40] sm:$0xff]
    %v8313 = vld [vmem:[#allocation7 + $0xd48] sm:$0xff]
    %v8314 = vld [vmem:[#allocation7 + $0xd50] sm:$0xff]
    %v8315 = vld [vmem:[#allocation7 + $0xd58] sm:$0xff]
    %v8316 = vld [vmem:[#allocation7 + $0xd60] sm:$0xff]
    %v8317 = vld [vmem:[#allocation7 + $0xd68] sm:$0xff]
    %v8318 = vld [vmem:[#allocation7 + $0xd70] sm:$0xff]
    %v8319 = vld [vmem:[#allocation7 + $0xd78] sm:$0xff]
    %v8320 = vld [vmem:[#allocation7 + $0xd80] sm:$0xff]
    %v8321 = vld [vmem:[#allocation7 + $0xd88] sm:$0xff]
    %v8322 = vld [vmem:[#allocation7 + $0xd90] sm:$0xff]
    %v8323 = vld [vmem:[#allocation7 + $0xd98] sm:$0xff]
    %v8324 = vld [vmem:[#allocation7 + $0xda0] sm:$0xff]
    %v8325 = vld [vmem:[#allocation7 + $0xda8] sm:$0xff]
    %v8326 = vld [vmem:[#allocation7 + $0xdb0] sm:$0xff]
    %v8327 = vld [vmem:[#allocation7 + $0xdb8] sm:$0xff]
    %v8328 = vld [vmem:[#allocation7 + $0xdc0] sm:$0xff]
    %v8329 = vld [vmem:[#allocation7 + $0xdc8] sm:$0xff]
    %v8330 = vld [vmem:[#allocation7 + $0xdd0] sm:$0xff]
    %v8331 = vld [vmem:[#allocation7 + $0xdd8] sm:$0xff]
    %v8332 = vld [vmem:[#allocation7 + $0xde0] sm:$0xff]
    %v8333 = vld [vmem:[#allocation7 + $0xde8] sm:$0xff]
    %v8334 = vld [vmem:[#allocation7 + $0xdf0] sm:$0xff]
    %v8335 = vld [vmem:[#allocation7 + $0xdf8] sm:$0xff]
    %v8336 = vld [vmem:[#allocation7 + $0xe00] sm:$0xff]
    %v8337 = vld [vmem:[#allocation7 + $0xe08] sm:$0xff]
    %v8338 = vld [vmem:[#allocation7 + $0xe10] sm:$0xff]
    %v8339 = vld [vmem:[#allocation7 + $0xe18] sm:$0xff]
    %v8340 = vld [vmem:[#allocation7 + $0xe20] sm:$0xff]
    %v8341 = vld [vmem:[#allocation7 + $0xe28] sm:$0xff]
    %v8342 = vld [vmem:[#allocation7 + $0xe30] sm:$0xff]
    %v8343 = vld [vmem:[#allocation7 + $0xe38] sm:$0xff]
    %v8344 = vld [vmem:[#allocation7 + $0xe40] sm:$0xff]
    %v8345 = vld [vmem:[#allocation7 + $0xe48] sm:$0xff]
    %v8346 = vld [vmem:[#allocation7 + $0xe50] sm:$0xff]
    %v8347 = vld [vmem:[#allocation7 + $0xe58] sm:$0xff]
    %v8348 = vld [vmem:[#allocation7 + $0xe60] sm:$0xff]
    %v8349 = vld [vmem:[#allocation7 + $0xe68] sm:$0xff]
    %v8350 = vld [vmem:[#allocation7 + $0xe70] sm:$0xff]
    %v8351 = vld [vmem:[#allocation7 + $0xe78] sm:$0xff]
    %v8352 = vld [vmem:[#allocation7 + $0xe80] sm:$0xff]
    %v8353 = vld [vmem:[#allocation7 + $0xe88] sm:$0xff]
    %v8354 = vld [vmem:[#allocation7 + $0xe90] sm:$0xff]
    %v8355 = vld [vmem:[#allocation7 + $0xe98] sm:$0xff]
    %v8356 = vld [vmem:[#allocation7 + $0xea0] sm:$0xff]
    %v8357 = vld [vmem:[#allocation7 + $0xea8] sm:$0xff]
    %v8358 = vld [vmem:[#allocation7 + $0xeb0] sm:$0xff]
    %v8359 = vld [vmem:[#allocation7 + $0xeb8] sm:$0xff]
    %v8360 = vld [vmem:[#allocation7 + $0xec0] sm:$0xff]
    %v8361 = vld [vmem:[#allocation7 + $0xec8] sm:$0xff]
    %v8362 = vld [vmem:[#allocation7 + $0xed0] sm:$0xff]
    %v8363 = vld [vmem:[#allocation7 + $0xed8] sm:$0xff]
    %v8364 = vld [vmem:[#allocation7 + $0xee0] sm:$0xff]
    %v8365 = vld [vmem:[#allocation7 + $0xee8] sm:$0xff]
    %v8366 = vld [vmem:[#allocation7 + $0xef0] sm:$0xff]
    %v8367 = vld [vmem:[#allocation7 + $0xef8] sm:$0xff]
    %v8368 = vld [vmem:[#allocation7 + $0xf00] sm:$0xff]
    %v8369 = vld [vmem:[#allocation7 + $0xf08] sm:$0xff]
    %v8370 = vld [vmem:[#allocation7 + $0xf10] sm:$0xff]
    %v8371 = vld [vmem:[#allocation7 + $0xf18] sm:$0xff]
    %v8372 = vld [vmem:[#allocation7 + $0xf20] sm:$0xff]
    %v8373 = vld [vmem:[#allocation7 + $0xf28] sm:$0xff]
    %v8374 = vld [vmem:[#allocation7 + $0xf30] sm:$0xff]
    %v8375 = vld [vmem:[#allocation7 + $0xf38] sm:$0xff]
    %v8376 = vld [vmem:[#allocation7 + $0xf40] sm:$0xff]
    %v8377 = vld [vmem:[#allocation7 + $0xf48] sm:$0xff]
    %v8378 = vld [vmem:[#allocation7 + $0xf50] sm:$0xff]
    %v8379 = vld [vmem:[#allocation7 + $0xf58] sm:$0xff]
    %v8380 = vld [vmem:[#allocation7 + $0xf60] sm:$0xff]
    %v8381 = vld [vmem:[#allocation7 + $0xf68] sm:$0xff]
    %v8382 = vld [vmem:[#allocation7 + $0xf70] sm:$0xff]
    %v8383 = vld [vmem:[#allocation7 + $0xf78] sm:$0xff]
    %v8384 = vld [vmem:[#allocation7 + $0xf80] sm:$0xff]
    %v8385 = vld [vmem:[#allocation7 + $0xf88] sm:$0xff]
    %v8386 = vld [vmem:[#allocation7 + $0xf90] sm:$0xff]
    %v8387 = vld [vmem:[#allocation7 + $0xf98] sm:$0xff]
    %v8388 = vld [vmem:[#allocation7 + $0xfa0] sm:$0xff]
    %v8389 = vld [vmem:[#allocation7 + $0xfa8] sm:$0xff]
    %v8390 = vld [vmem:[#allocation7 + $0xfb0] sm:$0xff]
    %v8391 = vld [vmem:[#allocation7 + $0xfb8] sm:$0xff]
    %v8392 = vld [vmem:[#allocation7 + $0xfc0] sm:$0xff]
    %v8393 = vld [vmem:[#allocation7 + $0xfc8] sm:$0xff]
    %v8394 = vld [vmem:[#allocation7 + $0xfd0] sm:$0xff]
    %v8395 = vld [vmem:[#allocation7 + $0xfd8] sm:$0xff]
    %v8396 = vld [vmem:[#allocation7 + $0xfe0] sm:$0xff]
    %v8397 = vld [vmem:[#allocation7 + $0xfe8] sm:$0xff]
    %v8398 = vld [vmem:[#allocation7 + $0xff0] sm:$0xff]
    %v8399 = vld [vmem:[#allocation7 + $0xff8] sm:$0xff]
    %v8912 = vunpack.c.l.b16 %v7888
    %v8913 = vunpack.c.h.b16 %v7888
    %v8914 = vunpack.c.l.b16 %v7889
    %v8915 = vunpack.c.h.b16 %v7889
    %v8916 = vunpack.c.l.b16 %v7890
    %v8917 = vunpack.c.h.b16 %v7890
    %v8918 = vunpack.c.l.b16 %v7891
    %v8919 = vunpack.c.h.b16 %v7891
    %v8920 = vunpack.c.l.b16 %v7892
    %v8921 = vunpack.c.h.b16 %v7892
    %v8922 = vunpack.c.l.b16 %v7893
    %v8923 = vunpack.c.h.b16 %v7893
    %v8924 = vunpack.c.l.b16 %v7894
    %v8925 = vunpack.c.h.b16 %v7894
    %v8926 = vunpack.c.l.b16 %v7895
    %v8927 = vunpack.c.h.b16 %v7895
    %v8928 = vunpack.c.l.b16 %v7896
    %v8929 = vunpack.c.h.b16 %v7896
    %v8930 = vunpack.c.l.b16 %v7897
    %v8931 = vunpack.c.h.b16 %v7897
    %v8932 = vunpack.c.l.b16 %v7898
    %v8933 = vunpack.c.h.b16 %v7898
    %v8934 = vunpack.c.l.b16 %v7899
    %v8935 = vunpack.c.h.b16 %v7899
    %v8936 = vunpack.c.l.b16 %v7900
    %v8937 = vunpack.c.h.b16 %v7900
    %v8938 = vunpack.c.l.b16 %v7901
    %v8939 = vunpack.c.h.b16 %v7901
    %v8940 = vunpack.c.l.b16 %v7902
    %v8941 = vunpack.c.h.b16 %v7902
    %v8942 = vunpack.c.l.b16 %v7903
    %v8943 = vunpack.c.h.b16 %v7903
    %v8944 = vunpack.c.l.b16 %v7904
    %v8945 = vunpack.c.h.b16 %v7904
    %v8946 = vunpack.c.l.b16 %v7905
    %v8947 = vunpack.c.h.b16 %v7905
    %v8948 = vunpack.c.l.b16 %v7906
    %v8949 = vunpack.c.h.b16 %v7906
    %v8950 = vunpack.c.l.b16 %v7907
    %v8951 = vunpack.c.h.b16 %v7907
    %v8952 = vunpack.c.l.b16 %v7908
    %v8953 = vunpack.c.h.b16 %v7908
    %v8954 = vunpack.c.l.b16 %v7909
    %v8955 = vunpack.c.h.b16 %v7909
    %v8956 = vunpack.c.l.b16 %v7910
    %v8957 = vunpack.c.h.b16 %v7910
    %v8958 = vunpack.c.l.b16 %v7911
    %v8959 = vunpack.c.h.b16 %v7911
    %v8960 = vunpack.c.l.b16 %v7912
    %v8961 = vunpack.c.h.b16 %v7912
    %v8962 = vunpack.c.l.b16 %v7913
    %v8963 = vunpack.c.h.b16 %v7913
    %v8964 = vunpack.c.l.b16 %v7914
    %v8965 = vunpack.c.h.b16 %v7914
    %v8966 = vunpack.c.l.b16 %v7915
    %v8967 = vunpack.c.h.b16 %v7915
    %v8968 = vunpack.c.l.b16 %v7916
    %v8969 = vunpack.c.h.b16 %v7916
    %v8970 = vunpack.c.l.b16 %v7917
    %v8971 = vunpack.c.h.b16 %v7917
    %v8972 = vunpack.c.l.b16 %v7918
    %v8973 = vunpack.c.h.b16 %v7918
    %v8974 = vunpack.c.l.b16 %v7919
    %v8975 = vunpack.c.h.b16 %v7919
    %v8976 = vunpack.c.l.b16 %v7920
    %v8977 = vunpack.c.h.b16 %v7920
    %v8978 = vunpack.c.l.b16 %v7921
    %v8979 = vunpack.c.h.b16 %v7921
    %v8980 = vunpack.c.l.b16 %v7922
    %v8981 = vunpack.c.h.b16 %v7922
    %v8982 = vunpack.c.l.b16 %v7923
    %v8983 = vunpack.c.h.b16 %v7923
    %v8984 = vunpack.c.l.b16 %v7924
    %v8985 = vunpack.c.h.b16 %v7924
    %v8986 = vunpack.c.l.b16 %v7925
    %v8987 = vunpack.c.h.b16 %v7925
    %v8988 = vunpack.c.l.b16 %v7926
    %v8989 = vunpack.c.h.b16 %v7926
    %v8990 = vunpack.c.l.b16 %v7927
    %v8991 = vunpack.c.h.b16 %v7927
    %v8992 = vunpack.c.l.b16 %v7928
    %v8993 = vunpack.c.h.b16 %v7928
    %v8994 = vunpack.c.l.b16 %v7929
    %v8995 = vunpack.c.h.b16 %v7929
    %v8996 = vunpack.c.l.b16 %v7930
    %v8997 = vunpack.c.h.b16 %v7930
    %v8998 = vunpack.c.l.b16 %v7931
    %v8999 = vunpack.c.h.b16 %v7931
    %v9000 = vunpack.c.l.b16 %v7932
    %v9001 = vunpack.c.h.b16 %v7932
    %v9002 = vunpack.c.l.b16 %v7933
    %v9003 = vunpack.c.h.b16 %v7933
    %v9004 = vunpack.c.l.b16 %v7934
    %v9005 = vunpack.c.h.b16 %v7934
    %v9006 = vunpack.c.l.b16 %v7935
    %v9007 = vunpack.c.h.b16 %v7935
    %v9008 = vunpack.c.l.b16 %v7936
    %v9009 = vunpack.c.h.b16 %v7936
    %v9010 = vunpack.c.l.b16 %v7937
    %v9011 = vunpack.c.h.b16 %v7937
    %v9012 = vunpack.c.l.b16 %v7938
    %v9013 = vunpack.c.h.b16 %v7938
    %v9014 = vunpack.c.l.b16 %v7939
    %v9015 = vunpack.c.h.b16 %v7939
    %v9016 = vunpack.c.l.b16 %v7940
    %v9017 = vunpack.c.h.b16 %v7940
    %v9018 = vunpack.c.l.b16 %v7941
    %v9019 = vunpack.c.h.b16 %v7941
    %v9020 = vunpack.c.l.b16 %v7942
    %v9021 = vunpack.c.h.b16 %v7942
    %v9022 = vunpack.c.l.b16 %v7943
    %v9023 = vunpack.c.h.b16 %v7943
    %v9024 = vunpack.c.l.b16 %v7944
    %v9025 = vunpack.c.h.b16 %v7944
    %v9026 = vunpack.c.l.b16 %v7945
    %v9027 = vunpack.c.h.b16 %v7945
    %v9028 = vunpack.c.l.b16 %v7946
    %v9029 = vunpack.c.h.b16 %v7946
    %v9030 = vunpack.c.l.b16 %v7947
    %v9031 = vunpack.c.h.b16 %v7947
    %v9032 = vunpack.c.l.b16 %v7948
    %v9033 = vunpack.c.h.b16 %v7948
    %v9034 = vunpack.c.l.b16 %v7949
    %v9035 = vunpack.c.h.b16 %v7949
    %v9036 = vunpack.c.l.b16 %v7950
    %v9037 = vunpack.c.h.b16 %v7950
    %v9038 = vunpack.c.l.b16 %v7951
    %v9039 = vunpack.c.h.b16 %v7951
    %v9040 = vunpack.c.l.b16 %v7952
    %v9041 = vunpack.c.h.b16 %v7952
    %v9042 = vunpack.c.l.b16 %v7953
    %v9043 = vunpack.c.h.b16 %v7953
    %v9044 = vunpack.c.l.b16 %v7954
    %v9045 = vunpack.c.h.b16 %v7954
    %v9046 = vunpack.c.l.b16 %v7955
    %v9047 = vunpack.c.h.b16 %v7955
    %v9048 = vunpack.c.l.b16 %v7956
    %v9049 = vunpack.c.h.b16 %v7956
    %v9050 = vunpack.c.l.b16 %v7957
    %v9051 = vunpack.c.h.b16 %v7957
    %v9052 = vunpack.c.l.b16 %v7958
    %v9053 = vunpack.c.h.b16 %v7958
    %v9054 = vunpack.c.l.b16 %v7959
    %v9055 = vunpack.c.h.b16 %v7959
    %v9056 = vunpack.c.l.b16 %v7960
    %v9057 = vunpack.c.h.b16 %v7960
    %v9058 = vunpack.c.l.b16 %v7961
    %v9059 = vunpack.c.h.b16 %v7961
    %v9060 = vunpack.c.l.b16 %v7962
    %v9061 = vunpack.c.h.b16 %v7962
    %v9062 = vunpack.c.l.b16 %v7963
    %v9063 = vunpack.c.h.b16 %v7963
    %v9064 = vunpack.c.l.b16 %v7964
    %v9065 = vunpack.c.h.b16 %v7964
    %v9066 = vunpack.c.l.b16 %v7965
    %v9067 = vunpack.c.h.b16 %v7965
    %v9068 = vunpack.c.l.b16 %v7966
    %v9069 = vunpack.c.h.b16 %v7966
    %v9070 = vunpack.c.l.b16 %v7967
    %v9071 = vunpack.c.h.b16 %v7967
    %v9072 = vunpack.c.l.b16 %v7968
    %v9073 = vunpack.c.h.b16 %v7968
    %v9074 = vunpack.c.l.b16 %v7969
    %v9075 = vunpack.c.h.b16 %v7969
    %v9076 = vunpack.c.l.b16 %v7970
    %v9077 = vunpack.c.h.b16 %v7970
    %v9078 = vunpack.c.l.b16 %v7971
    %v9079 = vunpack.c.h.b16 %v7971
    %v9080 = vunpack.c.l.b16 %v7972
    %v9081 = vunpack.c.h.b16 %v7972
    %v9082 = vunpack.c.l.b16 %v7973
    %v9083 = vunpack.c.h.b16 %v7973
    %v9084 = vunpack.c.l.b16 %v7974
    %v9085 = vunpack.c.h.b16 %v7974
    %v9086 = vunpack.c.l.b16 %v7975
    %v9087 = vunpack.c.h.b16 %v7975
    %v9088 = vunpack.c.l.b16 %v7976
    %v9089 = vunpack.c.h.b16 %v7976
    %v9090 = vunpack.c.l.b16 %v7977
    %v9091 = vunpack.c.h.b16 %v7977
    %v9092 = vunpack.c.l.b16 %v7978
    %v9093 = vunpack.c.h.b16 %v7978
    %v9094 = vunpack.c.l.b16 %v7979
    %v9095 = vunpack.c.h.b16 %v7979
    %v9096 = vunpack.c.l.b16 %v7980
    %v9097 = vunpack.c.h.b16 %v7980
    %v9098 = vunpack.c.l.b16 %v7981
    %v9099 = vunpack.c.h.b16 %v7981
    %v9100 = vunpack.c.l.b16 %v7982
    %v9101 = vunpack.c.h.b16 %v7982
    %v9102 = vunpack.c.l.b16 %v7983
    %v9103 = vunpack.c.h.b16 %v7983
    %v9104 = vunpack.c.l.b16 %v7984
    %v9105 = vunpack.c.h.b16 %v7984
    %v9106 = vunpack.c.l.b16 %v7985
    %v9107 = vunpack.c.h.b16 %v7985
    %v9108 = vunpack.c.l.b16 %v7986
    %v9109 = vunpack.c.h.b16 %v7986
    %v9110 = vunpack.c.l.b16 %v7987
    %v9111 = vunpack.c.h.b16 %v7987
    %v9112 = vunpack.c.l.b16 %v7988
    %v9113 = vunpack.c.h.b16 %v7988
    %v9114 = vunpack.c.l.b16 %v7989
    %v9115 = vunpack.c.h.b16 %v7989
    %v9116 = vunpack.c.l.b16 %v7990
    %v9117 = vunpack.c.h.b16 %v7990
    %v9118 = vunpack.c.l.b16 %v7991
    %v9119 = vunpack.c.h.b16 %v7991
    %v9120 = vunpack.c.l.b16 %v7992
    %v9121 = vunpack.c.h.b16 %v7992
    %v9122 = vunpack.c.l.b16 %v7993
    %v9123 = vunpack.c.h.b16 %v7993
    %v9124 = vunpack.c.l.b16 %v7994
    %v9125 = vunpack.c.h.b16 %v7994
    %v9126 = vunpack.c.l.b16 %v7995
    %v9127 = vunpack.c.h.b16 %v7995
    %v9128 = vunpack.c.l.b16 %v7996
    %v9129 = vunpack.c.h.b16 %v7996
    %v9130 = vunpack.c.l.b16 %v7997
    %v9131 = vunpack.c.h.b16 %v7997
    %v9132 = vunpack.c.l.b16 %v7998
    %v9133 = vunpack.c.h.b16 %v7998
    %v9134 = vunpack.c.l.b16 %v7999
    %v9135 = vunpack.c.h.b16 %v7999
    %v9136 = vunpack.c.l.b16 %v8000
    %v9137 = vunpack.c.h.b16 %v8000
    %v9138 = vunpack.c.l.b16 %v8001
    %v9139 = vunpack.c.h.b16 %v8001
    %v9140 = vunpack.c.l.b16 %v8002
    %v9141 = vunpack.c.h.b16 %v8002
    %v9142 = vunpack.c.l.b16 %v8003
    %v9143 = vunpack.c.h.b16 %v8003
    %v9144 = vunpack.c.l.b16 %v8004
    %v9145 = vunpack.c.h.b16 %v8004
    %v9146 = vunpack.c.l.b16 %v8005
    %v9147 = vunpack.c.h.b16 %v8005
    %v9148 = vunpack.c.l.b16 %v8006
    %v9149 = vunpack.c.h.b16 %v8006
    %v9150 = vunpack.c.l.b16 %v8007
    %v9151 = vunpack.c.h.b16 %v8007
    %v9152 = vunpack.c.l.b16 %v8008
    %v9153 = vunpack.c.h.b16 %v8008
    %v9154 = vunpack.c.l.b16 %v8009
    %v9155 = vunpack.c.h.b16 %v8009
    %v9156 = vunpack.c.l.b16 %v8010
    %v9157 = vunpack.c.h.b16 %v8010
    %v9158 = vunpack.c.l.b16 %v8011
    %v9159 = vunpack.c.h.b16 %v8011
    %v9160 = vunpack.c.l.b16 %v8012
    %v9161 = vunpack.c.h.b16 %v8012
    %v9162 = vunpack.c.l.b16 %v8013
    %v9163 = vunpack.c.h.b16 %v8013
    %v9164 = vunpack.c.l.b16 %v8014
    %v9165 = vunpack.c.h.b16 %v8014
    %v9166 = vunpack.c.l.b16 %v8015
    %v9167 = vunpack.c.h.b16 %v8015
    %v9168 = vunpack.c.l.b16 %v8016
    %v9169 = vunpack.c.h.b16 %v8016
    %v9170 = vunpack.c.l.b16 %v8017
    %v9171 = vunpack.c.h.b16 %v8017
    %v9172 = vunpack.c.l.b16 %v8018
    %v9173 = vunpack.c.h.b16 %v8018
    %v9174 = vunpack.c.l.b16 %v8019
    %v9175 = vunpack.c.h.b16 %v8019
    %v9176 = vunpack.c.l.b16 %v8020
    %v9177 = vunpack.c.h.b16 %v8020
    %v9178 = vunpack.c.l.b16 %v8021
    %v9179 = vunpack.c.h.b16 %v8021
    %v9180 = vunpack.c.l.b16 %v8022
    %v9181 = vunpack.c.h.b16 %v8022
    %v9182 = vunpack.c.l.b16 %v8023
    %v9183 = vunpack.c.h.b16 %v8023
    %v9184 = vunpack.c.l.b16 %v8024
    %v9185 = vunpack.c.h.b16 %v8024
    %v9186 = vunpack.c.l.b16 %v8025
    %v9187 = vunpack.c.h.b16 %v8025
    %v9188 = vunpack.c.l.b16 %v8026
    %v9189 = vunpack.c.h.b16 %v8026
    %v9190 = vunpack.c.l.b16 %v8027
    %v9191 = vunpack.c.h.b16 %v8027
    %v9192 = vunpack.c.l.b16 %v8028
    %v9193 = vunpack.c.h.b16 %v8028
    %v9194 = vunpack.c.l.b16 %v8029
    %v9195 = vunpack.c.h.b16 %v8029
    %v9196 = vunpack.c.l.b16 %v8030
    %v9197 = vunpack.c.h.b16 %v8030
    %v9198 = vunpack.c.l.b16 %v8031
    %v9199 = vunpack.c.h.b16 %v8031
    %v9200 = vunpack.c.l.b16 %v8032
    %v9201 = vunpack.c.h.b16 %v8032
    %v9202 = vunpack.c.l.b16 %v8033
    %v9203 = vunpack.c.h.b16 %v8033
    %v9204 = vunpack.c.l.b16 %v8034
    %v9205 = vunpack.c.h.b16 %v8034
    %v9206 = vunpack.c.l.b16 %v8035
    %v9207 = vunpack.c.h.b16 %v8035
    %v9208 = vunpack.c.l.b16 %v8036
    %v9209 = vunpack.c.h.b16 %v8036
    %v9210 = vunpack.c.l.b16 %v8037
    %v9211 = vunpack.c.h.b16 %v8037
    %v9212 = vunpack.c.l.b16 %v8038
    %v9213 = vunpack.c.h.b16 %v8038
    %v9214 = vunpack.c.l.b16 %v8039
    %v9215 = vunpack.c.h.b16 %v8039
    %v9216 = vunpack.c.l.b16 %v8040
    %v9217 = vunpack.c.h.b16 %v8040
    %v9218 = vunpack.c.l.b16 %v8041
    %v9219 = vunpack.c.h.b16 %v8041
    %v9220 = vunpack.c.l.b16 %v8042
    %v9221 = vunpack.c.h.b16 %v8042
    %v9222 = vunpack.c.l.b16 %v8043
    %v9223 = vunpack.c.h.b16 %v8043
    %v9224 = vunpack.c.l.b16 %v8044
    %v9225 = vunpack.c.h.b16 %v8044
    %v9226 = vunpack.c.l.b16 %v8045
    %v9227 = vunpack.c.h.b16 %v8045
    %v9228 = vunpack.c.l.b16 %v8046
    %v9229 = vunpack.c.h.b16 %v8046
    %v9230 = vunpack.c.l.b16 %v8047
    %v9231 = vunpack.c.h.b16 %v8047
    %v9232 = vunpack.c.l.b16 %v8048
    %v9233 = vunpack.c.h.b16 %v8048
    %v9234 = vunpack.c.l.b16 %v8049
    %v9235 = vunpack.c.h.b16 %v8049
    %v9236 = vunpack.c.l.b16 %v8050
    %v9237 = vunpack.c.h.b16 %v8050
    %v9238 = vunpack.c.l.b16 %v8051
    %v9239 = vunpack.c.h.b16 %v8051
    %v9240 = vunpack.c.l.b16 %v8052
    %v9241 = vunpack.c.h.b16 %v8052
    %v9242 = vunpack.c.l.b16 %v8053
    %v9243 = vunpack.c.h.b16 %v8053
    %v9244 = vunpack.c.l.b16 %v8054
    %v9245 = vunpack.c.h.b16 %v8054
    %v9246 = vunpack.c.l.b16 %v8055
    %v9247 = vunpack.c.h.b16 %v8055
    %v9248 = vunpack.c.l.b16 %v8056
    %v9249 = vunpack.c.h.b16 %v8056
    %v9250 = vunpack.c.l.b16 %v8057
    %v9251 = vunpack.c.h.b16 %v8057
    %v9252 = vunpack.c.l.b16 %v8058
    %v9253 = vunpack.c.h.b16 %v8058
    %v9254 = vunpack.c.l.b16 %v8059
    %v9255 = vunpack.c.h.b16 %v8059
    %v9256 = vunpack.c.l.b16 %v8060
    %v9257 = vunpack.c.h.b16 %v8060
    %v9258 = vunpack.c.l.b16 %v8061
    %v9259 = vunpack.c.h.b16 %v8061
    %v9260 = vunpack.c.l.b16 %v8062
    %v9261 = vunpack.c.h.b16 %v8062
    %v9262 = vunpack.c.l.b16 %v8063
    %v9263 = vunpack.c.h.b16 %v8063
    %v9264 = vunpack.c.l.b16 %v8064
    %v9265 = vunpack.c.h.b16 %v8064
    %v9266 = vunpack.c.l.b16 %v8065
    %v9267 = vunpack.c.h.b16 %v8065
    %v9268 = vunpack.c.l.b16 %v8066
    %v9269 = vunpack.c.h.b16 %v8066
    %v9270 = vunpack.c.l.b16 %v8067
    %v9271 = vunpack.c.h.b16 %v8067
    %v9272 = vunpack.c.l.b16 %v8068
    %v9273 = vunpack.c.h.b16 %v8068
    %v9274 = vunpack.c.l.b16 %v8069
    %v9275 = vunpack.c.h.b16 %v8069
    %v9276 = vunpack.c.l.b16 %v8070
    %v9277 = vunpack.c.h.b16 %v8070
    %v9278 = vunpack.c.l.b16 %v8071
    %v9279 = vunpack.c.h.b16 %v8071
    %v9280 = vunpack.c.l.b16 %v8072
    %v9281 = vunpack.c.h.b16 %v8072
    %v9282 = vunpack.c.l.b16 %v8073
    %v9283 = vunpack.c.h.b16 %v8073
    %v9284 = vunpack.c.l.b16 %v8074
    %v9285 = vunpack.c.h.b16 %v8074
    %v9286 = vunpack.c.l.b16 %v8075
    %v9287 = vunpack.c.h.b16 %v8075
    %v9288 = vunpack.c.l.b16 %v8076
    %v9289 = vunpack.c.h.b16 %v8076
    %v9290 = vunpack.c.l.b16 %v8077
    %v9291 = vunpack.c.h.b16 %v8077
    %v9292 = vunpack.c.l.b16 %v8078
    %v9293 = vunpack.c.h.b16 %v8078
    %v9294 = vunpack.c.l.b16 %v8079
    %v9295 = vunpack.c.h.b16 %v8079
    %v9296 = vunpack.c.l.b16 %v8080
    %v9297 = vunpack.c.h.b16 %v8080
    %v9298 = vunpack.c.l.b16 %v8081
    %v9299 = vunpack.c.h.b16 %v8081
    %v9300 = vunpack.c.l.b16 %v8082
    %v9301 = vunpack.c.h.b16 %v8082
    %v9302 = vunpack.c.l.b16 %v8083
    %v9303 = vunpack.c.h.b16 %v8083
    %v9304 = vunpack.c.l.b16 %v8084
    %v9305 = vunpack.c.h.b16 %v8084
    %v9306 = vunpack.c.l.b16 %v8085
    %v9307 = vunpack.c.h.b16 %v8085
    %v9308 = vunpack.c.l.b16 %v8086
    %v9309 = vunpack.c.h.b16 %v8086
    %v9310 = vunpack.c.l.b16 %v8087
    %v9311 = vunpack.c.h.b16 %v8087
    %v9312 = vunpack.c.l.b16 %v8088
    %v9313 = vunpack.c.h.b16 %v8088
    %v9314 = vunpack.c.l.b16 %v8089
    %v9315 = vunpack.c.h.b16 %v8089
    %v9316 = vunpack.c.l.b16 %v8090
    %v9317 = vunpack.c.h.b16 %v8090
    %v9318 = vunpack.c.l.b16 %v8091
    %v9319 = vunpack.c.h.b16 %v8091
    %v9320 = vunpack.c.l.b16 %v8092
    %v9321 = vunpack.c.h.b16 %v8092
    %v9322 = vunpack.c.l.b16 %v8093
    %v9323 = vunpack.c.h.b16 %v8093
    %v9324 = vunpack.c.l.b16 %v8094
    %v9325 = vunpack.c.h.b16 %v8094
    %v9326 = vunpack.c.l.b16 %v8095
    %v9327 = vunpack.c.h.b16 %v8095
    %v9328 = vunpack.c.l.b16 %v8096
    %v9329 = vunpack.c.h.b16 %v8096
    %v9330 = vunpack.c.l.b16 %v8097
    %v9331 = vunpack.c.h.b16 %v8097
    %v9332 = vunpack.c.l.b16 %v8098
    %v9333 = vunpack.c.h.b16 %v8098
    %v9334 = vunpack.c.l.b16 %v8099
    %v9335 = vunpack.c.h.b16 %v8099
    %v9336 = vunpack.c.l.b16 %v8100
    %v9337 = vunpack.c.h.b16 %v8100
    %v9338 = vunpack.c.l.b16 %v8101
    %v9339 = vunpack.c.h.b16 %v8101
    %v9340 = vunpack.c.l.b16 %v8102
    %v9341 = vunpack.c.h.b16 %v8102
    %v9342 = vunpack.c.l.b16 %v8103
    %v9343 = vunpack.c.h.b16 %v8103
    %v9344 = vunpack.c.l.b16 %v8104
    %v9345 = vunpack.c.h.b16 %v8104
    %v9346 = vunpack.c.l.b16 %v8105
    %v9347 = vunpack.c.h.b16 %v8105
    %v9348 = vunpack.c.l.b16 %v8106
    %v9349 = vunpack.c.h.b16 %v8106
    %v9350 = vunpack.c.l.b16 %v8107
    %v9351 = vunpack.c.h.b16 %v8107
    %v9352 = vunpack.c.l.b16 %v8108
    %v9353 = vunpack.c.h.b16 %v8108
    %v9354 = vunpack.c.l.b16 %v8109
    %v9355 = vunpack.c.h.b16 %v8109
    %v9356 = vunpack.c.l.b16 %v8110
    %v9357 = vunpack.c.h.b16 %v8110
    %v9358 = vunpack.c.l.b16 %v8111
    %v9359 = vunpack.c.h.b16 %v8111
    %v9360 = vunpack.c.l.b16 %v8112
    %v9361 = vunpack.c.h.b16 %v8112
    %v9362 = vunpack.c.l.b16 %v8113
    %v9363 = vunpack.c.h.b16 %v8113
    %v9364 = vunpack.c.l.b16 %v8114
    %v9365 = vunpack.c.h.b16 %v8114
    %v9366 = vunpack.c.l.b16 %v8115
    %v9367 = vunpack.c.h.b16 %v8115
    %v9368 = vunpack.c.l.b16 %v8116
    %v9369 = vunpack.c.h.b16 %v8116
    %v9370 = vunpack.c.l.b16 %v8117
    %v9371 = vunpack.c.h.b16 %v8117
    %v9372 = vunpack.c.l.b16 %v8118
    %v9373 = vunpack.c.h.b16 %v8118
    %v9374 = vunpack.c.l.b16 %v8119
    %v9375 = vunpack.c.h.b16 %v8119
    %v9376 = vunpack.c.l.b16 %v8120
    %v9377 = vunpack.c.h.b16 %v8120
    %v9378 = vunpack.c.l.b16 %v8121
    %v9379 = vunpack.c.h.b16 %v8121
    %v9380 = vunpack.c.l.b16 %v8122
    %v9381 = vunpack.c.h.b16 %v8122
    %v9382 = vunpack.c.l.b16 %v8123
    %v9383 = vunpack.c.h.b16 %v8123
    %v9384 = vunpack.c.l.b16 %v8124
    %v9385 = vunpack.c.h.b16 %v8124
    %v9386 = vunpack.c.l.b16 %v8125
    %v9387 = vunpack.c.h.b16 %v8125
    %v9388 = vunpack.c.l.b16 %v8126
    %v9389 = vunpack.c.h.b16 %v8126
    %v9390 = vunpack.c.l.b16 %v8127
    %v9391 = vunpack.c.h.b16 %v8127
    %v9392 = vunpack.c.l.b16 %v8128
    %v9393 = vunpack.c.h.b16 %v8128
    %v9394 = vunpack.c.l.b16 %v8129
    %v9395 = vunpack.c.h.b16 %v8129
    %v9396 = vunpack.c.l.b16 %v8130
    %v9397 = vunpack.c.h.b16 %v8130
    %v9398 = vunpack.c.l.b16 %v8131
    %v9399 = vunpack.c.h.b16 %v8131
    %v9400 = vunpack.c.l.b16 %v8132
    %v9401 = vunpack.c.h.b16 %v8132
    %v9402 = vunpack.c.l.b16 %v8133
    %v9403 = vunpack.c.h.b16 %v8133
    %v9404 = vunpack.c.l.b16 %v8134
    %v9405 = vunpack.c.h.b16 %v8134
    %v9406 = vunpack.c.l.b16 %v8135
    %v9407 = vunpack.c.h.b16 %v8135
    %v9408 = vunpack.c.l.b16 %v8136
    %v9409 = vunpack.c.h.b16 %v8136
    %v9410 = vunpack.c.l.b16 %v8137
    %v9411 = vunpack.c.h.b16 %v8137
    %v9412 = vunpack.c.l.b16 %v8138
    %v9413 = vunpack.c.h.b16 %v8138
    %v9414 = vunpack.c.l.b16 %v8139
    %v9415 = vunpack.c.h.b16 %v8139
    %v9416 = vunpack.c.l.b16 %v8140
    %v9417 = vunpack.c.h.b16 %v8140
    %v9418 = vunpack.c.l.b16 %v8141
    %v9419 = vunpack.c.h.b16 %v8141
    %v9420 = vunpack.c.l.b16 %v8142
    %v9421 = vunpack.c.h.b16 %v8142
    %v9422 = vunpack.c.l.b16 %v8143
    %v9423 = vunpack.c.h.b16 %v8143
    %v9424 = vunpack.c.l.b16 %v8144
    %v9425 = vunpack.c.h.b16 %v8144
    %v9426 = vunpack.c.l.b16 %v8145
    %v9427 = vunpack.c.h.b16 %v8145
    %v9428 = vunpack.c.l.b16 %v8146
    %v9429 = vunpack.c.h.b16 %v8146
    %v9430 = vunpack.c.l.b16 %v8147
    %v9431 = vunpack.c.h.b16 %v8147
    %v9432 = vunpack.c.l.b16 %v8148
    %v9433 = vunpack.c.h.b16 %v8148
    %v9434 = vunpack.c.l.b16 %v8149
    %v9435 = vunpack.c.h.b16 %v8149
    %v9436 = vunpack.c.l.b16 %v8150
    %v9437 = vunpack.c.h.b16 %v8150
    %v9438 = vunpack.c.l.b16 %v8151
    %v9439 = vunpack.c.h.b16 %v8151
    %v9440 = vunpack.c.l.b16 %v8152
    %v9441 = vunpack.c.h.b16 %v8152
    %v9442 = vunpack.c.l.b16 %v8153
    %v9443 = vunpack.c.h.b16 %v8153
    %v9444 = vunpack.c.l.b16 %v8154
    %v9445 = vunpack.c.h.b16 %v8154
    %v9446 = vunpack.c.l.b16 %v8155
    %v9447 = vunpack.c.h.b16 %v8155
    %v9448 = vunpack.c.l.b16 %v8156
    %v9449 = vunpack.c.h.b16 %v8156
    %v9450 = vunpack.c.l.b16 %v8157
    %v9451 = vunpack.c.h.b16 %v8157
    %v9452 = vunpack.c.l.b16 %v8158
    %v9453 = vunpack.c.h.b16 %v8158
    %v9454 = vunpack.c.l.b16 %v8159
    %v9455 = vunpack.c.h.b16 %v8159
    %v9456 = vunpack.c.l.b16 %v8160
    %v9457 = vunpack.c.h.b16 %v8160
    %v9458 = vunpack.c.l.b16 %v8161
    %v9459 = vunpack.c.h.b16 %v8161
    %v9460 = vunpack.c.l.b16 %v8162
    %v9461 = vunpack.c.h.b16 %v8162
    %v9462 = vunpack.c.l.b16 %v8163
    %v9463 = vunpack.c.h.b16 %v8163
    %v9464 = vunpack.c.l.b16 %v8164
    %v9465 = vunpack.c.h.b16 %v8164
    %v9466 = vunpack.c.l.b16 %v8165
    %v9467 = vunpack.c.h.b16 %v8165
    %v9468 = vunpack.c.l.b16 %v8166
    %v9469 = vunpack.c.h.b16 %v8166
    %v9470 = vunpack.c.l.b16 %v8167
    %v9471 = vunpack.c.h.b16 %v8167
    %v9472 = vunpack.c.l.b16 %v8168
    %v9473 = vunpack.c.h.b16 %v8168
    %v9474 = vunpack.c.l.b16 %v8169
    %v9475 = vunpack.c.h.b16 %v8169
    %v9476 = vunpack.c.l.b16 %v8170
    %v9477 = vunpack.c.h.b16 %v8170
    %v9478 = vunpack.c.l.b16 %v8171
    %v9479 = vunpack.c.h.b16 %v8171
    %v9480 = vunpack.c.l.b16 %v8172
    %v9481 = vunpack.c.h.b16 %v8172
    %v9482 = vunpack.c.l.b16 %v8173
    %v9483 = vunpack.c.h.b16 %v8173
    %v9484 = vunpack.c.l.b16 %v8174
    %v9485 = vunpack.c.h.b16 %v8174
    %v9486 = vunpack.c.l.b16 %v8175
    %v9487 = vunpack.c.h.b16 %v8175
    %v9488 = vunpack.c.l.b16 %v8176
    %v9489 = vunpack.c.h.b16 %v8176
    %v9490 = vunpack.c.l.b16 %v8177
    %v9491 = vunpack.c.h.b16 %v8177
    %v9492 = vunpack.c.l.b16 %v8178
    %v9493 = vunpack.c.h.b16 %v8178
    %v9494 = vunpack.c.l.b16 %v8179
    %v9495 = vunpack.c.h.b16 %v8179
    %v9496 = vunpack.c.l.b16 %v8180
    %v9497 = vunpack.c.h.b16 %v8180
    %v9498 = vunpack.c.l.b16 %v8181
    %v9499 = vunpack.c.h.b16 %v8181
    %v9500 = vunpack.c.l.b16 %v8182
    %v9501 = vunpack.c.h.b16 %v8182
    %v9502 = vunpack.c.l.b16 %v8183
    %v9503 = vunpack.c.h.b16 %v8183
    %v9504 = vunpack.c.l.b16 %v8184
    %v9505 = vunpack.c.h.b16 %v8184
    %v9506 = vunpack.c.l.b16 %v8185
    %v9507 = vunpack.c.h.b16 %v8185
    %v9508 = vunpack.c.l.b16 %v8186
    %v9509 = vunpack.c.h.b16 %v8186
    %v9510 = vunpack.c.l.b16 %v8187
    %v9511 = vunpack.c.h.b16 %v8187
    %v9512 = vunpack.c.l.b16 %v8188
    %v9513 = vunpack.c.h.b16 %v8188
    %v9514 = vunpack.c.l.b16 %v8189
    %v9515 = vunpack.c.h.b16 %v8189
    %v9516 = vunpack.c.l.b16 %v8190
    %v9517 = vunpack.c.h.b16 %v8190
    %v9518 = vunpack.c.l.b16 %v8191
    %v9519 = vunpack.c.h.b16 %v8191
    %v9520 = vunpack.c.l.b16 %v8192
    %v9521 = vunpack.c.h.b16 %v8192
    %v9522 = vunpack.c.l.b16 %v8193
    %v9523 = vunpack.c.h.b16 %v8193
    %v9524 = vunpack.c.l.b16 %v8194
    %v9525 = vunpack.c.h.b16 %v8194
    %v9526 = vunpack.c.l.b16 %v8195
    %v9527 = vunpack.c.h.b16 %v8195
    %v9528 = vunpack.c.l.b16 %v8196
    %v9529 = vunpack.c.h.b16 %v8196
    %v9530 = vunpack.c.l.b16 %v8197
    %v9531 = vunpack.c.h.b16 %v8197
    %v9532 = vunpack.c.l.b16 %v8198
    %v9533 = vunpack.c.h.b16 %v8198
    %v9534 = vunpack.c.l.b16 %v8199
    %v9535 = vunpack.c.h.b16 %v8199
    %v9536 = vunpack.c.l.b16 %v8200
    %v9537 = vunpack.c.h.b16 %v8200
    %v9538 = vunpack.c.l.b16 %v8201
    %v9539 = vunpack.c.h.b16 %v8201
    %v9540 = vunpack.c.l.b16 %v8202
    %v9541 = vunpack.c.h.b16 %v8202
    %v9542 = vunpack.c.l.b16 %v8203
    %v9543 = vunpack.c.h.b16 %v8203
    %v9544 = vunpack.c.l.b16 %v8204
    %v9545 = vunpack.c.h.b16 %v8204
    %v9546 = vunpack.c.l.b16 %v8205
    %v9547 = vunpack.c.h.b16 %v8205
    %v9548 = vunpack.c.l.b16 %v8206
    %v9549 = vunpack.c.h.b16 %v8206
    %v9550 = vunpack.c.l.b16 %v8207
    %v9551 = vunpack.c.h.b16 %v8207
    %v9552 = vunpack.c.l.b16 %v8208
    %v9553 = vunpack.c.h.b16 %v8208
    %v9554 = vunpack.c.l.b16 %v8209
    %v9555 = vunpack.c.h.b16 %v8209
    %v9556 = vunpack.c.l.b16 %v8210
    %v9557 = vunpack.c.h.b16 %v8210
    %v9558 = vunpack.c.l.b16 %v8211
    %v9559 = vunpack.c.h.b16 %v8211
    %v9560 = vunpack.c.l.b16 %v8212
    %v9561 = vunpack.c.h.b16 %v8212
    %v9562 = vunpack.c.l.b16 %v8213
    %v9563 = vunpack.c.h.b16 %v8213
    %v9564 = vunpack.c.l.b16 %v8214
    %v9565 = vunpack.c.h.b16 %v8214
    %v9566 = vunpack.c.l.b16 %v8215
    %v9567 = vunpack.c.h.b16 %v8215
    %v9568 = vunpack.c.l.b16 %v8216
    %v9569 = vunpack.c.h.b16 %v8216
    %v9570 = vunpack.c.l.b16 %v8217
    %v9571 = vunpack.c.h.b16 %v8217
    %v9572 = vunpack.c.l.b16 %v8218
    %v9573 = vunpack.c.h.b16 %v8218
    %v9574 = vunpack.c.l.b16 %v8219
    %v9575 = vunpack.c.h.b16 %v8219
    %v9576 = vunpack.c.l.b16 %v8220
    %v9577 = vunpack.c.h.b16 %v8220
    %v9578 = vunpack.c.l.b16 %v8221
    %v9579 = vunpack.c.h.b16 %v8221
    %v9580 = vunpack.c.l.b16 %v8222
    %v9581 = vunpack.c.h.b16 %v8222
    %v9582 = vunpack.c.l.b16 %v8223
    %v9583 = vunpack.c.h.b16 %v8223
    %v9584 = vunpack.c.l.b16 %v8224
    %v9585 = vunpack.c.h.b16 %v8224
    %v9586 = vunpack.c.l.b16 %v8225
    %v9587 = vunpack.c.h.b16 %v8225
    %v9588 = vunpack.c.l.b16 %v8226
    %v9589 = vunpack.c.h.b16 %v8226
    %v9590 = vunpack.c.l.b16 %v8227
    %v9591 = vunpack.c.h.b16 %v8227
    %v9592 = vunpack.c.l.b16 %v8228
    %v9593 = vunpack.c.h.b16 %v8228
    %v9594 = vunpack.c.l.b16 %v8229
    %v9595 = vunpack.c.h.b16 %v8229
    %v9596 = vunpack.c.l.b16 %v8230
    %v9597 = vunpack.c.h.b16 %v8230
    %v9598 = vunpack.c.l.b16 %v8231
    %v9599 = vunpack.c.h.b16 %v8231
    %v9600 = vunpack.c.l.b16 %v8232
    %v9601 = vunpack.c.h.b16 %v8232
    %v9602 = vunpack.c.l.b16 %v8233
    %v9603 = vunpack.c.h.b16 %v8233
    %v9604 = vunpack.c.l.b16 %v8234
    %v9605 = vunpack.c.h.b16 %v8234
    %v9606 = vunpack.c.l.b16 %v8235
    %v9607 = vunpack.c.h.b16 %v8235
    %v9608 = vunpack.c.l.b16 %v8236
    %v9609 = vunpack.c.h.b16 %v8236
    %v9610 = vunpack.c.l.b16 %v8237
    %v9611 = vunpack.c.h.b16 %v8237
    %v9612 = vunpack.c.l.b16 %v8238
    %v9613 = vunpack.c.h.b16 %v8238
    %v9614 = vunpack.c.l.b16 %v8239
    %v9615 = vunpack.c.h.b16 %v8239
    %v9616 = vunpack.c.l.b16 %v8240
    %v9617 = vunpack.c.h.b16 %v8240
    %v9618 = vunpack.c.l.b16 %v8241
    %v9619 = vunpack.c.h.b16 %v8241
    %v9620 = vunpack.c.l.b16 %v8242
    %v9621 = vunpack.c.h.b16 %v8242
    %v9622 = vunpack.c.l.b16 %v8243
    %v9623 = vunpack.c.h.b16 %v8243
    %v9624 = vunpack.c.l.b16 %v8244
    %v9625 = vunpack.c.h.b16 %v8244
    %v9626 = vunpack.c.l.b16 %v8245
    %v9627 = vunpack.c.h.b16 %v8245
    %v9628 = vunpack.c.l.b16 %v8246
    %v9629 = vunpack.c.h.b16 %v8246
    %v9630 = vunpack.c.l.b16 %v8247
    %v9631 = vunpack.c.h.b16 %v8247
    %v9632 = vunpack.c.l.b16 %v8248
    %v9633 = vunpack.c.h.b16 %v8248
    %v9634 = vunpack.c.l.b16 %v8249
    %v9635 = vunpack.c.h.b16 %v8249
    %v9636 = vunpack.c.l.b16 %v8250
    %v9637 = vunpack.c.h.b16 %v8250
    %v9638 = vunpack.c.l.b16 %v8251
    %v9639 = vunpack.c.h.b16 %v8251
    %v9640 = vunpack.c.l.b16 %v8252
    %v9641 = vunpack.c.h.b16 %v8252
    %v9642 = vunpack.c.l.b16 %v8253
    %v9643 = vunpack.c.h.b16 %v8253
    %v9644 = vunpack.c.l.b16 %v8254
    %v9645 = vunpack.c.h.b16 %v8254
    %v9646 = vunpack.c.l.b16 %v8255
    %v9647 = vunpack.c.h.b16 %v8255
    %v9648 = vunpack.c.l.b16 %v8256
    %v9649 = vunpack.c.h.b16 %v8256
    %v9650 = vunpack.c.l.b16 %v8257
    %v9651 = vunpack.c.h.b16 %v8257
    %v9652 = vunpack.c.l.b16 %v8258
    %v9653 = vunpack.c.h.b16 %v8258
    %v9654 = vunpack.c.l.b16 %v8259
    %v9655 = vunpack.c.h.b16 %v8259
    %v9656 = vunpack.c.l.b16 %v8260
    %v9657 = vunpack.c.h.b16 %v8260
    %v9658 = vunpack.c.l.b16 %v8261
    %v9659 = vunpack.c.h.b16 %v8261
    %v9660 = vunpack.c.l.b16 %v8262
    %v9661 = vunpack.c.h.b16 %v8262
    %v9662 = vunpack.c.l.b16 %v8263
    %v9663 = vunpack.c.h.b16 %v8263
    %v9664 = vunpack.c.l.b16 %v8264
    %v9665 = vunpack.c.h.b16 %v8264
    %v9666 = vunpack.c.l.b16 %v8265
    %v9667 = vunpack.c.h.b16 %v8265
    %v9668 = vunpack.c.l.b16 %v8266
    %v9669 = vunpack.c.h.b16 %v8266
    %v9670 = vunpack.c.l.b16 %v8267
    %v9671 = vunpack.c.h.b16 %v8267
    %v9672 = vunpack.c.l.b16 %v8268
    %v9673 = vunpack.c.h.b16 %v8268
    %v9674 = vunpack.c.l.b16 %v8269
    %v9675 = vunpack.c.h.b16 %v8269
    %v9676 = vunpack.c.l.b16 %v8270
    %v9677 = vunpack.c.h.b16 %v8270
    %v9678 = vunpack.c.l.b16 %v8271
    %v9679 = vunpack.c.h.b16 %v8271
    %v9680 = vunpack.c.l.b16 %v8272
    %v9681 = vunpack.c.h.b16 %v8272
    %v9682 = vunpack.c.l.b16 %v8273
    %v9683 = vunpack.c.h.b16 %v8273
    %v9684 = vunpack.c.l.b16 %v8274
    %v9685 = vunpack.c.h.b16 %v8274
    %v9686 = vunpack.c.l.b16 %v8275
    %v9687 = vunpack.c.h.b16 %v8275
    %v9688 = vunpack.c.l.b16 %v8276
    %v9689 = vunpack.c.h.b16 %v8276
    %v9690 = vunpack.c.l.b16 %v8277
    %v9691 = vunpack.c.h.b16 %v8277
    %v9692 = vunpack.c.l.b16 %v8278
    %v9693 = vunpack.c.h.b16 %v8278
    %v9694 = vunpack.c.l.b16 %v8279
    %v9695 = vunpack.c.h.b16 %v8279
    %v9696 = vunpack.c.l.b16 %v8280
    %v9697 = vunpack.c.h.b16 %v8280
    %v9698 = vunpack.c.l.b16 %v8281
    %v9699 = vunpack.c.h.b16 %v8281
    %v9700 = vunpack.c.l.b16 %v8282
    %v9701 = vunpack.c.h.b16 %v8282
    %v9702 = vunpack.c.l.b16 %v8283
    %v9703 = vunpack.c.h.b16 %v8283
    %v9704 = vunpack.c.l.b16 %v8284
    %v9705 = vunpack.c.h.b16 %v8284
    %v9706 = vunpack.c.l.b16 %v8285
    %v9707 = vunpack.c.h.b16 %v8285
    %v9708 = vunpack.c.l.b16 %v8286
    %v9709 = vunpack.c.h.b16 %v8286
    %v9710 = vunpack.c.l.b16 %v8287
    %v9711 = vunpack.c.h.b16 %v8287
    %v9712 = vunpack.c.l.b16 %v8288
    %v9713 = vunpack.c.h.b16 %v8288
    %v9714 = vunpack.c.l.b16 %v8289
    %v9715 = vunpack.c.h.b16 %v8289
    %v9716 = vunpack.c.l.b16 %v8290
    %v9717 = vunpack.c.h.b16 %v8290
    %v9718 = vunpack.c.l.b16 %v8291
    %v9719 = vunpack.c.h.b16 %v8291
    %v9720 = vunpack.c.l.b16 %v8292
    %v9721 = vunpack.c.h.b16 %v8292
    %v9722 = vunpack.c.l.b16 %v8293
    %v9723 = vunpack.c.h.b16 %v8293
    %v9724 = vunpack.c.l.b16 %v8294
    %v9725 = vunpack.c.h.b16 %v8294
    %v9726 = vunpack.c.l.b16 %v8295
    %v9727 = vunpack.c.h.b16 %v8295
    %v9728 = vunpack.c.l.b16 %v8296
    %v9729 = vunpack.c.h.b16 %v8296
    %v9730 = vunpack.c.l.b16 %v8297
    %v9731 = vunpack.c.h.b16 %v8297
    %v9732 = vunpack.c.l.b16 %v8298
    %v9733 = vunpack.c.h.b16 %v8298
    %v9734 = vunpack.c.l.b16 %v8299
    %v9735 = vunpack.c.h.b16 %v8299
    %v9736 = vunpack.c.l.b16 %v8300
    %v9737 = vunpack.c.h.b16 %v8300
    %v9738 = vunpack.c.l.b16 %v8301
    %v9739 = vunpack.c.h.b16 %v8301
    %v9740 = vunpack.c.l.b16 %v8302
    %v9741 = vunpack.c.h.b16 %v8302
    %v9742 = vunpack.c.l.b16 %v8303
    %v9743 = vunpack.c.h.b16 %v8303
    %v9744 = vunpack.c.l.b16 %v8304
    %v9745 = vunpack.c.h.b16 %v8304
    %v9746 = vunpack.c.l.b16 %v8305
    %v9747 = vunpack.c.h.b16 %v8305
    %v9748 = vunpack.c.l.b16 %v8306
    %v9749 = vunpack.c.h.b16 %v8306
    %v9750 = vunpack.c.l.b16 %v8307
    %v9751 = vunpack.c.h.b16 %v8307
    %v9752 = vunpack.c.l.b16 %v8308
    %v9753 = vunpack.c.h.b16 %v8308
    %v9754 = vunpack.c.l.b16 %v8309
    %v9755 = vunpack.c.h.b16 %v8309
    %v9756 = vunpack.c.l.b16 %v8310
    %v9757 = vunpack.c.h.b16 %v8310
    %v9758 = vunpack.c.l.b16 %v8311
    %v9759 = vunpack.c.h.b16 %v8311
    %v9760 = vunpack.c.l.b16 %v8312
    %v9761 = vunpack.c.h.b16 %v8312
    %v9762 = vunpack.c.l.b16 %v8313
    %v9763 = vunpack.c.h.b16 %v8313
    %v9764 = vunpack.c.l.b16 %v8314
    %v9765 = vunpack.c.h.b16 %v8314
    %v9766 = vunpack.c.l.b16 %v8315
    %v9767 = vunpack.c.h.b16 %v8315
    %v9768 = vunpack.c.l.b16 %v8316
    %v9769 = vunpack.c.h.b16 %v8316
    %v9770 = vunpack.c.l.b16 %v8317
    %v9771 = vunpack.c.h.b16 %v8317
    %v9772 = vunpack.c.l.b16 %v8318
    %v9773 = vunpack.c.h.b16 %v8318
    %v9774 = vunpack.c.l.b16 %v8319
    %v9775 = vunpack.c.h.b16 %v8319
    %v9776 = vunpack.c.l.b16 %v8320
    %v9777 = vunpack.c.h.b16 %v8320
    %v9778 = vunpack.c.l.b16 %v8321
    %v9779 = vunpack.c.h.b16 %v8321
    %v9780 = vunpack.c.l.b16 %v8322
    %v9781 = vunpack.c.h.b16 %v8322
    %v9782 = vunpack.c.l.b16 %v8323
    %v9783 = vunpack.c.h.b16 %v8323
    %v9784 = vunpack.c.l.b16 %v8324
    %v9785 = vunpack.c.h.b16 %v8324
    %v9786 = vunpack.c.l.b16 %v8325
    %v9787 = vunpack.c.h.b16 %v8325
    %v9788 = vunpack.c.l.b16 %v8326
    %v9789 = vunpack.c.h.b16 %v8326
    %v9790 = vunpack.c.l.b16 %v8327
    %v9791 = vunpack.c.h.b16 %v8327
    %v9792 = vunpack.c.l.b16 %v8328
    %v9793 = vunpack.c.h.b16 %v8328
    %v9794 = vunpack.c.l.b16 %v8329
    %v9795 = vunpack.c.h.b16 %v8329
    %v9796 = vunpack.c.l.b16 %v8330
    %v9797 = vunpack.c.h.b16 %v8330
    %v9798 = vunpack.c.l.b16 %v8331
    %v9799 = vunpack.c.h.b16 %v8331
    %v9800 = vunpack.c.l.b16 %v8332
    %v9801 = vunpack.c.h.b16 %v8332
    %v9802 = vunpack.c.l.b16 %v8333
    %v9803 = vunpack.c.h.b16 %v8333
    %v9804 = vunpack.c.l.b16 %v8334
    %v9805 = vunpack.c.h.b16 %v8334
    %v9806 = vunpack.c.l.b16 %v8335
    %v9807 = vunpack.c.h.b16 %v8335
    %v9808 = vunpack.c.l.b16 %v8336
    %v9809 = vunpack.c.h.b16 %v8336
    %v9810 = vunpack.c.l.b16 %v8337
    %v9811 = vunpack.c.h.b16 %v8337
    %v9812 = vunpack.c.l.b16 %v8338
    %v9813 = vunpack.c.h.b16 %v8338
    %v9814 = vunpack.c.l.b16 %v8339
    %v9815 = vunpack.c.h.b16 %v8339
    %v9816 = vunpack.c.l.b16 %v8340
    %v9817 = vunpack.c.h.b16 %v8340
    %v9818 = vunpack.c.l.b16 %v8341
    %v9819 = vunpack.c.h.b16 %v8341
    %v9820 = vunpack.c.l.b16 %v8342
    %v9821 = vunpack.c.h.b16 %v8342
    %v9822 = vunpack.c.l.b16 %v8343
    %v9823 = vunpack.c.h.b16 %v8343
    %v9824 = vunpack.c.l.b16 %v8344
    %v9825 = vunpack.c.h.b16 %v8344
    %v9826 = vunpack.c.l.b16 %v8345
    %v9827 = vunpack.c.h.b16 %v8345
    %v9828 = vunpack.c.l.b16 %v8346
    %v9829 = vunpack.c.h.b16 %v8346
    %v9830 = vunpack.c.l.b16 %v8347
    %v9831 = vunpack.c.h.b16 %v8347
    %v9832 = vunpack.c.l.b16 %v8348
    %v9833 = vunpack.c.h.b16 %v8348
    %v9834 = vunpack.c.l.b16 %v8349
    %v9835 = vunpack.c.h.b16 %v8349
    %v9836 = vunpack.c.l.b16 %v8350
    %v9837 = vunpack.c.h.b16 %v8350
    %v9838 = vunpack.c.l.b16 %v8351
    %v9839 = vunpack.c.h.b16 %v8351
    %v9840 = vunpack.c.l.b16 %v8352
    %v9841 = vunpack.c.h.b16 %v8352
    %v9842 = vunpack.c.l.b16 %v8353
    %v9843 = vunpack.c.h.b16 %v8353
    %v9844 = vunpack.c.l.b16 %v8354
    %v9845 = vunpack.c.h.b16 %v8354
    %v9846 = vunpack.c.l.b16 %v8355
    %v9847 = vunpack.c.h.b16 %v8355
    %v9848 = vunpack.c.l.b16 %v8356
    %v9849 = vunpack.c.h.b16 %v8356
    %v9850 = vunpack.c.l.b16 %v8357
    %v9851 = vunpack.c.h.b16 %v8357
    %v9852 = vunpack.c.l.b16 %v8358
    %v9853 = vunpack.c.h.b16 %v8358
    %v9854 = vunpack.c.l.b16 %v8359
    %v9855 = vunpack.c.h.b16 %v8359
    %v9856 = vunpack.c.l.b16 %v8360
    %v9857 = vunpack.c.h.b16 %v8360
    %v9858 = vunpack.c.l.b16 %v8361
    %v9859 = vunpack.c.h.b16 %v8361
    %v9860 = vunpack.c.l.b16 %v8362
    %v9861 = vunpack.c.h.b16 %v8362
    %v9862 = vunpack.c.l.b16 %v8363
    %v9863 = vunpack.c.h.b16 %v8363
    %v9864 = vunpack.c.l.b16 %v8364
    %v9865 = vunpack.c.h.b16 %v8364
    %v9866 = vunpack.c.l.b16 %v8365
    %v9867 = vunpack.c.h.b16 %v8365
    %v9868 = vunpack.c.l.b16 %v8366
    %v9869 = vunpack.c.h.b16 %v8366
    %v9870 = vunpack.c.l.b16 %v8367
    %v9871 = vunpack.c.h.b16 %v8367
    %v9872 = vunpack.c.l.b16 %v8368
    %v9873 = vunpack.c.h.b16 %v8368
    %v9874 = vunpack.c.l.b16 %v8369
    %v9875 = vunpack.c.h.b16 %v8369
    %v9876 = vunpack.c.l.b16 %v8370
    %v9877 = vunpack.c.h.b16 %v8370
    %v9878 = vunpack.c.l.b16 %v8371
    %v9879 = vunpack.c.h.b16 %v8371
    %v9880 = vunpack.c.l.b16 %v8372
    %v9881 = vunpack.c.h.b16 %v8372
    %v9882 = vunpack.c.l.b16 %v8373
    %v9883 = vunpack.c.h.b16 %v8373
    %v9884 = vunpack.c.l.b16 %v8374
    %v9885 = vunpack.c.h.b16 %v8374
    %v9886 = vunpack.c.l.b16 %v8375
    %v9887 = vunpack.c.h.b16 %v8375
    %v9888 = vunpack.c.l.b16 %v8376
    %v9889 = vunpack.c.h.b16 %v8376
    %v9890 = vunpack.c.l.b16 %v8377
    %v9891 = vunpack.c.h.b16 %v8377
    %v9892 = vunpack.c.l.b16 %v8378
    %v9893 = vunpack.c.h.b16 %v8378
    %v9894 = vunpack.c.l.b16 %v8379
    %v9895 = vunpack.c.h.b16 %v8379
    %v9896 = vunpack.c.l.b16 %v8380
    %v9897 = vunpack.c.h.b16 %v8380
    %v9898 = vunpack.c.l.b16 %v8381
    %v9899 = vunpack.c.h.b16 %v8381
    %v9900 = vunpack.c.l.b16 %v8382
    %v9901 = vunpack.c.h.b16 %v8382
    %v9902 = vunpack.c.l.b16 %v8383
    %v9903 = vunpack.c.h.b16 %v8383
    %v9904 = vunpack.c.l.b16 %v8384
    %v9905 = vunpack.c.h.b16 %v8384
    %v9906 = vunpack.c.l.b16 %v8385
    %v9907 = vunpack.c.h.b16 %v8385
    %v9908 = vunpack.c.l.b16 %v8386
    %v9909 = vunpack.c.h.b16 %v8386
    %v9910 = vunpack.c.l.b16 %v8387
    %v9911 = vunpack.c.h.b16 %v8387
    %v9912 = vunpack.c.l.b16 %v8388
    %v9913 = vunpack.c.h.b16 %v8388
    %v9914 = vunpack.c.l.b16 %v8389
    %v9915 = vunpack.c.h.b16 %v8389
    %v9916 = vunpack.c.l.b16 %v8390
    %v9917 = vunpack.c.h.b16 %v8390
    %v9918 = vunpack.c.l.b16 %v8391
    %v9919 = vunpack.c.h.b16 %v8391
    %v9920 = vunpack.c.l.b16 %v8392
    %v9921 = vunpack.c.h.b16 %v8392
    %v9922 = vunpack.c.l.b16 %v8393
    %v9923 = vunpack.c.h.b16 %v8393
    %v9924 = vunpack.c.l.b16 %v8394
    %v9925 = vunpack.c.h.b16 %v8394
    %v9926 = vunpack.c.l.b16 %v8395
    %v9927 = vunpack.c.h.b16 %v8395
    %v9928 = vunpack.c.l.b16 %v8396
    %v9929 = vunpack.c.h.b16 %v8396
    %v9930 = vunpack.c.l.b16 %v8397
    %v9931 = vunpack.c.h.b16 %v8397
    %v9932 = vunpack.c.l.b16 %v8398
    %v9933 = vunpack.c.h.b16 %v8398
    %v9934 = vunpack.c.l.b16 %v8399
    %v9935 = vunpack.c.h.b16 %v8399
    %v9936 = vpack.c.b16 %v8920, %v8912
    %v9937 = vpack.c.b16 %v8921, %v8913
    %v9938 = vpack.c.b16 %v8922, %v8914
    %v9939 = vpack.c.b16 %v8923, %v8915
    %v9940 = vpack.c.b16 %v8924, %v8916
    %v9941 = vpack.c.b16 %v8925, %v8917
    %v9942 = vpack.c.b16 %v8926, %v8918
    %v9943 = vpack.c.b16 %v8927, %v8919
    %v9944 = vpack.c.b16 %v8936, %v8928
    %v9945 = vpack.c.b16 %v8937, %v8929
    %v9946 = vpack.c.b16 %v8938, %v8930
    %v9947 = vpack.c.b16 %v8939, %v8931
    %v9948 = vpack.c.b16 %v8940, %v8932
    %v9949 = vpack.c.b16 %v8941, %v8933
    %v9950 = vpack.c.b16 %v8942, %v8934
    %v9951 = vpack.c.b16 %v8943, %v8935
    %v9952 = vpack.c.b16 %v8952, %v8944
    %v9953 = vpack.c.b16 %v8953, %v8945
    %v9954 = vpack.c.b16 %v8954, %v8946
    %v9955 = vpack.c.b16 %v8955, %v8947
    %v9956 = vpack.c.b16 %v8956, %v8948
    %v9957 = vpack.c.b16 %v8957, %v8949
    %v9958 = vpack.c.b16 %v8958, %v8950
    %v9959 = vpack.c.b16 %v8959, %v8951
    %v9960 = vpack.c.b16 %v8968, %v8960
    %v9961 = vpack.c.b16 %v8969, %v8961
    %v9962 = vpack.c.b16 %v8970, %v8962
    %v9963 = vpack.c.b16 %v8971, %v8963
    %v9964 = vpack.c.b16 %v8972, %v8964
    %v9965 = vpack.c.b16 %v8973, %v8965
    %v9966 = vpack.c.b16 %v8974, %v8966
    %v9967 = vpack.c.b16 %v8975, %v8967
    %v9968 = vpack.c.b16 %v8984, %v8976
    %v9969 = vpack.c.b16 %v8985, %v8977
    %v9970 = vpack.c.b16 %v8986, %v8978
    %v9971 = vpack.c.b16 %v8987, %v8979
    %v9972 = vpack.c.b16 %v8988, %v8980
    %v9973 = vpack.c.b16 %v8989, %v8981
    %v9974 = vpack.c.b16 %v8990, %v8982
    %v9975 = vpack.c.b16 %v8991, %v8983
    %v9976 = vpack.c.b16 %v9000, %v8992
    %v9977 = vpack.c.b16 %v9001, %v8993
    %v9978 = vpack.c.b16 %v9002, %v8994
    %v9979 = vpack.c.b16 %v9003, %v8995
    %v9980 = vpack.c.b16 %v9004, %v8996
    %v9981 = vpack.c.b16 %v9005, %v8997
    %v9982 = vpack.c.b16 %v9006, %v8998
    %v9983 = vpack.c.b16 %v9007, %v8999
    %v9984 = vpack.c.b16 %v9016, %v9008
    %v9985 = vpack.c.b16 %v9017, %v9009
    %v9986 = vpack.c.b16 %v9018, %v9010
    %v9987 = vpack.c.b16 %v9019, %v9011
    %v9988 = vpack.c.b16 %v9020, %v9012
    %v9989 = vpack.c.b16 %v9021, %v9013
    %v9990 = vpack.c.b16 %v9022, %v9014
    %v9991 = vpack.c.b16 %v9023, %v9015
    %v9992 = vpack.c.b16 %v9032, %v9024
    %v9993 = vpack.c.b16 %v9033, %v9025
    %v9994 = vpack.c.b16 %v9034, %v9026
    %v9995 = vpack.c.b16 %v9035, %v9027
    %v9996 = vpack.c.b16 %v9036, %v9028
    %v9997 = vpack.c.b16 %v9037, %v9029
    %v9998 = vpack.c.b16 %v9038, %v9030
    %v9999 = vpack.c.b16 %v9039, %v9031
    %v10000 = vpack.c.b16 %v9048, %v9040
    %v10001 = vpack.c.b16 %v9049, %v9041
    %v10002 = vpack.c.b16 %v9050, %v9042
    %v10003 = vpack.c.b16 %v9051, %v9043
    %v10004 = vpack.c.b16 %v9052, %v9044
    %v10005 = vpack.c.b16 %v9053, %v9045
    %v10006 = vpack.c.b16 %v9054, %v9046
    %v10007 = vpack.c.b16 %v9055, %v9047
    %v10008 = vpack.c.b16 %v9064, %v9056
    %v10009 = vpack.c.b16 %v9065, %v9057
    %v10010 = vpack.c.b16 %v9066, %v9058
    %v10011 = vpack.c.b16 %v9067, %v9059
    %v10012 = vpack.c.b16 %v9068, %v9060
    %v10013 = vpack.c.b16 %v9069, %v9061
    %v10014 = vpack.c.b16 %v9070, %v9062
    %v10015 = vpack.c.b16 %v9071, %v9063
    %v10016 = vpack.c.b16 %v9080, %v9072
    %v10017 = vpack.c.b16 %v9081, %v9073
    %v10018 = vpack.c.b16 %v9082, %v9074
    %v10019 = vpack.c.b16 %v9083, %v9075
    %v10020 = vpack.c.b16 %v9084, %v9076
    %v10021 = vpack.c.b16 %v9085, %v9077
    %v10022 = vpack.c.b16 %v9086, %v9078
    %v10023 = vpack.c.b16 %v9087, %v9079
    %v10024 = vpack.c.b16 %v9096, %v9088
    %v10025 = vpack.c.b16 %v9097, %v9089
    %v10026 = vpack.c.b16 %v9098, %v9090
    %v10027 = vpack.c.b16 %v9099, %v9091
    %v10028 = vpack.c.b16 %v9100, %v9092
    %v10029 = vpack.c.b16 %v9101, %v9093
    %v10030 = vpack.c.b16 %v9102, %v9094
    %v10031 = vpack.c.b16 %v9103, %v9095
    %v10032 = vpack.c.b16 %v9112, %v9104
    %v10033 = vpack.c.b16 %v9113, %v9105
    %v10034 = vpack.c.b16 %v9114, %v9106
    %v10035 = vpack.c.b16 %v9115, %v9107
    %v10036 = vpack.c.b16 %v9116, %v9108
    %v10037 = vpack.c.b16 %v9117, %v9109
    %v10038 = vpack.c.b16 %v9118, %v9110
    %v10039 = vpack.c.b16 %v9119, %v9111
    %v10040 = vpack.c.b16 %v9128, %v9120
    %v10041 = vpack.c.b16 %v9129, %v9121
    %v10042 = vpack.c.b16 %v9130, %v9122
    %v10043 = vpack.c.b16 %v9131, %v9123
    %v10044 = vpack.c.b16 %v9132, %v9124
    %v10045 = vpack.c.b16 %v9133, %v9125
    %v10046 = vpack.c.b16 %v9134, %v9126
    %v10047 = vpack.c.b16 %v9135, %v9127
    %v10048 = vpack.c.b16 %v9144, %v9136
    %v10049 = vpack.c.b16 %v9145, %v9137
    %v10050 = vpack.c.b16 %v9146, %v9138
    %v10051 = vpack.c.b16 %v9147, %v9139
    %v10052 = vpack.c.b16 %v9148, %v9140
    %v10053 = vpack.c.b16 %v9149, %v9141
    %v10054 = vpack.c.b16 %v9150, %v9142
    %v10055 = vpack.c.b16 %v9151, %v9143
    %v10056 = vpack.c.b16 %v9160, %v9152
    %v10057 = vpack.c.b16 %v9161, %v9153
    %v10058 = vpack.c.b16 %v9162, %v9154
    %v10059 = vpack.c.b16 %v9163, %v9155
    %v10060 = vpack.c.b16 %v9164, %v9156
    %v10061 = vpack.c.b16 %v9165, %v9157
    %v10062 = vpack.c.b16 %v9166, %v9158
    %v10063 = vpack.c.b16 %v9167, %v9159
    %v10064 = vpack.c.b16 %v9176, %v9168
    %v10065 = vpack.c.b16 %v9177, %v9169
    %v10066 = vpack.c.b16 %v9178, %v9170
    %v10067 = vpack.c.b16 %v9179, %v9171
    %v10068 = vpack.c.b16 %v9180, %v9172
    %v10069 = vpack.c.b16 %v9181, %v9173
    %v10070 = vpack.c.b16 %v9182, %v9174
    %v10071 = vpack.c.b16 %v9183, %v9175
    %v10072 = vpack.c.b16 %v9192, %v9184
    %v10073 = vpack.c.b16 %v9193, %v9185
    %v10074 = vpack.c.b16 %v9194, %v9186
    %v10075 = vpack.c.b16 %v9195, %v9187
    %v10076 = vpack.c.b16 %v9196, %v9188
    %v10077 = vpack.c.b16 %v9197, %v9189
    %v10078 = vpack.c.b16 %v9198, %v9190
    %v10079 = vpack.c.b16 %v9199, %v9191
    %v10080 = vpack.c.b16 %v9208, %v9200
    %v10081 = vpack.c.b16 %v9209, %v9201
    %v10082 = vpack.c.b16 %v9210, %v9202
    %v10083 = vpack.c.b16 %v9211, %v9203
    %v10084 = vpack.c.b16 %v9212, %v9204
    %v10085 = vpack.c.b16 %v9213, %v9205
    %v10086 = vpack.c.b16 %v9214, %v9206
    %v10087 = vpack.c.b16 %v9215, %v9207
    %v10088 = vpack.c.b16 %v9224, %v9216
    %v10089 = vpack.c.b16 %v9225, %v9217
    %v10090 = vpack.c.b16 %v9226, %v9218
    %v10091 = vpack.c.b16 %v9227, %v9219
    %v10092 = vpack.c.b16 %v9228, %v9220
    %v10093 = vpack.c.b16 %v9229, %v9221
    %v10094 = vpack.c.b16 %v9230, %v9222
    %v10095 = vpack.c.b16 %v9231, %v9223
    %v10096 = vpack.c.b16 %v9240, %v9232
    %v10097 = vpack.c.b16 %v9241, %v9233
    %v10098 = vpack.c.b16 %v9242, %v9234
    %v10099 = vpack.c.b16 %v9243, %v9235
    %v10100 = vpack.c.b16 %v9244, %v9236
    %v10101 = vpack.c.b16 %v9245, %v9237
    %v10102 = vpack.c.b16 %v9246, %v9238
    %v10103 = vpack.c.b16 %v9247, %v9239
    %v10104 = vpack.c.b16 %v9256, %v9248
    %v10105 = vpack.c.b16 %v9257, %v9249
    %v10106 = vpack.c.b16 %v9258, %v9250
    %v10107 = vpack.c.b16 %v9259, %v9251
    %v10108 = vpack.c.b16 %v9260, %v9252
    %v10109 = vpack.c.b16 %v9261, %v9253
    %v10110 = vpack.c.b16 %v9262, %v9254
    %v10111 = vpack.c.b16 %v9263, %v9255
    %v10112 = vpack.c.b16 %v9272, %v9264
    %v10113 = vpack.c.b16 %v9273, %v9265
    %v10114 = vpack.c.b16 %v9274, %v9266
    %v10115 = vpack.c.b16 %v9275, %v9267
    %v10116 = vpack.c.b16 %v9276, %v9268
    %v10117 = vpack.c.b16 %v9277, %v9269
    %v10118 = vpack.c.b16 %v9278, %v9270
    %v10119 = vpack.c.b16 %v9279, %v9271
    %v10120 = vpack.c.b16 %v9288, %v9280
    %v10121 = vpack.c.b16 %v9289, %v9281
    %v10122 = vpack.c.b16 %v9290, %v9282
    %v10123 = vpack.c.b16 %v9291, %v9283
    %v10124 = vpack.c.b16 %v9292, %v9284
    %v10125 = vpack.c.b16 %v9293, %v9285
    %v10126 = vpack.c.b16 %v9294, %v9286
    %v10127 = vpack.c.b16 %v9295, %v9287
    %v10128 = vpack.c.b16 %v9304, %v9296
    %v10129 = vpack.c.b16 %v9305, %v9297
    %v10130 = vpack.c.b16 %v9306, %v9298
    %v10131 = vpack.c.b16 %v9307, %v9299
    %v10132 = vpack.c.b16 %v9308, %v9300
    %v10133 = vpack.c.b16 %v9309, %v9301
    %v10134 = vpack.c.b16 %v9310, %v9302
    %v10135 = vpack.c.b16 %v9311, %v9303
    %v10136 = vpack.c.b16 %v9320, %v9312
    %v10137 = vpack.c.b16 %v9321, %v9313
    %v10138 = vpack.c.b16 %v9322, %v9314
    %v10139 = vpack.c.b16 %v9323, %v9315
    %v10140 = vpack.c.b16 %v9324, %v9316
    %v10141 = vpack.c.b16 %v9325, %v9317
    %v10142 = vpack.c.b16 %v9326, %v9318
    %v10143 = vpack.c.b16 %v9327, %v9319
    %v10144 = vpack.c.b16 %v9336, %v9328
    %v10145 = vpack.c.b16 %v9337, %v9329
    %v10146 = vpack.c.b16 %v9338, %v9330
    %v10147 = vpack.c.b16 %v9339, %v9331
    %v10148 = vpack.c.b16 %v9340, %v9332
    %v10149 = vpack.c.b16 %v9341, %v9333
    %v10150 = vpack.c.b16 %v9342, %v9334
    %v10151 = vpack.c.b16 %v9343, %v9335
    %v10152 = vpack.c.b16 %v9352, %v9344
    %v10153 = vpack.c.b16 %v9353, %v9345
    %v10154 = vpack.c.b16 %v9354, %v9346
    %v10155 = vpack.c.b16 %v9355, %v9347
    %v10156 = vpack.c.b16 %v9356, %v9348
    %v10157 = vpack.c.b16 %v9357, %v9349
    %v10158 = vpack.c.b16 %v9358, %v9350
    %v10159 = vpack.c.b16 %v9359, %v9351
    %v10160 = vpack.c.b16 %v9368, %v9360
    %v10161 = vpack.c.b16 %v9369, %v9361
    %v10162 = vpack.c.b16 %v9370, %v9362
    %v10163 = vpack.c.b16 %v9371, %v9363
    %v10164 = vpack.c.b16 %v9372, %v9364
    %v10165 = vpack.c.b16 %v9373, %v9365
    %v10166 = vpack.c.b16 %v9374, %v9366
    %v10167 = vpack.c.b16 %v9375, %v9367
    %v10168 = vpack.c.b16 %v9384, %v9376
    %v10169 = vpack.c.b16 %v9385, %v9377
    %v10170 = vpack.c.b16 %v9386, %v9378
    %v10171 = vpack.c.b16 %v9387, %v9379
    %v10172 = vpack.c.b16 %v9388, %v9380
    %v10173 = vpack.c.b16 %v9389, %v9381
    %v10174 = vpack.c.b16 %v9390, %v9382
    %v10175 = vpack.c.b16 %v9391, %v9383
    %v10176 = vpack.c.b16 %v9400, %v9392
    %v10177 = vpack.c.b16 %v9401, %v9393
    %v10178 = vpack.c.b16 %v9402, %v9394
    %v10179 = vpack.c.b16 %v9403, %v9395
    %v10180 = vpack.c.b16 %v9404, %v9396
    %v10181 = vpack.c.b16 %v9405, %v9397
    %v10182 = vpack.c.b16 %v9406, %v9398
    %v10183 = vpack.c.b16 %v9407, %v9399
    %v10184 = vpack.c.b16 %v9416, %v9408
    %v10185 = vpack.c.b16 %v9417, %v9409
    %v10186 = vpack.c.b16 %v9418, %v9410
    %v10187 = vpack.c.b16 %v9419, %v9411
    %v10188 = vpack.c.b16 %v9420, %v9412
    %v10189 = vpack.c.b16 %v9421, %v9413
    %v10190 = vpack.c.b16 %v9422, %v9414
    %v10191 = vpack.c.b16 %v9423, %v9415
    %v10192 = vpack.c.b16 %v9432, %v9424
    %v10193 = vpack.c.b16 %v9433, %v9425
    %v10194 = vpack.c.b16 %v9434, %v9426
    %v10195 = vpack.c.b16 %v9435, %v9427
    %v10196 = vpack.c.b16 %v9436, %v9428
    %v10197 = vpack.c.b16 %v9437, %v9429
    %v10198 = vpack.c.b16 %v9438, %v9430
    %v10199 = vpack.c.b16 %v9439, %v9431
    %v10200 = vpack.c.b16 %v9448, %v9440
    %v10201 = vpack.c.b16 %v9449, %v9441
    %v10202 = vpack.c.b16 %v9450, %v9442
    %v10203 = vpack.c.b16 %v9451, %v9443
    %v10204 = vpack.c.b16 %v9452, %v9444
    %v10205 = vpack.c.b16 %v9453, %v9445
    %v10206 = vpack.c.b16 %v9454, %v9446
    %v10207 = vpack.c.b16 %v9455, %v9447
    %v10208 = vpack.c.b16 %v9464, %v9456
    %v10209 = vpack.c.b16 %v9465, %v9457
    %v10210 = vpack.c.b16 %v9466, %v9458
    %v10211 = vpack.c.b16 %v9467, %v9459
    %v10212 = vpack.c.b16 %v9468, %v9460
    %v10213 = vpack.c.b16 %v9469, %v9461
    %v10214 = vpack.c.b16 %v9470, %v9462
    %v10215 = vpack.c.b16 %v9471, %v9463
    %v10216 = vpack.c.b16 %v9480, %v9472
    %v10217 = vpack.c.b16 %v9481, %v9473
    %v10218 = vpack.c.b16 %v9482, %v9474
    %v10219 = vpack.c.b16 %v9483, %v9475
    %v10220 = vpack.c.b16 %v9484, %v9476
    %v10221 = vpack.c.b16 %v9485, %v9477
    %v10222 = vpack.c.b16 %v9486, %v9478
    %v10223 = vpack.c.b16 %v9487, %v9479
    %v10224 = vpack.c.b16 %v9496, %v9488
    %v10225 = vpack.c.b16 %v9497, %v9489
    %v10226 = vpack.c.b16 %v9498, %v9490
    %v10227 = vpack.c.b16 %v9499, %v9491
    %v10228 = vpack.c.b16 %v9500, %v9492
    %v10229 = vpack.c.b16 %v9501, %v9493
    %v10230 = vpack.c.b16 %v9502, %v9494
    %v10231 = vpack.c.b16 %v9503, %v9495
    %v10232 = vpack.c.b16 %v9512, %v9504
    %v10233 = vpack.c.b16 %v9513, %v9505
    %v10234 = vpack.c.b16 %v9514, %v9506
    %v10235 = vpack.c.b16 %v9515, %v9507
    %v10236 = vpack.c.b16 %v9516, %v9508
    %v10237 = vpack.c.b16 %v9517, %v9509
    %v10238 = vpack.c.b16 %v9518, %v9510
    %v10239 = vpack.c.b16 %v9519, %v9511
    %v10240 = vpack.c.b16 %v9528, %v9520
    %v10241 = vpack.c.b16 %v9529, %v9521
    %v10242 = vpack.c.b16 %v9530, %v9522
    %v10243 = vpack.c.b16 %v9531, %v9523
    %v10244 = vpack.c.b16 %v9532, %v9524
    %v10245 = vpack.c.b16 %v9533, %v9525
    %v10246 = vpack.c.b16 %v9534, %v9526
    %v10247 = vpack.c.b16 %v9535, %v9527
    %v10248 = vpack.c.b16 %v9544, %v9536
    %v10249 = vpack.c.b16 %v9545, %v9537
    %v10250 = vpack.c.b16 %v9546, %v9538
    %v10251 = vpack.c.b16 %v9547, %v9539
    %v10252 = vpack.c.b16 %v9548, %v9540
    %v10253 = vpack.c.b16 %v9549, %v9541
    %v10254 = vpack.c.b16 %v9550, %v9542
    %v10255 = vpack.c.b16 %v9551, %v9543
    %v10256 = vpack.c.b16 %v9560, %v9552
    %v10257 = vpack.c.b16 %v9561, %v9553
    %v10258 = vpack.c.b16 %v9562, %v9554
    %v10259 = vpack.c.b16 %v9563, %v9555
    %v10260 = vpack.c.b16 %v9564, %v9556
    %v10261 = vpack.c.b16 %v9565, %v9557
    %v10262 = vpack.c.b16 %v9566, %v9558
    %v10263 = vpack.c.b16 %v9567, %v9559
    %v10264 = vpack.c.b16 %v9576, %v9568
    %v10265 = vpack.c.b16 %v9577, %v9569
    %v10266 = vpack.c.b16 %v9578, %v9570
    %v10267 = vpack.c.b16 %v9579, %v9571
    %v10268 = vpack.c.b16 %v9580, %v9572
    %v10269 = vpack.c.b16 %v9581, %v9573
    %v10270 = vpack.c.b16 %v9582, %v9574
    %v10271 = vpack.c.b16 %v9583, %v9575
    %v10272 = vpack.c.b16 %v9592, %v9584
    %v10273 = vpack.c.b16 %v9593, %v9585
    %v10274 = vpack.c.b16 %v9594, %v9586
    %v10275 = vpack.c.b16 %v9595, %v9587
    %v10276 = vpack.c.b16 %v9596, %v9588
    %v10277 = vpack.c.b16 %v9597, %v9589
    %v10278 = vpack.c.b16 %v9598, %v9590
    %v10279 = vpack.c.b16 %v9599, %v9591
    %v10280 = vpack.c.b16 %v9608, %v9600
    %v10281 = vpack.c.b16 %v9609, %v9601
    %v10282 = vpack.c.b16 %v9610, %v9602
    %v10283 = vpack.c.b16 %v9611, %v9603
    %v10284 = vpack.c.b16 %v9612, %v9604
    %v10285 = vpack.c.b16 %v9613, %v9605
    %v10286 = vpack.c.b16 %v9614, %v9606
    %v10287 = vpack.c.b16 %v9615, %v9607
    %v10288 = vpack.c.b16 %v9624, %v9616
    %v10289 = vpack.c.b16 %v9625, %v9617
    %v10290 = vpack.c.b16 %v9626, %v9618
    %v10291 = vpack.c.b16 %v9627, %v9619
    %v10292 = vpack.c.b16 %v9628, %v9620
    %v10293 = vpack.c.b16 %v9629, %v9621
    %v10294 = vpack.c.b16 %v9630, %v9622
    %v10295 = vpack.c.b16 %v9631, %v9623
    %v10296 = vpack.c.b16 %v9640, %v9632
    %v10297 = vpack.c.b16 %v9641, %v9633
    %v10298 = vpack.c.b16 %v9642, %v9634
    %v10299 = vpack.c.b16 %v9643, %v9635
    %v10300 = vpack.c.b16 %v9644, %v9636
    %v10301 = vpack.c.b16 %v9645, %v9637
    %v10302 = vpack.c.b16 %v9646, %v9638
    %v10303 = vpack.c.b16 %v9647, %v9639
    %v10304 = vpack.c.b16 %v9656, %v9648
    %v10305 = vpack.c.b16 %v9657, %v9649
    %v10306 = vpack.c.b16 %v9658, %v9650
    %v10307 = vpack.c.b16 %v9659, %v9651
    %v10308 = vpack.c.b16 %v9660, %v9652
    %v10309 = vpack.c.b16 %v9661, %v9653
    %v10310 = vpack.c.b16 %v9662, %v9654
    %v10311 = vpack.c.b16 %v9663, %v9655
    %v10312 = vpack.c.b16 %v9672, %v9664
    %v10313 = vpack.c.b16 %v9673, %v9665
    %v10314 = vpack.c.b16 %v9674, %v9666
    %v10315 = vpack.c.b16 %v9675, %v9667
    %v10316 = vpack.c.b16 %v9676, %v9668
    %v10317 = vpack.c.b16 %v9677, %v9669
    %v10318 = vpack.c.b16 %v9678, %v9670
    %v10319 = vpack.c.b16 %v9679, %v9671
    %v10320 = vpack.c.b16 %v9688, %v9680
    %v10321 = vpack.c.b16 %v9689, %v9681
    %v10322 = vpack.c.b16 %v9690, %v9682
    %v10323 = vpack.c.b16 %v9691, %v9683
    %v10324 = vpack.c.b16 %v9692, %v9684
    %v10325 = vpack.c.b16 %v9693, %v9685
    %v10326 = vpack.c.b16 %v9694, %v9686
    %v10327 = vpack.c.b16 %v9695, %v9687
    %v10328 = vpack.c.b16 %v9704, %v9696
    %v10329 = vpack.c.b16 %v9705, %v9697
    %v10330 = vpack.c.b16 %v9706, %v9698
    %v10331 = vpack.c.b16 %v9707, %v9699
    %v10332 = vpack.c.b16 %v9708, %v9700
    %v10333 = vpack.c.b16 %v9709, %v9701
    %v10334 = vpack.c.b16 %v9710, %v9702
    %v10335 = vpack.c.b16 %v9711, %v9703
    %v10336 = vpack.c.b16 %v9720, %v9712
    %v10337 = vpack.c.b16 %v9721, %v9713
    %v10338 = vpack.c.b16 %v9722, %v9714
    %v10339 = vpack.c.b16 %v9723, %v9715
    %v10340 = vpack.c.b16 %v9724, %v9716
    %v10341 = vpack.c.b16 %v9725, %v9717
    %v10342 = vpack.c.b16 %v9726, %v9718
    %v10343 = vpack.c.b16 %v9727, %v9719
    %v10344 = vpack.c.b16 %v9736, %v9728
    %v10345 = vpack.c.b16 %v9737, %v9729
    %v10346 = vpack.c.b16 %v9738, %v9730
    %v10347 = vpack.c.b16 %v9739, %v9731
    %v10348 = vpack.c.b16 %v9740, %v9732
    %v10349 = vpack.c.b16 %v9741, %v9733
    %v10350 = vpack.c.b16 %v9742, %v9734
    %v10351 = vpack.c.b16 %v9743, %v9735
    %v10352 = vpack.c.b16 %v9752, %v9744
    %v10353 = vpack.c.b16 %v9753, %v9745
    %v10354 = vpack.c.b16 %v9754, %v9746
    %v10355 = vpack.c.b16 %v9755, %v9747
    %v10356 = vpack.c.b16 %v9756, %v9748
    %v10357 = vpack.c.b16 %v9757, %v9749
    %v10358 = vpack.c.b16 %v9758, %v9750
    %v10359 = vpack.c.b16 %v9759, %v9751
    %v10360 = vpack.c.b16 %v9768, %v9760
    %v10361 = vpack.c.b16 %v9769, %v9761
    %v10362 = vpack.c.b16 %v9770, %v9762
    %v10363 = vpack.c.b16 %v9771, %v9763
    %v10364 = vpack.c.b16 %v9772, %v9764
    %v10365 = vpack.c.b16 %v9773, %v9765
    %v10366 = vpack.c.b16 %v9774, %v9766
    %v10367 = vpack.c.b16 %v9775, %v9767
    %v10368 = vpack.c.b16 %v9784, %v9776
    %v10369 = vpack.c.b16 %v9785, %v9777
    %v10370 = vpack.c.b16 %v9786, %v9778
    %v10371 = vpack.c.b16 %v9787, %v9779
    %v10372 = vpack.c.b16 %v9788, %v9780
    %v10373 = vpack.c.b16 %v9789, %v9781
    %v10374 = vpack.c.b16 %v9790, %v9782
    %v10375 = vpack.c.b16 %v9791, %v9783
    %v10376 = vpack.c.b16 %v9800, %v9792
    %v10377 = vpack.c.b16 %v9801, %v9793
    %v10378 = vpack.c.b16 %v9802, %v9794
    %v10379 = vpack.c.b16 %v9803, %v9795
    %v10380 = vpack.c.b16 %v9804, %v9796
    %v10381 = vpack.c.b16 %v9805, %v9797
    %v10382 = vpack.c.b16 %v9806, %v9798
    %v10383 = vpack.c.b16 %v9807, %v9799
    %v10384 = vpack.c.b16 %v9816, %v9808
    %v10385 = vpack.c.b16 %v9817, %v9809
    %v10386 = vpack.c.b16 %v9818, %v9810
    %v10387 = vpack.c.b16 %v9819, %v9811
    %v10388 = vpack.c.b16 %v9820, %v9812
    %v10389 = vpack.c.b16 %v9821, %v9813
    %v10390 = vpack.c.b16 %v9822, %v9814
    %v10391 = vpack.c.b16 %v9823, %v9815
    %v10392 = vpack.c.b16 %v9832, %v9824
    %v10393 = vpack.c.b16 %v9833, %v9825
    %v10394 = vpack.c.b16 %v9834, %v9826
    %v10395 = vpack.c.b16 %v9835, %v9827
    %v10396 = vpack.c.b16 %v9836, %v9828
    %v10397 = vpack.c.b16 %v9837, %v9829
    %v10398 = vpack.c.b16 %v9838, %v9830
    %v10399 = vpack.c.b16 %v9839, %v9831
    %v10400 = vpack.c.b16 %v9848, %v9840
    %v10401 = vpack.c.b16 %v9849, %v9841
    %v10402 = vpack.c.b16 %v9850, %v9842
    %v10403 = vpack.c.b16 %v9851, %v9843
    %v10404 = vpack.c.b16 %v9852, %v9844
    %v10405 = vpack.c.b16 %v9853, %v9845
    %v10406 = vpack.c.b16 %v9854, %v9846
    %v10407 = vpack.c.b16 %v9855, %v9847
    %v10408 = vpack.c.b16 %v9864, %v9856
    %v10409 = vpack.c.b16 %v9865, %v9857
    %v10410 = vpack.c.b16 %v9866, %v9858
    %v10411 = vpack.c.b16 %v9867, %v9859
    %v10412 = vpack.c.b16 %v9868, %v9860
    %v10413 = vpack.c.b16 %v9869, %v9861
    %v10414 = vpack.c.b16 %v9870, %v9862
    %v10415 = vpack.c.b16 %v9871, %v9863
    %v10416 = vpack.c.b16 %v9880, %v9872
    %v10417 = vpack.c.b16 %v9881, %v9873
    %v10418 = vpack.c.b16 %v9882, %v9874
    %v10419 = vpack.c.b16 %v9883, %v9875
    %v10420 = vpack.c.b16 %v9884, %v9876
    %v10421 = vpack.c.b16 %v9885, %v9877
    %v10422 = vpack.c.b16 %v9886, %v9878
    %v10423 = vpack.c.b16 %v9887, %v9879
    %v10424 = vpack.c.b16 %v9896, %v9888
    %v10425 = vpack.c.b16 %v9897, %v9889
    %v10426 = vpack.c.b16 %v9898, %v9890
    %v10427 = vpack.c.b16 %v9899, %v9891
    %v10428 = vpack.c.b16 %v9900, %v9892
    %v10429 = vpack.c.b16 %v9901, %v9893
    %v10430 = vpack.c.b16 %v9902, %v9894
    %v10431 = vpack.c.b16 %v9903, %v9895
    %v10432 = vpack.c.b16 %v9912, %v9904
    %v10433 = vpack.c.b16 %v9913, %v9905
    %v10434 = vpack.c.b16 %v9914, %v9906
    %v10435 = vpack.c.b16 %v9915, %v9907
    %v10436 = vpack.c.b16 %v9916, %v9908
    %v10437 = vpack.c.b16 %v9917, %v9909
    %v10438 = vpack.c.b16 %v9918, %v9910
    %v10439 = vpack.c.b16 %v9919, %v9911
    %v10440 = vpack.c.b16 %v9928, %v9920
    %v10441 = vpack.c.b16 %v9929, %v9921
    %v10442 = vpack.c.b16 %v9930, %v9922
    %v10443 = vpack.c.b16 %v9931, %v9923
    %v10444 = vpack.c.b16 %v9932, %v9924
    %v10445 = vpack.c.b16 %v9933, %v9925
    %v10446 = vpack.c.b16 %v9934, %v9926
    %v10447 = vpack.c.b16 %v9935, %v9927
    %10960 = vmatprep.subr.bf16.mxu0 %v9937
    %10961 = vmatpush1.bf16.msra.mxu0 %v9936
    %10962 = vmatprep.subr.bf16.mxu0 %v9945
    %10963 = vmatpush1.bf16.msra.mxu0 %v9944
    %10964 = vmatprep.subr.bf16.mxu0 %v9953
    %10965 = vmatpush1.bf16.msra.mxu0 %v9952
    %10966 = vmatprep.subr.bf16.mxu0 %v9961
    %10967 = vmatpush1.bf16.msra.mxu0 %v9960
    %10968 = vmatprep.subr.bf16.mxu0 %v9969
    %10969 = vmatpush1.bf16.msra.mxu0 %v9968
    %10970 = vmatprep.subr.bf16.mxu0 %v9977
    %10971 = vmatpush1.bf16.msra.mxu0 %v9976
    %10972 = vmatprep.subr.bf16.mxu0 %v9985
    %10973 = vmatpush1.bf16.msra.mxu0 %v9984
    %10974 = vmatprep.subr.bf16.mxu0 %v9993
    %10975 = vmatpush1.bf16.msra.mxu0 %v9992
    %10976 = vmatprep.subr.bf16.mxu0 %v10001
    %10977 = vmatpush1.bf16.msra.mxu0 %v10000
    %10978 = vmatprep.subr.bf16.mxu0 %v10009
    %10979 = vmatpush1.bf16.msra.mxu0 %v10008
    %10980 = vmatprep.subr.bf16.mxu0 %v10017
    %10981 = vmatpush1.bf16.msra.mxu0 %v10016
    %10982 = vmatprep.subr.bf16.mxu0 %v10025
    %10983 = vmatpush1.bf16.msra.mxu0 %v10024
    %10984 = vmatprep.subr.bf16.mxu0 %v10033
    %10985 = vmatpush1.bf16.msra.mxu0 %v10032
    %10986 = vmatprep.subr.bf16.mxu0 %v10041
    %10987 = vmatpush1.bf16.msra.mxu0 %v10040
    %10988 = vmatprep.subr.bf16.mxu0 %v10049
    %10989 = vmatpush1.bf16.msra.mxu0 %v10048
    %10990 = vmatprep.subr.bf16.mxu0 %v10057
    %10991 = vmatpush1.bf16.msra.mxu0 %v10056
    %10992 = vmatprep.mubr.bf16.mxu0 %v7881
    %10993 = vmatmul.mubr.bf16.gmra.mrb[0].mxu0 %v7880
    %v10994 = vpop.f32.mrb[0].mxu0
    %v10995 = vadd.f32 0.0, %v10994
    %v10996 = vpop.f32.mrb[0].mxu0
    %v10997 = vadd.f32 0.0, %v10996
    %v10998 = vpop.f32.mrb[0].mxu0
    %v10999 = vadd.f32 0.0, %v10998
    %v11000 = vpop.f32.mrb[0].mxu0
    %v11001 = vadd.f32 0.0, %v11000
    %11002 = vdwg.mxu0
    %11003 = vmatprep.subr.bf16.mxu0 %v10065
    %11004 = vmatpush1.bf16.msra.mxu0 %v10064
    %11005 = vmatprep.subr.bf16.mxu0 %v10073
    %11006 = vmatpush1.bf16.msra.mxu0 %v10072
    %11007 = vmatprep.subr.bf16.mxu0 %v10081
    %11008 = vmatpush1.bf16.msra.mxu0 %v10080
    %11009 = vmatprep.subr.bf16.mxu0 %v10089
    %11010 = vmatpush1.bf16.msra.mxu0 %v10088
    %11011 = vmatprep.subr.bf16.mxu0 %v10097
    %11012 = vmatpush1.bf16.msra.mxu0 %v10096
    %11013 = vmatprep.subr.bf16.mxu0 %v10105
    %11014 = vmatpush1.bf16.msra.mxu0 %v10104
    %11015 = vmatprep.subr.bf16.mxu0 %v10113
    %11016 = vmatpush1.bf16.msra.mxu0 %v10112
    %11017 = vmatprep.subr.bf16.mxu0 %v10121
    %11018 = vmatpush1.bf16.msra.mxu0 %v10120
    %11019 = vmatprep.subr.bf16.mxu0 %v10129
    %11020 = vmatpush1.bf16.msra.mxu0 %v10128
    %11021 = vmatprep.subr.bf16.mxu0 %v10137
    %11022 = vmatpush1.bf16.msra.mxu0 %v10136
    %11023 = vmatprep.subr.bf16.mxu0 %v10145
    %11024 = vmatpush1.bf16.msra.mxu0 %v10144
    %11025 = vmatprep.subr.bf16.mxu0 %v10153
    %11026 = vmatpush1.bf16.msra.mxu0 %v10152
    %11027 = vmatprep.subr.bf16.mxu0 %v10161
    %11028 = vmatpush1.bf16.msra.mxu0 %v10160
    %11029 = vmatprep.subr.bf16.mxu0 %v10169
    %11030 = vmatpush1.bf16.msra.mxu0 %v10168
    %11031 = vmatprep.subr.bf16.mxu0 %v10177
    %11032 = vmatpush1.bf16.msra.mxu0 %v10176
    %11033 = vmatprep.subr.bf16.mxu0 %v10185
    %11034 = vmatpush1.bf16.msra.mxu0 %v10184
    %11035 = vmatprep.mubr.bf16.mxu0 %v7883
    %11036 = vmatmul.mubr.bf16.gmra.mrb[0].mxu0 %v7882
    %v11037 = vpop.f32.mrb[0].mxu0
    %v11038 = vadd.f32 %v10995, %v11037
    %v11039 = vpop.f32.mrb[0].mxu0
    %v11040 = vadd.f32 %v10997, %v11039
    %v11041 = vpop.f32.mrb[0].mxu0
    %v11042 = vadd.f32 %v10999, %v11041
    %v11043 = vpop.f32.mrb[0].mxu0
    %v11044 = vadd.f32 %v11001, %v11043
    %11045 = vdwg.mxu0
    %11046 = vmatprep.subr.bf16.mxu0 %v10193
    %11047 = vmatpush1.bf16.msra.mxu0 %v10192
    %11048 = vmatprep.subr.bf16.mxu0 %v10201
    %11049 = vmatpush1.bf16.msra.mxu0 %v10200
    %11050 = vmatprep.subr.bf16.mxu0 %v10209
    %11051 = vmatpush1.bf16.msra.mxu0 %v10208
    %11052 = vmatprep.subr.bf16.mxu0 %v10217
    %11053 = vmatpush1.bf16.msra.mxu0 %v10216
    %11054 = vmatprep.subr.bf16.mxu0 %v10225
    %11055 = vmatpush1.bf16.msra.mxu0 %v10224
    %11056 = vmatprep.subr.bf16.mxu0 %v10233
    %11057 = vmatpush1.bf16.msra.mxu0 %v10232
    %11058 = vmatprep.subr.bf16.mxu0 %v10241
    %11059 = vmatpush1.bf16.msra.mxu0 %v10240
    %11060 = vmatprep.subr.bf16.mxu0 %v10249
    %11061 = vmatpush1.bf16.msra.mxu0 %v10248
    %11062 = vmatprep.subr.bf16.mxu0 %v10257
    %11063 = vmatpush1.bf16.msra.mxu0 %v10256
    %11064 = vmatprep.subr.bf16.mxu0 %v10265
    %11065 = vmatpush1.bf16.msra.mxu0 %v10264
    %11066 = vmatprep.subr.bf16.mxu0 %v10273
    %11067 = vmatpush1.bf16.msra.mxu0 %v10272
    %11068 = vmatprep.subr.bf16.mxu0 %v10281
    %11069 = vmatpush1.bf16.msra.mxu0 %v10280
    %11070 = vmatprep.subr.bf16.mxu0 %v10289
    %11071 = vmatpush1.bf16.msra.mxu0 %v10288
    %11072 = vmatprep.subr.bf16.mxu0 %v10297
    %11073 = vmatpush1.bf16.msra.mxu0 %v10296
    %11074 = vmatprep.subr.bf16.mxu0 %v10305
    %11075 = vmatpush1.bf16.msra.mxu0 %v10304
    %11076 = vmatprep.subr.bf16.mxu0 %v10313
    %11077 = vmatpush1.bf16.msra.mxu0 %v10312
    %11078 = vmatprep.mubr.bf16.mxu0 %v7885
    %11079 = vmatmul.mubr.bf16.gmra.mrb[0].mxu0 %v7884
    %v11080 = vpop.f32.mrb[0].mxu0
    %v11081 = vadd.f32 %v11038, %v11080
    %v11082 = vpop.f32.mrb[0].mxu0
    %v11083 = vadd.f32 %v11040, %v11082
    %v11084 = vpop.f32.mrb[0].mxu0
    %v11085 = vadd.f32 %v11042, %v11084
    %v11086 = vpop.f32.mrb[0].mxu0
    %v11087 = vadd.f32 %v11044, %v11086
    %11088 = vdwg.mxu0
    %11089 = vmatprep.subr.bf16.mxu0 %v10321
    %11090 = vmatpush1.bf16.msra.mxu0 %v10320
    %11091 = vmatprep.subr.bf16.mxu0 %v10329
    %11092 = vmatpush1.bf16.msra.mxu0 %v10328
    %11093 = vmatprep.subr.bf16.mxu0 %v10337
    %11094 = vmatpush1.bf16.msra.mxu0 %v10336
    %11095 = vmatprep.subr.bf16.mxu0 %v10345
    %11096 = vmatpush1.bf16.msra.mxu0 %v10344
    %11097 = vmatprep.subr.bf16.mxu0 %v10353
    %11098 = vmatpush1.bf16.msra.mxu0 %v10352
    %11099 = vmatprep.subr.bf16.mxu0 %v10361
    %11100 = vmatpush1.bf16.msra.mxu0 %v10360
    %11101 = vmatprep.subr.bf16.mxu0 %v10369
    %11102 = vmatpush1.bf16.msra.mxu0 %v10368
    %11103 = vmatprep.subr.bf16.mxu0 %v10377
    %11104 = vmatpush1.bf16.msra.mxu0 %v10376
    %11105 = vmatprep.subr.bf16.mxu0 %v10385
    %11106 = vmatpush1.bf16.msra.mxu0 %v10384
    %11107 = vmatprep.subr.bf16.mxu0 %v10393
    %11108 = vmatpush1.bf16.msra.mxu0 %v10392
    %11109 = vmatprep.subr.bf16.mxu0 %v10401
    %11110 = vmatpush1.bf16.msra.mxu0 %v10400
    %11111 = vmatprep.subr.bf16.mxu0 %v10409
    %11112 = vmatpush1.bf16.msra.mxu0 %v10408
    %11113 = vmatprep.subr.bf16.mxu0 %v10417
    %11114 = vmatpush1.bf16.msra.mxu0 %v10416
    %11115 = vmatprep.subr.bf16.mxu0 %v10425
    %11116 = vmatpush1.bf16.msra.mxu0 %v10424
    %11117 = vmatprep.subr.bf16.mxu0 %v10433
    %11118 = vmatpush1.bf16.msra.mxu0 %v10432
    %11119 = vmatprep.subr.bf16.mxu0 %v10441
    %11120 = vmatpush1.bf16.msra.mxu0 %v10440
    %11121 = vmatprep.mubr.bf16.mxu0 %v7887
    %11122 = vmatmul.mubr.bf16.gmra.mrb[0].mxu0 %v7886
    %v11123 = vpop.f32.mrb[0].mxu0
    %v11124 = vadd.f32 %v11081, %v11123
    %v11125 = vpop.f32.mrb[0].mxu0
    %v11126 = vadd.f32 %v11083, %v11125
    %v11127 = vpop.f32.mrb[0].mxu0
    %v11128 = vadd.f32 %v11085, %v11127
    %v11129 = vpop.f32.mrb[0].mxu0
    %v11130 = vadd.f32 %v11087, %v11129
    %11131 = vdwg.mxu0
    %11132 = vmatprep.subr.bf16.mxu0 %v9939
    %11133 = vmatpush1.bf16.msra.mxu0 %v9938
    %11134 = vmatprep.subr.bf16.mxu0 %v9947
    %11135 = vmatpush1.bf16.msra.mxu0 %v9946
    %11136 = vmatprep.subr.bf16.mxu0 %v9955
    %11137 = vmatpush1.bf16.msra.mxu0 %v9954
    %11138 = vmatprep.subr.bf16.mxu0 %v9963
    %11139 = vmatpush1.bf16.msra.mxu0 %v9962
    %11140 = vmatprep.subr.bf16.mxu0 %v9971
    %11141 = vmatpush1.bf16.msra.mxu0 %v9970
    %11142 = vmatprep.subr.bf16.mxu0 %v9979
    %11143 = vmatpush1.bf16.msra.mxu0 %v9978
    %11144 = vmatprep.subr.bf16.mxu0 %v9987
    %11145 = vmatpush1.bf16.msra.mxu0 %v9986
    %11146 = vmatprep.subr.bf16.mxu0 %v9995
    %11147 = vmatpush1.bf16.msra.mxu0 %v9994
    %11148 = vmatprep.subr.bf16.mxu0 %v10003
    %11149 = vmatpush1.bf16.msra.mxu0 %v10002
    %11150 = vmatprep.subr.bf16.mxu0 %v10011
    %11151 = vmatpush1.bf16.msra.mxu0 %v10010
    %11152 = vmatprep.subr.bf16.mxu0 %v10019
    %11153 = vmatpush1.bf16.msra.mxu0 %v10018
    %11154 = vmatprep.subr.bf16.mxu0 %v10027
    %11155 = vmatpush1.bf16.msra.mxu0 %v10026
    %11156 = vmatprep.subr.bf16.mxu0 %v10035
    %11157 = vmatpush1.bf16.msra.mxu0 %v10034
    %11158 = vmatprep.subr.bf16.mxu0 %v10043
    %11159 = vmatpush1.bf16.msra.mxu0 %v10042
    %11160 = vmatprep.subr.bf16.mxu0 %v10051
    %11161 = vmatpush1.bf16.msra.mxu0 %v10050
    %11162 = vmatprep.subr.bf16.mxu0 %v10059
    %11163 = vmatpush1.bf16.msra.mxu0 %v10058
    %11164 = vmatprep.mubr.bf16.mxu0 %v7881
    %11165 = vmatmul.mubr.bf16.gmra.mrb[0].mxu0 %v7880
    %v11166 = vpop.f32.mrb[0].mxu0
    %v11167 = vadd.f32 0.0, %v11166
    %v11168 = vpop.f32.mrb[0].mxu0
    %v11169 = vadd.f32 0.0, %v11168
    %v11170 = vpop.f32.mrb[0].mxu0
    %v11171 = vadd.f32 0.0, %v11170
    %v11172 = vpop.f32.mrb[0].mxu0
    %v11173 = vadd.f32 0.0, %v11172
    %11174 = vdwg.mxu0
    %11175 = vmatprep.subr.bf16.mxu0 %v10067
    %11176 = vmatpush1.bf16.msra.mxu0 %v10066
    %11177 = vmatprep.subr.bf16.mxu0 %v10075
    %11178 = vmatpush1.bf16.msra.mxu0 %v10074
    %11179 = vmatprep.subr.bf16.mxu0 %v10083
    %11180 = vmatpush1.bf16.msra.mxu0 %v10082
    %11181 = vmatprep.subr.bf16.mxu0 %v10091
    %11182 = vmatpush1.bf16.msra.mxu0 %v10090
    %11183 = vmatprep.subr.bf16.mxu0 %v10099
    %11184 = vmatpush1.bf16.msra.mxu0 %v10098
    %11185 = vmatprep.subr.bf16.mxu0 %v10107
    %11186 = vmatpush1.bf16.msra.mxu0 %v10106
    %11187 = vmatprep.subr.bf16.mxu0 %v10115
    %11188 = vmatpush1.bf16.msra.mxu0 %v10114
    %11189 = vmatprep.subr.bf16.mxu0 %v10123
    %11190 = vmatpush1.bf16.msra.mxu0 %v10122
    %11191 = vmatprep.subr.bf16.mxu0 %v10131
    %11192 = vmatpush1.bf16.msra.mxu0 %v10130
    %11193 = vmatprep.subr.bf16.mxu0 %v10139
    %11194 = vmatpush1.bf16.msra.mxu0 %v10138
    %11195 = vmatprep.subr.bf16.mxu0 %v10147
    %11196 = vmatpush1.bf16.msra.mxu0 %v10146
    %11197 = vmatprep.subr.bf16.mxu0 %v10155
    %11198 = vmatpush1.bf16.msra.mxu0 %v10154
    %11199 = vmatprep.subr.bf16.mxu0 %v10163
    %11200 = vmatpush1.bf16.msra.mxu0 %v10162
    %11201 = vmatprep.subr.bf16.mxu0 %v10171
    %11202 = vmatpush1.bf16.msra.mxu0 %v10170
    %11203 = vmatprep.subr.bf16.mxu0 %v10179
    %11204 = vmatpush1.bf16.msra.mxu0 %v10178
    %11205 = vmatprep.subr.bf16.mxu0 %v10187
    %11206 = vmatpush1.bf16.msra.mxu0 %v10186
    %11207 = vmatprep.mubr.bf16.mxu0 %v7883
    %11208 = vmatmul.mubr.bf16.gmra.mrb[0].mxu0 %v7882
    %v11209 = vpop.f32.mrb[0].mxu0
    %v11210 = vadd.f32 %v11167, %v11209
    %v11211 = vpop.f32.mrb[0].mxu0
    %v11212 = vadd.f32 %v11169, %v11211
    %v11213 = vpop.f32.mrb[0].mxu0
    %v11214 = vadd.f32 %v11171, %v11213
    %v11215 = vpop.f32.mrb[0].mxu0
    %v11216 = vadd.f32 %v11173, %v11215
    %11217 = vdwg.mxu0
    %11218 = vmatprep.subr.bf16.mxu0 %v10195
    %11219 = vmatpush1.bf16.msra.mxu0 %v10194
    %11220 = vmatprep.subr.bf16.mxu0 %v10203
    %11221 = vmatpush1.bf16.msra.mxu0 %v10202
    %11222 = vmatprep.subr.bf16.mxu0 %v10211
    %11223 = vmatpush1.bf16.msra.mxu0 %v10210
    %11224 = vmatprep.subr.bf16.mxu0 %v10219
    %11225 = vmatpush1.bf16.msra.mxu0 %v10218
    %11226 = vmatprep.subr.bf16.mxu0 %v10227
    %11227 = vmatpush1.bf16.msra.mxu0 %v10226
    %11228 = vmatprep.subr.bf16.mxu0 %v10235
    %11229 = vmatpush1.bf16.msra.mxu0 %v10234
    %11230 = vmatprep.subr.bf16.mxu0 %v10243
    %11231 = vmatpush1.bf16.msra.mxu0 %v10242
    %11232 = vmatprep.subr.bf16.mxu0 %v10251
    %11233 = vmatpush1.bf16.msra.mxu0 %v10250
    %11234 = vmatprep.subr.bf16.mxu0 %v10259
    %11235 = vmatpush1.bf16.msra.mxu0 %v10258
    %11236 = vmatprep.subr.bf16.mxu0 %v10267
    %11237 = vmatpush1.bf16.msra.mxu0 %v10266
    %11238 = vmatprep.subr.bf16.mxu0 %v10275
    %11239 = vmatpush1.bf16.msra.mxu0 %v10274
    %11240 = vmatprep.subr.bf16.mxu0 %v10283
    %11241 = vmatpush1.bf16.msra.mxu0 %v10282
    %11242 = vmatprep.subr.bf16.mxu0 %v10291
    %11243 = vmatpush1.bf16.msra.mxu0 %v10290
    %11244 = vmatprep.subr.bf16.mxu0 %v10299
    %11245 = vmatpush1.bf16.msra.mxu0 %v10298
    %11246 = vmatprep.subr.bf16.mxu0 %v10307
    %11247 = vmatpush1.bf16.msra.mxu0 %v10306
    %11248 = vmatprep.subr.bf16.mxu0 %v10315
    %11249 = vmatpush1.bf16.msra.mxu0 %v10314
    %11250 = vmatprep.mubr.bf16.mxu0 %v7885
    %11251 = vmatmul.mubr.bf16.gmra.mrb[0].mxu0 %v7884
    %v11252 = vpop.f32.mrb[0].mxu0
    %v11253 = vadd.f32 %v11210, %v11252
    %v11254 = vpop.f32.mrb[0].mxu0
    %v11255 = vadd.f32 %v11212, %v11254
    %v11256 = vpop.f32.mrb[0].mxu0
    %v11257 = vadd.f32 %v11214, %v11256
    %v11258 = vpop.f32.mrb[0].mxu0
    %v11259 = vadd.f32 %v11216, %v11258
    %11260 = vdwg.mxu0
    %11261 = vmatprep.subr.bf16.mxu0 %v10323
    %11262 = vmatpush1.bf16.msra.mxu0 %v10322
    %11263 = vmatprep.subr.bf16.mxu0 %v10331
    %11264 = vmatpush1.bf16.msra.mxu0 %v10330
    %11265 = vmatprep.subr.bf16.mxu0 %v10339
    %11266 = vmatpush1.bf16.msra.mxu0 %v10338
    %11267 = vmatprep.subr.bf16.mxu0 %v10347
    %11268 = vmatpush1.bf16.msra.mxu0 %v10346
    %11269 = vmatprep.subr.bf16.mxu0 %v10355
    %11270 = vmatpush1.bf16.msra.mxu0 %v10354
    %11271 = vmatprep.subr.bf16.mxu0 %v10363
    %11272 = vmatpush1.bf16.msra.mxu0 %v10362
    %11273 = vmatprep.subr.bf16.mxu0 %v10371
    %11274 = vmatpush1.bf16.msra.mxu0 %v10370
    %11275 = vmatprep.subr.bf16.mxu0 %v10379
    %11276 = vmatpush1.bf16.msra.mxu0 %v10378
    %11277 = vmatprep.subr.bf16.mxu0 %v10387
    %11278 = vmatpush1.bf16.msra.mxu0 %v10386
    %11279 = vmatprep.subr.bf16.mxu0 %v10395
    %11280 = vmatpush1.bf16.msra.mxu0 %v10394
    %11281 = vmatprep.subr.bf16.mxu0 %v10403
    %11282 = vmatpush1.bf16.msra.mxu0 %v10402
    %11283 = vmatprep.subr.bf16.mxu0 %v10411
    %11284 = vmatpush1.bf16.msra.mxu0 %v10410
    %11285 = vmatprep.subr.bf16.mxu0 %v10419
    %11286 = vmatpush1.bf16.msra.mxu0 %v10418
    %11287 = vmatprep.subr.bf16.mxu0 %v10427
    %11288 = vmatpush1.bf16.msra.mxu0 %v10426
    %11289 = vmatprep.subr.bf16.mxu0 %v10435
    %11290 = vmatpush1.bf16.msra.mxu0 %v10434
    %11291 = vmatprep.subr.bf16.mxu0 %v10443
    %11292 = vmatpush1.bf16.msra.mxu0 %v10442
    %11293 = vmatprep.mubr.bf16.mxu0 %v7887
    %11294 = vmatmul.mubr.bf16.gmra.mrb[0].mxu0 %v7886
    %v11295 = vpop.f32.mrb[0].mxu0
    %v11296 = vadd.f32 %v11253, %v11295
    %v11297 = vpop.f32.mrb[0].mxu0
    %v11298 = vadd.f32 %v11255, %v11297
    %v11299 = vpop.f32.mrb[0].mxu0
    %v11300 = vadd.f32 %v11257, %v11299
    %v11301 = vpop.f32.mrb[0].mxu0
    %v11302 = vadd.f32 %v11259, %v11301
    %11303 = vdwg.mxu0
    %11304 = vmatprep.subr.bf16.mxu0 %v9941
    %11305 = vmatpush1.bf16.msra.mxu0 %v9940
    %11306 = vmatprep.subr.bf16.mxu0 %v9949
    %11307 = vmatpush1.bf16.msra.mxu0 %v9948
    %11308 = vmatprep.subr.bf16.mxu0 %v9957
    %11309 = vmatpush1.bf16.msra.mxu0 %v9956
    %11310 = vmatprep.subr.bf16.mxu0 %v9965
    %11311 = vmatpush1.bf16.msra.mxu0 %v9964
    %11312 = vmatprep.subr.bf16.mxu0 %v9973
    %11313 = vmatpush1.bf16.msra.mxu0 %v9972
    %11314 = vmatprep.subr.bf16.mxu0 %v9981
    %11315 = vmatpush1.bf16.msra.mxu0 %v9980
    %11316 = vmatprep.subr.bf16.mxu0 %v9989
    %11317 = vmatpush1.bf16.msra.mxu0 %v9988
    %11318 = vmatprep.subr.bf16.mxu0 %v9997
    %11319 = vmatpush1.bf16.msra.mxu0 %v9996
    %11320 = vmatprep.subr.bf16.mxu0 %v10005
    %11321 = vmatpush1.bf16.msra.mxu0 %v10004
    %11322 = vmatprep.subr.bf16.mxu0 %v10013
    %11323 = vmatpush1.bf16.msra.mxu0 %v10012
    %11324 = vmatprep.subr.bf16.mxu0 %v10021
    %11325 = vmatpush1.bf16.msra.mxu0 %v10020
    %11326 = vmatprep.subr.bf16.mxu0 %v10029
    %11327 = vmatpush1.bf16.msra.mxu0 %v10028
    %11328 = vmatprep.subr.bf16.mxu0 %v10037
    %11329 = vmatpush1.bf16.msra.mxu0 %v10036
    %11330 = vmatprep.subr.bf16.mxu0 %v10045
    %11331 = vmatpush1.bf16.msra.mxu0 %v10044
    %11332 = vmatprep.subr.bf16.mxu0 %v10053
    %11333 = vmatpush1.bf16.msra.mxu0 %v10052
    %11334 = vmatprep.subr.bf16.mxu0 %v10061
    %11335 = vmatpush1.bf16.msra.mxu0 %v10060
    %11336 = vmatprep.mubr.bf16.mxu0 %v7881
    %11337 = vmatmul.mubr.bf16.gmra.mrb[0].mxu0 %v7880
    %v11338 = vpop.f32.mrb[0].mxu0
    %v11339 = vadd.f32 0.0, %v11338
    %v11340 = vpop.f32.mrb[0].mxu0
    %v11341 = vadd.f32 0.0, %v11340
    %v11342 = vpop.f32.mrb[0].mxu0
    %v11343 = vadd.f32 0.0, %v11342
    %v11344 = vpop.f32.mrb[0].mxu0
    %v11345 = vadd.f32 0.0, %v11344
    %11346 = vdwg.mxu0
    %11347 = vmatprep.subr.bf16.mxu0 %v10069
    %11348 = vmatpush1.bf16.msra.mxu0 %v10068
    %11349 = vmatprep.subr.bf16.mxu0 %v10077
    %11350 = vmatpush1.bf16.msra.mxu0 %v10076
    %11351 = vmatprep.subr.bf16.mxu0 %v10085
    %11352 = vmatpush1.bf16.msra.mxu0 %v10084
    %11353 = vmatprep.subr.bf16.mxu0 %v10093
    %11354 = vmatpush1.bf16.msra.mxu0 %v10092
    %11355 = vmatprep.subr.bf16.mxu0 %v10101
    %11356 = vmatpush1.bf16.msra.mxu0 %v10100
    %11357 = vmatprep.subr.bf16.mxu0 %v10109
    %11358 = vmatpush1.bf16.msra.mxu0 %v10108
    %11359 = vmatprep.subr.bf16.mxu0 %v10117
    %11360 = vmatpush1.bf16.msra.mxu0 %v10116
    %11361 = vmatprep.subr.bf16.mxu0 %v10125
    %11362 = vmatpush1.bf16.msra.mxu0 %v10124
    %11363 = vmatprep.subr.bf16.mxu0 %v10133
    %11364 = vmatpush1.bf16.msra.mxu0 %v10132
    %11365 = vmatprep.subr.bf16.mxu0 %v10141
    %11366 = vmatpush1.bf16.msra.mxu0 %v10140
    %11367 = vmatprep.subr.bf16.mxu0 %v10149
    %11368 = vmatpush1.bf16.msra.mxu0 %v10148
    %11369 = vmatprep.subr.bf16.mxu0 %v10157
    %11370 = vmatpush1.bf16.msra.mxu0 %v10156
    %11371 = vmatprep.subr.bf16.mxu0 %v10165
    %11372 = vmatpush1.bf16.msra.mxu0 %v10164
    %11373 = vmatprep.subr.bf16.mxu0 %v10173
    %11374 = vmatpush1.bf16.msra.mxu0 %v10172
    %11375 = vmatprep.subr.bf16.mxu0 %v10181
    %11376 = vmatpush1.bf16.msra.mxu0 %v10180
    %11377 = vmatprep.subr.bf16.mxu0 %v10189
    %11378 = vmatpush1.bf16.msra.mxu0 %v10188
    %11379 = vmatprep.mubr.bf16.mxu0 %v7883
    %11380 = vmatmul.mubr.bf16.gmra.mrb[0].mxu0 %v7882
    %v11381 = vpop.f32.mrb[0].mxu0
    %v11382 = vadd.f32 %v11339, %v11381
    %v11383 = vpop.f32.mrb[0].mxu0
    %v11384 = vadd.f32 %v11341, %v11383
    %v11385 = vpop.f32.mrb[0].mxu0
    %v11386 = vadd.f32 %v11343, %v11385
    %v11387 = vpop.f32.mrb[0].mxu0
    %v11388 = vadd.f32 %v11345, %v11387
    %11389 = vdwg.mxu0
    %11390 = vmatprep.subr.bf16.mxu0 %v10197
    %11391 = vmatpush1.bf16.msra.mxu0 %v10196
    %11392 = vmatprep.subr.bf16.mxu0 %v10205
    %11393 = vmatpush1.bf16.msra.mxu0 %v10204
    %11394 = vmatprep.subr.bf16.mxu0 %v10213
    %11395 = vmatpush1.bf16.msra.mxu0 %v10212
    %11396 = vmatprep.subr.bf16.mxu0 %v10221
    %11397 = vmatpush1.bf16.msra.mxu0 %v10220
    %11398 = vmatprep.subr.bf16.mxu0 %v10229
    %11399 = vmatpush1.bf16.msra.mxu0 %v10228
    %11400 = vmatprep.subr.bf16.mxu0 %v10237
    %11401 = vmatpush1.bf16.msra.mxu0 %v10236
    %11402 = vmatprep.subr.bf16.mxu0 %v10245
    %11403 = vmatpush1.bf16.msra.mxu0 %v10244
    %11404 = vmatprep.subr.bf16.mxu0 %v10253
    %11405 = vmatpush1.bf16.msra.mxu0 %v10252
    %11406 = vmatprep.subr.bf16.mxu0 %v10261
    %11407 = vmatpush1.bf16.msra.mxu0 %v10260
    %11408 = vmatprep.subr.bf16.mxu0 %v10269
    %11409 = vmatpush1.bf16.msra.mxu0 %v10268
    %11410 = vmatprep.subr.bf16.mxu0 %v10277
    %11411 = vmatpush1.bf16.msra.mxu0 %v10276
    %11412 = vmatprep.subr.bf16.mxu0 %v10285
    %11413 = vmatpush1.bf16.msra.mxu0 %v10284
    %11414 = vmatprep.subr.bf16.mxu0 %v10293
    %11415 = vmatpush1.bf16.msra.mxu0 %v10292
    %11416 = vmatprep.subr.bf16.mxu0 %v10301
    %11417 = vmatpush1.bf16.msra.mxu0 %v10300
    %11418 = vmatprep.subr.bf16.mxu0 %v10309
    %11419 = vmatpush1.bf16.msra.mxu0 %v10308
    %11420 = vmatprep.subr.bf16.mxu0 %v10317
    %11421 = vmatpush1.bf16.msra.mxu0 %v10316
    %11422 = vmatprep.mubr.bf16.mxu0 %v7885
    %11423 = vmatmul.mubr.bf16.gmra.mrb[0].mxu0 %v7884
    %v11424 = vpop.f32.mrb[0].mxu0
    %v11425 = vadd.f32 %v11382, %v11424
    %v11426 = vpop.f32.mrb[0].mxu0
    %v11427 = vadd.f32 %v11384, %v11426
    %v11428 = vpop.f32.mrb[0].mxu0
    %v11429 = vadd.f32 %v11386, %v11428
    %v11430 = vpop.f32.mrb[0].mxu0
    %v11431 = vadd.f32 %v11388, %v11430
    %11432 = vdwg.mxu0
    %11433 = vmatprep.subr.bf16.mxu0 %v10325
    %11434 = vmatpush1.bf16.msra.mxu0 %v10324
    %11435 = vmatprep.subr.bf16.mxu0 %v10333
    %11436 = vmatpush1.bf16.msra.mxu0 %v10332
    %11437 = vmatprep.subr.bf16.mxu0 %v10341
    %11438 = vmatpush1.bf16.msra.mxu0 %v10340
    %11439 = vmatprep.subr.bf16.mxu0 %v10349
    %11440 = vmatpush1.bf16.msra.mxu0 %v10348
    %11441 = vmatprep.subr.bf16.mxu0 %v10357
    %11442 = vmatpush1.bf16.msra.mxu0 %v10356
    %11443 = vmatprep.subr.bf16.mxu0 %v10365
    %11444 = vmatpush1.bf16.msra.mxu0 %v10364
    %11445 = vmatprep.subr.bf16.mxu0 %v10373
    %11446 = vmatpush1.bf16.msra.mxu0 %v10372
    %11447 = vmatprep.subr.bf16.mxu0 %v10381
    %11448 = vmatpush1.bf16.msra.mxu0 %v10380
    %11449 = vmatprep.subr.bf16.mxu0 %v10389
    %11450 = vmatpush1.bf16.msra.mxu0 %v10388
    %11451 = vmatprep.subr.bf16.mxu0 %v10397
    %11452 = vmatpush1.bf16.msra.mxu0 %v10396
    %11453 = vmatprep.subr.bf16.mxu0 %v10405
    %11454 = vmatpush1.bf16.msra.mxu0 %v10404
    %11455 = vmatprep.subr.bf16.mxu0 %v10413
    %11456 = vmatpush1.bf16.msra.mxu0 %v10412
    %11457 = vmatprep.subr.bf16.mxu0 %v10421
    %11458 = vmatpush1.bf16.msra.mxu0 %v10420
    %11459 = vmatprep.subr.bf16.mxu0 %v10429
    %11460 = vmatpush1.bf16.msra.mxu0 %v10428
    %11461 = vmatprep.subr.bf16.mxu0 %v10437
    %11462 = vmatpush1.bf16.msra.mxu0 %v10436
    %11463 = vmatprep.subr.bf16.mxu0 %v10445
    %11464 = vmatpush1.bf16.msra.mxu0 %v10444
    %11465 = vmatprep.mubr.bf16.mxu0 %v7887
    %11466 = vmatmul.mubr.bf16.gmra.mrb[0].mxu0 %v7886
    %v11467 = vpop.f32.mrb[0].mxu0
    %v11468 = vadd.f32 %v11425, %v11467
    %v11469 = vpop.f32.mrb[0].mxu0
    %v11470 = vadd.f32 %v11427, %v11469
    %v11471 = vpop.f32.mrb[0].mxu0
    %v11472 = vadd.f32 %v11429, %v11471
    %v11473 = vpop.f32.mrb[0].mxu0
    %v11474 = vadd.f32 %v11431, %v11473
    %11475 = vdwg.mxu0
    %11476 = vmatprep.subr.bf16.mxu0 %v9943
    %11477 = vmatpush1.bf16.msra.mxu0 %v9942
    %11478 = vmatprep.subr.bf16.mxu0 %v9951
    %11479 = vmatpush1.bf16.msra.mxu0 %v9950
    %11480 = vmatprep.subr.bf16.mxu0 %v9959
    %11481 = vmatpush1.bf16.msra.mxu0 %v9958
    %11482 = vmatprep.subr.bf16.mxu0 %v9967
    %11483 = vmatpush1.bf16.msra.mxu0 %v9966
    %11484 = vmatprep.subr.bf16.mxu0 %v9975
    %11485 = vmatpush1.bf16.msra.mxu0 %v9974
    %11486 = vmatprep.subr.bf16.mxu0 %v9983
    %11487 = vmatpush1.bf16.msra.mxu0 %v9982
    %11488 = vmatprep.subr.bf16.mxu0 %v9991
    %11489 = vmatpush1.bf16.msra.mxu0 %v9990
    %11490 = vmatprep.subr.bf16.mxu0 %v9999
    %11491 = vmatpush1.bf16.msra.mxu0 %v9998
    %11492 = vmatprep.subr.bf16.mxu0 %v10007
    %11493 = vmatpush1.bf16.msra.mxu0 %v10006
    %11494 = vmatprep.subr.bf16.mxu0 %v10015
    %11495 = vmatpush1.bf16.msra.mxu0 %v10014
    %11496 = vmatprep.subr.bf16.mxu0 %v10023
    %11497 = vmatpush1.bf16.msra.mxu0 %v10022
    %11498 = vmatprep.subr.bf16.mxu0 %v10031
    %11499 = vmatpush1.bf16.msra.mxu0 %v10030
    %11500 = vmatprep.subr.bf16.mxu0 %v10039
    %11501 = vmatpush1.bf16.msra.mxu0 %v10038
    %11502 = vmatprep.subr.bf16.mxu0 %v10047
    %11503 = vmatpush1.bf16.msra.mxu0 %v10046
    %11504 = vmatprep.subr.bf16.mxu0 %v10055
    %11505 = vmatpush1.bf16.msra.mxu0 %v10054
    %11506 = vmatprep.subr.bf16.mxu0 %v10063
    %11507 = vmatpush1.bf16.msra.mxu0 %v10062
    %11508 = vmatprep.mubr.bf16.mxu0 %v7881
    %11509 = vmatmul.mubr.bf16.gmra.mrb[0].mxu0 %v7880
    %v11510 = vpop.f32.mrb[0].mxu0
    %v11511 = vadd.f32 0.0, %v11510
    %v11512 = vpop.f32.mrb[0].mxu0
    %v11513 = vadd.f32 0.0, %v11512
    %v11514 = vpop.f32.mrb[0].mxu0
    %v11515 = vadd.f32 0.0, %v11514
    %v11516 = vpop.f32.mrb[0].mxu0
    %v11517 = vadd.f32 0.0, %v11516
    %11518 = vdwg.mxu0
    %11519 = vmatprep.subr.bf16.mxu0 %v10071
    %11520 = vmatpush1.bf16.msra.mxu0 %v10070
    %11521 = vmatprep.subr.bf16.mxu0 %v10079
    %11522 = vmatpush1.bf16.msra.mxu0 %v10078
    %11523 = vmatprep.subr.bf16.mxu0 %v10087
    %11524 = vmatpush1.bf16.msra.mxu0 %v10086
    %11525 = vmatprep.subr.bf16.mxu0 %v10095
    %11526 = vmatpush1.bf16.msra.mxu0 %v10094
    %11527 = vmatprep.subr.bf16.mxu0 %v10103
    %11528 = vmatpush1.bf16.msra.mxu0 %v10102
    %11529 = vmatprep.subr.bf16.mxu0 %v10111
    %11530 = vmatpush1.bf16.msra.mxu0 %v10110
    %11531 = vmatprep.subr.bf16.mxu0 %v10119
    %11532 = vmatpush1.bf16.msra.mxu0 %v10118
    %11533 = vmatprep.subr.bf16.mxu0 %v10127
    %11534 = vmatpush1.bf16.msra.mxu0 %v10126
    %11535 = vmatprep.subr.bf16.mxu0 %v10135
    %11536 = vmatpush1.bf16.msra.mxu0 %v10134
    %11537 = vmatprep.subr.bf16.mxu0 %v10143
    %11538 = vmatpush1.bf16.msra.mxu0 %v10142
    %11539 = vmatprep.subr.bf16.mxu0 %v10151
    %11540 = vmatpush1.bf16.msra.mxu0 %v10150
    %11541 = vmatprep.subr.bf16.mxu0 %v10159
    %11542 = vmatpush1.bf16.msra.mxu0 %v10158
    %11543 = vmatprep.subr.bf16.mxu0 %v10167
    %11544 = vmatpush1.bf16.msra.mxu0 %v10166
    %11545 = vmatprep.subr.bf16.mxu0 %v10175
    %11546 = vmatpush1.bf16.msra.mxu0 %v10174
    %11547 = vmatprep.subr.bf16.mxu0 %v10183
    %11548 = vmatpush1.bf16.msra.mxu0 %v10182
    %11549 = vmatprep.subr.bf16.mxu0 %v10191
    %11550 = vmatpush1.bf16.msra.mxu0 %v10190
    %11551 = vmatprep.mubr.bf16.mxu0 %v7883
    %11552 = vmatmul.mubr.bf16.gmra.mrb[0].mxu0 %v7882
    %v11553 = vpop.f32.mrb[0].mxu0
    %v11554 = vadd.f32 %v11511, %v11553
    %v11555 = vpop.f32.mrb[0].mxu0
    %v11556 = vadd.f32 %v11513, %v11555
    %v11557 = vpop.f32.mrb[0].mxu0
    %v11558 = vadd.f32 %v11515, %v11557
    %v11559 = vpop.f32.mrb[0].mxu0
    %v11560 = vadd.f32 %v11517, %v11559
    %11561 = vdwg.mxu0
    %11562 = vmatprep.subr.bf16.mxu0 %v10199
    %11563 = vmatpush1.bf16.msra.mxu0 %v10198
    %11564 = vmatprep.subr.bf16.mxu0 %v10207
    %11565 = vmatpush1.bf16.msra.mxu0 %v10206
    %11566 = vmatprep.subr.bf16.mxu0 %v10215
    %11567 = vmatpush1.bf16.msra.mxu0 %v10214
    %11568 = vmatprep.subr.bf16.mxu0 %v10223
    %11569 = vmatpush1.bf16.msra.mxu0 %v10222
    %11570 = vmatprep.subr.bf16.mxu0 %v10231
    %11571 = vmatpush1.bf16.msra.mxu0 %v10230
    %11572 = vmatprep.subr.bf16.mxu0 %v10239
    %11573 = vmatpush1.bf16.msra.mxu0 %v10238
    %11574 = vmatprep.subr.bf16.mxu0 %v10247
    %11575 = vmatpush1.bf16.msra.mxu0 %v10246
    %11576 = vmatprep.subr.bf16.mxu0 %v10255
    %11577 = vmatpush1.bf16.msra.mxu0 %v10254
    %11578 = vmatprep.subr.bf16.mxu0 %v10263
    %11579 = vmatpush1.bf16.msra.mxu0 %v10262
    %11580 = vmatprep.subr.bf16.mxu0 %v10271
    %11581 = vmatpush1.bf16.msra.mxu0 %v10270
    %11582 = vmatprep.subr.bf16.mxu0 %v10279
    %11583 = vmatpush1.bf16.msra.mxu0 %v10278
    %11584 = vmatprep.subr.bf16.mxu0 %v10287
    %11585 = vmatpush1.bf16.msra.mxu0 %v10286
    %11586 = vmatprep.subr.bf16.mxu0 %v10295
    %11587 = vmatpush1.bf16.msra.mxu0 %v10294
    %11588 = vmatprep.subr.bf16.mxu0 %v10303
    %11589 = vmatpush1.bf16.msra.mxu0 %v10302
    %11590 = vmatprep.subr.bf16.mxu0 %v10311
    %11591 = vmatpush1.bf16.msra.mxu0 %v10310
    %11592 = vmatprep.subr.bf16.mxu0 %v10319
    %11593 = vmatpush1.bf16.msra.mxu0 %v10318
    %11594 = vmatprep.mubr.bf16.mxu0 %v7885
    %11595 = vmatmul.mubr.bf16.gmra.mrb[0].mxu0 %v7884
    %v11596 = vpop.f32.mrb[0].mxu0
    %v11597 = vadd.f32 %v11554, %v11596
    %v11598 = vpop.f32.mrb[0].mxu0
    %v11599 = vadd.f32 %v11556, %v11598
    %v11600 = vpop.f32.mrb[0].mxu0
    %v11601 = vadd.f32 %v11558, %v11600
    %v11602 = vpop.f32.mrb[0].mxu0
    %v11603 = vadd.f32 %v11560, %v11602
    %11604 = vdwg.mxu0
    %11605 = vmatprep.subr.bf16.mxu0 %v10327
    %11606 = vmatpush1.bf16.msra.mxu0 %v10326
    %11607 = vmatprep.subr.bf16.mxu0 %v10335
    %11608 = vmatpush1.bf16.msra.mxu0 %v10334
    %11609 = vmatprep.subr.bf16.mxu0 %v10343
    %11610 = vmatpush1.bf16.msra.mxu0 %v10342
    %11611 = vmatprep.subr.bf16.mxu0 %v10351
    %11612 = vmatpush1.bf16.msra.mxu0 %v10350
    %11613 = vmatprep.subr.bf16.mxu0 %v10359
    %11614 = vmatpush1.bf16.msra.mxu0 %v10358
    %11615 = vmatprep.subr.bf16.mxu0 %v10367
    %11616 = vmatpush1.bf16.msra.mxu0 %v10366
    %11617 = vmatprep.subr.bf16.mxu0 %v10375
    %11618 = vmatpush1.bf16.msra.mxu0 %v10374
    %11619 = vmatprep.subr.bf16.mxu0 %v10383
    %11620 = vmatpush1.bf16.msra.mxu0 %v10382
    %11621 = vmatprep.subr.bf16.mxu0 %v10391
    %11622 = vmatpush1.bf16.msra.mxu0 %v10390
    %11623 = vmatprep.subr.bf16.mxu0 %v10399
    %11624 = vmatpush1.bf16.msra.mxu0 %v10398
    %11625 = vmatprep.subr.bf16.mxu0 %v10407
    %11626 = vmatpush1.bf16.msra.mxu0 %v10406
    %11627 = vmatprep.subr.bf16.mxu0 %v10415
    %11628 = vmatpush1.bf16.msra.mxu0 %v10414
    %11629 = vmatprep.subr.bf16.mxu0 %v10423
    %11630 = vmatpush1.bf16.msra.mxu0 %v10422
    %11631 = vmatprep.subr.bf16.mxu0 %v10431
    %11632 = vmatpush1.bf16.msra.mxu0 %v10430
    %11633 = vmatprep.subr.bf16.mxu0 %v10439
    %11634 = vmatpush1.bf16.msra.mxu0 %v10438
    %11635 = vmatprep.subr.bf16.mxu0 %v10447
    %11636 = vmatpush1.bf16.msra.mxu0 %v10446
    %11637 = vmatprep.mubr.bf16.mxu0 %v7887
    %11638 = vmatmul.mubr.bf16.gmra.mrb[0].mxu0 %v7886
    %v11639 = vpop.f32.mrb[0].mxu0
    %v11640 = vadd.f32 %v11597, %v11639
    %v11641 = vpop.f32.mrb[0].mxu0
    %v11642 = vadd.f32 %v11599, %v11641
    %v11643 = vpop.f32.mrb[0].mxu0
    %v11644 = vadd.f32 %v11601, %v11643
    %v11645 = vpop.f32.mrb[0].mxu0
    %v11646 = vadd.f32 %v11603, %v11645
    %11647 = vdwg.mxu0
    %v11648 = vld [vmem:[#allocation9] sm:$0xff]
    %v11650 = vlaneseq
    %v11651 = vshrl.u32 %v11650, 7
    %v11652 = vsub.s32 0, %v11651
    %v11653 = vrot.slane %v11648, %v11652
    %v11654 = vlaneseq
    %v11655 = vshrl.u32 %v11654, 7
    %v11656 = vsub.s32 1, %v11655
    %v11657 = vrot.slane %v11648, %v11656
    %v11658 = vlaneseq
    %v11659 = vshrl.u32 %v11658, 7
    %v11660 = vsub.s32 2, %v11659
    %v11661 = vrot.slane %v11648, %v11660
    %v11662 = vlaneseq
    %v11663 = vshrl.u32 %v11662, 7
    %v11664 = vsub.s32 3, %v11663
    %v11665 = vrot.slane %v11648, %v11664
    %v11666 = vlaneseq
    %v11667 = vshrl.u32 %v11666, 7
    %v11668 = vsub.s32 4, %v11667
    %v11669 = vrot.slane %v11648, %v11668
    %v11670 = vlaneseq
    %v11671 = vshrl.u32 %v11670, 7
    %v11672 = vsub.s32 5, %v11671
    %v11673 = vrot.slane %v11648, %v11672
    %v11674 = vlaneseq
    %v11675 = vshrl.u32 %v11674, 7
    %v11676 = vsub.s32 6, %v11675
    %v11677 = vrot.slane %v11648, %v11676
    %v11678 = vlaneseq
    %v11679 = vshrl.u32 %v11678, 7
    %v11680 = vsub.s32 7, %v11679
    %v11681 = vrot.slane %v11648, %v11680
    %v11690 = vmul.f32 %v11124, %v11653
    %v11691 = vmul.f32 %v11126, %v11657
    %v11692 = vmul.f32 %v11296, %v11661
    %v11693 = vmul.f32 %v11298, %v11665
    %v11694 = vmul.f32 %v11468, %v11669
    %v11695 = vmul.f32 %v11470, %v11673
    %v11696 = vmul.f32 %v11640, %v11677
    %v11697 = vmul.f32 %v11642, %v11681
    %v11698 = vmul.f32 %v11128, %v11653
    %v11699 = vmul.f32 %v11130, %v11657
    %v11700 = vmul.f32 %v11300, %v11661
    %v11701 = vmul.f32 %v11302, %v11665
    %v11702 = vmul.f32 %v11472, %v11669
    %v11703 = vmul.f32 %v11474, %v11673
    %v11704 = vmul.f32 %v11644, %v11677
    %v11705 = vmul.f32 %v11646, %v11681
    %v11706 = vld [vmem:[#allocation10] sm:$0xff]
    %v11708 = vlaneseq
    %v11709 = vshrl.u32 %v11708, 7
    %v11710 = vsub.s32 0, %v11709
    %v11711 = vrot.slane %v11706, %v11710
    %v11712 = vlaneseq
    %v11713 = vshrl.u32 %v11712, 7
    %v11714 = vsub.s32 1, %v11713
    %v11715 = vrot.slane %v11706, %v11714
    %v11716 = vlaneseq
    %v11717 = vshrl.u32 %v11716, 7
    %v11718 = vsub.s32 2, %v11717
    %v11719 = vrot.slane %v11706, %v11718
    %v11720 = vlaneseq
    %v11721 = vshrl.u32 %v11720, 7
    %v11722 = vsub.s32 3, %v11721
    %v11723 = vrot.slane %v11706, %v11722
    %v11724 = vlaneseq
    %v11725 = vshrl.u32 %v11724, 7
    %v11726 = vsub.s32 4, %v11725
    %v11727 = vrot.slane %v11706, %v11726
    %v11728 = vlaneseq
    %v11729 = vshrl.u32 %v11728, 7
    %v11730 = vsub.s32 5, %v11729
    %v11731 = vrot.slane %v11706, %v11730
    %v11732 = vlaneseq
    %v11733 = vshrl.u32 %v11732, 7
    %v11734 = vsub.s32 6, %v11733
    %v11735 = vrot.slane %v11706, %v11734
    %v11736 = vlaneseq
    %v11737 = vshrl.u32 %v11736, 7
    %v11738 = vsub.s32 7, %v11737
    %v11739 = vrot.slane %v11706, %v11738
    %v11748 = vadd.f32 %v11690, %v11711
    %v11749 = vadd.f32 %v11691, %v11715
    %v11750 = vadd.f32 %v11692, %v11719
    %v11751 = vadd.f32 %v11693, %v11723
    %v11752 = vadd.f32 %v11694, %v11727
    %v11753 = vadd.f32 %v11695, %v11731
    %v11754 = vadd.f32 %v11696, %v11735
    %v11755 = vadd.f32 %v11697, %v11739
    %v11756 = vadd.f32 %v11698, %v11711
    %v11757 = vadd.f32 %v11699, %v11715
    %v11758 = vadd.f32 %v11700, %v11719
    %v11759 = vadd.f32 %v11701, %v11723
    %v11760 = vadd.f32 %v11702, %v11727
    %v11761 = vadd.f32 %v11703, %v11731
    %v11762 = vadd.f32 %v11704, %v11735
    %v11763 = vadd.f32 %v11705, %v11739
    %v11764 = vmax.f32 %v11748, 0.0
    %v11765 = vmax.f32 %v11749, 0.0
    %v11766 = vmax.f32 %v11750, 0.0
    %v11767 = vmax.f32 %v11751, 0.0
    %v11768 = vmax.f32 %v11752, 0.0
    %v11769 = vmax.f32 %v11753, 0.0
    %v11770 = vmax.f32 %v11754, 0.0
    %v11771 = vmax.f32 %v11755, 0.0
    %v11772 = vmax.f32 %v11756, 0.0
    %v11773 = vmax.f32 %v11757, 0.0
    %v11774 = vmax.f32 %v11758, 0.0
    %v11775 = vmax.f32 %v11759, 0.0
    %v11776 = vmax.f32 %v11760, 0.0
    %v11777 = vmax.f32 %v11761, 0.0
    %v11778 = vmax.f32 %v11762, 0.0
    %v11779 = vmax.f32 %v11763, 0.0
    %v11780 = vpack.c.bf16 %v11772, %v11764
    %v11781 = vpack.c.bf16 %v11773, %v11765
    %v11782 = vpack.c.bf16 %v11774, %v11766
    %v11783 = vpack.c.bf16 %v11775, %v11767
    %v11784 = vpack.c.bf16 %v11776, %v11768
    %v11785 = vpack.c.bf16 %v11777, %v11769
    %v11786 = vpack.c.bf16 %v11778, %v11770
    %v11787 = vpack.c.bf16 %v11779, %v11771
    %v11788 = vld [vmem:[#allocation12] sm:$0xf]
    %v11789 = vld [vmem:[#allocation12 + $0x4] sm:$0xf]
    %v11790 = vld [vmem:[#allocation12 + $0x8] sm:$0xf]
    %v11791 = vld [vmem:[#allocation12 + $0xc] sm:$0xf]
    %v11792 = vld [vmem:[#allocation12 + $0x10] sm:$0xf]
    %v11793 = vld [vmem:[#allocation12 + $0x14] sm:$0xf]
    %v11794 = vld [vmem:[#allocation12 + $0x18] sm:$0xf]
    %v11795 = vld [vmem:[#allocation12 + $0x1c] sm:$0xf]
    %v11796 = vld [vmem:[#allocation12 + $0x20] sm:$0xf]
    %v11797 = vld [vmem:[#allocation12 + $0x24] sm:$0xf]
    %v11798 = vld [vmem:[#allocation12 + $0x28] sm:$0xf]
    %v11799 = vld [vmem:[#allocation12 + $0x2c] sm:$0xf]
    %v11800 = vld [vmem:[#allocation12 + $0x30] sm:$0xf]
    %v11801 = vld [vmem:[#allocation12 + $0x34] sm:$0xf]
    %v11802 = vld [vmem:[#allocation12 + $0x38] sm:$0xf]
    %v11803 = vld [vmem:[#allocation12 + $0x3c] sm:$0xf]
    %v11804 = vld [vmem:[#allocation12 + $0x40] sm:$0xf]
    %v11805 = vld [vmem:[#allocation12 + $0x44] sm:$0xf]
    %v11806 = vld [vmem:[#allocation12 + $0x48] sm:$0xf]
    %v11807 = vld [vmem:[#allocation12 + $0x4c] sm:$0xf]
    %v11808 = vld [vmem:[#allocation12 + $0x50] sm:$0xf]
    %v11809 = vld [vmem:[#allocation12 + $0x54] sm:$0xf]
    %v11810 = vld [vmem:[#allocation12 + $0x58] sm:$0xf]
    %v11811 = vld [vmem:[#allocation12 + $0x5c] sm:$0xf]
    %v11812 = vld [vmem:[#allocation12 + $0x60] sm:$0xf]
    %v11813 = vld [vmem:[#allocation12 + $0x64] sm:$0xf]
    %v11814 = vld [vmem:[#allocation12 + $0x68] sm:$0xf]
    %v11815 = vld [vmem:[#allocation12 + $0x6c] sm:$0xf]
    %v11816 = vld [vmem:[#allocation12 + $0x70] sm:$0xf]
    %v11817 = vld [vmem:[#allocation12 + $0x74] sm:$0xf]
    %v11818 = vld [vmem:[#allocation12 + $0x78] sm:$0xf]
    %v11819 = vld [vmem:[#allocation12 + $0x7c] sm:$0xf]
    %v11820 = vld [vmem:[#allocation12 + $0x80] sm:$0xf]
    %v11821 = vld [vmem:[#allocation12 + $0x84] sm:$0xf]
    %v11822 = vld [vmem:[#allocation12 + $0x88] sm:$0xf]
    %v11823 = vld [vmem:[#allocation12 + $0x8c] sm:$0xf]
    %v11824 = vld [vmem:[#allocation12 + $0x90] sm:$0xf]
    %v11825 = vld [vmem:[#allocation12 + $0x94] sm:$0xf]
    %v11826 = vld [vmem:[#allocation12 + $0x98] sm:$0xf]
    %v11827 = vld [vmem:[#allocation12 + $0x9c] sm:$0xf]
    %v11828 = vld [vmem:[#allocation12 + $0xa0] sm:$0xf]
    %v11829 = vld [vmem:[#allocation12 + $0xa4] sm:$0xf]
    %v11830 = vld [vmem:[#allocation12 + $0xa8] sm:$0xf]
    %v11831 = vld [vmem:[#allocation12 + $0xac] sm:$0xf]
    %v11832 = vld [vmem:[#allocation12 + $0xb0] sm:$0xf]
    %v11833 = vld [vmem:[#allocation12 + $0xb4] sm:$0xf]
    %v11834 = vld [vmem:[#allocation12 + $0xb8] sm:$0xf]
    %v11835 = vld [vmem:[#allocation12 + $0xbc] sm:$0xf]
    %v11836 = vld [vmem:[#allocation12 + $0xc0] sm:$0xf]
    %v11837 = vld [vmem:[#allocation12 + $0xc4] sm:$0xf]
    %v11838 = vld [vmem:[#allocation12 + $0xc8] sm:$0xf]
    %v11839 = vld [vmem:[#allocation12 + $0xcc] sm:$0xf]
    %v11840 = vld [vmem:[#allocation12 + $0xd0] sm:$0xf]
    %v11841 = vld [vmem:[#allocation12 + $0xd4] sm:$0xf]
    %v11842 = vld [vmem:[#allocation12 + $0xd8] sm:$0xf]
    %v11843 = vld [vmem:[#allocation12 + $0xdc] sm:$0xf]
    %v11844 = vld [vmem:[#allocation12 + $0xe0] sm:$0xf]
    %v11845 = vld [vmem:[#allocation12 + $0xe4] sm:$0xf]
    %v11846 = vld [vmem:[#allocation12 + $0xe8] sm:$0xf]
    %v11847 = vld [vmem:[#allocation12 + $0xec] sm:$0xf]
    %v11848 = vld [vmem:[#allocation12 + $0xf0] sm:$0xf]
    %v11849 = vld [vmem:[#allocation12 + $0xf4] sm:$0xf]
    %v11850 = vld [vmem:[#allocation12 + $0xf8] sm:$0xf]
    %v11851 = vld [vmem:[#allocation12 + $0xfc] sm:$0xf]
    %v11852 = vld [vmem:[#allocation12 + $0x100] sm:$0xf]
    %v11853 = vld [vmem:[#allocation12 + $0x104] sm:$0xf]
    %v11854 = vld [vmem:[#allocation12 + $0x108] sm:$0xf]
    %v11855 = vld [vmem:[#allocation12 + $0x10c] sm:$0xf]
    %v11856 = vld [vmem:[#allocation12 + $0x110] sm:$0xf]
    %v11857 = vld [vmem:[#allocation12 + $0x114] sm:$0xf]
    %v11858 = vld [vmem:[#allocation12 + $0x118] sm:$0xf]
    %v11859 = vld [vmem:[#allocation12 + $0x11c] sm:$0xf]
    %v11860 = vld [vmem:[#allocation12 + $0x120] sm:$0xf]
    %v11861 = vld [vmem:[#allocation12 + $0x124] sm:$0xf]
    %v11862 = vld [vmem:[#allocation12 + $0x128] sm:$0xf]
    %v11863 = vld [vmem:[#allocation12 + $0x12c] sm:$0xf]
    %v11864 = vld [vmem:[#allocation12 + $0x130] sm:$0xf]
    %v11865 = vld [vmem:[#allocation12 + $0x134] sm:$0xf]
    %v11866 = vld [vmem:[#allocation12 + $0x138] sm:$0xf]
    %v11867 = vld [vmem:[#allocation12 + $0x13c] sm:$0xf]
    %v11868 = vld [vmem:[#allocation12 + $0x140] sm:$0xf]
    %v11869 = vld [vmem:[#allocation12 + $0x144] sm:$0xf]
    %v11870 = vld [vmem:[#allocation12 + $0x148] sm:$0xf]
    %v11871 = vld [vmem:[#allocation12 + $0x14c] sm:$0xf]
    %v11872 = vld [vmem:[#allocation12 + $0x150] sm:$0xf]
    %v11873 = vld [vmem:[#allocation12 + $0x154] sm:$0xf]
    %v11874 = vld [vmem:[#allocation12 + $0x158] sm:$0xf]
    %v11875 = vld [vmem:[#allocation12 + $0x15c] sm:$0xf]
    %v11876 = vld [vmem:[#allocation12 + $0x160] sm:$0xf]
    %v11877 = vld [vmem:[#allocation12 + $0x164] sm:$0xf]
    %v11878 = vld [vmem:[#allocation12 + $0x168] sm:$0xf]
    %v11879 = vld [vmem:[#allocation12 + $0x16c] sm:$0xf]
    %v11880 = vld [vmem:[#allocation12 + $0x170] sm:$0xf]
    %v11881 = vld [vmem:[#allocation12 + $0x174] sm:$0xf]
    %v11882 = vld [vmem:[#allocation12 + $0x178] sm:$0xf]
    %v11883 = vld [vmem:[#allocation12 + $0x17c] sm:$0xf]
    %v11884 = vld [vmem:[#allocation12 + $0x180] sm:$0xf]
    %v11885 = vld [vmem:[#allocation12 + $0x184] sm:$0xf]
    %v11886 = vld [vmem:[#allocation12 + $0x188] sm:$0xf]
    %v11887 = vld [vmem:[#allocation12 + $0x18c] sm:$0xf]
    %v11888 = vld [vmem:[#allocation12 + $0x190] sm:$0xf]
    %v11889 = vld [vmem:[#allocation12 + $0x194] sm:$0xf]
    %v11890 = vld [vmem:[#allocation12 + $0x198] sm:$0xf]
    %v11891 = vld [vmem:[#allocation12 + $0x19c] sm:$0xf]
    %v11892 = vld [vmem:[#allocation12 + $0x1a0] sm:$0xf]
    %v11893 = vld [vmem:[#allocation12 + $0x1a4] sm:$0xf]
    %v11894 = vld [vmem:[#allocation12 + $0x1a8] sm:$0xf]
    %v11895 = vld [vmem:[#allocation12 + $0x1ac] sm:$0xf]
    %v11896 = vld [vmem:[#allocation12 + $0x1b0] sm:$0xf]
    %v11897 = vld [vmem:[#allocation12 + $0x1b4] sm:$0xf]
    %v11898 = vld [vmem:[#allocation12 + $0x1b8] sm:$0xf]
    %v11899 = vld [vmem:[#allocation12 + $0x1bc] sm:$0xf]
    %v11900 = vld [vmem:[#allocation12 + $0x1c0] sm:$0xf]
    %v11901 = vld [vmem:[#allocation12 + $0x1c4] sm:$0xf]
    %v11902 = vld [vmem:[#allocation12 + $0x1c8] sm:$0xf]
    %v11903 = vld [vmem:[#allocation12 + $0x1cc] sm:$0xf]
    %v11904 = vld [vmem:[#allocation12 + $0x1d0] sm:$0xf]
    %v11905 = vld [vmem:[#allocation12 + $0x1d4] sm:$0xf]
    %v11906 = vld [vmem:[#allocation12 + $0x1d8] sm:$0xf]
    %v11907 = vld [vmem:[#allocation12 + $0x1dc] sm:$0xf]
    %v11908 = vld [vmem:[#allocation12 + $0x1e0] sm:$0xf]
    %v11909 = vld [vmem:[#allocation12 + $0x1e4] sm:$0xf]
    %v11910 = vld [vmem:[#allocation12 + $0x1e8] sm:$0xf]
    %v11911 = vld [vmem:[#allocation12 + $0x1ec] sm:$0xf]
    %v11912 = vld [vmem:[#allocation12 + $0x1f0] sm:$0xf]
    %v11913 = vld [vmem:[#allocation12 + $0x1f4] sm:$0xf]
    %v11914 = vld [vmem:[#allocation12 + $0x1f8] sm:$0xf]
    %v11915 = vld [vmem:[#allocation12 + $0x1fc] sm:$0xf]
    %v11916 = vld [vmem:[#allocation13] sm:$0x1]
    %v11918 = vlaneseq
    %v11919 = vshrl.u32 %v11918, 7
    %v11920 = vsub.s32 0, %v11919
    %v11921 = vrot.slane %v11916, %v11920
    %v12051 = vunpack.c.l.b16 %v11788
    %v12052 = vunpack.c.l.b16 %v11789
    %v12053 = vunpack.c.l.b16 %v11790
    %v12054 = vunpack.c.l.b16 %v11791
    %v12055 = vunpack.c.l.b16 %v11792
    %v12056 = vunpack.c.l.b16 %v11793
    %v12057 = vunpack.c.l.b16 %v11794
    %v12058 = vunpack.c.l.b16 %v11795
    %v12059 = vunpack.c.l.b16 %v11796
    %v12060 = vunpack.c.l.b16 %v11797
    %v12061 = vunpack.c.l.b16 %v11798
    %v12062 = vunpack.c.l.b16 %v11799
    %v12063 = vunpack.c.l.b16 %v11800
    %v12064 = vunpack.c.l.b16 %v11801
    %v12065 = vunpack.c.l.b16 %v11802
    %v12066 = vunpack.c.l.b16 %v11803
    %v12067 = vunpack.c.l.b16 %v11804
    %v12068 = vunpack.c.l.b16 %v11805
    %v12069 = vunpack.c.l.b16 %v11806
    %v12070 = vunpack.c.l.b16 %v11807
    %v12071 = vunpack.c.l.b16 %v11808
    %v12072 = vunpack.c.l.b16 %v11809
    %v12073 = vunpack.c.l.b16 %v11810
    %v12074 = vunpack.c.l.b16 %v11811
    %v12075 = vunpack.c.l.b16 %v11812
    %v12076 = vunpack.c.l.b16 %v11813
    %v12077 = vunpack.c.l.b16 %v11814
    %v12078 = vunpack.c.l.b16 %v11815
    %v12079 = vunpack.c.l.b16 %v11816
    %v12080 = vunpack.c.l.b16 %v11817
    %v12081 = vunpack.c.l.b16 %v11818
    %v12082 = vunpack.c.l.b16 %v11819
    %v12083 = vunpack.c.l.b16 %v11820
    %v12084 = vunpack.c.l.b16 %v11821
    %v12085 = vunpack.c.l.b16 %v11822
    %v12086 = vunpack.c.l.b16 %v11823
    %v12087 = vunpack.c.l.b16 %v11824
    %v12088 = vunpack.c.l.b16 %v11825
    %v12089 = vunpack.c.l.b16 %v11826
    %v12090 = vunpack.c.l.b16 %v11827
    %v12091 = vunpack.c.l.b16 %v11828
    %v12092 = vunpack.c.l.b16 %v11829
    %v12093 = vunpack.c.l.b16 %v11830
    %v12094 = vunpack.c.l.b16 %v11831
    %v12095 = vunpack.c.l.b16 %v11832
    %v12096 = vunpack.c.l.b16 %v11833
    %v12097 = vunpack.c.l.b16 %v11834
    %v12098 = vunpack.c.l.b16 %v11835
    %v12099 = vunpack.c.l.b16 %v11836
    %v12100 = vunpack.c.l.b16 %v11837
    %v12101 = vunpack.c.l.b16 %v11838
    %v12102 = vunpack.c.l.b16 %v11839
    %v12103 = vunpack.c.l.b16 %v11840
    %v12104 = vunpack.c.l.b16 %v11841
    %v12105 = vunpack.c.l.b16 %v11842
    %v12106 = vunpack.c.l.b16 %v11843
    %v12107 = vunpack.c.l.b16 %v11844
    %v12108 = vunpack.c.l.b16 %v11845
    %v12109 = vunpack.c.l.b16 %v11846
    %v12110 = vunpack.c.l.b16 %v11847
    %v12111 = vunpack.c.l.b16 %v11848
    %v12112 = vunpack.c.l.b16 %v11849
    %v12113 = vunpack.c.l.b16 %v11850
    %v12114 = vunpack.c.l.b16 %v11851
    %v12115 = vunpack.c.l.b16 %v11852
    %v12116 = vunpack.c.l.b16 %v11853
    %v12117 = vunpack.c.l.b16 %v11854
    %v12118 = vunpack.c.l.b16 %v11855
    %v12119 = vunpack.c.l.b16 %v11856
    %v12120 = vunpack.c.l.b16 %v11857
    %v12121 = vunpack.c.l.b16 %v11858
    %v12122 = vunpack.c.l.b16 %v11859
    %v12123 = vunpack.c.l.b16 %v11860
    %v12124 = vunpack.c.l.b16 %v11861
    %v12125 = vunpack.c.l.b16 %v11862
    %v12126 = vunpack.c.l.b16 %v11863
    %v12127 = vunpack.c.l.b16 %v11864
    %v12128 = vunpack.c.l.b16 %v11865
    %v12129 = vunpack.c.l.b16 %v11866
    %v12130 = vunpack.c.l.b16 %v11867
    %v12131 = vunpack.c.l.b16 %v11868
    %v12132 = vunpack.c.l.b16 %v11869
    %v12133 = vunpack.c.l.b16 %v11870
    %v12134 = vunpack.c.l.b16 %v11871
    %v12135 = vunpack.c.l.b16 %v11872
    %v12136 = vunpack.c.l.b16 %v11873
    %v12137 = vunpack.c.l.b16 %v11874
    %v12138 = vunpack.c.l.b16 %v11875
    %v12139 = vunpack.c.l.b16 %v11876
    %v12140 = vunpack.c.l.b16 %v11877
    %v12141 = vunpack.c.l.b16 %v11878
    %v12142 = vunpack.c.l.b16 %v11879
    %v12143 = vunpack.c.l.b16 %v11880
    %v12144 = vunpack.c.l.b16 %v11881
    %v12145 = vunpack.c.l.b16 %v11882
    %v12146 = vunpack.c.l.b16 %v11883
    %v12147 = vunpack.c.l.b16 %v11884
    %v12148 = vunpack.c.l.b16 %v11885
    %v12149 = vunpack.c.l.b16 %v11886
    %v12150 = vunpack.c.l.b16 %v11887
    %v12151 = vunpack.c.l.b16 %v11888
    %v12152 = vunpack.c.l.b16 %v11889
    %v12153 = vunpack.c.l.b16 %v11890
    %v12154 = vunpack.c.l.b16 %v11891
    %v12155 = vunpack.c.l.b16 %v11892
    %v12156 = vunpack.c.l.b16 %v11893
    %v12157 = vunpack.c.l.b16 %v11894
    %v12158 = vunpack.c.l.b16 %v11895
    %v12159 = vunpack.c.l.b16 %v11896
    %v12160 = vunpack.c.l.b16 %v11897
    %v12161 = vunpack.c.l.b16 %v11898
    %v12162 = vunpack.c.l.b16 %v11899
    %v12163 = vunpack.c.l.b16 %v11900
    %v12164 = vunpack.c.l.b16 %v11901
    %v12165 = vunpack.c.l.b16 %v11902
    %v12166 = vunpack.c.l.b16 %v11903
    %v12167 = vunpack.c.l.b16 %v11904
    %v12168 = vunpack.c.l.b16 %v11905
    %v12169 = vunpack.c.l.b16 %v11906
    %v12170 = vunpack.c.l.b16 %v11907
    %v12171 = vunpack.c.l.b16 %v11908
    %v12172 = vunpack.c.l.b16 %v11909
    %v12173 = vunpack.c.l.b16 %v11910
    %v12174 = vunpack.c.l.b16 %v11911
    %v12175 = vunpack.c.l.b16 %v11912
    %v12176 = vunpack.c.l.b16 %v11913
    %v12177 = vunpack.c.l.b16 %v11914
    %v12178 = vunpack.c.l.b16 %v11915
    %v12179 = vpack.c.b16 %v12052, %v12051
    %v12180 = vpack.c.b16 %v12054, %v12053
    %v12181 = vpack.c.b16 %v12056, %v12055
    %v12182 = vpack.c.b16 %v12058, %v12057
    %v12183 = vpack.c.b16 %v12060, %v12059
    %v12184 = vpack.c.b16 %v12062, %v12061
    %v12185 = vpack.c.b16 %v12064, %v12063
    %v12186 = vpack.c.b16 %v12066, %v12065
    %v12187 = vpack.c.b16 %v12068, %v12067
    %v12188 = vpack.c.b16 %v12070, %v12069
    %v12189 = vpack.c.b16 %v12072, %v12071
    %v12190 = vpack.c.b16 %v12074, %v12073
    %v12191 = vpack.c.b16 %v12076, %v12075
    %v12192 = vpack.c.b16 %v12078, %v12077
    %v12193 = vpack.c.b16 %v12080, %v12079
    %v12194 = vpack.c.b16 %v12082, %v12081
    %v12195 = vpack.c.b16 %v12084, %v12083
    %v12196 = vpack.c.b16 %v12086, %v12085
    %v12197 = vpack.c.b16 %v12088, %v12087
    %v12198 = vpack.c.b16 %v12090, %v12089
    %v12199 = vpack.c.b16 %v12092, %v12091
    %v12200 = vpack.c.b16 %v12094, %v12093
    %v12201 = vpack.c.b16 %v12096, %v12095
    %v12202 = vpack.c.b16 %v12098, %v12097
    %v12203 = vpack.c.b16 %v12100, %v12099
    %v12204 = vpack.c.b16 %v12102, %v12101
    %v12205 = vpack.c.b16 %v12104, %v12103
    %v12206 = vpack.c.b16 %v12106, %v12105
    %v12207 = vpack.c.b16 %v12108, %v12107
    %v12208 = vpack.c.b16 %v12110, %v12109
    %v12209 = vpack.c.b16 %v12112, %v12111
    %v12210 = vpack.c.b16 %v12114, %v12113
    %v12211 = vpack.c.b16 %v12116, %v12115
    %v12212 = vpack.c.b16 %v12118, %v12117
    %v12213 = vpack.c.b16 %v12120, %v12119
    %v12214 = vpack.c.b16 %v12122, %v12121
    %v12215 = vpack.c.b16 %v12124, %v12123
    %v12216 = vpack.c.b16 %v12126, %v12125
    %v12217 = vpack.c.b16 %v12128, %v12127
    %v12218 = vpack.c.b16 %v12130, %v12129
    %v12219 = vpack.c.b16 %v12132, %v12131
    %v12220 = vpack.c.b16 %v12134, %v12133
    %v12221 = vpack.c.b16 %v12136, %v12135
    %v12222 = vpack.c.b16 %v12138, %v12137
    %v12223 = vpack.c.b16 %v12140, %v12139
    %v12224 = vpack.c.b16 %v12142, %v12141
    %v12225 = vpack.c.b16 %v12144, %v12143
    %v12226 = vpack.c.b16 %v12146, %v12145
    %v12227 = vpack.c.b16 %v12148, %v12147
    %v12228 = vpack.c.b16 %v12150, %v12149
    %v12229 = vpack.c.b16 %v12152, %v12151
    %v12230 = vpack.c.b16 %v12154, %v12153
    %v12231 = vpack.c.b16 %v12156, %v12155
    %v12232 = vpack.c.b16 %v12158, %v12157
    %v12233 = vpack.c.b16 %v12160, %v12159
    %v12234 = vpack.c.b16 %v12162, %v12161
    %v12235 = vpack.c.b16 %v12164, %v12163
    %v12236 = vpack.c.b16 %v12166, %v12165
    %v12237 = vpack.c.b16 %v12168, %v12167
    %v12238 = vpack.c.b16 %v12170, %v12169
    %v12239 = vpack.c.b16 %v12172, %v12171
    %v12240 = vpack.c.b16 %v12174, %v12173
    %v12241 = vpack.c.b16 %v12176, %v12175
    %v12242 = vpack.c.b16 %v12178, %v12177
    %12307 = vmatprep.subr.bf16.mxu0 0
    %12308 = vmatpush1.bf16.msra.mxu0 %v12179
    %12309 = vmatprep.subr.bf16.mxu0 0
    %12310 = vmatpush1.bf16.msra.mxu0 %v12180
    %12311 = vmatprep.subr.bf16.mxu0 0
    %12312 = vmatpush1.bf16.msra.mxu0 %v12181
    %12313 = vmatprep.subr.bf16.mxu0 0
    %12314 = vmatpush1.bf16.msra.mxu0 %v12182
    %12315 = vmatprep.subr.bf16.mxu0 0
    %12316 = vmatpush1.bf16.msra.mxu0 %v12183
    %12317 = vmatprep.subr.bf16.mxu0 0
    %12318 = vmatpush1.bf16.msra.mxu0 %v12184
    %12319 = vmatprep.subr.bf16.mxu0 0
    %12320 = vmatpush1.bf16.msra.mxu0 %v12185
    %12321 = vmatprep.subr.bf16.mxu0 0
    %12322 = vmatpush1.bf16.msra.mxu0 %v12186
    %12323 = vmatprep.subr.bf16.mxu0 0
    %12324 = vmatpush1.bf16.msra.mxu0 %v12187
    %12325 = vmatprep.subr.bf16.mxu0 0
    %12326 = vmatpush1.bf16.msra.mxu0 %v12188
    %12327 = vmatprep.subr.bf16.mxu0 0
    %12328 = vmatpush1.bf16.msra.mxu0 %v12189
    %12329 = vmatprep.subr.bf16.mxu0 0
    %12330 = vmatpush1.bf16.msra.mxu0 %v12190
    %12331 = vmatprep.subr.bf16.mxu0 0
    %12332 = vmatpush1.bf16.msra.mxu0 %v12191
    %12333 = vmatprep.subr.bf16.mxu0 0
    %12334 = vmatpush1.bf16.msra.mxu0 %v12192
    %12335 = vmatprep.subr.bf16.mxu0 0
    %12336 = vmatpush1.bf16.msra.mxu0 %v12193
    %12337 = vmatprep.subr.bf16.mxu0 0
    %12338 = vmatpush1.bf16.msra.mxu0 %v12194
    %12339 = vmatprep.mubr.bf16.mxu0 %v11781
    %12340 = vmatmul.mubr.bf16.gmra.mrb[0].mxu0 %v11780
    %v12341 = vpop.f32.mrb[0].mxu0
    %v12342 = vadd.f32 %v11921, %v12341
    %v12343 = vpop.f32.mrb[0].mxu0
    %v12344 = vpop.f32.mrb[0].mxu0
    %v12345 = vadd.f32 %v11921, %v12344
    %v12346 = vpop.f32.mrb[0].mxu0
    %12347 = vdwg.mxu0
    %12348 = vmatprep.subr.bf16.mxu0 0
    %12349 = vmatpush1.bf16.msra.mxu0 %v12195
    %12350 = vmatprep.subr.bf16.mxu0 0
    %12351 = vmatpush1.bf16.msra.mxu0 %v12196
    %12352 = vmatprep.subr.bf16.mxu0 0
    %12353 = vmatpush1.bf16.msra.mxu0 %v12197
    %12354 = vmatprep.subr.bf16.mxu0 0
    %12355 = vmatpush1.bf16.msra.mxu0 %v12198
    %12356 = vmatprep.subr.bf16.mxu0 0
    %12357 = vmatpush1.bf16.msra.mxu0 %v12199
    %12358 = vmatprep.subr.bf16.mxu0 0
    %12359 = vmatpush1.bf16.msra.mxu0 %v12200
    %12360 = vmatprep.subr.bf16.mxu0 0
    %12361 = vmatpush1.bf16.msra.mxu0 %v12201
    %12362 = vmatprep.subr.bf16.mxu0 0
    %12363 = vmatpush1.bf16.msra.mxu0 %v12202
    %12364 = vmatprep.subr.bf16.mxu0 0
    %12365 = vmatpush1.bf16.msra.mxu0 %v12203
    %12366 = vmatprep.subr.bf16.mxu0 0
    %12367 = vmatpush1.bf16.msra.mxu0 %v12204
    %12368 = vmatprep.subr.bf16.mxu0 0
    %12369 = vmatpush1.bf16.msra.mxu0 %v12205
    %12370 = vmatprep.subr.bf16.mxu0 0
    %12371 = vmatpush1.bf16.msra.mxu0 %v12206
    %12372 = vmatprep.subr.bf16.mxu0 0
    %12373 = vmatpush1.bf16.msra.mxu0 %v12207
    %12374 = vmatprep.subr.bf16.mxu0 0
    %12375 = vmatpush1.bf16.msra.mxu0 %v12208
    %12376 = vmatprep.subr.bf16.mxu0 0
    %12377 = vmatpush1.bf16.msra.mxu0 %v12209
    %12378 = vmatprep.subr.bf16.mxu0 0
    %12379 = vmatpush1.bf16.msra.mxu0 %v12210
    %12380 = vmatprep.mubr.bf16.mxu0 %v11783
    %12381 = vmatmul.mubr.bf16.gmra.mrb[0].mxu0 %v11782
    %v12382 = vpop.f32.mrb[0].mxu0
    %v12383 = vadd.f32 %v12342, %v12382
    %v12384 = vpop.f32.mrb[0].mxu0
    %v12385 = vpop.f32.mrb[0].mxu0
    %v12386 = vadd.f32 %v12345, %v12385
    %v12387 = vpop.f32.mrb[0].mxu0
    %12388 = vdwg.mxu0
    %12389 = vmatprep.subr.bf16.mxu0 0
    %12390 = vmatpush1.bf16.msra.mxu0 %v12211
    %12391 = vmatprep.subr.bf16.mxu0 0
    %12392 = vmatpush1.bf16.msra.mxu0 %v12212
    %12393 = vmatprep.subr.bf16.mxu0 0
    %12394 = vmatpush1.bf16.msra.mxu0 %v12213
    %12395 = vmatprep.subr.bf16.mxu0 0
    %12396 = vmatpush1.bf16.msra.mxu0 %v12214
    %12397 = vmatprep.subr.bf16.mxu0 0
    %12398 = vmatpush1.bf16.msra.mxu0 %v12215
    %12399 = vmatprep.subr.bf16.mxu0 0
    %12400 = vmatpush1.bf16.msra.mxu0 %v12216
    %12401 = vmatprep.subr.bf16.mxu0 0
    %12402 = vmatpush1.bf16.msra.mxu0 %v12217
    %12403 = vmatprep.subr.bf16.mxu0 0
    %12404 = vmatpush1.bf16.msra.mxu0 %v12218
    %12405 = vmatprep.subr.bf16.mxu0 0
    %12406 = vmatpush1.bf16.msra.mxu0 %v12219
    %12407 = vmatprep.subr.bf16.mxu0 0
    %12408 = vmatpush1.bf16.msra.mxu0 %v12220
    %12409 = vmatprep.subr.bf16.mxu0 0
    %12410 = vmatpush1.bf16.msra.mxu0 %v12221
    %12411 = vmatprep.subr.bf16.mxu0 0
    %12412 = vmatpush1.bf16.msra.mxu0 %v12222
    %12413 = vmatprep.subr.bf16.mxu0 0
    %12414 = vmatpush1.bf16.msra.mxu0 %v12223
    %12415 = vmatprep.subr.bf16.mxu0 0
    %12416 = vmatpush1.bf16.msra.mxu0 %v12224
    %12417 = vmatprep.subr.bf16.mxu0 0
    %12418 = vmatpush1.bf16.msra.mxu0 %v12225
    %12419 = vmatprep.subr.bf16.mxu0 0
    %12420 = vmatpush1.bf16.msra.mxu0 %v12226
    %12421 = vmatprep.mubr.bf16.mxu0 %v11785
    %12422 = vmatmul.mubr.bf16.gmra.mrb[0].mxu0 %v11784
    %v12423 = vpop.f32.mrb[0].mxu0
    %v12424 = vadd.f32 %v12383, %v12423
    %v12425 = vpop.f32.mrb[0].mxu0
    %v12426 = vpop.f32.mrb[0].mxu0
    %v12427 = vadd.f32 %v12386, %v12426
    %v12428 = vpop.f32.mrb[0].mxu0
    %12429 = vdwg.mxu0
    %12430 = vmatprep.subr.bf16.mxu0 0
    %12431 = vmatpush1.bf16.msra.mxu0 %v12227
    %12432 = vmatprep.subr.bf16.mxu0 0
    %12433 = vmatpush1.bf16.msra.mxu0 %v12228
    %12434 = vmatprep.subr.bf16.mxu0 0
    %12435 = vmatpush1.bf16.msra.mxu0 %v12229
    %12436 = vmatprep.subr.bf16.mxu0 0
    %12437 = vmatpush1.bf16.msra.mxu0 %v12230
    %12438 = vmatprep.subr.bf16.mxu0 0
    %12439 = vmatpush1.bf16.msra.mxu0 %v12231
    %12440 = vmatprep.subr.bf16.mxu0 0
    %12441 = vmatpush1.bf16.msra.mxu0 %v12232
    %12442 = vmatprep.subr.bf16.mxu0 0
    %12443 = vmatpush1.bf16.msra.mxu0 %v12233
    %12444 = vmatprep.subr.bf16.mxu0 0
    %12445 = vmatpush1.bf16.msra.mxu0 %v12234
    %12446 = vmatprep.subr.bf16.mxu0 0
    %12447 = vmatpush1.bf16.msra.mxu0 %v12235
    %12448 = vmatprep.subr.bf16.mxu0 0
    %12449 = vmatpush1.bf16.msra.mxu0 %v12236
    %12450 = vmatprep.subr.bf16.mxu0 0
    %12451 = vmatpush1.bf16.msra.mxu0 %v12237
    %12452 = vmatprep.subr.bf16.mxu0 0
    %12453 = vmatpush1.bf16.msra.mxu0 %v12238
    %12454 = vmatprep.subr.bf16.mxu0 0
    %12455 = vmatpush1.bf16.msra.mxu0 %v12239
    %12456 = vmatprep.subr.bf16.mxu0 0
    %12457 = vmatpush1.bf16.msra.mxu0 %v12240
    %12458 = vmatprep.subr.bf16.mxu0 0
    %12459 = vmatpush1.bf16.msra.mxu0 %v12241
    %12460 = vmatprep.subr.bf16.mxu0 0
    %12461 = vmatpush1.bf16.msra.mxu0 %v12242
    %12462 = vmatprep.mubr.bf16.mxu0 %v11787
    %12463 = vmatmul.mubr.bf16.gmra.mrb[0].mxu0 %v11786
    %v12464 = vpop.f32.mrb[0].mxu0
    %v12465 = vadd.f32 %v12424, %v12464
    %v12466 = vpop.f32.mrb[0].mxu0
    %v12467 = vpop.f32.mrb[0].mxu0
    %v12468 = vadd.f32 %v12427, %v12467
    %v12469 = vpop.f32.mrb[0].mxu0
    %12470 = vdwg.mxu0
    %12471 = vmax.xlane.f32.xlu0 %v12465
    %v12472 = vpop.xlane.xlu0 %12471
    %12473 = vmax.xlane.f32.xlu0 %v12468
    %v12474 = vpop.xlane.xlu0 %12473
    %v12475 = vsub.f32 %v12465, %v12472
    %v12476 = vsub.f32 %v12468, %v12474
    %v12477 = vmul.f32 %v12475, 1.442695
    %v12478 = vpow.pop %v12477
    %v12479 = vmul.f32 %v12476, 1.442695
    %v12480 = vpow.pop %v12479
    %12481 = vadd.xlane.f32.xlu0 %v12478
    %v12482 = vpop.xlane.xlu0 %12481
    %12483 = vadd.xlane.f32.xlu0 %v12480
    %v12484 = vpop.xlane.xlu0 %12483
    %v12485 = vlog2.pop %v12482
    %v12486 = vmul.f32 %v12485, 0.6931472
    %v12487 = vlog2.pop %v12484
    %v12488 = vmul.f32 %v12487, 0.6931472
    %v12489 = vsub.f32 %v12475, %v12486
    %v12490 = vsub.f32 %v12476, %v12488
    %12491 = vst [vmem:[%s9] sm:$0xff] %v12489
    %12492 = vst [vmem:[%s9 + $0x8] sm:$0xff] %v12490
    // Predicated region
    $region70: #{svhn_domain_classifier_forward.1} parent=1 // pred_check
      _
    $region71: #{svhn_domain_classifier_forward.1} parent=1 // pred_check_branch
      %12494 = sbr.rel (0) target = $region73
    $region72: #{svhn_domain_classifier_forward.1} parent=1 // pred_region
      _
    $region73: #{svhn_domain_classifier_forward.1} parent=1 // pred_fallthru
      _
    // Predicated region
    $region74: #{svhn_domain_classifier_forward.1} parent=1 // pred_check
      _
    $region75: #{svhn_domain_classifier_forward.1} parent=1 // pred_check_branch
      %12496 = sbr.rel (0) target = $region77
    $region76: #{svhn_domain_classifier_forward.1} parent=1 // pred_region
      _
    $region77: #{svhn_domain_classifier_forward.1} parent=1 // pred_fallthru
      _
    %12497 = vsyncpa [#allocation3], 1
    %12498 = vsyncpa [#allocation5], 1
    %12499 = vsyncpa [#allocation8], 1
    %12500 = vsyncpa [#allocation11], 1
    %12501 = vsyncpa [#allocation14], 1

</llo_original>
